<compile_context>
chip_gen: v7x
topology: tpu7x:2x2x1
jax: 0.10.0
libtpu: 0.0.40
codegen_flags: <defaults>
</compile_context>

<pallas_src>
import math
from functools import partial

import jax
import jax.numpy as jnp
from jax import lax
from jax.experimental import pallas as pl
from jax.experimental.pallas import tpu as pltpu


# ----------------------------- Pallas kernel -------------------------------------

def _window_block_kernel(x_ref, g1_ref, b1_ref, wqkv_ref, bqkv_ref, bias_ref,
                         wproj_ref, bproj_ref, g2_ref, b2_ref,
                         w1_ref, bf1_ref, w2_ref, bf2_ref, o_ref, ctx_ref,
                         *, num_heads):
    gw, _, ws, C = x_ref.shape            # (G*ws, 1, ws, C): G whole windows
    N = ws * ws
    Wb = gw // ws                          # windows in this grid step
    T = Wb * N                             # tokens in this grid step
    hd = C // num_heads
    scale = float(hd) ** (-0.5)

    # Windows arrive already grouped by the BlockSpec -> flat (tokens, C) view.
    x = x_ref[...].reshape(T, C)
    shortcut = x

    # ---- LayerNorm 1 (f32, eps=1e-5 == nn.LayerNorm default) ----
    mu = jnp.mean(x, axis=-1, keepdims=True)
    var = jnp.mean(jnp.square(x - mu), axis=-1, keepdims=True)
    xn = (x - mu) * lax.rsqrt(var + 1e-5) * g1_ref[...] + b1_ref[...]

    # ---- fused QKV projection (bf16 operands, f32 accumulation on the MXU) ----
    qkv = jnp.dot(xn.astype(jnp.bfloat16), wqkv_ref[...],
                  preferred_element_type=jnp.float32) + bqkv_ref[...]   # (T, 3C)

    # ---- multi-head window attention, batched over the Wb windows ----
    # qkv columns are laid out [q|k|v] x [head] x [head_dim] (torch's reshape order),
    # so per-head operands are static lane slices.  Each head runs ONE window-batched
    # einsum pair (batch=Wb).  Heads stay a short unrolled loop: a fully head-batched
    # form needs a (Wb,N,nh,hd)->(Wb,nh,N,hd) relayout that Mosaic lowers poorly; the
    # expensive part (the output projection) is still a single K=C matmul below.
    # TODO(synk): at real dims (C>=128) also consider lane-dense relayout of C=32 work.
    for h in range(num_heads):
        q = (qkv[:, h * hd:(h + 1) * hd] * scale).astype(jnp.bfloat16).reshape(Wb, N, hd)
        k = qkv[:, C + h * hd:C + (h + 1) * hd].astype(jnp.bfloat16).reshape(Wb, N, hd)
        v = qkv[:, 2 * C + h * hd:2 * C + (h + 1) * hd].astype(jnp.bfloat16).reshape(Wb, N, hd)
        s = jnp.einsum('bnd,bmd->bnm', q, k,
                       preferred_element_type=jnp.float32)              # (Wb, N, N)
        s = s + bias_ref[h]                                             # rel-pos bias
        s = s - jnp.max(s, axis=-1, keepdims=True)
        p = jnp.exp(s)
        p = p * pl.reciprocal(jnp.sum(p, axis=-1, keepdims=True), approx=True)
        ctx_h = jnp.einsum('bnm,bmd->bnd', p.astype(jnp.bfloat16), v,
                           preferred_element_type=jnp.float32)          # (Wb, N, hd)
        ctx_ref[:, h * hd:(h + 1) * hd] = ctx_h.reshape(T, hd)          # concat heads

    # ---- single output projection (K = C, not per-head K = hd) + residual 1 ----
    attn_out = jnp.dot(ctx_ref[...].astype(jnp.bfloat16), wproj_ref[...],
                       preferred_element_type=jnp.float32) + bproj_ref[...]
    x1 = shortcut + attn_out

    # ---- LayerNorm 2 + MLP + residual 2 ----
    mu2 = jnp.mean(x1, axis=-1, keepdims=True)
    var2 = jnp.mean(jnp.square(x1 - mu2), axis=-1, keepdims=True)
    xn2 = (x1 - mu2) * lax.rsqrt(var2 + 1e-5) * g2_ref[...] + b2_ref[...]
    h1 = jnp.dot(xn2.astype(jnp.bfloat16), w1_ref[...],
                 preferred_element_type=jnp.float32) + bf1_ref[...]
    h1 = jax.nn.gelu(h1, approximate=True)   # tanh GELU -> EUP (tiny delta vs erf GELU)
    h2 = jnp.dot(h1.astype(jnp.bfloat16), w2_ref[...],
                 preferred_element_type=jnp.float32) + bf2_ref[...]
    o_ref[...] = (x1 + h2).reshape(o_ref.shape).astype(o_ref.dtype)


# ----------------------------- plain-JAX glue -------------------------------------

def _relative_position_bias(table, ws, num_heads):
    coords = jnp.stack(jnp.meshgrid(jnp.arange(ws), jnp.arange(ws), indexing='ij'))
    coords_flat = coords.reshape(2, -1)                       # (2, N)
    rel = coords_flat[:, :, None] - coords_flat[:, None, :]   # (2, N, N)
    rel = rel.transpose(1, 2, 0)                              # (N, N, 2)
    rel = rel + jnp.array([ws - 1, ws - 1])
    rel = rel * jnp.array([2 * ws - 1, 1])
    idx = rel.sum(-1)                                         # (N, N)
    N = ws * ws
    bias = jnp.take(table, idx.reshape(-1), axis=0)           # (N*N, nh)
    return bias.reshape(N, N, num_heads).transpose(2, 0, 1).astype(jnp.float32)


def _pick_window_batch(n_window_rows, n_window_cols, target=4):
    """Whole windows per grid step (G); keep >= 2 grid steps when possible (v7x)."""
    G = 1
    for cand in range(min(n_window_rows, target), 0, -1):
        if n_window_rows % cand == 0:
            G = cand
            break
    while G > 1 and (n_window_rows // G) * n_window_cols < 2:
        G = next(c for c in range(G - 1, 0, -1) if n_window_rows % c == 0)
    return G


def window_transformer_forward(x, params, *, window_size, num_heads, attn_mask=None):
    del attn_mask                      # torch forward sets attn_mask = None
    B, L, C = x.shape
    H = W = int(math.sqrt(L))
    assert H * W == L
    ws = window_size
    # TODO(synk): padded path (H or W not a multiple of window_size) not implemented.
    assert H % ws == 0 and W % ws == 0
    assert C % num_heads == 0
    nWh, nWw = H // ws, W // ws
    N = ws * ws

    # Window partition fused into the BlockSpec: this reshape is free (contiguous)
    # and each (G*ws, 1, ws, C) block below is exactly G whole windows -> no HBM
    # relayout passes before/after the kernel.
    xv = x.reshape(B * H, nWw, ws, C)

    G = _pick_window_batch(B * nWh, nWw)           # windows per grid step
    grid = ((B * nWh) // G, nWw)
    T = G * N

    bias = _relative_position_bias(params['rel_pos_table'], ws, num_heads)
    mlp_hidden = params['w_fc1'].shape[1]

    # bf16 weights for the MXU (accumulation stays f32 in-kernel); LN/biases stay f32.
    wqkv = params['w_qkv'].astype(jnp.bfloat16)
    wproj = params['w_proj'].astype(jnp.bfloat16)
    wfc1 = params['w_fc1'].astype(jnp.bfloat16)
    wfc2 = params['w_fc2'].astype(jnp.bfloat16)

    def const_spec(shape):
        r = len(shape)
        # TODO(synk): at real Swin dims mark these pipeline_mode=pl.Buffered(1) to
        # single-buffer the grid-invariant weights (VMEM headroom on v7x / v5e).
        return pl.BlockSpec(shape, lambda *_, _r=r: (0,) * _r)

    io_spec = pl.BlockSpec((G * ws, 1, ws, C), lambda r, w: (r, w, 0, 0))

    kernel = partial(_window_block_kernel, num_heads=num_heads)
    out = pl.pallas_call(
        kernel,
        out_shape=jax.ShapeDtypeStruct(xv.shape, x.dtype),
        grid_spec=pltpu.PrefetchScalarGridSpec(
            num_scalar_prefetch=0,
            grid=grid,
            in_specs=[
                io_spec,                                         # x: G windows / step
                const_spec((1, C)), const_spec((1, C)),          # norm1 gamma/beta
                const_spec((C, 3 * C)), const_spec((1, 3 * C)),  # qkv weight/bias
                const_spec((num_heads, N, N)),                   # relative pos bias
                const_spec((C, C)), const_spec((1, C)),          # proj weight/bias
                const_spec((1, C)), const_spec((1, C)),          # norm2 gamma/beta
                const_spec((C, mlp_hidden)), const_spec((1, mlp_hidden)),  # fc1
                const_spec((mlp_hidden, C)), const_spec((1, C)),           # fc2
            ],
            out_specs=io_spec,
            scratch_shapes=[pltpu.VMEM((T, C), jnp.float32)],    # head-concat buffer
        ),
        compiler_params=pltpu.CompilerParams(
            dimension_semantics=("parallel", "parallel"),
            vmem_limit_bytes=32 * 1024 * 1024,
        ),
    )(xv,
      params['norm1_g'], params['norm1_b'],
      wqkv, params['b_qkv'],
      bias,
      wproj, params['b_proj'],
      params['norm2_g'], params['norm2_b'],
      wfc1, params['b_fc1'],
      wfc2, params['b_fc2'])

    return out.reshape(B, L, C)


# ----------------------------------- main ------------------------------------------

if __name__ == "__main__":
    B, dim, num_heads, ws = 2, 32, 4, 8
    H = W = 16
    L = H * W
    mlp_hidden = int(dim * 4.0)

    key = jax.random.PRNGKey(0)
    ks = jax.random.split(key, 12)

    def init(k, shape, scale=0.02):
        return (scale * jax.random.normal(k, shape)).astype(jnp.float32)

    params = dict(
        norm1_g=jnp.ones((1, dim), jnp.float32),
        norm1_b=jnp.zeros((1, dim), jnp.float32),
        rel_pos_table=init(ks[0], ((2 * ws - 1) * (2 * ws - 1), num_heads)),
        w_qkv=init(ks[1], (dim, 3 * dim)),
        b_qkv=init(ks[2], (1, 3 * dim)),
        w_proj=init(ks[3], (dim, dim)),
        b_proj=init(ks[4], (1, dim)),
        norm2_g=jnp.ones((1, dim), jnp.float32),
        norm2_b=jnp.zeros((1, dim), jnp.float32),
        w_fc1=init(ks[5], (dim, mlp_hidden)),
        b_fc1=init(ks[6], (1, mlp_hidden)),
        w_fc2=init(ks[7], (mlp_hidden, dim)),
        b_fc2=init(ks[8], (1, dim)),
    )

    x = jax.random.normal(ks[9], (B, L, dim), jnp.float32)

    out = window_transformer_forward(x, params, window_size=ws,
                                     num_heads=num_heads, attn_mask=None)
    out = jax.block_until_ready(out)

    assert out.shape == (B, L, dim), out.shape
    assert bool(jnp.all(jnp.isfinite(out)))
    print("KERNEL_OK")
</pallas_src>

<mosaic_0001>
module attributes {stable_mosaic.version = 11 : i64} {
  func.func @_window_block_kernel(%arg0: i32, %arg1: i32, %arg2: memref<32x1x8x32xf32, #tpu.memory_space<vmem>>, %arg3: memref<1x32xf32, #tpu.memory_space<vmem>>, %arg4: memref<1x32xf32, #tpu.memory_space<vmem>>, %arg5: memref<32x96xbf16, #tpu.memory_space<vmem>>, %arg6: memref<1x96xf32, #tpu.memory_space<vmem>>, %arg7: memref<4x64x64xf32, #tpu.memory_space<vmem>>, %arg8: memref<32x32xbf16, #tpu.memory_space<vmem>>, %arg9: memref<1x32xf32, #tpu.memory_space<vmem>>, %arg10: memref<1x32xf32, #tpu.memory_space<vmem>>, %arg11: memref<1x32xf32, #tpu.memory_space<vmem>>, %arg12: memref<32x128xbf16, #tpu.memory_space<vmem>>, %arg13: memref<1x128xf32, #tpu.memory_space<vmem>>, %arg14: memref<128x32xbf16, #tpu.memory_space<vmem>>, %arg15: memref<1x32xf32, #tpu.memory_space<vmem>>, %arg16: memref<32x1x8x32xf32, #tpu.memory_space<vmem>>, %arg17: memref<256x32xf32, #tpu.memory_space<vmem>>) attributes {dimension_semantics = [#tpu.dimension_semantics<parallel>, #tpu.dimension_semantics<parallel>], iteration_bounds = array<i64: 1, 2>, scalar_prefetch = 0 : i64, scratch_operands = 1 : i64, tpu.core_type = #tpu.core_type<tc>, window_params = [{transform_indices = @transform_0, window_bounds = array<i64: 32, 1, 8, 32>}, {pipeline_mode = #tpu.pipeline_mode<synchronous>, transform_indices = @transform_1, window_bounds = array<i64: 1, 32>}, {pipeline_mode = #tpu.pipeline_mode<synchronous>, transform_indices = @transform_2, window_bounds = array<i64: 1, 32>}, {pipeline_mode = #tpu.pipeline_mode<synchronous>, transform_indices = @transform_3, window_bounds = array<i64: 32, 96>}, {pipeline_mode = #tpu.pipeline_mode<synchronous>, transform_indices = @transform_4, window_bounds = array<i64: 1, 96>}, {pipeline_mode = #tpu.pipeline_mode<synchronous>, transform_indices = @transform_5, window_bounds = array<i64: 4, 64, 64>}, {pipeline_mode = #tpu.pipeline_mode<synchronous>, transform_indices = @transform_6, window_bounds = array<i64: 32, 32>}, {pipeline_mode = #tpu.pipeline_mode<synchronous>, transform_indices = @transform_7, window_bounds = array<i64: 1, 32>}, {pipeline_mode = #tpu.pipeline_mode<synchronous>, transform_indices = @transform_8, window_bounds = array<i64: 1, 32>}, {pipeline_mode = #tpu.pipeline_mode<synchronous>, transform_indices = @transform_9, window_bounds = array<i64: 1, 32>}, {pipeline_mode = #tpu.pipeline_mode<synchronous>, transform_indices = @transform_10, window_bounds = array<i64: 32, 128>}, {pipeline_mode = #tpu.pipeline_mode<synchronous>, transform_indices = @transform_11, window_bounds = array<i64: 1, 128>}, {pipeline_mode = #tpu.pipeline_mode<synchronous>, transform_indices = @transform_12, window_bounds = array<i64: 128, 32>}, {pipeline_mode = #tpu.pipeline_mode<synchronous>, transform_indices = @transform_13, window_bounds = array<i64: 1, 32>}, {transform_indices = @transform_14, window_bounds = array<i64: 32, 1, 8, 32>}]} {
    %c0 = arith.constant 0 : index
    %c0_0 = arith.constant 0 : index
    %c0_1 = arith.constant 0 : index
    %c0_2 = arith.constant 0 : index
    %0 = vector.load %arg2[%c0, %c0_0, %c0_1, %c0_2] : memref<32x1x8x32xf32, #tpu.memory_space<vmem>>, vector<32x1x8x32xf32>
    %1 = vector.shape_cast %0 : vector<32x1x8x32xf32> to vector<256x32xf32>
    %cst = arith.constant dense<0.000000e+00> : vector<256xf32>
    %2 = vector.multi_reduction <add>, %1, %cst [1] : vector<256x32xf32> to vector<256xf32>
    %3 = vector.shape_cast %2 : vector<256xf32> to vector<256x1xf32>
    %cst_3 = arith.constant 3.200000e+01 : f32
    %4 = vector.broadcast %cst_3 : f32 to vector<256x1xf32>
    %5 = arith.divf %3, %4 : vector<256x1xf32>
    %6 = vector.broadcast %5 : vector<256x1xf32> to vector<256x32xf32>
    %7 = arith.subf %1, %6 : vector<256x32xf32>
    %8 = arith.mulf %7, %7 : vector<256x32xf32>
    %cst_4 = arith.constant dense<0.000000e+00> : vector<256xf32>
    %9 = vector.multi_reduction <add>, %8, %cst_4 [1] : vector<256x32xf32> to vector<256xf32>
    %10 = vector.shape_cast %9 : vector<256xf32> to vector<256x1xf32>
    %cst_5 = arith.constant 3.200000e+01 : f32
    %11 = vector.broadcast %cst_5 : f32 to vector<256x1xf32>
    %12 = arith.divf %10, %11 : vector<256x1xf32>
    %13 = vector.broadcast %5 : vector<256x1xf32> to vector<256x32xf32>
    %14 = arith.subf %1, %13 : vector<256x32xf32>
    %cst_6 = arith.constant 9.99999974E-6 : f32
    %15 = vector.broadcast %cst_6 : f32 to vector<256x1xf32>
    %16 = arith.addf %12, %15 : vector<256x1xf32>
    %17 = math.rsqrt %16 : vector<256x1xf32>
    %18 = vector.broadcast %17 : vector<256x1xf32> to vector<256x32xf32>
    %19 = arith.mulf %14, %18 : vector<256x32xf32>
    %c0_7 = arith.constant 0 : index
    %c0_8 = arith.constant 0 : index
    %20 = vector.load %arg3[%c0_7, %c0_8] : memref<1x32xf32, #tpu.memory_space<vmem>>, vector<1x32xf32>
    %21 = vector.broadcast %20 : vector<1x32xf32> to vector<256x32xf32>
    %22 = arith.mulf %19, %21 : vector<256x32xf32>
    %c0_9 = arith.constant 0 : index
    %c0_10 = arith.constant 0 : index
    %23 = vector.load %arg4[%c0_9, %c0_10] : memref<1x32xf32, #tpu.memory_space<vmem>>, vector<1x32xf32>
    %24 = vector.broadcast %23 : vector<1x32xf32> to vector<256x32xf32>
    %25 = arith.addf %22, %24 : vector<256x32xf32>
    %26 = arith.truncf %25 : vector<256x32xf32> to vector<256x32xbf16>
    %c0_11 = arith.constant 0 : index
    %c0_12 = arith.constant 0 : index
    %27 = vector.load %arg5[%c0_11, %c0_12] : memref<32x96xbf16, #tpu.memory_space<vmem>>, vector<32x96xbf16>
    %cst_13 = arith.constant dense<0.000000e+00> : vector<256x96xf32>
    %28 = tpu.matmul %26, %27, %cst_13 {dimension_numbers = #tpu.dot_dimension_numbers<[1], [0], [0], [1], [0, 0, 1, 1], [], []>} : vector<256x32xbf16>, vector<32x96xbf16>, vector<256x96xf32> -> vector<256x96xf32>
    %c0_14 = arith.constant 0 : index
    %c0_15 = arith.constant 0 : index
    %29 = vector.load %arg6[%c0_14, %c0_15] : memref<1x96xf32, #tpu.memory_space<vmem>>, vector<1x96xf32>
    %30 = vector.broadcast %29 : vector<1x96xf32> to vector<256x96xf32>
    %31 = arith.addf %28, %30 : vector<256x96xf32>
    %32 = vector.extract_strided_slice %31 {offsets = [0, 0], sizes = [256, 8], strides = [1, 1]} : vector<256x96xf32> to vector<256x8xf32>
    %cst_16 = arith.constant 0.353553385 : f32
    %33 = vector.broadcast %cst_16 : f32 to vector<256x8xf32>
    %34 = arith.mulf %32, %33 : vector<256x8xf32>
    %35 = arith.truncf %34 : vector<256x8xf32> to vector<256x8xbf16>
    %36 = vector.shape_cast %35 : vector<256x8xbf16> to vector<4x64x8xbf16>
    %37 = vector.extract_strided_slice %31 {offsets = [0, 32], sizes = [256, 8], strides = [1, 1]} : vector<256x96xf32> to vector<256x8xf32>
    %38 = arith.truncf %37 : vector<256x8xf32> to vector<256x8xbf16>
    %39 = vector.shape_cast %38 : vector<256x8xbf16> to vector<4x64x8xbf16>
    %40 = vector.extract_strided_slice %31 {offsets = [0, 64], sizes = [256, 8], strides = [1, 1]} : vector<256x96xf32> to vector<256x8xf32>
    %41 = arith.truncf %40 : vector<256x8xf32> to vector<256x8xbf16>
    %42 = vector.shape_cast %41 : vector<256x8xbf16> to vector<4x64x8xbf16>
    "tpu.trace_start"() <{level = 10 : i32, message = "bnd,bmd->bnm"}> : () -> ()
    %cst_17 = arith.constant dense<0.000000e+00> : vector<4x64x64xf32>
    %43 = tpu.matmul %36, %39, %cst_17 {dimension_numbers = #tpu.dot_dimension_numbers<[2], [2], [1], [1], [0, 0, 0, 1, 1, 1], [0], [0]>} : vector<4x64x8xbf16>, vector<4x64x8xbf16>, vector<4x64x64xf32> -> vector<4x64x64xf32>
    "tpu.trace_stop"() : () -> ()
    %c0_18 = arith.constant 0 : index
    %c0_19 = arith.constant 0 : index
    %c0_20 = arith.constant 0 : index
    %44 = vector.load %arg7[%c0_18, %c0_19, %c0_20] : memref<4x64x64xf32, #tpu.memory_space<vmem>>, vector<1x64x64xf32>
    %45 = vector.shape_cast %44 : vector<1x64x64xf32> to vector<64x64xf32>
    %46 = vector.shape_cast %45 : vector<64x64xf32> to vector<1x64x64xf32>
    %47 = vector.broadcast %46 : vector<1x64x64xf32> to vector<4x64x64xf32>
    %48 = arith.addf %43, %47 : vector<4x64x64xf32>
    %cst_21 = arith.constant dense<0xFF800000> : vector<4x64xf32>
    %49 = vector.multi_reduction <maximumf>, %48, %cst_21 [2] : vector<4x64x64xf32> to vector<4x64xf32>
    %50 = vector.shape_cast %49 : vector<4x64xf32> to vector<4x64x1xf32>
    %51 = vector.broadcast %50 : vector<4x64x1xf32> to vector<4x64x64xf32>
    %52 = arith.subf %48, %51 : vector<4x64x64xf32>
    %53 = math.exp %52 : vector<4x64x64xf32>
    %cst_22 = arith.constant dense<0.000000e+00> : vector<4x64xf32>
    %54 = vector.multi_reduction <add>, %53, %cst_22 [2] : vector<4x64x64xf32> to vector<4x64xf32>
    %55 = vector.shape_cast %54 : vector<4x64xf32> to vector<4x64x1xf32>
    %56 = tpu.reciprocal %55 {approx = true} : vector<4x64x1xf32> -> vector<4x64x1xf32>
    %57 = vector.broadcast %56 : vector<4x64x1xf32> to vector<4x64x64xf32>
    %58 = arith.mulf %53, %57 : vector<4x64x64xf32>
    %59 = arith.truncf %58 : vector<4x64x64xf32> to vector<4x64x64xbf16>
    "tpu.trace_start"() <{level = 10 : i32, message = "bnm,bmd->bnd"}> : () -> ()
    %cst_23 = arith.constant dense<0.000000e+00> : vector<4x64x8xf32>
    %60 = tpu.matmul %59, %42, %cst_23 {dimension_numbers = #tpu.dot_dimension_numbers<[2], [1], [1], [2], [0, 0, 0, 1, 1, 2], [0], [0]>} : vector<4x64x64xbf16>, vector<4x64x8xbf16>, vector<4x64x8xf32> -> vector<4x64x8xf32>
    "tpu.trace_stop"() : () -> ()
    %61 = vector.shape_cast %60 : vector<4x64x8xf32> to vector<256x8xf32>
    %c0_24 = arith.constant 0 : index
    %c0_25 = arith.constant 0 : index
    %62 = vector.load %arg17[%c0_24, %c0_25] : memref<256x32xf32, #tpu.memory_space<vmem>>, vector<256x8xf32>
    tpu.vector_store %arg17[%c0_24, %c0_25], %61 {strides = array<i32>} : memref<256x32xf32, #tpu.memory_space<vmem>>, vector<256x8xf32>,
    %63 = vector.extract_strided_slice %31 {offsets = [0, 8], sizes = [256, 8], strides = [1, 1]} : vector<256x96xf32> to vector<256x8xf32>
    %cst_26 = arith.constant 0.353553385 : f32
    %64 = vector.broadcast %cst_26 : f32 to vector<256x8xf32>
    %65 = arith.mulf %63, %64 : vector<256x8xf32>
    %66 = arith.truncf %65 : vector<256x8xf32> to vector<256x8xbf16>
    %67 = vector.shape_cast %66 : vector<256x8xbf16> to vector<4x64x8xbf16>
    %68 = vector.extract_strided_slice %31 {offsets = [0, 40], sizes = [256, 8], strides = [1, 1]} : vector<256x96xf32> to vector<256x8xf32>
    %69 = arith.truncf %68 : vector<256x8xf32> to vector<256x8xbf16>
    %70 = vector.shape_cast %69 : vector<256x8xbf16> to vector<4x64x8xbf16>
    %71 = vector.extract_strided_slice %31 {offsets = [0, 72], sizes = [256, 8], strides = [1, 1]} : vector<256x96xf32> to vector<256x8xf32>
    %72 = arith.truncf %71 : vector<256x8xf32> to vector<256x8xbf16>
    %73 = vector.shape_cast %72 : vector<256x8xbf16> to vector<4x64x8xbf16>
    "tpu.trace_start"() <{level = 10 : i32, message = "bnd,bmd->bnm"}> : () -> ()
    %cst_27 = arith.constant dense<0.000000e+00> : vector<4x64x64xf32>
    %74 = tpu.matmul %67, %70, %cst_27 {dimension_numbers = #tpu.dot_dimension_numbers<[2], [2], [1], [1], [0, 0, 0, 1, 1, 1], [0], [0]>} : vector<4x64x8xbf16>, vector<4x64x8xbf16>, vector<4x64x64xf32> -> vector<4x64x64xf32>
    "tpu.trace_stop"() : () -> ()
    %c1 = arith.constant 1 : index
    %c0_28 = arith.constant 0 : index
    %c0_29 = arith.constant 0 : index
    %75 = vector.load %arg7[%c1, %c0_28, %c0_29] : memref<4x64x64xf32, #tpu.memory_space<vmem>>, vector<1x64x64xf32>
    %76 = vector.shape_cast %75 : vector<1x64x64xf32> to vector<64x64xf32>
    %77 = vector.shape_cast %76 : vector<64x64xf32> to vector<1x64x64xf32>
    %78 = vector.broadcast %77 : vector<1x64x64xf32> to vector<4x64x64xf32>
    %79 = arith.addf %74, %78 : vector<4x64x64xf32>
    %cst_30 = arith.constant dense<0xFF800000> : vector<4x64xf32>
    %80 = vector.multi_reduction <maximumf>, %79, %cst_30 [2] : vector<4x64x64xf32> to vector<4x64xf32>
    %81 = vector.shape_cast %80 : vector<4x64xf32> to vector<4x64x1xf32>
    %82 = vector.broadcast %81 : vector<4x64x1xf32> to vector<4x64x64xf32>
    %83 = arith.subf %79, %82 : vector<4x64x64xf32>
    %84 = math.exp %83 : vector<4x64x64xf32>
    %cst_31 = arith.constant dense<0.000000e+00> : vector<4x64xf32>
    %85 = vector.multi_reduction <add>, %84, %cst_31 [2] : vector<4x64x64xf32> to vector<4x64xf32>
    %86 = vector.shape_cast %85 : vector<4x64xf32> to vector<4x64x1xf32>
    %87 = tpu.reciprocal %86 {approx = true} : vector<4x64x1xf32> -> vector<4x64x1xf32>
    %88 = vector.broadcast %87 : vector<4x64x1xf32> to vector<4x64x64xf32>
    %89 = arith.mulf %84, %88 : vector<4x64x64xf32>
    %90 = arith.truncf %89 : vector<4x64x64xf32> to vector<4x64x64xbf16>
    "tpu.trace_start"() <{level = 10 : i32, message = "bnm,bmd->bnd"}> : () -> ()
    %cst_32 = arith.constant dense<0.000000e+00> : vector<4x64x8xf32>
    %91 = tpu.matmul %90, %73, %cst_32 {dimension_numbers = #tpu.dot_dimension_numbers<[2], [1], [1], [2], [0, 0, 0, 1, 1, 2], [0], [0]>} : vector<4x64x64xbf16>, vector<4x64x8xbf16>, vector<4x64x8xf32> -> vector<4x64x8xf32>
    "tpu.trace_stop"() : () -> ()
    %92 = vector.shape_cast %91 : vector<4x64x8xf32> to vector<256x8xf32>
    %c0_33 = arith.constant 0 : index
    %c8 = arith.constant 8 : index
    %93 = vector.load %arg17[%c0_33, %c8] : memref<256x32xf32, #tpu.memory_space<vmem>>, vector<256x8xf32>
    tpu.vector_store %arg17[%c0_33, %c8], %92 {strides = array<i32>} : memref<256x32xf32, #tpu.memory_space<vmem>>, vector<256x8xf32>,
    %94 = vector.extract_strided_slice %31 {offsets = [0, 16], sizes = [256, 8], strides = [1, 1]} : vector<256x96xf32> to vector<256x8xf32>
    %cst_34 = arith.constant 0.353553385 : f32
    %95 = vector.broadcast %cst_34 : f32 to vector<256x8xf32>
    %96 = arith.mulf %94, %95 : vector<256x8xf32>
    %97 = arith.truncf %96 : vector<256x8xf32> to vector<256x8xbf16>
    %98 = vector.shape_cast %97 : vector<256x8xbf16> to vector<4x64x8xbf16>
    %99 = vector.extract_strided_slice %31 {offsets = [0, 48], sizes = [256, 8], strides = [1, 1]} : vector<256x96xf32> to vector<256x8xf32>
    %100 = arith.truncf %99 : vector<256x8xf32> to vector<256x8xbf16>
    %101 = vector.shape_cast %100 : vector<256x8xbf16> to vector<4x64x8xbf16>
    %102 = vector.extract_strided_slice %31 {offsets = [0, 80], sizes = [256, 8], strides = [1, 1]} : vector<256x96xf32> to vector<256x8xf32>
    %103 = arith.truncf %102 : vector<256x8xf32> to vector<256x8xbf16>
    %104 = vector.shape_cast %103 : vector<256x8xbf16> to vector<4x64x8xbf16>
    "tpu.trace_start"() <{level = 10 : i32, message = "bnd,bmd->bnm"}> : () -> ()
    %cst_35 = arith.constant dense<0.000000e+00> : vector<4x64x64xf32>
    %105 = tpu.matmul %98, %101, %cst_35 {dimension_numbers = #tpu.dot_dimension_numbers<[2], [2], [1], [1], [0, 0, 0, 1, 1, 1], [0], [0]>} : vector<4x64x8xbf16>, vector<4x64x8xbf16>, vector<4x64x64xf32> -> vector<4x64x64xf32>
    "tpu.trace_stop"() : () -> ()
    %c2 = arith.constant 2 : index
    %c0_36 = arith.constant 0 : index
    %c0_37 = arith.constant 0 : index
    %106 = vector.load %arg7[%c2, %c0_36, %c0_37] : memref<4x64x64xf32, #tpu.memory_space<vmem>>, vector<1x64x64xf32>
    %107 = vector.shape_cast %106 : vector<1x64x64xf32> to vector<64x64xf32>
    %108 = vector.shape_cast %107 : vector<64x64xf32> to vector<1x64x64xf32>
    %109 = vector.broadcast %108 : vector<1x64x64xf32> to vector<4x64x64xf32>
    %110 = arith.addf %105, %109 : vector<4x64x64xf32>
    %cst_38 = arith.constant dense<0xFF800000> : vector<4x64xf32>
    %111 = vector.multi_reduction <maximumf>, %110, %cst_38 [2] : vector<4x64x64xf32> to vector<4x64xf32>
    %112 = vector.shape_cast %111 : vector<4x64xf32> to vector<4x64x1xf32>
    %113 = vector.broadcast %112 : vector<4x64x1xf32> to vector<4x64x64xf32>
    %114 = arith.subf %110, %113 : vector<4x64x64xf32>
    %115 = math.exp %114 : vector<4x64x64xf32>
    %cst_39 = arith.constant dense<0.000000e+00> : vector<4x64xf32>
    %116 = vector.multi_reduction <add>, %115, %cst_39 [2] : vector<4x64x64xf32> to vector<4x64xf32>
    %117 = vector.shape_cast %116 : vector<4x64xf32> to vector<4x64x1xf32>
    %118 = tpu.reciprocal %117 {approx = true} : vector<4x64x1xf32> -> vector<4x64x1xf32>
    %119 = vector.broadcast %118 : vector<4x64x1xf32> to vector<4x64x64xf32>
    %120 = arith.mulf %115, %119 : vector<4x64x64xf32>
    %121 = arith.truncf %120 : vector<4x64x64xf32> to vector<4x64x64xbf16>
    "tpu.trace_start"() <{level = 10 : i32, message = "bnm,bmd->bnd"}> : () -> ()
    %cst_40 = arith.constant dense<0.000000e+00> : vector<4x64x8xf32>
    %122 = tpu.matmul %121, %104, %cst_40 {dimension_numbers = #tpu.dot_dimension_numbers<[2], [1], [1], [2], [0, 0, 0, 1, 1, 2], [0], [0]>} : vector<4x64x64xbf16>, vector<4x64x8xbf16>, vector<4x64x8xf32> -> vector<4x64x8xf32>
    "tpu.trace_stop"() : () -> ()
    %123 = vector.shape_cast %122 : vector<4x64x8xf32> to vector<256x8xf32>
    %c0_41 = arith.constant 0 : index
    %c16 = arith.constant 16 : index
    %124 = vector.load %arg17[%c0_41, %c16] : memref<256x32xf32, #tpu.memory_space<vmem>>, vector<256x8xf32>
    tpu.vector_store %arg17[%c0_41, %c16], %123 {strides = array<i32>} : memref<256x32xf32, #tpu.memory_space<vmem>>, vector<256x8xf32>,
    %125 = vector.extract_strided_slice %31 {offsets = [0, 24], sizes = [256, 8], strides = [1, 1]} : vector<256x96xf32> to vector<256x8xf32>
    %cst_42 = arith.constant 0.353553385 : f32
    %126 = vector.broadcast %cst_42 : f32 to vector<256x8xf32>
    %127 = arith.mulf %125, %126 : vector<256x8xf32>
    %128 = arith.truncf %127 : vector<256x8xf32> to vector<256x8xbf16>
    %129 = vector.shape_cast %128 : vector<256x8xbf16> to vector<4x64x8xbf16>
    %130 = vector.extract_strided_slice %31 {offsets = [0, 56], sizes = [256, 8], strides = [1, 1]} : vector<256x96xf32> to vector<256x8xf32>
    %131 = arith.truncf %130 : vector<256x8xf32> to vector<256x8xbf16>
    %132 = vector.shape_cast %131 : vector<256x8xbf16> to vector<4x64x8xbf16>
    %133 = vector.extract_strided_slice %31 {offsets = [0, 88], sizes = [256, 8], strides = [1, 1]} : vector<256x96xf32> to vector<256x8xf32>
    %134 = arith.truncf %133 : vector<256x8xf32> to vector<256x8xbf16>
    %135 = vector.shape_cast %134 : vector<256x8xbf16> to vector<4x64x8xbf16>
    "tpu.trace_start"() <{level = 10 : i32, message = "bnd,bmd->bnm"}> : () -> ()
    %cst_43 = arith.constant dense<0.000000e+00> : vector<4x64x64xf32>
    %136 = tpu.matmul %129, %132, %cst_43 {dimension_numbers = #tpu.dot_dimension_numbers<[2], [2], [1], [1], [0, 0, 0, 1, 1, 1], [0], [0]>} : vector<4x64x8xbf16>, vector<4x64x8xbf16>, vector<4x64x64xf32> -> vector<4x64x64xf32>
    "tpu.trace_stop"() : () -> ()
    %c3 = arith.constant 3 : index
    %c0_44 = arith.constant 0 : index
    %c0_45 = arith.constant 0 : index
    %137 = vector.load %arg7[%c3, %c0_44, %c0_45] : memref<4x64x64xf32, #tpu.memory_space<vmem>>, vector<1x64x64xf32>
    %138 = vector.shape_cast %137 : vector<1x64x64xf32> to vector<64x64xf32>
    %139 = vector.shape_cast %138 : vector<64x64xf32> to vector<1x64x64xf32>
    %140 = vector.broadcast %139 : vector<1x64x64xf32> to vector<4x64x64xf32>
    %141 = arith.addf %136, %140 : vector<4x64x64xf32>
    %cst_46 = arith.constant dense<0xFF800000> : vector<4x64xf32>
    %142 = vector.multi_reduction <maximumf>, %141, %cst_46 [2] : vector<4x64x64xf32> to vector<4x64xf32>
    %143 = vector.shape_cast %142 : vector<4x64xf32> to vector<4x64x1xf32>
    %144 = vector.broadcast %143 : vector<4x64x1xf32> to vector<4x64x64xf32>
    %145 = arith.subf %141, %144 : vector<4x64x64xf32>
    %146 = math.exp %145 : vector<4x64x64xf32>
    %cst_47 = arith.constant dense<0.000000e+00> : vector<4x64xf32>
    %147 = vector.multi_reduction <add>, %146, %cst_47 [2] : vector<4x64x64xf32> to vector<4x64xf32>
    %148 = vector.shape_cast %147 : vector<4x64xf32> to vector<4x64x1xf32>
    %149 = tpu.reciprocal %148 {approx = true} : vector<4x64x1xf32> -> vector<4x64x1xf32>
    %150 = vector.broadcast %149 : vector<4x64x1xf32> to vector<4x64x64xf32>
    %151 = arith.mulf %146, %150 : vector<4x64x64xf32>
    %152 = arith.truncf %151 : vector<4x64x64xf32> to vector<4x64x64xbf16>
    "tpu.trace_start"() <{level = 10 : i32, message = "bnm,bmd->bnd"}> : () -> ()
    %cst_48 = arith.constant dense<0.000000e+00> : vector<4x64x8xf32>
    %153 = tpu.matmul %152, %135, %cst_48 {dimension_numbers = #tpu.dot_dimension_numbers<[2], [1], [1], [2], [0, 0, 0, 1, 1, 2], [0], [0]>} : vector<4x64x64xbf16>, vector<4x64x8xbf16>, vector<4x64x8xf32> -> vector<4x64x8xf32>
    "tpu.trace_stop"() : () -> ()
    %154 = vector.shape_cast %153 : vector<4x64x8xf32> to vector<256x8xf32>
    %c0_49 = arith.constant 0 : index
    %c24 = arith.constant 24 : index
    %155 = vector.load %arg17[%c0_49, %c24] : memref<256x32xf32, #tpu.memory_space<vmem>>, vector<256x8xf32>
    tpu.vector_store %arg17[%c0_49, %c24], %154 {strides = array<i32>} : memref<256x32xf32, #tpu.memory_space<vmem>>, vector<256x8xf32>,
    %c0_50 = arith.constant 0 : index
    %c0_51 = arith.constant 0 : index
    %156 = vector.load %arg17[%c0_50, %c0_51] : memref<256x32xf32, #tpu.memory_space<vmem>>, vector<256x32xf32>
    %157 = arith.truncf %156 : vector<256x32xf32> to vector<256x32xbf16>
    %c0_52 = arith.constant 0 : index
    %c0_53 = arith.constant 0 : index
    %158 = vector.load %arg8[%c0_52, %c0_53] : memref<32x32xbf16, #tpu.memory_space<vmem>>, vector<32x32xbf16>
    %cst_54 = arith.constant dense<0.000000e+00> : vector<256x32xf32>
    %159 = tpu.matmul %157, %158, %cst_54 {dimension_numbers = #tpu.dot_dimension_numbers<[1], [0], [0], [1], [0, 0, 1, 1], [], []>} : vector<256x32xbf16>, vector<32x32xbf16>, vector<256x32xf32> -> vector<256x32xf32>
    %c0_55 = arith.constant 0 : index
    %c0_56 = arith.constant 0 : index
    %160 = vector.load %arg9[%c0_55, %c0_56] : memref<1x32xf32, #tpu.memory_space<vmem>>, vector<1x32xf32>
    %161 = vector.broadcast %160 : vector<1x32xf32> to vector<256x32xf32>
    %162 = arith.addf %159, %161 : vector<256x32xf32>
    %163 = arith.addf %1, %162 : vector<256x32xf32>
    %cst_57 = arith.constant dense<0.000000e+00> : vector<256xf32>
    %164 = vector.multi_reduction <add>, %163, %cst_57 [1] : vector<256x32xf32> to vector<256xf32>
    %165 = vector.shape_cast %164 : vector<256xf32> to vector<256x1xf32>
    %cst_58 = arith.constant 3.200000e+01 : f32
    %166 = vector.broadcast %cst_58 : f32 to vector<256x1xf32>
    %167 = arith.divf %165, %166 : vector<256x1xf32>
    %168 = vector.broadcast %167 : vector<256x1xf32> to vector<256x32xf32>
    %169 = arith.subf %163, %168 : vector<256x32xf32>
    %170 = arith.mulf %169, %169 : vector<256x32xf32>
    %cst_59 = arith.constant dense<0.000000e+00> : vector<256xf32>
    %171 = vector.multi_reduction <add>, %170, %cst_59 [1] : vector<256x32xf32> to vector<256xf32>
    %172 = vector.shape_cast %171 : vector<256xf32> to vector<256x1xf32>
    %cst_60 = arith.constant 3.200000e+01 : f32
    %173 = vector.broadcast %cst_60 : f32 to vector<256x1xf32>
    %174 = arith.divf %172, %173 : vector<256x1xf32>
    %175 = vector.broadcast %167 : vector<256x1xf32> to vector<256x32xf32>
    %176 = arith.subf %163, %175 : vector<256x32xf32>
    %cst_61 = arith.constant 9.99999974E-6 : f32
    %177 = vector.broadcast %cst_61 : f32 to vector<256x1xf32>
    %178 = arith.addf %174, %177 : vector<256x1xf32>
    %179 = math.rsqrt %178 : vector<256x1xf32>
    %180 = vector.broadcast %179 : vector<256x1xf32> to vector<256x32xf32>
    %181 = arith.mulf %176, %180 : vector<256x32xf32>
    %c0_62 = arith.constant 0 : index
    %c0_63 = arith.constant 0 : index
    %182 = vector.load %arg10[%c0_62, %c0_63] : memref<1x32xf32, #tpu.memory_space<vmem>>, vector<1x32xf32>
    %183 = vector.broadcast %182 : vector<1x32xf32> to vector<256x32xf32>
    %184 = arith.mulf %181, %183 : vector<256x32xf32>
    %c0_64 = arith.constant 0 : index
    %c0_65 = arith.constant 0 : index
    %185 = vector.load %arg11[%c0_64, %c0_65] : memref<1x32xf32, #tpu.memory_space<vmem>>, vector<1x32xf32>
    %186 = vector.broadcast %185 : vector<1x32xf32> to vector<256x32xf32>
    %187 = arith.addf %184, %186 : vector<256x32xf32>
    %188 = arith.truncf %187 : vector<256x32xf32> to vector<256x32xbf16>
    %c0_66 = arith.constant 0 : index
    %c0_67 = arith.constant 0 : index
    %189 = vector.load %arg12[%c0_66, %c0_67] : memref<32x128xbf16, #tpu.memory_space<vmem>>, vector<32x128xbf16>
    %cst_68 = arith.constant dense<0.000000e+00> : vector<256x128xf32>
    %190 = tpu.matmul %188, %189, %cst_68 {dimension_numbers = #tpu.dot_dimension_numbers<[1], [0], [0], [1], [0, 0, 1, 1], [], []>} : vector<256x32xbf16>, vector<32x128xbf16>, vector<256x128xf32> -> vector<256x128xf32>
    %c0_69 = arith.constant 0 : index
    %c0_70 = arith.constant 0 : index
    %191 = vector.load %arg13[%c0_69, %c0_70] : memref<1x128xf32, #tpu.memory_space<vmem>>, vector<1x128xf32>
    %192 = vector.broadcast %191 : vector<1x128xf32> to vector<256x128xf32>
    %193 = arith.addf %190, %192 : vector<256x128xf32>
    %194 = arith.mulf %193, %193 : vector<256x128xf32>
    %195 = arith.mulf %193, %194 : vector<256x128xf32>
    %cst_71 = arith.constant 4.471500e-02 : f32
    %196 = vector.broadcast %cst_71 : f32 to vector<256x128xf32>
    %197 = arith.mulf %196, %195 : vector<256x128xf32>
    %198 = arith.addf %193, %197 : vector<256x128xf32>
    %cst_72 = arith.constant 0.797884583 : f32
    %199 = vector.broadcast %cst_72 : f32 to vector<256x128xf32>
    %200 = arith.mulf %199, %198 : vector<256x128xf32>
    %201 = math.tanh %200 : vector<256x128xf32>
    %cst_73 = arith.constant 1.000000e+00 : f32
    %202 = vector.broadcast %cst_73 : f32 to vector<256x128xf32>
    %203 = arith.addf %202, %201 : vector<256x128xf32>
    %cst_74 = arith.constant 5.000000e-01 : f32
    %204 = vector.broadcast %cst_74 : f32 to vector<256x128xf32>
    %205 = arith.mulf %204, %203 : vector<256x128xf32>
    %206 = arith.mulf %193, %205 : vector<256x128xf32>
    %207 = arith.truncf %206 : vector<256x128xf32> to vector<256x128xbf16>
    %c0_75 = arith.constant 0 : index
    %c0_76 = arith.constant 0 : index
    %208 = vector.load %arg14[%c0_75, %c0_76] : memref<128x32xbf16, #tpu.memory_space<vmem>>, vector<128x32xbf16>
    %cst_77 = arith.constant dense<0.000000e+00> : vector<256x32xf32>
    %209 = tpu.matmul %207, %208, %cst_77 {dimension_numbers = #tpu.dot_dimension_numbers<[1], [0], [0], [1], [0, 0, 1, 1], [], []>} : vector<256x128xbf16>, vector<128x32xbf16>, vector<256x32xf32> -> vector<256x32xf32>
    %c0_78 = arith.constant 0 : index
    %c0_79 = arith.constant 0 : index
    %210 = vector.load %arg15[%c0_78, %c0_79] : memref<1x32xf32, #tpu.memory_space<vmem>>, vector<1x32xf32>
    %211 = vector.broadcast %210 : vector<1x32xf32> to vector<256x32xf32>
    %212 = arith.addf %209, %211 : vector<256x32xf32>
    %213 = arith.addf %163, %212 : vector<256x32xf32>
    %214 = vector.shape_cast %213 : vector<256x32xf32> to vector<32x1x8x32xf32>
    %c0_80 = arith.constant 0 : index
    %c0_81 = arith.constant 0 : index
    %c0_82 = arith.constant 0 : index
    %c0_83 = arith.constant 0 : index
    %215 = vector.load %arg16[%c0_80, %c0_81, %c0_82, %c0_83] : memref<32x1x8x32xf32, #tpu.memory_space<vmem>>, vector<32x1x8x32xf32>
    tpu.vector_store %arg16[%c0_80, %c0_81, %c0_82, %c0_83], %214 {strides = array<i32>} : memref<32x1x8x32xf32, #tpu.memory_space<vmem>>, vector<32x1x8x32xf32>,
    return
  }
  func.func @transform_0(%arg0: i32, %arg1: i32) -> (i32, i32, i32, i32) {
    %c0_i32 = arith.constant 0 : i32
    %c0_i32_0 = arith.constant 0 : i32
    %c0_i32_1 = arith.constant 0 : i32
    return %arg0, %arg1, %c0_i32, %c0_i32_0 : i32, i32, i32, i32
  }
  func.func @transform_1(%arg0: i32, %arg1: i32) -> (i32, i32) {
    %c0_i32 = arith.constant 0 : i32
    %c0_i32_0 = arith.constant 0 : i32
    %c0_i32_1 = arith.constant 0 : i32
    return %c0_i32, %c0_i32_0 : i32, i32
  }
  func.func @transform_2(%arg0: i32, %arg1: i32) -> (i32, i32) {
    %c0_i32 = arith.constant 0 : i32
    %c0_i32_0 = arith.constant 0 : i32
    %c0_i32_1 = arith.constant 0 : i32
    return %c0_i32, %c0_i32_0 : i32, i32
  }
  func.func @transform_3(%arg0: i32, %arg1: i32) -> (i32, i32) {
    %c0_i32 = arith.constant 0 : i32
    %c0_i32_0 = arith.constant 0 : i32
    %c0_i32_1 = arith.constant 0 : i32
    return %c0_i32, %c0_i32_0 : i32, i32
  }
  func.func @transform_4(%arg0: i32, %arg1: i32) -> (i32, i32) {
    %c0_i32 = arith.constant 0 : i32
    %c0_i32_0 = arith.constant 0 : i32
    %c0_i32_1 = arith.constant 0 : i32
    return %c0_i32, %c0_i32_0 : i32, i32
  }
  func.func @transform_5(%arg0: i32, %arg1: i32) -> (i32, i32, i32) {
    %c0_i32 = arith.constant 0 : i32
    %c0_i32_0 = arith.constant 0 : i32
    %c0_i32_1 = arith.constant 0 : i32
    %c0_i32_2 = arith.constant 0 : i32
    return %c0_i32, %c0_i32_0, %c0_i32_1 : i32, i32, i32
  }
  func.func @transform_6(%arg0: i32, %arg1: i32) -> (i32, i32) {
    %c0_i32 = arith.constant 0 : i32
    %c0_i32_0 = arith.constant 0 : i32
    %c0_i32_1 = arith.constant 0 : i32
    return %c0_i32, %c0_i32_0 : i32, i32
  }
  func.func @transform_7(%arg0: i32, %arg1: i32) -> (i32, i32) {
    %c0_i32 = arith.constant 0 : i32
    %c0_i32_0 = arith.constant 0 : i32
    %c0_i32_1 = arith.constant 0 : i32
    return %c0_i32, %c0_i32_0 : i32, i32
  }
  func.func @transform_8(%arg0: i32, %arg1: i32) -> (i32, i32) {
    %c0_i32 = arith.constant 0 : i32
    %c0_i32_0 = arith.constant 0 : i32
    %c0_i32_1 = arith.constant 0 : i32
    return %c0_i32, %c0_i32_0 : i32, i32
  }
  func.func @transform_9(%arg0: i32, %arg1: i32) -> (i32, i32) {
    %c0_i32 = arith.constant 0 : i32
    %c0_i32_0 = arith.constant 0 : i32
    %c0_i32_1 = arith.constant 0 : i32
    return %c0_i32, %c0_i32_0 : i32, i32
  }
  func.func @transform_10(%arg0: i32, %arg1: i32) -> (i32, i32) {
    %c0_i32 = arith.constant 0 : i32
    %c0_i32_0 = arith.constant 0 : i32
    %c0_i32_1 = arith.constant 0 : i32
    return %c0_i32, %c0_i32_0 : i32, i32
  }
  func.func @transform_11(%arg0: i32, %arg1: i32) -> (i32, i32) {
    %c0_i32 = arith.constant 0 : i32
    %c0_i32_0 = arith.constant 0 : i32
    %c0_i32_1 = arith.constant 0 : i32
    return %c0_i32, %c0_i32_0 : i32, i32
  }
  func.func @transform_12(%arg0: i32, %arg1: i32) -> (i32, i32) {
    %c0_i32 = arith.constant 0 : i32
    %c0_i32_0 = arith.constant 0 : i32
    %c0_i32_1 = arith.constant 0 : i32
    return %c0_i32, %c0_i32_0 : i32, i32
  }
  func.func @transform_13(%arg0: i32, %arg1: i32) -> (i32, i32) {
    %c0_i32 = arith.constant 0 : i32
    %c0_i32_0 = arith.constant 0 : i32
    %c0_i32_1 = arith.constant 0 : i32
    return %c0_i32, %c0_i32_0 : i32, i32
  }
  func.func @transform_14(%arg0: i32, %arg1: i32) -> (i32, i32, i32, i32) {
    %c0_i32 = arith.constant 0 : i32
    %c0_i32_0 = arith.constant 0 : i32
    %c0_i32_1 = arith.constant 0 : i32
    return %arg0, %arg1, %c0_i32, %c0_i32_0 : i32, i32, i32, i32
  }
}

</mosaic_0001>

<llo_original>
// kernel: tpu_custom_call.1
$region0: #{tpu_custom_call.1}
  #allocation0 [shape = 'u32[]', space=smem, size = 0x4, offset = 0x4, fixed_abs, tag = 'smem constant byte address 0x4 - core index']
  #allocation1 [shape = 'u32[144,128]{1,0:T(1,128)}', space=vmem, size = 0x12000, scoped, tag = 'internal scratch']
  #allocation2 [shape = 'f32[256,32]{1,0:T(8,128)}', space=vmem, size = 0x20000, scoped, tag = 'scratch operand']
  %s0 = inlined_call_operand.hbm [shape: f32[32,2,8,32], index: 0, kind: input, shape index: {}]
  %s1 = inlined_call_operand.vmem [shape: f32[1,32], index: 1, kind: input, shape index: {}]
  %s2 = inlined_call_operand.vmem [shape: f32[1,32], index: 2, kind: input, shape index: {}]
  %s3 = inlined_call_operand.vmem [shape: bf16[32,96], index: 3, kind: input, shape index: {}]
  %s4 = inlined_call_operand.vmem [shape: f32[1,96], index: 4, kind: input, shape index: {}]
  %s5 = inlined_call_operand.hbm [shape: f32[4,64,64], index: 5, kind: input, shape index: {}]
  %s6 = inlined_call_operand.vmem [shape: bf16[32,32], index: 6, kind: input, shape index: {}]
  %s7 = inlined_call_operand.vmem [shape: f32[1,32], index: 7, kind: input, shape index: {}]
  %s8 = inlined_call_operand.vmem [shape: f32[1,32], index: 8, kind: input, shape index: {}]
  %s9 = inlined_call_operand.vmem [shape: f32[1,32], index: 9, kind: input, shape index: {}]
  %s10 = inlined_call_operand.vmem [shape: bf16[32,128], index: 10, kind: input, shape index: {}]
  %s11 = inlined_call_operand.vmem [shape: f32[1,128], index: 11, kind: input, shape index: {}]
  %s12 = inlined_call_operand.vmem [shape: bf16[128,32], index: 12, kind: input, shape index: {}]
  %s13 = inlined_call_operand.vmem [shape: f32[1,32], index: 13, kind: input, shape index: {}]
  %s14 = inlined_call_operand.hbm [shape: f32[32,2,8,32], index: 14, kind: output, shape index: {}]
  %s15 = sld [smem:[#allocation0]]
  $region97: #{tpu_custom_call.1} parent=0
    _
  %s17 = ssub.s32 1, %s15
  %s18 = scalar_select 0, %s17, %s15
  $region1: #{tpu_custom_call.1} parent=0
    #allocation3 [shape = 'u8[262144]{0}', space=vmem, size = 0x40000, scoped, tag = 'input window, operand 0']
    #allocation4 [shape = 's32[2]{0}', space=sflag, size = 0x8, scoped, tag = 'scoped memory for tpu_custom_call.1']
    #allocation5 [shape = 's32[2]{0}', space=sflag, size = 0x8, scoped, tag = 'scoped memory for tpu_custom_call.1']
    #allocation6 [shape = 'u8[131072]{0}', space=vmem, size = 0x20000, scoped, tag = 'input window, operand 5, single buffered']
    #allocation7 [shape = 's32[1]{0}', space=sflag, size = 0x4, scoped, tag = 'scoped memory for tpu_custom_call.1']
    #allocation8 [shape = 'u8[262144]{0}', space=vmem, size = 0x40000, scoped, tag = 'output window, operand 0']
    %19 = vsyncpa [#allocation4], 0
    %s20 = scalar_lea.sflag [#allocation4], 1
    %21 = vsyncpa %s20, 0
    %22 = vsyncpa [#allocation7], 0
    %23 = vsyncpa [#allocation5], 0
    %s24 = scalar_lea.sflag [#allocation5], 1
    %25 = vsyncpa %s24, 0
    loop: start=0, step=1, limit=4
    $region2: #{tpu_custom_call.1} parent=1 // loop_pre_header
      _
    $region3: #{tpu_custom_call.1} parent=1 // loop_header
      %s27 = sphi 0, %s31
      %p28 = scmp.ge.s32.totalorder %s27, 4
      %s34 = sphi 0, %s46
      %s35 = sphi 0, %s42
      %s36 = sphi 0, %s34
      %s37 = sphi 0, %s35
      %s38 = sphi 0, %s36
      %s39 = sphi 0, %s37
      %s51 = sphi 0, %s53
      %s54 = sphi 0, %s51
      %s55 = sphi 0, %s54
      %s71 = sphi 0, %s55
      %s75 = sphi 0, %s75
      %s77 = sphi 0, %s75
      %s78 = sphi 0, %s77
      %s92 = sphi 0, %s78
      %s96 = sphi 0, %s96
      %s98 = sphi 0, %s96
      %s99 = sphi 0, %s98
      %s113 = sphi 0, %s99
      %s117 = sphi 0, %s117
      %s119 = sphi 0, %s117
      %s120 = sphi 0, %s119
      %s134 = sphi 0, %s120
      %s138 = sphi 0, %s138
      %s140 = sphi 0, %s138
      %s141 = sphi 0, %s140
      %s155 = sphi 0, %s141
      %s159 = sphi 0, %s159
      %s161 = sphi 0, %s159
      %s162 = sphi 0, %s161
      %s176 = sphi 0, %s162
      %s180 = sphi 0, %s180
      %s182 = sphi 0, %s180
      %s183 = sphi 0, %s182
      %s197 = sphi 0, %s183
      %s201 = sphi 0, %s201
      %s203 = sphi 0, %s201
      %s204 = sphi 0, %s203
      %s218 = sphi 0, %s204
      %s222 = sphi 0, %s222
      %s224 = sphi 0, %s222
      %s225 = sphi 0, %s224
      %s239 = sphi 0, %s225
      %s243 = sphi 0, %s243
      %s245 = sphi 0, %s243
      %s246 = sphi 0, %s245
      %s260 = sphi 0, %s246
      %s264 = sphi 0, %s264
      %s266 = sphi 0, %s264
      %s267 = sphi 0, %s266
      %s281 = sphi 0, %s267
      %s285 = sphi 0, %s285
      %s287 = sphi 0, %s285
      %s288 = sphi 0, %s287
      %s302 = sphi 0, %s288
      %s306 = sphi 0, %s306
      %s308 = sphi 0, %s306
      %s309 = sphi 0, %s308
      %s323 = sphi 0, %s309
      %s327 = sphi 0, %s327
      %s329 = sphi 0, %s327
      %s330 = sphi 0, %s329
      %s344 = sphi 0, %s330
      %s352 = sphi 0, %s354
      %s355 = sphi 0, %s352
      %s356 = sphi 0, %s355
      %s372 = sphi 0, %s356
    $region4: #{tpu_custom_call.1} parent=1 // loop_header_branch
      %30 = sbr.rel (%p28) target = $region8
    $region5: #{tpu_custom_call.1} parent=1 // loop_body
      %s32 = ssub.s32 %s27, 1
      %s33 = ssub.s32 %s27, 2
      %s40 = sadd.s32 1, %s35
      %p41 = scmp.ge.s32.totalorder %s40, 2
      %s42 = scalar_select %p41, 0, %s40
      %s43 = sadd.s32 1, %s34
      %s44 = scalar_select %p41, %s43, %s34
      %p45 = scmp.ge.s32.totalorder %s44, 1
      %s46 = scalar_select %p45, 0, %s44
      %s47 = ssub.s32 %s34, %s46
      %s48 = ssub.s32 %s35, %s42
      %s49 = sor.u32 %s47, %s48
      %p50 = scmp.eq.s32.totalorder %s49, 0
      %s52 = sadd.s32 %s51, 1
      %s53 = scalar_select %p50, %s51, %s52
      %p56 = pneg %p50
      %p57 = scmp.eq.s32.totalorder %s27, 1
      %p58 = por %p56, %p57
      %p59 = scmp.ne.s32.totalorder %s51, %s54
      %p60 = scmp.eq.s32.totalorder %s27, 0
      %p61 = por %p59, %p60
      %p62 = scmp.ne.s32.totalorder %s51, %s54
      %p63 = scmp.eq.s32.totalorder %s32, 1
      %p64 = por %p62, %p63
      %p65 = scmp.ne.s32.totalorder %s54, %s55
      %p66 = scmp.eq.s32.totalorder %s32, 0
      %p67 = por %p65, %p66
      %p68 = scmp.ne.s32.totalorder %s54, %s55
      %p69 = scmp.eq.s32.totalorder %s33, 1
      %p70 = por %p68, %p69
      %p72 = scmp.ne.s32.totalorder %s55, %s71
      %p73 = scmp.eq.s32.totalorder %s33, 0
      %p74 = por %p72, %p73
      %s76 = sadd.s32 %s75, 1
      %p79 = scmp.eq.s32.totalorder %s27, 1
      %p80 = scmp.ne.s32.totalorder %s75, %s77
      %p81 = scmp.eq.s32.totalorder %s27, 0
      %p82 = por %p80, %p81
      %p83 = scmp.ne.s32.totalorder %s75, %s77
      %p84 = scmp.eq.s32.totalorder %s32, 1
      %p85 = por %p83, %p84
      %p86 = scmp.ne.s32.totalorder %s77, %s78
      %p87 = scmp.eq.s32.totalorder %s32, 0
      %p88 = por %p86, %p87
      %p89 = scmp.ne.s32.totalorder %s77, %s78
      %p90 = scmp.eq.s32.totalorder %s33, 1
      %p91 = por %p89, %p90
      %p93 = scmp.ne.s32.totalorder %s78, %s92
      %p94 = scmp.eq.s32.totalorder %s33, 0
      %p95 = por %p93, %p94
      %s97 = sadd.s32 %s96, 1
      %p100 = scmp.eq.s32.totalorder %s27, 1
      %p101 = scmp.ne.s32.totalorder %s96, %s98
      %p102 = scmp.eq.s32.totalorder %s27, 0
      %p103 = por %p101, %p102
      %p104 = scmp.ne.s32.totalorder %s96, %s98
      %p105 = scmp.eq.s32.totalorder %s32, 1
      %p106 = por %p104, %p105
      %p107 = scmp.ne.s32.totalorder %s98, %s99
      %p108 = scmp.eq.s32.totalorder %s32, 0
      %p109 = por %p107, %p108
      %p110 = scmp.ne.s32.totalorder %s98, %s99
      %p111 = scmp.eq.s32.totalorder %s33, 1
      %p112 = por %p110, %p111
      %p114 = scmp.ne.s32.totalorder %s99, %s113
      %p115 = scmp.eq.s32.totalorder %s33, 0
      %p116 = por %p114, %p115
      %s118 = sadd.s32 %s117, 1
      %p121 = scmp.eq.s32.totalorder %s27, 1
      %p122 = scmp.ne.s32.totalorder %s117, %s119
      %p123 = scmp.eq.s32.totalorder %s27, 0
      %p124 = por %p122, %p123
      %p125 = scmp.ne.s32.totalorder %s117, %s119
      %p126 = scmp.eq.s32.totalorder %s32, 1
      %p127 = por %p125, %p126
      %p128 = scmp.ne.s32.totalorder %s119, %s120
      %p129 = scmp.eq.s32.totalorder %s32, 0
      %p130 = por %p128, %p129
      %p131 = scmp.ne.s32.totalorder %s119, %s120
      %p132 = scmp.eq.s32.totalorder %s33, 1
      %p133 = por %p131, %p132
      %p135 = scmp.ne.s32.totalorder %s120, %s134
      %p136 = scmp.eq.s32.totalorder %s33, 0
      %p137 = por %p135, %p136
      %s139 = sadd.s32 %s138, 1
      %p142 = scmp.eq.s32.totalorder %s27, 1
      %p143 = scmp.ne.s32.totalorder %s138, %s140
      %p144 = scmp.eq.s32.totalorder %s27, 0
      %p145 = por %p143, %p144
      %p146 = scmp.ne.s32.totalorder %s138, %s140
      %p147 = scmp.eq.s32.totalorder %s32, 1
      %p148 = por %p146, %p147
      %p149 = scmp.ne.s32.totalorder %s140, %s141
      %p150 = scmp.eq.s32.totalorder %s32, 0
      %p151 = por %p149, %p150
      %p152 = scmp.ne.s32.totalorder %s140, %s141
      %p153 = scmp.eq.s32.totalorder %s33, 1
      %p154 = por %p152, %p153
      %p156 = scmp.ne.s32.totalorder %s141, %s155
      %p157 = scmp.eq.s32.totalorder %s33, 0
      %p158 = por %p156, %p157
      %s160 = sadd.s32 %s159, 1
      %p163 = scmp.eq.s32.totalorder %s27, 1
      %p164 = scmp.ne.s32.totalorder %s159, %s161
      %p165 = scmp.eq.s32.totalorder %s27, 0
      %p166 = por %p164, %p165
      %p167 = scmp.ne.s32.totalorder %s159, %s161
      %p168 = scmp.eq.s32.totalorder %s32, 1
      %p169 = por %p167, %p168
      %p170 = scmp.ne.s32.totalorder %s161, %s162
      %p171 = scmp.eq.s32.totalorder %s32, 0
      %p172 = por %p170, %p171
      %p173 = scmp.ne.s32.totalorder %s161, %s162
      %p174 = scmp.eq.s32.totalorder %s33, 1
      %p175 = por %p173, %p174
      %p177 = scmp.ne.s32.totalorder %s162, %s176
      %p178 = scmp.eq.s32.totalorder %s33, 0
      %p179 = por %p177, %p178
      %s181 = sadd.s32 %s180, 1
      %p184 = scmp.eq.s32.totalorder %s27, 1
      %p185 = scmp.ne.s32.totalorder %s180, %s182
      %p186 = scmp.eq.s32.totalorder %s27, 0
      %p187 = por %p185, %p186
      %p188 = scmp.ne.s32.totalorder %s180, %s182
      %p189 = scmp.eq.s32.totalorder %s32, 1
      %p190 = por %p188, %p189
      %p191 = scmp.ne.s32.totalorder %s182, %s183
      %p192 = scmp.eq.s32.totalorder %s32, 0
      %p193 = por %p191, %p192
      %p194 = scmp.ne.s32.totalorder %s182, %s183
      %p195 = scmp.eq.s32.totalorder %s33, 1
      %p196 = por %p194, %p195
      %p198 = scmp.ne.s32.totalorder %s183, %s197
      %p199 = scmp.eq.s32.totalorder %s33, 0
      %p200 = por %p198, %p199
      %s202 = sadd.s32 %s201, 1
      %p205 = scmp.eq.s32.totalorder %s27, 1
      %p206 = scmp.ne.s32.totalorder %s201, %s203
      %p207 = scmp.eq.s32.totalorder %s27, 0
      %p208 = por %p206, %p207
      %p209 = scmp.ne.s32.totalorder %s201, %s203
      %p210 = scmp.eq.s32.totalorder %s32, 1
      %p211 = por %p209, %p210
      %p212 = scmp.ne.s32.totalorder %s203, %s204
      %p213 = scmp.eq.s32.totalorder %s32, 0
      %p214 = por %p212, %p213
      %p215 = scmp.ne.s32.totalorder %s203, %s204
      %p216 = scmp.eq.s32.totalorder %s33, 1
      %p217 = por %p215, %p216
      %p219 = scmp.ne.s32.totalorder %s204, %s218
      %p220 = scmp.eq.s32.totalorder %s33, 0
      %p221 = por %p219, %p220
      %s223 = sadd.s32 %s222, 1
      %p226 = scmp.eq.s32.totalorder %s27, 1
      %p227 = scmp.ne.s32.totalorder %s222, %s224
      %p228 = scmp.eq.s32.totalorder %s27, 0
      %p229 = por %p227, %p228
      %p230 = scmp.ne.s32.totalorder %s222, %s224
      %p231 = scmp.eq.s32.totalorder %s32, 1
      %p232 = por %p230, %p231
      %p233 = scmp.ne.s32.totalorder %s224, %s225
      %p234 = scmp.eq.s32.totalorder %s32, 0
      %p235 = por %p233, %p234
      %p236 = scmp.ne.s32.totalorder %s224, %s225
      %p237 = scmp.eq.s32.totalorder %s33, 1
      %p238 = por %p236, %p237
      %p240 = scmp.ne.s32.totalorder %s225, %s239
      %p241 = scmp.eq.s32.totalorder %s33, 0
      %p242 = por %p240, %p241
      %s244 = sadd.s32 %s243, 1
      %p247 = scmp.eq.s32.totalorder %s27, 1
      %p248 = scmp.ne.s32.totalorder %s243, %s245
      %p249 = scmp.eq.s32.totalorder %s27, 0
      %p250 = por %p248, %p249
      %p251 = scmp.ne.s32.totalorder %s243, %s245
      %p252 = scmp.eq.s32.totalorder %s32, 1
      %p253 = por %p251, %p252
      %p254 = scmp.ne.s32.totalorder %s245, %s246
      %p255 = scmp.eq.s32.totalorder %s32, 0
      %p256 = por %p254, %p255
      %p257 = scmp.ne.s32.totalorder %s245, %s246
      %p258 = scmp.eq.s32.totalorder %s33, 1
      %p259 = por %p257, %p258
      %p261 = scmp.ne.s32.totalorder %s246, %s260
      %p262 = scmp.eq.s32.totalorder %s33, 0
      %p263 = por %p261, %p262
      %s265 = sadd.s32 %s264, 1
      %p268 = scmp.eq.s32.totalorder %s27, 1
      %p269 = scmp.ne.s32.totalorder %s264, %s266
      %p270 = scmp.eq.s32.totalorder %s27, 0
      %p271 = por %p269, %p270
      %p272 = scmp.ne.s32.totalorder %s264, %s266
      %p273 = scmp.eq.s32.totalorder %s32, 1
      %p274 = por %p272, %p273
      %p275 = scmp.ne.s32.totalorder %s266, %s267
      %p276 = scmp.eq.s32.totalorder %s32, 0
      %p277 = por %p275, %p276
      %p278 = scmp.ne.s32.totalorder %s266, %s267
      %p279 = scmp.eq.s32.totalorder %s33, 1
      %p280 = por %p278, %p279
      %p282 = scmp.ne.s32.totalorder %s267, %s281
      %p283 = scmp.eq.s32.totalorder %s33, 0
      %p284 = por %p282, %p283
      %s286 = sadd.s32 %s285, 1
      %p289 = scmp.eq.s32.totalorder %s27, 1
      %p290 = scmp.ne.s32.totalorder %s285, %s287
      %p291 = scmp.eq.s32.totalorder %s27, 0
      %p292 = por %p290, %p291
      %p293 = scmp.ne.s32.totalorder %s285, %s287
      %p294 = scmp.eq.s32.totalorder %s32, 1
      %p295 = por %p293, %p294
      %p296 = scmp.ne.s32.totalorder %s287, %s288
      %p297 = scmp.eq.s32.totalorder %s32, 0
      %p298 = por %p296, %p297
      %p299 = scmp.ne.s32.totalorder %s287, %s288
      %p300 = scmp.eq.s32.totalorder %s33, 1
      %p301 = por %p299, %p300
      %p303 = scmp.ne.s32.totalorder %s288, %s302
      %p304 = scmp.eq.s32.totalorder %s33, 0
      %p305 = por %p303, %p304
      %s307 = sadd.s32 %s306, 1
      %p310 = scmp.eq.s32.totalorder %s27, 1
      %p311 = scmp.ne.s32.totalorder %s306, %s308
      %p312 = scmp.eq.s32.totalorder %s27, 0
      %p313 = por %p311, %p312
      %p314 = scmp.ne.s32.totalorder %s306, %s308
      %p315 = scmp.eq.s32.totalorder %s32, 1
      %p316 = por %p314, %p315
      %p317 = scmp.ne.s32.totalorder %s308, %s309
      %p318 = scmp.eq.s32.totalorder %s32, 0
      %p319 = por %p317, %p318
      %p320 = scmp.ne.s32.totalorder %s308, %s309
      %p321 = scmp.eq.s32.totalorder %s33, 1
      %p322 = por %p320, %p321
      %p324 = scmp.ne.s32.totalorder %s309, %s323
      %p325 = scmp.eq.s32.totalorder %s33, 0
      %p326 = por %p324, %p325
      %s328 = sadd.s32 %s327, 1
      %p331 = scmp.eq.s32.totalorder %s27, 1
      %p332 = scmp.ne.s32.totalorder %s327, %s329
      %p333 = scmp.eq.s32.totalorder %s27, 0
      %p334 = por %p332, %p333
      %p335 = scmp.ne.s32.totalorder %s327, %s329
      %p336 = scmp.eq.s32.totalorder %s32, 1
      %p337 = por %p335, %p336
      %p338 = scmp.ne.s32.totalorder %s329, %s330
      %p339 = scmp.eq.s32.totalorder %s32, 0
      %p340 = por %p338, %p339
      %p341 = scmp.ne.s32.totalorder %s329, %s330
      %p342 = scmp.eq.s32.totalorder %s33, 1
      %p343 = por %p341, %p342
      %p345 = scmp.ne.s32.totalorder %s330, %s344
      %p346 = scmp.eq.s32.totalorder %s33, 0
      %p347 = por %p345, %p346
      %s348 = ssub.s32 %s34, %s46
      %s349 = ssub.s32 %s35, %s42
      %s350 = sor.u32 %s348, %s349
      %p351 = scmp.eq.s32.totalorder %s350, 0
      %s353 = sadd.s32 %s352, 1
      %s354 = scalar_select %p351, %s352, %s353
      %p357 = pneg %p351
      %p358 = scmp.eq.s32.totalorder %s27, 1
      %p359 = por %p357, %p358
      %p360 = scmp.ne.s32.totalorder %s352, %s355
      %p361 = scmp.eq.s32.totalorder %s27, 0
      %p362 = por %p360, %p361
      %p363 = scmp.ne.s32.totalorder %s352, %s355
      %p364 = scmp.eq.s32.totalorder %s32, 1
      %p365 = por %p363, %p364
      %p366 = scmp.ne.s32.totalorder %s355, %s356
      %p367 = scmp.eq.s32.totalorder %s32, 0
      %p368 = por %p366, %p367
      %p369 = scmp.ne.s32.totalorder %s355, %s356
      %p370 = scmp.eq.s32.totalorder %s33, 1
      %p371 = por %p369, %p370
      %p373 = scmp.ne.s32.totalorder %s356, %s372
      %p374 = scmp.eq.s32.totalorder %s33, 0
      %p375 = por %p373, %p374
      %p376 = scmp.le.s32.totalorder 1, %s27
      %p377 = scmp.lt.s32.totalorder %s27, 3
      %p378 = pnand %p376, %p377
      %p379 = pneg %p378
      // Predicated region
      $region9: #{tpu_custom_call.1} parent=5 // pred_check
        _
      $region10: #{tpu_custom_call.1} parent=5 // pred_check_branch
        %381 = sbr.rel (%p378) target = $region12
      $region11: #{tpu_custom_call.1} parent=5 // pred_region
        %s382 = ssub.s32 %s27, 1
        // Predicated region
        $region13: #{tpu_custom_call.1} parent=11 // pred_check
          %p383 = pneg %p88
        $region14: #{tpu_custom_call.1} parent=11 // pred_check_branch
          %385 = sbr.rel (%p383) target = $region16
        $region15: #{tpu_custom_call.1} parent=11 // pred_region
          _
        $region16: #{tpu_custom_call.1} parent=11 // pred_fallthru
          _
        // Predicated region
        $region17: #{tpu_custom_call.1} parent=11 // pred_check
          %p386 = pneg %p109
        $region18: #{tpu_custom_call.1} parent=11 // pred_check_branch
          %388 = sbr.rel (%p386) target = $region20
        $region19: #{tpu_custom_call.1} parent=11 // pred_region
          _
        $region20: #{tpu_custom_call.1} parent=11 // pred_fallthru
          _
        // Predicated region
        $region21: #{tpu_custom_call.1} parent=11 // pred_check
          %p389 = pneg %p130
        $region22: #{tpu_custom_call.1} parent=11 // pred_check_branch
          %391 = sbr.rel (%p389) target = $region24
        $region23: #{tpu_custom_call.1} parent=11 // pred_region
          _
        $region24: #{tpu_custom_call.1} parent=11 // pred_fallthru
          _
        // Predicated region
        $region25: #{tpu_custom_call.1} parent=11 // pred_check
          %p392 = pneg %p151
        $region26: #{tpu_custom_call.1} parent=11 // pred_check_branch
          %394 = sbr.rel (%p392) target = $region28
        $region27: #{tpu_custom_call.1} parent=11 // pred_region
          _
        $region28: #{tpu_custom_call.1} parent=11 // pred_fallthru
          _
        // Predicated region
        $region29: #{tpu_custom_call.1} parent=11 // pred_check
          %p395 = pneg %p172
        $region30: #{tpu_custom_call.1} parent=11 // pred_check_branch
          %397 = sbr.rel (%p395) target = $region32
        $region31: #{tpu_custom_call.1} parent=11 // pred_region
          %s399 = ssub.s32 4096, 4096
          %400 = vsyncadd [#allocation7], %s399
          %s401 = sshll.u32 [#allocation6], 4
          %s402 = int_to_ptr.vmem [resolvable:$true] %s401
          %407 = dma.hbm_to_vmem [thread:$0]  %s5, 4096, %s402, [#allocation7], 128, 128, 8
        $region32: #{tpu_custom_call.1} parent=11 // pred_fallthru
          _
        // Predicated region
        $region33: #{tpu_custom_call.1} parent=11 // pred_check
          %p408 = pneg %p193
        $region34: #{tpu_custom_call.1} parent=11 // pred_check_branch
          %410 = sbr.rel (%p408) target = $region36
        $region35: #{tpu_custom_call.1} parent=11 // pred_region
          _
        $region36: #{tpu_custom_call.1} parent=11 // pred_fallthru
          _
        // Predicated region
        $region37: #{tpu_custom_call.1} parent=11 // pred_check
          %p411 = pneg %p214
        $region38: #{tpu_custom_call.1} parent=11 // pred_check_branch
          %413 = sbr.rel (%p411) target = $region40
        $region39: #{tpu_custom_call.1} parent=11 // pred_region
          _
        $region40: #{tpu_custom_call.1} parent=11 // pred_fallthru
          _
        // Predicated region
        $region41: #{tpu_custom_call.1} parent=11 // pred_check
          %p414 = pneg %p235
        $region42: #{tpu_custom_call.1} parent=11 // pred_check_branch
          %416 = sbr.rel (%p414) target = $region44
        $region43: #{tpu_custom_call.1} parent=11 // pred_region
          _
        $region44: #{tpu_custom_call.1} parent=11 // pred_fallthru
          _
        // Predicated region
        $region45: #{tpu_custom_call.1} parent=11 // pred_check
          %p417 = pneg %p256
        $region46: #{tpu_custom_call.1} parent=11 // pred_check_branch
          %419 = sbr.rel (%p417) target = $region48
        $region47: #{tpu_custom_call.1} parent=11 // pred_region
          _
        $region48: #{tpu_custom_call.1} parent=11 // pred_fallthru
          _
        // Predicated region
        $region49: #{tpu_custom_call.1} parent=11 // pred_check
          %p420 = pneg %p277
        $region50: #{tpu_custom_call.1} parent=11 // pred_check_branch
          %422 = sbr.rel (%p420) target = $region52
        $region51: #{tpu_custom_call.1} parent=11 // pred_region
          _
        $region52: #{tpu_custom_call.1} parent=11 // pred_fallthru
          _
        // Predicated region
        $region53: #{tpu_custom_call.1} parent=11 // pred_check
          %p423 = pneg %p298
        $region54: #{tpu_custom_call.1} parent=11 // pred_check_branch
          %425 = sbr.rel (%p423) target = $region56
        $region55: #{tpu_custom_call.1} parent=11 // pred_region
          _
        $region56: #{tpu_custom_call.1} parent=11 // pred_fallthru
          _
        // Predicated region
        $region57: #{tpu_custom_call.1} parent=11 // pred_check
          %p426 = pneg %p319
        $region58: #{tpu_custom_call.1} parent=11 // pred_check_branch
          %428 = sbr.rel (%p426) target = $region60
        $region59: #{tpu_custom_call.1} parent=11 // pred_region
          _
        $region60: #{tpu_custom_call.1} parent=11 // pred_fallthru
          _
        // Predicated region
        $region61: #{tpu_custom_call.1} parent=11 // pred_check
          %p429 = pneg %p340
        $region62: #{tpu_custom_call.1} parent=11 // pred_check_branch
          %431 = sbr.rel (%p429) target = $region64
        $region63: #{tpu_custom_call.1} parent=11 // pred_region
          _
        $region64: #{tpu_custom_call.1} parent=11 // pred_fallthru
          _
      $region12: #{tpu_custom_call.1} parent=5 // pred_fallthru
        _
      %p432 = scmp.lt.s32.totalorder %s27, 2
      // Predicated region
      $region65: #{tpu_custom_call.1} parent=5 // pred_check
        %p433 = pneg %p432
      $region66: #{tpu_custom_call.1} parent=5 // pred_check_branch
        %435 = sbr.rel (%p433) target = $region68
      $region67: #{tpu_custom_call.1} parent=5 // pred_region
        // Predicated region
        $region69: #{tpu_custom_call.1} parent=67 // pred_check
          %p436 = pneg %p61
        $region70: #{tpu_custom_call.1} parent=67 // pred_check_branch
          %438 = sbr.rel (%p436) target = $region72
        $region71: #{tpu_custom_call.1} parent=67 // pred_region
          %s439 = sand.u32 %s51, 1
          %s440 = scalar_lea.sflag [#allocation4], %s439
          %s441 = sand.u32 %s51, 1
          %s442 = smul.addr %s441, 256
          %s443 = scalar_lea.vmem [#allocation3], %s442
          %s444 = smul.u32 32, %s34
          %s446 = ssub.s32 4096, 4096
          %447 = vsyncadd %s440, %s446
          %s448 = smul.addr %s444, 2
          %s449 = sadd.s32 %s35, %s448
          %s450 = smul.addr %s449, 128
          %s451 = scalar_lea.hbm %s0, %s450
          %s452 = sshll.u32 %s443, 4
          %s453 = int_to_ptr.vmem [resolvable:$true] %s452
          %458 = dma.hbm_to_vmem [thread:$0]  %s451, 4096, %s453, %s440, 256, 128, 8
        $region72: #{tpu_custom_call.1} parent=67 // pred_fallthru
          _
      $region68: #{tpu_custom_call.1} parent=5 // pred_fallthru
        _
      %p459 = scmp.le.s32.totalorder 1, %s27
      %p460 = scmp.lt.s32.totalorder %s27, 3
      %p461 = pnand %p459, %p460
      %p462 = pneg %p461
      // Predicated region
      $region73: #{tpu_custom_call.1} parent=5 // pred_check
        _
      $region74: #{tpu_custom_call.1} parent=5 // pred_check_branch
        %464 = sbr.rel (%p461) target = $region76
      $region75: #{tpu_custom_call.1} parent=5 // pred_region
        %s465 = ssub.s32 %s27, 1
        %s466 = sand.u32 %s54, 1
        %s467 = scalar_lea.sflag [#allocation4], %s466
        %s468 = sand.u32 %s54, 1
        %s469 = smul.addr %s468, 256
        %s470 = scalar_lea.vmem [#allocation3], %s469
        // Predicated region
        $region77: #{tpu_custom_call.1} parent=75 // pred_check
          %p471 = pneg %p67
        $region78: #{tpu_custom_call.1} parent=75 // pred_check_branch
          %473 = sbr.rel (%p471) target = $region80
        $region79: #{tpu_custom_call.1} parent=75 // pred_region
          %474 = dma.done %s467, 4096
        $region80: #{tpu_custom_call.1} parent=75 // pred_fallthru
          _
        // Predicated region
        $region81: #{tpu_custom_call.1} parent=75 // pred_check
          %p475 = pneg %p172
        $region82: #{tpu_custom_call.1} parent=75 // pred_check_branch
          %477 = sbr.rel (%p475) target = $region84
        $region83: #{tpu_custom_call.1} parent=75 // pred_region
          %478 = dma.done [#allocation7], 4096
        $region84: #{tpu_custom_call.1} parent=75 // pred_fallthru
          _
        %s479 = sand.u32 %s54, 1
        %s480 = scalar_lea.sflag [#allocation4], %s479
        %s481 = sand.u32 %s54, 1
        %s482 = smul.addr %s481, 256
        %s483 = scalar_lea.vmem [#allocation3], %s482
        %p484 = pneg %p67
        %p485 = pneg %p64
        %p486 = pneg %p88
        %p487 = pneg %p85
        %p488 = pneg %p109
        %p489 = pneg %p106
        %p490 = pneg %p130
        %p491 = pneg %p127
        %p492 = pneg %p151
        %p493 = pneg %p148
        %p494 = pneg %p172
        %p495 = pneg %p169
        %p496 = pneg %p193
        %p497 = pneg %p190
        %p498 = pneg %p214
        %p499 = pneg %p211
        %p500 = pneg %p235
        %p501 = pneg %p232
        %p502 = pneg %p256
        %p503 = pneg %p253
        %p504 = pneg %p277
        %p505 = pneg %p274
        %p506 = pneg %p298
        %p507 = pneg %p295
        %p508 = pneg %p319
        %p509 = pneg %p316
        %p510 = pneg %p340
        %p511 = pneg %p337
        %p512 = pneg %p368
        %p513 = pneg %p365
        %s514 = sand.u32 %s355, 1
        %s515 = scalar_lea.sflag [#allocation5], %s514
        %s516 = sand.u32 %s355, 1
        %s517 = smul.addr %s516, 256
        %s518 = scalar_lea.vmem [#allocation8], %s517
        %s519 = smul.u32 32, %s36
        %s520 = smul.u32 32, %s36
        %v522 = vld [vmem:[%s470] sm:$0xff]
        %v523 = vld [vmem:[%s470 + $0x8] sm:$0xff]
        %v524 = vld [vmem:[%s470 + $0x10] sm:$0xff]
        %v525 = vld [vmem:[%s470 + $0x18] sm:$0xff]
        %v526 = vld [vmem:[%s470 + $0x20] sm:$0xff]
        %v527 = vld [vmem:[%s470 + $0x28] sm:$0xff]
        %v528 = vld [vmem:[%s470 + $0x30] sm:$0xff]
        %v529 = vld [vmem:[%s470 + $0x38] sm:$0xff]
        %v530 = vld [vmem:[%s470 + $0x40] sm:$0xff]
        %v531 = vld [vmem:[%s470 + $0x48] sm:$0xff]
        %v532 = vld [vmem:[%s470 + $0x50] sm:$0xff]
        %v533 = vld [vmem:[%s470 + $0x58] sm:$0xff]
        %v534 = vld [vmem:[%s470 + $0x60] sm:$0xff]
        %v535 = vld [vmem:[%s470 + $0x68] sm:$0xff]
        %v536 = vld [vmem:[%s470 + $0x70] sm:$0xff]
        %v537 = vld [vmem:[%s470 + $0x78] sm:$0xff]
        %v538 = vld [vmem:[%s470 + $0x80] sm:$0xff]
        %v539 = vld [vmem:[%s470 + $0x88] sm:$0xff]
        %v540 = vld [vmem:[%s470 + $0x90] sm:$0xff]
        %v541 = vld [vmem:[%s470 + $0x98] sm:$0xff]
        %v542 = vld [vmem:[%s470 + $0xa0] sm:$0xff]
        %v543 = vld [vmem:[%s470 + $0xa8] sm:$0xff]
        %v544 = vld [vmem:[%s470 + $0xb0] sm:$0xff]
        %v545 = vld [vmem:[%s470 + $0xb8] sm:$0xff]
        %v546 = vld [vmem:[%s470 + $0xc0] sm:$0xff]
        %v547 = vld [vmem:[%s470 + $0xc8] sm:$0xff]
        %v548 = vld [vmem:[%s470 + $0xd0] sm:$0xff]
        %v549 = vld [vmem:[%s470 + $0xd8] sm:$0xff]
        %v550 = vld [vmem:[%s470 + $0xe0] sm:$0xff]
        %v551 = vld [vmem:[%s470 + $0xe8] sm:$0xff]
        %v552 = vld [vmem:[%s470 + $0xf0] sm:$0xff]
        %v553 = vld [vmem:[%s470 + $0xf8] sm:$0xff]
        %vm554 = vcmask 261120
        %v555 = vsel %vm554, %v522, 0.0
        %556 = vadd.xlane.f32.xlu0 %v555
        %v557 = vpop.xlane.xlu0 %556
        %v558 = vsel %vm554, %v523, 0.0
        %559 = vadd.xlane.f32.xlu0 %v558
        %v560 = vpop.xlane.xlu0 %559
        %v561 = vsel %vm554, %v524, 0.0
        %562 = vadd.xlane.f32.xlu0 %v561
        %v563 = vpop.xlane.xlu0 %562
        %v564 = vsel %vm554, %v525, 0.0
        %565 = vadd.xlane.f32.xlu0 %v564
        %v566 = vpop.xlane.xlu0 %565
        %v567 = vsel %vm554, %v526, 0.0
        %568 = vadd.xlane.f32.xlu0 %v567
        %v569 = vpop.xlane.xlu0 %568
        %v570 = vsel %vm554, %v527, 0.0
        %571 = vadd.xlane.f32.xlu0 %v570
        %v572 = vpop.xlane.xlu0 %571
        %v573 = vsel %vm554, %v528, 0.0
        %574 = vadd.xlane.f32.xlu0 %v573
        %v575 = vpop.xlane.xlu0 %574
        %v576 = vsel %vm554, %v529, 0.0
        %577 = vadd.xlane.f32.xlu0 %v576
        %v578 = vpop.xlane.xlu0 %577
        %v579 = vsel %vm554, %v530, 0.0
        %580 = vadd.xlane.f32.xlu0 %v579
        %v581 = vpop.xlane.xlu0 %580
        %v582 = vsel %vm554, %v531, 0.0
        %583 = vadd.xlane.f32.xlu0 %v582
        %v584 = vpop.xlane.xlu0 %583
        %v585 = vsel %vm554, %v532, 0.0
        %586 = vadd.xlane.f32.xlu0 %v585
        %v587 = vpop.xlane.xlu0 %586
        %v588 = vsel %vm554, %v533, 0.0
        %589 = vadd.xlane.f32.xlu0 %v588
        %v590 = vpop.xlane.xlu0 %589
        %v591 = vsel %vm554, %v534, 0.0
        %592 = vadd.xlane.f32.xlu0 %v591
        %v593 = vpop.xlane.xlu0 %592
        %v594 = vsel %vm554, %v535, 0.0
        %595 = vadd.xlane.f32.xlu0 %v594
        %v596 = vpop.xlane.xlu0 %595
        %v597 = vsel %vm554, %v536, 0.0
        %598 = vadd.xlane.f32.xlu0 %v597
        %v599 = vpop.xlane.xlu0 %598
        %v600 = vsel %vm554, %v537, 0.0
        %601 = vadd.xlane.f32.xlu0 %v600
        %v602 = vpop.xlane.xlu0 %601
        %v603 = vsel %vm554, %v538, 0.0
        %604 = vadd.xlane.f32.xlu0 %v603
        %v605 = vpop.xlane.xlu0 %604
        %v606 = vsel %vm554, %v539, 0.0
        %607 = vadd.xlane.f32.xlu0 %v606
        %v608 = vpop.xlane.xlu0 %607
        %v609 = vsel %vm554, %v540, 0.0
        %610 = vadd.xlane.f32.xlu0 %v609
        %v611 = vpop.xlane.xlu0 %610
        %v612 = vsel %vm554, %v541, 0.0
        %613 = vadd.xlane.f32.xlu0 %v612
        %v614 = vpop.xlane.xlu0 %613
        %v615 = vsel %vm554, %v542, 0.0
        %616 = vadd.xlane.f32.xlu0 %v615
        %v617 = vpop.xlane.xlu0 %616
        %v618 = vsel %vm554, %v543, 0.0
        %619 = vadd.xlane.f32.xlu0 %v618
        %v620 = vpop.xlane.xlu0 %619
        %v621 = vsel %vm554, %v544, 0.0
        %622 = vadd.xlane.f32.xlu0 %v621
        %v623 = vpop.xlane.xlu0 %622
        %v624 = vsel %vm554, %v545, 0.0
        %625 = vadd.xlane.f32.xlu0 %v624
        %v626 = vpop.xlane.xlu0 %625
        %v627 = vsel %vm554, %v546, 0.0
        %628 = vadd.xlane.f32.xlu0 %v627
        %v629 = vpop.xlane.xlu0 %628
        %v630 = vsel %vm554, %v547, 0.0
        %631 = vadd.xlane.f32.xlu0 %v630
        %v632 = vpop.xlane.xlu0 %631
        %v633 = vsel %vm554, %v548, 0.0
        %634 = vadd.xlane.f32.xlu0 %v633
        %v635 = vpop.xlane.xlu0 %634
        %v636 = vsel %vm554, %v549, 0.0
        %637 = vadd.xlane.f32.xlu0 %v636
        %v638 = vpop.xlane.xlu0 %637
        %v639 = vsel %vm554, %v550, 0.0
        %640 = vadd.xlane.f32.xlu0 %v639
        %v641 = vpop.xlane.xlu0 %640
        %v642 = vsel %vm554, %v551, 0.0
        %643 = vadd.xlane.f32.xlu0 %v642
        %v644 = vpop.xlane.xlu0 %643
        %v645 = vsel %vm554, %v552, 0.0
        %646 = vadd.xlane.f32.xlu0 %v645
        %v647 = vpop.xlane.xlu0 %646
        %v648 = vsel %vm554, %v553, 0.0
        %649 = vadd.xlane.f32.xlu0 %v648
        %v650 = vpop.xlane.xlu0 %649
        %v651 = vrcp.pop 32.0
        %v652 = vmul.f32 %v557, %v651
        %v653 = vmul.f32 %v560, %v651
        %v654 = vmul.f32 %v563, %v651
        %v655 = vmul.f32 %v566, %v651
        %v656 = vmul.f32 %v569, %v651
        %v657 = vmul.f32 %v572, %v651
        %v658 = vmul.f32 %v575, %v651
        %v659 = vmul.f32 %v578, %v651
        %v660 = vmul.f32 %v581, %v651
        %v661 = vmul.f32 %v584, %v651
        %v662 = vmul.f32 %v587, %v651
        %v663 = vmul.f32 %v590, %v651
        %v664 = vmul.f32 %v593, %v651
        %v665 = vmul.f32 %v596, %v651
        %v666 = vmul.f32 %v599, %v651
        %v667 = vmul.f32 %v602, %v651
        %v668 = vmul.f32 %v605, %v651
        %v669 = vmul.f32 %v608, %v651
        %v670 = vmul.f32 %v611, %v651
        %v671 = vmul.f32 %v614, %v651
        %v672 = vmul.f32 %v617, %v651
        %v673 = vmul.f32 %v620, %v651
        %v674 = vmul.f32 %v623, %v651
        %v675 = vmul.f32 %v626, %v651
        %v676 = vmul.f32 %v629, %v651
        %v677 = vmul.f32 %v632, %v651
        %v678 = vmul.f32 %v635, %v651
        %v679 = vmul.f32 %v638, %v651
        %v680 = vmul.f32 %v641, %v651
        %v681 = vmul.f32 %v644, %v651
        %v682 = vmul.f32 %v647, %v651
        %v683 = vmul.f32 %v650, %v651
        %v684 = vsub.f32 %v522, %v652
        %v685 = vsub.f32 %v523, %v653
        %v686 = vsub.f32 %v524, %v654
        %v687 = vsub.f32 %v525, %v655
        %v688 = vsub.f32 %v526, %v656
        %v689 = vsub.f32 %v527, %v657
        %v690 = vsub.f32 %v528, %v658
        %v691 = vsub.f32 %v529, %v659
        %v692 = vsub.f32 %v530, %v660
        %v693 = vsub.f32 %v531, %v661
        %v694 = vsub.f32 %v532, %v662
        %v695 = vsub.f32 %v533, %v663
        %v696 = vsub.f32 %v534, %v664
        %v697 = vsub.f32 %v535, %v665
        %v698 = vsub.f32 %v536, %v666
        %v699 = vsub.f32 %v537, %v667
        %v700 = vsub.f32 %v538, %v668
        %v701 = vsub.f32 %v539, %v669
        %v702 = vsub.f32 %v540, %v670
        %v703 = vsub.f32 %v541, %v671
        %v704 = vsub.f32 %v542, %v672
        %v705 = vsub.f32 %v543, %v673
        %v706 = vsub.f32 %v544, %v674
        %v707 = vsub.f32 %v545, %v675
        %v708 = vsub.f32 %v546, %v676
        %v709 = vsub.f32 %v547, %v677
        %v710 = vsub.f32 %v548, %v678
        %v711 = vsub.f32 %v549, %v679
        %v712 = vsub.f32 %v550, %v680
        %v713 = vsub.f32 %v551, %v681
        %v714 = vsub.f32 %v552, %v682
        %v715 = vsub.f32 %v553, %v683
        %v716 = vmul.f32 %v684, %v684
        %v717 = vmul.f32 %v685, %v685
        %v718 = vmul.f32 %v686, %v686
        %v719 = vmul.f32 %v687, %v687
        %v720 = vmul.f32 %v688, %v688
        %v721 = vmul.f32 %v689, %v689
        %v722 = vmul.f32 %v690, %v690
        %v723 = vmul.f32 %v691, %v691
        %v724 = vmul.f32 %v692, %v692
        %v725 = vmul.f32 %v693, %v693
        %v726 = vmul.f32 %v694, %v694
        %v727 = vmul.f32 %v695, %v695
        %v728 = vmul.f32 %v696, %v696
        %v729 = vmul.f32 %v697, %v697
        %v730 = vmul.f32 %v698, %v698
        %v731 = vmul.f32 %v699, %v699
        %v732 = vmul.f32 %v700, %v700
        %v733 = vmul.f32 %v701, %v701
        %v734 = vmul.f32 %v702, %v702
        %v735 = vmul.f32 %v703, %v703
        %v736 = vmul.f32 %v704, %v704
        %v737 = vmul.f32 %v705, %v705
        %v738 = vmul.f32 %v706, %v706
        %v739 = vmul.f32 %v707, %v707
        %v740 = vmul.f32 %v708, %v708
        %v741 = vmul.f32 %v709, %v709
        %v742 = vmul.f32 %v710, %v710
        %v743 = vmul.f32 %v711, %v711
        %v744 = vmul.f32 %v712, %v712
        %v745 = vmul.f32 %v713, %v713
        %v746 = vmul.f32 %v714, %v714
        %v747 = vmul.f32 %v715, %v715
        %v748 = vsel %vm554, %v716, 0.0
        %749 = vadd.xlane.f32.xlu0 %v748
        %v750 = vpop.xlane.xlu0 %749
        %v751 = vsel %vm554, %v717, 0.0
        %752 = vadd.xlane.f32.xlu0 %v751
        %v753 = vpop.xlane.xlu0 %752
        %v754 = vsel %vm554, %v718, 0.0
        %755 = vadd.xlane.f32.xlu0 %v754
        %v756 = vpop.xlane.xlu0 %755
        %v757 = vsel %vm554, %v719, 0.0
        %758 = vadd.xlane.f32.xlu0 %v757
        %v759 = vpop.xlane.xlu0 %758
        %v760 = vsel %vm554, %v720, 0.0
        %761 = vadd.xlane.f32.xlu0 %v760
        %v762 = vpop.xlane.xlu0 %761
        %v763 = vsel %vm554, %v721, 0.0
        %764 = vadd.xlane.f32.xlu0 %v763
        %v765 = vpop.xlane.xlu0 %764
        %v766 = vsel %vm554, %v722, 0.0
        %767 = vadd.xlane.f32.xlu0 %v766
        %v768 = vpop.xlane.xlu0 %767
        %v769 = vsel %vm554, %v723, 0.0
        %770 = vadd.xlane.f32.xlu0 %v769
        %v771 = vpop.xlane.xlu0 %770
        %v772 = vsel %vm554, %v724, 0.0
        %773 = vadd.xlane.f32.xlu0 %v772
        %v774 = vpop.xlane.xlu0 %773
        %v775 = vsel %vm554, %v725, 0.0
        %776 = vadd.xlane.f32.xlu0 %v775
        %v777 = vpop.xlane.xlu0 %776
        %v778 = vsel %vm554, %v726, 0.0
        %779 = vadd.xlane.f32.xlu0 %v778
        %v780 = vpop.xlane.xlu0 %779
        %v781 = vsel %vm554, %v727, 0.0
        %782 = vadd.xlane.f32.xlu0 %v781
        %v783 = vpop.xlane.xlu0 %782
        %v784 = vsel %vm554, %v728, 0.0
        %785 = vadd.xlane.f32.xlu0 %v784
        %v786 = vpop.xlane.xlu0 %785
        %v787 = vsel %vm554, %v729, 0.0
        %788 = vadd.xlane.f32.xlu0 %v787
        %v789 = vpop.xlane.xlu0 %788
        %v790 = vsel %vm554, %v730, 0.0
        %791 = vadd.xlane.f32.xlu0 %v790
        %v792 = vpop.xlane.xlu0 %791
        %v793 = vsel %vm554, %v731, 0.0
        %794 = vadd.xlane.f32.xlu0 %v793
        %v795 = vpop.xlane.xlu0 %794
        %v796 = vsel %vm554, %v732, 0.0
        %797 = vadd.xlane.f32.xlu0 %v796
        %v798 = vpop.xlane.xlu0 %797
        %v799 = vsel %vm554, %v733, 0.0
        %800 = vadd.xlane.f32.xlu0 %v799
        %v801 = vpop.xlane.xlu0 %800
        %v802 = vsel %vm554, %v734, 0.0
        %803 = vadd.xlane.f32.xlu0 %v802
        %v804 = vpop.xlane.xlu0 %803
        %v805 = vsel %vm554, %v735, 0.0
        %806 = vadd.xlane.f32.xlu0 %v805
        %v807 = vpop.xlane.xlu0 %806
        %v808 = vsel %vm554, %v736, 0.0
        %809 = vadd.xlane.f32.xlu0 %v808
        %v810 = vpop.xlane.xlu0 %809
        %v811 = vsel %vm554, %v737, 0.0
        %812 = vadd.xlane.f32.xlu0 %v811
        %v813 = vpop.xlane.xlu0 %812
        %v814 = vsel %vm554, %v738, 0.0
        %815 = vadd.xlane.f32.xlu0 %v814
        %v816 = vpop.xlane.xlu0 %815
        %v817 = vsel %vm554, %v739, 0.0
        %818 = vadd.xlane.f32.xlu0 %v817
        %v819 = vpop.xlane.xlu0 %818
        %v820 = vsel %vm554, %v740, 0.0
        %821 = vadd.xlane.f32.xlu0 %v820
        %v822 = vpop.xlane.xlu0 %821
        %v823 = vsel %vm554, %v741, 0.0
        %824 = vadd.xlane.f32.xlu0 %v823
        %v825 = vpop.xlane.xlu0 %824
        %v826 = vsel %vm554, %v742, 0.0
        %827 = vadd.xlane.f32.xlu0 %v826
        %v828 = vpop.xlane.xlu0 %827
        %v829 = vsel %vm554, %v743, 0.0
        %830 = vadd.xlane.f32.xlu0 %v829
        %v831 = vpop.xlane.xlu0 %830
        %v832 = vsel %vm554, %v744, 0.0
        %833 = vadd.xlane.f32.xlu0 %v832
        %v834 = vpop.xlane.xlu0 %833
        %v835 = vsel %vm554, %v745, 0.0
        %836 = vadd.xlane.f32.xlu0 %v835
        %v837 = vpop.xlane.xlu0 %836
        %v838 = vsel %vm554, %v746, 0.0
        %839 = vadd.xlane.f32.xlu0 %v838
        %v840 = vpop.xlane.xlu0 %839
        %v841 = vsel %vm554, %v747, 0.0
        %842 = vadd.xlane.f32.xlu0 %v841
        %v843 = vpop.xlane.xlu0 %842
        %v844 = vmul.f32 %v750, %v651
        %v845 = vmul.f32 %v753, %v651
        %v846 = vmul.f32 %v756, %v651
        %v847 = vmul.f32 %v759, %v651
        %v848 = vmul.f32 %v762, %v651
        %v849 = vmul.f32 %v765, %v651
        %v850 = vmul.f32 %v768, %v651
        %v851 = vmul.f32 %v771, %v651
        %v852 = vmul.f32 %v774, %v651
        %v853 = vmul.f32 %v777, %v651
        %v854 = vmul.f32 %v780, %v651
        %v855 = vmul.f32 %v783, %v651
        %v856 = vmul.f32 %v786, %v651
        %v857 = vmul.f32 %v789, %v651
        %v858 = vmul.f32 %v792, %v651
        %v859 = vmul.f32 %v795, %v651
        %v860 = vmul.f32 %v798, %v651
        %v861 = vmul.f32 %v801, %v651
        %v862 = vmul.f32 %v804, %v651
        %v863 = vmul.f32 %v807, %v651
        %v864 = vmul.f32 %v810, %v651
        %v865 = vmul.f32 %v813, %v651
        %v866 = vmul.f32 %v816, %v651
        %v867 = vmul.f32 %v819, %v651
        %v868 = vmul.f32 %v822, %v651
        %v869 = vmul.f32 %v825, %v651
        %v870 = vmul.f32 %v828, %v651
        %v871 = vmul.f32 %v831, %v651
        %v872 = vmul.f32 %v834, %v651
        %v873 = vmul.f32 %v837, %v651
        %v874 = vmul.f32 %v840, %v651
        %v875 = vmul.f32 %v843, %v651
        %v876 = vadd.f32 %v844, 1e-05
        %v877 = vadd.f32 %v845, 1e-05
        %v878 = vadd.f32 %v846, 1e-05
        %v879 = vadd.f32 %v847, 1e-05
        %v880 = vadd.f32 %v848, 1e-05
        %v881 = vadd.f32 %v849, 1e-05
        %v882 = vadd.f32 %v850, 1e-05
        %v883 = vadd.f32 %v851, 1e-05
        %v884 = vadd.f32 %v852, 1e-05
        %v885 = vadd.f32 %v853, 1e-05
        %v886 = vadd.f32 %v854, 1e-05
        %v887 = vadd.f32 %v855, 1e-05
        %v888 = vadd.f32 %v856, 1e-05
        %v889 = vadd.f32 %v857, 1e-05
        %v890 = vadd.f32 %v858, 1e-05
        %v891 = vadd.f32 %v859, 1e-05
        %v892 = vadd.f32 %v860, 1e-05
        %v893 = vadd.f32 %v861, 1e-05
        %v894 = vadd.f32 %v862, 1e-05
        %v895 = vadd.f32 %v863, 1e-05
        %v896 = vadd.f32 %v864, 1e-05
        %v897 = vadd.f32 %v865, 1e-05
        %v898 = vadd.f32 %v866, 1e-05
        %v899 = vadd.f32 %v867, 1e-05
        %v900 = vadd.f32 %v868, 1e-05
        %v901 = vadd.f32 %v869, 1e-05
        %v902 = vadd.f32 %v870, 1e-05
        %v903 = vadd.f32 %v871, 1e-05
        %v904 = vadd.f32 %v872, 1e-05
        %v905 = vadd.f32 %v873, 1e-05
        %v906 = vadd.f32 %v874, 1e-05
        %v907 = vadd.f32 %v875, 1e-05
        %v908 = vrsqrt.pop %v876
        %v909 = vrsqrt.pop %v877
        %v910 = vrsqrt.pop %v878
        %v911 = vrsqrt.pop %v879
        %v912 = vrsqrt.pop %v880
        %v913 = vrsqrt.pop %v881
        %v914 = vrsqrt.pop %v882
        %v915 = vrsqrt.pop %v883
        %v916 = vrsqrt.pop %v884
        %v917 = vrsqrt.pop %v885
        %v918 = vrsqrt.pop %v886
        %v919 = vrsqrt.pop %v887
        %v920 = vrsqrt.pop %v888
        %v921 = vrsqrt.pop %v889
        %v922 = vrsqrt.pop %v890
        %v923 = vrsqrt.pop %v891
        %v924 = vrsqrt.pop %v892
        %v925 = vrsqrt.pop %v893
        %v926 = vrsqrt.pop %v894
        %v927 = vrsqrt.pop %v895
        %v928 = vrsqrt.pop %v896
        %v929 = vrsqrt.pop %v897
        %v930 = vrsqrt.pop %v898
        %v931 = vrsqrt.pop %v899
        %v932 = vrsqrt.pop %v900
        %v933 = vrsqrt.pop %v901
        %v934 = vrsqrt.pop %v902
        %v935 = vrsqrt.pop %v903
        %v936 = vrsqrt.pop %v904
        %v937 = vrsqrt.pop %v905
        %v938 = vrsqrt.pop %v906
        %v939 = vrsqrt.pop %v907
        %v940 = vmul.f32 %v684, %v908
        %v941 = vmul.f32 %v685, %v909
        %v942 = vmul.f32 %v686, %v910
        %v943 = vmul.f32 %v687, %v911
        %v944 = vmul.f32 %v688, %v912
        %v945 = vmul.f32 %v689, %v913
        %v946 = vmul.f32 %v690, %v914
        %v947 = vmul.f32 %v691, %v915
        %v948 = vmul.f32 %v692, %v916
        %v949 = vmul.f32 %v693, %v917
        %v950 = vmul.f32 %v694, %v918
        %v951 = vmul.f32 %v695, %v919
        %v952 = vmul.f32 %v696, %v920
        %v953 = vmul.f32 %v697, %v921
        %v954 = vmul.f32 %v698, %v922
        %v955 = vmul.f32 %v699, %v923
        %v956 = vmul.f32 %v700, %v924
        %v957 = vmul.f32 %v701, %v925
        %v958 = vmul.f32 %v702, %v926
        %v959 = vmul.f32 %v703, %v927
        %v960 = vmul.f32 %v704, %v928
        %v961 = vmul.f32 %v705, %v929
        %v962 = vmul.f32 %v706, %v930
        %v963 = vmul.f32 %v707, %v931
        %v964 = vmul.f32 %v708, %v932
        %v965 = vmul.f32 %v709, %v933
        %v966 = vmul.f32 %v710, %v934
        %v967 = vmul.f32 %v711, %v935
        %v968 = vmul.f32 %v712, %v936
        %v969 = vmul.f32 %v713, %v937
        %v970 = vmul.f32 %v714, %v938
        %v971 = vmul.f32 %v715, %v939
        %v972 = vld [vmem:[%s1] sm:$0x1]
        %v974 = vlaneseq
        %v975 = vshrl.u32 %v974, 7
        %v976 = vsub.s32 0, %v975
        %v977 = vrot.slane %v972, %v976
        %v979 = vmul.f32 %v940, %v977
        %v980 = vmul.f32 %v941, %v977
        %v981 = vmul.f32 %v942, %v977
        %v982 = vmul.f32 %v943, %v977
        %v983 = vmul.f32 %v944, %v977
        %v984 = vmul.f32 %v945, %v977
        %v985 = vmul.f32 %v946, %v977
        %v986 = vmul.f32 %v947, %v977
        %v987 = vmul.f32 %v948, %v977
        %v988 = vmul.f32 %v949, %v977
        %v989 = vmul.f32 %v950, %v977
        %v990 = vmul.f32 %v951, %v977
        %v991 = vmul.f32 %v952, %v977
        %v992 = vmul.f32 %v953, %v977
        %v993 = vmul.f32 %v954, %v977
        %v994 = vmul.f32 %v955, %v977
        %v995 = vmul.f32 %v956, %v977
        %v996 = vmul.f32 %v957, %v977
        %v997 = vmul.f32 %v958, %v977
        %v998 = vmul.f32 %v959, %v977
        %v999 = vmul.f32 %v960, %v977
        %v1000 = vmul.f32 %v961, %v977
        %v1001 = vmul.f32 %v962, %v977
        %v1002 = vmul.f32 %v963, %v977
        %v1003 = vmul.f32 %v964, %v977
        %v1004 = vmul.f32 %v965, %v977
        %v1005 = vmul.f32 %v966, %v977
        %v1006 = vmul.f32 %v967, %v977
        %v1007 = vmul.f32 %v968, %v977
        %v1008 = vmul.f32 %v969, %v977
        %v1009 = vmul.f32 %v970, %v977
        %v1010 = vmul.f32 %v971, %v977
        %v1011 = vld [vmem:[%s2] sm:$0x1]
        %v1013 = vlaneseq
        %v1014 = vshrl.u32 %v1013, 7
        %v1015 = vsub.s32 0, %v1014
        %v1016 = vrot.slane %v1011, %v1015
        %v1018 = vadd.f32 %v979, %v1016
        %v1019 = vadd.f32 %v980, %v1016
        %v1020 = vadd.f32 %v981, %v1016
        %v1021 = vadd.f32 %v982, %v1016
        %v1022 = vadd.f32 %v983, %v1016
        %v1023 = vadd.f32 %v984, %v1016
        %v1024 = vadd.f32 %v985, %v1016
        %v1025 = vadd.f32 %v986, %v1016
        %v1026 = vadd.f32 %v987, %v1016
        %v1027 = vadd.f32 %v988, %v1016
        %v1028 = vadd.f32 %v989, %v1016
        %v1029 = vadd.f32 %v990, %v1016
        %v1030 = vadd.f32 %v991, %v1016
        %v1031 = vadd.f32 %v992, %v1016
        %v1032 = vadd.f32 %v993, %v1016
        %v1033 = vadd.f32 %v994, %v1016
        %v1034 = vadd.f32 %v995, %v1016
        %v1035 = vadd.f32 %v996, %v1016
        %v1036 = vadd.f32 %v997, %v1016
        %v1037 = vadd.f32 %v998, %v1016
        %v1038 = vadd.f32 %v999, %v1016
        %v1039 = vadd.f32 %v1000, %v1016
        %v1040 = vadd.f32 %v1001, %v1016
        %v1041 = vadd.f32 %v1002, %v1016
        %v1042 = vadd.f32 %v1003, %v1016
        %v1043 = vadd.f32 %v1004, %v1016
        %v1044 = vadd.f32 %v1005, %v1016
        %v1045 = vadd.f32 %v1006, %v1016
        %v1046 = vadd.f32 %v1007, %v1016
        %v1047 = vadd.f32 %v1008, %v1016
        %v1048 = vadd.f32 %v1009, %v1016
        %v1049 = vadd.f32 %v1010, %v1016
        %v1050 = vpack.c.bf16 %v1019, %v1018
        %v1051 = vpack.c.bf16 %v1021, %v1020
        %v1052 = vpack.c.bf16 %v1023, %v1022
        %v1053 = vpack.c.bf16 %v1025, %v1024
        %v1054 = vpack.c.bf16 %v1027, %v1026
        %v1055 = vpack.c.bf16 %v1029, %v1028
        %v1056 = vpack.c.bf16 %v1031, %v1030
        %v1057 = vpack.c.bf16 %v1033, %v1032
        %v1058 = vpack.c.bf16 %v1035, %v1034
        %v1059 = vpack.c.bf16 %v1037, %v1036
        %v1060 = vpack.c.bf16 %v1039, %v1038
        %v1061 = vpack.c.bf16 %v1041, %v1040
        %v1062 = vpack.c.bf16 %v1043, %v1042
        %v1063 = vpack.c.bf16 %v1045, %v1044
        %v1064 = vpack.c.bf16 %v1047, %v1046
        %v1065 = vpack.c.bf16 %v1049, %v1048
        %v1066 = vld [vmem:[%s3] sm:$0xf]
        %v1067 = vld [vmem:[%s3 + $0x4] sm:$0xf]
        %v1068 = vld [vmem:[%s3 + $0x8] sm:$0xf]
        %v1069 = vld [vmem:[%s3 + $0xc] sm:$0xf]
        %v1070 = vld [vmem:[%s4] sm:$0x1]
        %v1072 = vlaneseq
        %v1073 = vshrl.u32 %v1072, 7
        %v1074 = vsub.s32 0, %v1073
        %v1075 = vrot.slane %v1070, %v1074
        %v1081 = vunpack.c.l.b16 %v1066
        %v1082 = vunpack.c.l.b16 %v1067
        %v1083 = vunpack.c.l.b16 %v1068
        %v1084 = vunpack.c.l.b16 %v1069
        %v1085 = vpack.c.b16 %v1082, %v1081
        %v1086 = vpack.c.b16 %v1084, %v1083
        %v1090 = vsel %vm554, %v1050, 0
        %v1093 = vsel %vm554, %v1051, 0
        %v1096 = vsel %vm554, %v1052, 0
        %v1099 = vsel %vm554, %v1053, 0
        %v1102 = vsel %vm554, %v1054, 0
        %v1105 = vsel %vm554, %v1055, 0
        %v1108 = vsel %vm554, %v1056, 0
        %v1111 = vsel %vm554, %v1057, 0
        %v1114 = vsel %vm554, %v1058, 0
        %v1117 = vsel %vm554, %v1059, 0
        %v1120 = vsel %vm554, %v1060, 0
        %v1123 = vsel %vm554, %v1061, 0
        %v1126 = vsel %vm554, %v1062, 0
        %v1129 = vsel %vm554, %v1063, 0
        %v1132 = vsel %vm554, %v1064, 0
        %v1135 = vsel %vm554, %v1065, 0
        %1137 = vmatprep.subr.bf16.mxu0 0
        %1138 = vmatpush1.bf16.msra.mxu0 %v1085
        %1139 = vmatprep.subr.bf16.mxu0 0
        %1140 = vmatpush1.bf16.msra.mxu0 %v1086
        %1141 = vmatprep.subr.bf16.mxu0 0
        %1142 = vmatpush1.bf16.msra.mxu0 0
        %1143 = vmatprep.subr.bf16.mxu0 0
        %1144 = vmatpush1.bf16.msra.mxu0 0
        %1145 = vmatprep.subr.bf16.mxu0 0
        %1146 = vmatpush1.bf16.msra.mxu0 0
        %1147 = vmatprep.subr.bf16.mxu0 0
        %1148 = vmatpush1.bf16.msra.mxu0 0
        %1149 = vmatprep.subr.bf16.mxu0 0
        %1150 = vmatpush1.bf16.msra.mxu0 0
        %1151 = vmatprep.subr.bf16.mxu0 0
        %1152 = vmatpush1.bf16.msra.mxu0 0
        %1153 = vmatprep.subr.bf16.mxu0 0
        %1154 = vmatpush1.bf16.msra.mxu0 0
        %1155 = vmatprep.subr.bf16.mxu0 0
        %1156 = vmatpush1.bf16.msra.mxu0 0
        %1157 = vmatprep.subr.bf16.mxu0 0
        %1158 = vmatpush1.bf16.msra.mxu0 0
        %1159 = vmatprep.subr.bf16.mxu0 0
        %1160 = vmatpush1.bf16.msra.mxu0 0
        %1161 = vmatprep.subr.bf16.mxu0 0
        %1162 = vmatpush1.bf16.msra.mxu0 0
        %1163 = vmatprep.subr.bf16.mxu0 0
        %1164 = vmatpush1.bf16.msra.mxu0 0
        %1165 = vmatprep.subr.bf16.mxu0 0
        %1166 = vmatpush1.bf16.msra.mxu0 0
        %1167 = vmatprep.subr.bf16.mxu0 0
        %1168 = vmatpush1.bf16.msra.mxu0 0
        %1169 = vmatprep.mubr.bf16.mxu0 0
        %1170 = vmatmul.mubr.bf16.gmra.mrb[0].mxu0 %v1090
        %v1171 = vpop.f32.mrb[0].mxu0
        %v1172 = vadd.f32 %v1075, %v1171
        %v1173 = vpop.f32.mrb[0].mxu0
        %v1174 = vpop.f32.mrb[0].mxu0
        %v1175 = vadd.f32 %v1075, %v1174
        %v1176 = vpop.f32.mrb[0].mxu0
        %1177 = vmatprep.mubr.bf16.mxu0 0
        %1178 = vmatmul.mubr.bf16.gmra.mrb[0].mxu0 %v1093
        %v1179 = vpop.f32.mrb[0].mxu0
        %v1180 = vadd.f32 %v1075, %v1179
        %v1181 = vpop.f32.mrb[0].mxu0
        %v1182 = vpop.f32.mrb[0].mxu0
        %v1183 = vadd.f32 %v1075, %v1182
        %v1184 = vpop.f32.mrb[0].mxu0
        %1185 = vmatprep.mubr.bf16.mxu0 0
        %1186 = vmatmul.mubr.bf16.gmra.mrb[0].mxu0 %v1096
        %v1187 = vpop.f32.mrb[0].mxu0
        %v1188 = vadd.f32 %v1075, %v1187
        %v1189 = vpop.f32.mrb[0].mxu0
        %v1190 = vpop.f32.mrb[0].mxu0
        %v1191 = vadd.f32 %v1075, %v1190
        %v1192 = vpop.f32.mrb[0].mxu0
        %1193 = vmatprep.mubr.bf16.mxu0 0
        %1194 = vmatmul.mubr.bf16.gmra.mrb[0].mxu0 %v1099
        %v1195 = vpop.f32.mrb[0].mxu0
        %v1196 = vadd.f32 %v1075, %v1195
        %v1197 = vpop.f32.mrb[0].mxu0
        %v1198 = vpop.f32.mrb[0].mxu0
        %v1199 = vadd.f32 %v1075, %v1198
        %v1200 = vpop.f32.mrb[0].mxu0
        %1201 = vmatprep.mubr.bf16.mxu0 0
        %1202 = vmatmul.mubr.bf16.gmra.mrb[0].mxu0 %v1102
        %v1203 = vpop.f32.mrb[0].mxu0
        %v1204 = vadd.f32 %v1075, %v1203
        %v1205 = vpop.f32.mrb[0].mxu0
        %v1206 = vpop.f32.mrb[0].mxu0
        %v1207 = vadd.f32 %v1075, %v1206
        %v1208 = vpop.f32.mrb[0].mxu0
        %1209 = vmatprep.mubr.bf16.mxu0 0
        %1210 = vmatmul.mubr.bf16.gmra.mrb[0].mxu0 %v1105
        %v1211 = vpop.f32.mrb[0].mxu0
        %v1212 = vadd.f32 %v1075, %v1211
        %v1213 = vpop.f32.mrb[0].mxu0
        %v1214 = vpop.f32.mrb[0].mxu0
        %v1215 = vadd.f32 %v1075, %v1214
        %v1216 = vpop.f32.mrb[0].mxu0
        %1217 = vmatprep.mubr.bf16.mxu0 0
        %1218 = vmatmul.mubr.bf16.gmra.mrb[0].mxu0 %v1108
        %v1219 = vpop.f32.mrb[0].mxu0
        %v1220 = vadd.f32 %v1075, %v1219
        %v1221 = vpop.f32.mrb[0].mxu0
        %v1222 = vpop.f32.mrb[0].mxu0
        %v1223 = vadd.f32 %v1075, %v1222
        %v1224 = vpop.f32.mrb[0].mxu0
        %1225 = vmatprep.mubr.bf16.mxu0 0
        %1226 = vmatmul.mubr.bf16.gmra.mrb[0].mxu0 %v1111
        %v1227 = vpop.f32.mrb[0].mxu0
        %v1228 = vadd.f32 %v1075, %v1227
        %v1229 = vpop.f32.mrb[0].mxu0
        %v1230 = vpop.f32.mrb[0].mxu0
        %v1231 = vadd.f32 %v1075, %v1230
        %v1232 = vpop.f32.mrb[0].mxu0
        %1233 = vmatprep.mubr.bf16.mxu0 0
        %1234 = vmatmul.mubr.bf16.gmra.mrb[0].mxu0 %v1114
        %v1235 = vpop.f32.mrb[0].mxu0
        %v1236 = vadd.f32 %v1075, %v1235
        %v1237 = vpop.f32.mrb[0].mxu0
        %v1238 = vpop.f32.mrb[0].mxu0
        %v1239 = vadd.f32 %v1075, %v1238
        %v1240 = vpop.f32.mrb[0].mxu0
        %1241 = vmatprep.mubr.bf16.mxu0 0
        %1242 = vmatmul.mubr.bf16.gmra.mrb[0].mxu0 %v1117
        %v1243 = vpop.f32.mrb[0].mxu0
        %v1244 = vadd.f32 %v1075, %v1243
        %v1245 = vpop.f32.mrb[0].mxu0
        %v1246 = vpop.f32.mrb[0].mxu0
        %v1247 = vadd.f32 %v1075, %v1246
        %v1248 = vpop.f32.mrb[0].mxu0
        %1249 = vmatprep.mubr.bf16.mxu0 0
        %1250 = vmatmul.mubr.bf16.gmra.mrb[0].mxu0 %v1120
        %v1251 = vpop.f32.mrb[0].mxu0
        %v1252 = vadd.f32 %v1075, %v1251
        %v1253 = vpop.f32.mrb[0].mxu0
        %v1254 = vpop.f32.mrb[0].mxu0
        %v1255 = vadd.f32 %v1075, %v1254
        %v1256 = vpop.f32.mrb[0].mxu0
        %1257 = vmatprep.mubr.bf16.mxu0 0
        %1258 = vmatmul.mubr.bf16.gmra.mrb[0].mxu0 %v1123
        %v1259 = vpop.f32.mrb[0].mxu0
        %v1260 = vadd.f32 %v1075, %v1259
        %v1261 = vpop.f32.mrb[0].mxu0
        %v1262 = vpop.f32.mrb[0].mxu0
        %v1263 = vadd.f32 %v1075, %v1262
        %v1264 = vpop.f32.mrb[0].mxu0
        %1265 = vmatprep.mubr.bf16.mxu0 0
        %1266 = vmatmul.mubr.bf16.gmra.mrb[0].mxu0 %v1126
        %v1267 = vpop.f32.mrb[0].mxu0
        %v1268 = vadd.f32 %v1075, %v1267
        %v1269 = vpop.f32.mrb[0].mxu0
        %v1270 = vpop.f32.mrb[0].mxu0
        %v1271 = vadd.f32 %v1075, %v1270
        %v1272 = vpop.f32.mrb[0].mxu0
        %1273 = vmatprep.mubr.bf16.mxu0 0
        %1274 = vmatmul.mubr.bf16.gmra.mrb[0].mxu0 %v1129
        %v1275 = vpop.f32.mrb[0].mxu0
        %v1276 = vadd.f32 %v1075, %v1275
        %v1277 = vpop.f32.mrb[0].mxu0
        %v1278 = vpop.f32.mrb[0].mxu0
        %v1279 = vadd.f32 %v1075, %v1278
        %v1280 = vpop.f32.mrb[0].mxu0
        %1281 = vmatprep.mubr.bf16.mxu0 0
        %1282 = vmatmul.mubr.bf16.gmra.mrb[0].mxu0 %v1132
        %v1283 = vpop.f32.mrb[0].mxu0
        %v1284 = vadd.f32 %v1075, %v1283
        %v1285 = vpop.f32.mrb[0].mxu0
        %v1286 = vpop.f32.mrb[0].mxu0
        %v1287 = vadd.f32 %v1075, %v1286
        %v1288 = vpop.f32.mrb[0].mxu0
        %1289 = vmatprep.mubr.bf16.mxu0 0
        %1290 = vmatmul.mubr.bf16.gmra.mrb[0].mxu0 %v1135
        %v1291 = vpop.f32.mrb[0].mxu0
        %v1292 = vadd.f32 %v1075, %v1291
        %v1293 = vpop.f32.mrb[0].mxu0
        %v1294 = vpop.f32.mrb[0].mxu0
        %v1295 = vadd.f32 %v1075, %v1294
        %v1296 = vpop.f32.mrb[0].mxu0
        %1297 = vdwg.mxu0
        %v1298 = vmul.f32 %v1172, 0.35355338
        %v1299 = vmul.f32 %v1175, 0.35355338
        %v1300 = vmul.f32 %v1180, 0.35355338
        %v1301 = vmul.f32 %v1183, 0.35355338
        %v1302 = vmul.f32 %v1188, 0.35355338
        %v1303 = vmul.f32 %v1191, 0.35355338
        %v1304 = vmul.f32 %v1196, 0.35355338
        %v1305 = vmul.f32 %v1199, 0.35355338
        %v1306 = vmul.f32 %v1204, 0.35355338
        %v1307 = vmul.f32 %v1207, 0.35355338
        %v1308 = vmul.f32 %v1212, 0.35355338
        %v1309 = vmul.f32 %v1215, 0.35355338
        %v1310 = vmul.f32 %v1220, 0.35355338
        %v1311 = vmul.f32 %v1223, 0.35355338
        %v1312 = vmul.f32 %v1228, 0.35355338
        %v1313 = vmul.f32 %v1231, 0.35355338
        %v1314 = vmul.f32 %v1236, 0.35355338
        %v1315 = vmul.f32 %v1239, 0.35355338
        %v1316 = vmul.f32 %v1244, 0.35355338
        %v1317 = vmul.f32 %v1247, 0.35355338
        %v1318 = vmul.f32 %v1252, 0.35355338
        %v1319 = vmul.f32 %v1255, 0.35355338
        %v1320 = vmul.f32 %v1260, 0.35355338
        %v1321 = vmul.f32 %v1263, 0.35355338
        %v1322 = vmul.f32 %v1268, 0.35355338
        %v1323 = vmul.f32 %v1271, 0.35355338
        %v1324 = vmul.f32 %v1276, 0.35355338
        %v1325 = vmul.f32 %v1279, 0.35355338
        %v1326 = vmul.f32 %v1284, 0.35355338
        %v1327 = vmul.f32 %v1287, 0.35355338
        %v1328 = vmul.f32 %v1292, 0.35355338
        %v1329 = vmul.f32 %v1295, 0.35355338
        %v1330 = vpack.c.bf16 %v1299, %v1298
        %v1331 = vpack.c.bf16 %v1301, %v1300
        %v1332 = vpack.c.bf16 %v1303, %v1302
        %v1333 = vpack.c.bf16 %v1305, %v1304
        %v1334 = vpack.c.bf16 %v1307, %v1306
        %v1335 = vpack.c.bf16 %v1309, %v1308
        %v1336 = vpack.c.bf16 %v1311, %v1310
        %v1337 = vpack.c.bf16 %v1313, %v1312
        %v1338 = vpack.c.bf16 %v1315, %v1314
        %v1339 = vpack.c.bf16 %v1317, %v1316
        %v1340 = vpack.c.bf16 %v1319, %v1318
        %v1341 = vpack.c.bf16 %v1321, %v1320
        %v1342 = vpack.c.bf16 %v1323, %v1322
        %v1343 = vpack.c.bf16 %v1325, %v1324
        %v1344 = vpack.c.bf16 %v1327, %v1326
        %v1345 = vpack.c.bf16 %v1329, %v1328
        %v1346 = vpack.c.bf16 %v1175, %v1172
        %v1347 = vpack.c.bf16 %v1183, %v1180
        %v1348 = vpack.c.bf16 %v1191, %v1188
        %v1349 = vpack.c.bf16 %v1199, %v1196
        %v1350 = vpack.c.bf16 %v1207, %v1204
        %v1351 = vpack.c.bf16 %v1215, %v1212
        %v1352 = vpack.c.bf16 %v1223, %v1220
        %v1353 = vpack.c.bf16 %v1231, %v1228
        %v1354 = vpack.c.bf16 %v1239, %v1236
        %v1355 = vpack.c.bf16 %v1247, %v1244
        %v1356 = vpack.c.bf16 %v1255, %v1252
        %v1357 = vpack.c.bf16 %v1263, %v1260
        %v1358 = vpack.c.bf16 %v1271, %v1268
        %v1359 = vpack.c.bf16 %v1279, %v1276
        %v1360 = vpack.c.bf16 %v1287, %v1284
        %v1361 = vpack.c.bf16 %v1295, %v1292
        %v1362 = vld [vmem:[#allocation6] sm:$0xff]
        %v1363 = vld [vmem:[#allocation6 + $0x8] sm:$0xff]
        %v1364 = vld [vmem:[#allocation6 + $0x10] sm:$0xff]
        %v1365 = vld [vmem:[#allocation6 + $0x18] sm:$0xff]
        %v1366 = vld [vmem:[#allocation6 + $0x20] sm:$0xff]
        %v1367 = vld [vmem:[#allocation6 + $0x28] sm:$0xff]
        %v1368 = vld [vmem:[#allocation6 + $0x30] sm:$0xff]
        %v1369 = vld [vmem:[#allocation6 + $0x38] sm:$0xff]
        %1374 = vrot.lane.b32.xlu0 %v1346, 96
        %v1375 = vpop.permute.xlu0 %1374
        %1376 = vrot.lane.b32.xlu0 %v1347, 96
        %v1377 = vpop.permute.xlu0 %1376
        %1378 = vrot.lane.b32.xlu0 %v1348, 96
        %v1379 = vpop.permute.xlu0 %1378
        %1380 = vrot.lane.b32.xlu0 %v1349, 96
        %v1381 = vpop.permute.xlu0 %1380
        %vm1382 = vcmask 64512
        %v1384 = vsel %vm1382, %v1330, 0
        %v1387 = vsel %vm1382, %v1331, 0
        %v1390 = vsel %vm1382, %v1332, 0
        %v1393 = vsel %vm1382, %v1333, 0
        %v1396 = vsel %vm1382, %v1375, 0
        %v1399 = vsel %vm1382, %v1377, 0
        %v1402 = vsel %vm1382, %v1379, 0
        %v1405 = vsel %vm1382, %v1381, 0
        %1407 = vmatprep.subr.bf16.mxu0 0
        %1408 = vmatpush1.bf16.xpose.msra.mxu0 %v1396
        %1409 = vmatprep.subr.bf16.mxu0 0
        %1410 = vmatpush1.bf16.xpose.msra.mxu0 %v1399
        %1411 = vmatprep.subr.bf16.mxu0 0
        %1412 = vmatpush1.bf16.xpose.msra.mxu0 %v1402
        %1413 = vmatprep.subr.bf16.mxu0 0
        %1414 = vmatpush1.bf16.xpose.msra.mxu0 %v1405
        %1415 = vmatprep.subr.bf16.mxu0 0
        %1416 = vmatpush1.bf16.xpose.msra.mxu0 0
        %1417 = vmatprep.subr.bf16.mxu0 0
        %1418 = vmatpush1.bf16.xpose.msra.mxu0 0
        %1419 = vmatprep.subr.bf16.mxu0 0
        %1420 = vmatpush1.bf16.xpose.msra.mxu0 0
        %1421 = vmatprep.subr.bf16.mxu0 0
        %1422 = vmatpush1.bf16.xpose.msra.mxu0 0
        %1423 = vmatprep.subr.bf16.mxu0 0
        %1424 = vmatpush1.bf16.xpose.msra.mxu0 0
        %1425 = vmatprep.subr.bf16.mxu0 0
        %1426 = vmatpush1.bf16.xpose.msra.mxu0 0
        %1427 = vmatprep.subr.bf16.mxu0 0
        %1428 = vmatpush1.bf16.xpose.msra.mxu0 0
        %1429 = vmatprep.subr.bf16.mxu0 0
        %1430 = vmatpush1.bf16.xpose.msra.mxu0 0
        %1431 = vmatprep.subr.bf16.mxu0 0
        %1432 = vmatpush1.bf16.xpose.msra.mxu0 0
        %1433 = vmatprep.subr.bf16.mxu0 0
        %1434 = vmatpush1.bf16.xpose.msra.mxu0 0
        %1435 = vmatprep.subr.bf16.mxu0 0
        %1436 = vmatpush1.bf16.xpose.msra.mxu0 0
        %1437 = vmatprep.subr.bf16.mxu0 0
        %1438 = vmatpush1.bf16.xpose.msra.mxu0 0
        %1439 = vmatprep.mubr.bf16.mxu0 0
        %1440 = vmatmul.mubr.bf16.gmra.mrb[0].mxu0 %v1384
        %v1441 = vpop.f32.mrb[0].mxu0
        %v1442 = vadd.f32 %v1362, %v1441
        %v1443 = vpop.f32.mrb[0].mxu0
        %v1444 = vpop.f32.mrb[0].mxu0
        %v1445 = vadd.f32 %v1363, %v1444
        %v1446 = vpop.f32.mrb[0].mxu0
        %1447 = vmatprep.mubr.bf16.mxu0 0
        %1448 = vmatmul.mubr.bf16.gmra.mrb[0].mxu0 %v1387
        %v1449 = vpop.f32.mrb[0].mxu0
        %v1450 = vadd.f32 %v1364, %v1449
        %v1451 = vpop.f32.mrb[0].mxu0
        %v1452 = vpop.f32.mrb[0].mxu0
        %v1453 = vadd.f32 %v1365, %v1452
        %v1454 = vpop.f32.mrb[0].mxu0
        %1455 = vmatprep.mubr.bf16.mxu0 0
        %1456 = vmatmul.mubr.bf16.gmra.mrb[0].mxu0 %v1390
        %v1457 = vpop.f32.mrb[0].mxu0
        %v1458 = vadd.f32 %v1366, %v1457
        %v1459 = vpop.f32.mrb[0].mxu0
        %v1460 = vpop.f32.mrb[0].mxu0
        %v1461 = vadd.f32 %v1367, %v1460
        %v1462 = vpop.f32.mrb[0].mxu0
        %1463 = vmatprep.mubr.bf16.mxu0 0
        %1464 = vmatmul.mubr.bf16.gmra.mrb[0].mxu0 %v1393
        %v1465 = vpop.f32.mrb[0].mxu0
        %v1466 = vadd.f32 %v1368, %v1465
        %v1467 = vpop.f32.mrb[0].mxu0
        %v1468 = vpop.f32.mrb[0].mxu0
        %v1469 = vadd.f32 %v1369, %v1468
        %v1470 = vpop.f32.mrb[0].mxu0
        %1471 = vdwg.mxu0
        %1476 = vrot.lane.b32.xlu0 %v1350, 96
        %v1477 = vpop.permute.xlu0 %1476
        %1478 = vrot.lane.b32.xlu0 %v1351, 96
        %v1479 = vpop.permute.xlu0 %1478
        %1480 = vrot.lane.b32.xlu0 %v1352, 96
        %v1481 = vpop.permute.xlu0 %1480
        %1482 = vrot.lane.b32.xlu0 %v1353, 96
        %v1483 = vpop.permute.xlu0 %1482
        %v1485 = vsel %vm1382, %v1334, 0
        %v1488 = vsel %vm1382, %v1335, 0
        %v1491 = vsel %vm1382, %v1336, 0
        %v1494 = vsel %vm1382, %v1337, 0
        %v1497 = vsel %vm1382, %v1477, 0
        %v1500 = vsel %vm1382, %v1479, 0
        %v1503 = vsel %vm1382, %v1481, 0
        %v1506 = vsel %vm1382, %v1483, 0
        %1508 = vmatprep.subr.bf16.mxu0 0
        %1509 = vmatpush1.bf16.xpose.msra.mxu0 %v1497
        %1510 = vmatprep.subr.bf16.mxu0 0
        %1511 = vmatpush1.bf16.xpose.msra.mxu0 %v1500
        %1512 = vmatprep.subr.bf16.mxu0 0
        %1513 = vmatpush1.bf16.xpose.msra.mxu0 %v1503
        %1514 = vmatprep.subr.bf16.mxu0 0
        %1515 = vmatpush1.bf16.xpose.msra.mxu0 %v1506
        %1516 = vmatprep.subr.bf16.mxu0 0
        %1517 = vmatpush1.bf16.xpose.msra.mxu0 0
        %1518 = vmatprep.subr.bf16.mxu0 0
        %1519 = vmatpush1.bf16.xpose.msra.mxu0 0
        %1520 = vmatprep.subr.bf16.mxu0 0
        %1521 = vmatpush1.bf16.xpose.msra.mxu0 0
        %1522 = vmatprep.subr.bf16.mxu0 0
        %1523 = vmatpush1.bf16.xpose.msra.mxu0 0
        %1524 = vmatprep.subr.bf16.mxu0 0
        %1525 = vmatpush1.bf16.xpose.msra.mxu0 0
        %1526 = vmatprep.subr.bf16.mxu0 0
        %1527 = vmatpush1.bf16.xpose.msra.mxu0 0
        %1528 = vmatprep.subr.bf16.mxu0 0
        %1529 = vmatpush1.bf16.xpose.msra.mxu0 0
        %1530 = vmatprep.subr.bf16.mxu0 0
        %1531 = vmatpush1.bf16.xpose.msra.mxu0 0
        %1532 = vmatprep.subr.bf16.mxu0 0
        %1533 = vmatpush1.bf16.xpose.msra.mxu0 0
        %1534 = vmatprep.subr.bf16.mxu0 0
        %1535 = vmatpush1.bf16.xpose.msra.mxu0 0
        %1536 = vmatprep.subr.bf16.mxu0 0
        %1537 = vmatpush1.bf16.xpose.msra.mxu0 0
        %1538 = vmatprep.subr.bf16.mxu0 0
        %1539 = vmatpush1.bf16.xpose.msra.mxu0 0
        %1540 = vmatprep.mubr.bf16.mxu0 0
        %1541 = vmatmul.mubr.bf16.gmra.mrb[0].mxu0 %v1485
        %v1542 = vpop.f32.mrb[0].mxu0
        %v1543 = vadd.f32 %v1362, %v1542
        %v1544 = vpop.f32.mrb[0].mxu0
        %v1545 = vpop.f32.mrb[0].mxu0
        %v1546 = vadd.f32 %v1363, %v1545
        %v1547 = vpop.f32.mrb[0].mxu0
        %1548 = vmatprep.mubr.bf16.mxu0 0
        %1549 = vmatmul.mubr.bf16.gmra.mrb[0].mxu0 %v1488
        %v1550 = vpop.f32.mrb[0].mxu0
        %v1551 = vadd.f32 %v1364, %v1550
        %v1552 = vpop.f32.mrb[0].mxu0
        %v1553 = vpop.f32.mrb[0].mxu0
        %v1554 = vadd.f32 %v1365, %v1553
        %v1555 = vpop.f32.mrb[0].mxu0
        %1556 = vmatprep.mubr.bf16.mxu0 0
        %1557 = vmatmul.mubr.bf16.gmra.mrb[0].mxu0 %v1491
        %v1558 = vpop.f32.mrb[0].mxu0
        %v1559 = vadd.f32 %v1366, %v1558
        %v1560 = vpop.f32.mrb[0].mxu0
        %v1561 = vpop.f32.mrb[0].mxu0
        %v1562 = vadd.f32 %v1367, %v1561
        %v1563 = vpop.f32.mrb[0].mxu0
        %1564 = vmatprep.mubr.bf16.mxu0 0
        %1565 = vmatmul.mubr.bf16.gmra.mrb[0].mxu0 %v1494
        %v1566 = vpop.f32.mrb[0].mxu0
        %v1567 = vadd.f32 %v1368, %v1566
        %v1568 = vpop.f32.mrb[0].mxu0
        %v1569 = vpop.f32.mrb[0].mxu0
        %v1570 = vadd.f32 %v1369, %v1569
        %v1571 = vpop.f32.mrb[0].mxu0
        %1572 = vdwg.mxu0
        %1577 = vrot.lane.b32.xlu0 %v1354, 96
        %v1578 = vpop.permute.xlu0 %1577
        %1579 = vrot.lane.b32.xlu0 %v1355, 96
        %v1580 = vpop.permute.xlu0 %1579
        %1581 = vrot.lane.b32.xlu0 %v1356, 96
        %v1582 = vpop.permute.xlu0 %1581
        %1583 = vrot.lane.b32.xlu0 %v1357, 96
        %v1584 = vpop.permute.xlu0 %1583
        %v1586 = vsel %vm1382, %v1338, 0
        %v1589 = vsel %vm1382, %v1339, 0
        %v1592 = vsel %vm1382, %v1340, 0
        %v1595 = vsel %vm1382, %v1341, 0
        %v1598 = vsel %vm1382, %v1578, 0
        %v1601 = vsel %vm1382, %v1580, 0
        %v1604 = vsel %vm1382, %v1582, 0
        %v1607 = vsel %vm1382, %v1584, 0
        %1609 = vmatprep.subr.bf16.mxu0 0
        %1610 = vmatpush1.bf16.xpose.msra.mxu0 %v1598
        %1611 = vmatprep.subr.bf16.mxu0 0
        %1612 = vmatpush1.bf16.xpose.msra.mxu0 %v1601
        %1613 = vmatprep.subr.bf16.mxu0 0
        %1614 = vmatpush1.bf16.xpose.msra.mxu0 %v1604
        %1615 = vmatprep.subr.bf16.mxu0 0
        %1616 = vmatpush1.bf16.xpose.msra.mxu0 %v1607
        %1617 = vmatprep.subr.bf16.mxu0 0
        %1618 = vmatpush1.bf16.xpose.msra.mxu0 0
        %1619 = vmatprep.subr.bf16.mxu0 0
        %1620 = vmatpush1.bf16.xpose.msra.mxu0 0
        %1621 = vmatprep.subr.bf16.mxu0 0
        %1622 = vmatpush1.bf16.xpose.msra.mxu0 0
        %1623 = vmatprep.subr.bf16.mxu0 0
        %1624 = vmatpush1.bf16.xpose.msra.mxu0 0
        %1625 = vmatprep.subr.bf16.mxu0 0
        %1626 = vmatpush1.bf16.xpose.msra.mxu0 0
        %1627 = vmatprep.subr.bf16.mxu0 0
        %1628 = vmatpush1.bf16.xpose.msra.mxu0 0
        %1629 = vmatprep.subr.bf16.mxu0 0
        %1630 = vmatpush1.bf16.xpose.msra.mxu0 0
        %1631 = vmatprep.subr.bf16.mxu0 0
        %1632 = vmatpush1.bf16.xpose.msra.mxu0 0
        %1633 = vmatprep.subr.bf16.mxu0 0
        %1634 = vmatpush1.bf16.xpose.msra.mxu0 0
        %1635 = vmatprep.subr.bf16.mxu0 0
        %1636 = vmatpush1.bf16.xpose.msra.mxu0 0
        %1637 = vmatprep.subr.bf16.mxu0 0
        %1638 = vmatpush1.bf16.xpose.msra.mxu0 0
        %1639 = vmatprep.subr.bf16.mxu0 0
        %1640 = vmatpush1.bf16.xpose.msra.mxu0 0
        %1641 = vmatprep.mubr.bf16.mxu0 0
        %1642 = vmatmul.mubr.bf16.gmra.mrb[0].mxu0 %v1586
        %v1643 = vpop.f32.mrb[0].mxu0
        %v1644 = vadd.f32 %v1362, %v1643
        %v1645 = vpop.f32.mrb[0].mxu0
        %v1646 = vpop.f32.mrb[0].mxu0
        %v1647 = vadd.f32 %v1363, %v1646
        %v1648 = vpop.f32.mrb[0].mxu0
        %1649 = vmatprep.mubr.bf16.mxu0 0
        %1650 = vmatmul.mubr.bf16.gmra.mrb[0].mxu0 %v1589
        %v1651 = vpop.f32.mrb[0].mxu0
        %v1652 = vadd.f32 %v1364, %v1651
        %v1653 = vpop.f32.mrb[0].mxu0
        %v1654 = vpop.f32.mrb[0].mxu0
        %v1655 = vadd.f32 %v1365, %v1654
        %v1656 = vpop.f32.mrb[0].mxu0
        %1657 = vmatprep.mubr.bf16.mxu0 0
        %1658 = vmatmul.mubr.bf16.gmra.mrb[0].mxu0 %v1592
        %v1659 = vpop.f32.mrb[0].mxu0
        %v1660 = vadd.f32 %v1366, %v1659
        %v1661 = vpop.f32.mrb[0].mxu0
        %v1662 = vpop.f32.mrb[0].mxu0
        %v1663 = vadd.f32 %v1367, %v1662
        %v1664 = vpop.f32.mrb[0].mxu0
        %1665 = vmatprep.mubr.bf16.mxu0 0
        %1666 = vmatmul.mubr.bf16.gmra.mrb[0].mxu0 %v1595
        %v1667 = vpop.f32.mrb[0].mxu0
        %v1668 = vadd.f32 %v1368, %v1667
        %v1669 = vpop.f32.mrb[0].mxu0
        %v1670 = vpop.f32.mrb[0].mxu0
        %v1671 = vadd.f32 %v1369, %v1670
        %v1672 = vpop.f32.mrb[0].mxu0
        %1673 = vdwg.mxu0
        %1678 = vrot.lane.b32.xlu0 %v1358, 96
        %v1679 = vpop.permute.xlu0 %1678
        %1680 = vrot.lane.b32.xlu0 %v1359, 96
        %v1681 = vpop.permute.xlu0 %1680
        %1682 = vrot.lane.b32.xlu0 %v1360, 96
        %v1683 = vpop.permute.xlu0 %1682
        %1684 = vrot.lane.b32.xlu0 %v1361, 96
        %v1685 = vpop.permute.xlu0 %1684
        %v1687 = vsel %vm1382, %v1342, 0
        %v1690 = vsel %vm1382, %v1343, 0
        %v1693 = vsel %vm1382, %v1344, 0
        %v1696 = vsel %vm1382, %v1345, 0
        %v1699 = vsel %vm1382, %v1679, 0
        %v1702 = vsel %vm1382, %v1681, 0
        %v1705 = vsel %vm1382, %v1683, 0
        %v1708 = vsel %vm1382, %v1685, 0
        %1710 = vmatprep.subr.bf16.mxu0 0
        %1711 = vmatpush1.bf16.xpose.msra.mxu0 %v1699
        %1712 = vmatprep.subr.bf16.mxu0 0
        %1713 = vmatpush1.bf16.xpose.msra.mxu0 %v1702
        %1714 = vmatprep.subr.bf16.mxu0 0
        %1715 = vmatpush1.bf16.xpose.msra.mxu0 %v1705
        %1716 = vmatprep.subr.bf16.mxu0 0
        %1717 = vmatpush1.bf16.xpose.msra.mxu0 %v1708
        %1718 = vmatprep.subr.bf16.mxu0 0
        %1719 = vmatpush1.bf16.xpose.msra.mxu0 0
        %1720 = vmatprep.subr.bf16.mxu0 0
        %1721 = vmatpush1.bf16.xpose.msra.mxu0 0
        %1722 = vmatprep.subr.bf16.mxu0 0
        %1723 = vmatpush1.bf16.xpose.msra.mxu0 0
        %1724 = vmatprep.subr.bf16.mxu0 0
        %1725 = vmatpush1.bf16.xpose.msra.mxu0 0
        %1726 = vmatprep.subr.bf16.mxu0 0
        %1727 = vmatpush1.bf16.xpose.msra.mxu0 0
        %1728 = vmatprep.subr.bf16.mxu0 0
        %1729 = vmatpush1.bf16.xpose.msra.mxu0 0
        %1730 = vmatprep.subr.bf16.mxu0 0
        %1731 = vmatpush1.bf16.xpose.msra.mxu0 0
        %1732 = vmatprep.subr.bf16.mxu0 0
        %1733 = vmatpush1.bf16.xpose.msra.mxu0 0
        %1734 = vmatprep.subr.bf16.mxu0 0
        %1735 = vmatpush1.bf16.xpose.msra.mxu0 0
        %1736 = vmatprep.subr.bf16.mxu0 0
        %1737 = vmatpush1.bf16.xpose.msra.mxu0 0
        %1738 = vmatprep.subr.bf16.mxu0 0
        %1739 = vmatpush1.bf16.xpose.msra.mxu0 0
        %1740 = vmatprep.subr.bf16.mxu0 0
        %1741 = vmatpush1.bf16.xpose.msra.mxu0 0
        %1742 = vmatprep.mubr.bf16.mxu0 0
        %1743 = vmatmul.mubr.bf16.gmra.mrb[0].mxu0 %v1687
        %v1744 = vpop.f32.mrb[0].mxu0
        %v1745 = vadd.f32 %v1362, %v1744
        %v1746 = vpop.f32.mrb[0].mxu0
        %v1747 = vpop.f32.mrb[0].mxu0
        %v1748 = vadd.f32 %v1363, %v1747
        %v1749 = vpop.f32.mrb[0].mxu0
        %1750 = vmatprep.mubr.bf16.mxu0 0
        %1751 = vmatmul.mubr.bf16.gmra.mrb[0].mxu0 %v1690
        %v1752 = vpop.f32.mrb[0].mxu0
        %v1753 = vadd.f32 %v1364, %v1752
        %v1754 = vpop.f32.mrb[0].mxu0
        %v1755 = vpop.f32.mrb[0].mxu0
        %v1756 = vadd.f32 %v1365, %v1755
        %v1757 = vpop.f32.mrb[0].mxu0
        %1758 = vmatprep.mubr.bf16.mxu0 0
        %1759 = vmatmul.mubr.bf16.gmra.mrb[0].mxu0 %v1693
        %v1760 = vpop.f32.mrb[0].mxu0
        %v1761 = vadd.f32 %v1366, %v1760
        %v1762 = vpop.f32.mrb[0].mxu0
        %v1763 = vpop.f32.mrb[0].mxu0
        %v1764 = vadd.f32 %v1367, %v1763
        %v1765 = vpop.f32.mrb[0].mxu0
        %1766 = vmatprep.mubr.bf16.mxu0 0
        %1767 = vmatmul.mubr.bf16.gmra.mrb[0].mxu0 %v1696
        %v1768 = vpop.f32.mrb[0].mxu0
        %v1769 = vadd.f32 %v1368, %v1768
        %v1770 = vpop.f32.mrb[0].mxu0
        %v1771 = vpop.f32.mrb[0].mxu0
        %v1772 = vadd.f32 %v1369, %v1771
        %v1773 = vpop.f32.mrb[0].mxu0
        %1774 = vdwg.mxu0
        %vm1775 = vcmask 523264
        %v1776 = vsel %vm1775, %v1442, -inf
        %1777 = vmax.xlane.f32.xlu0 %v1776
        %v1778 = vpop.xlane.xlu0 %1777
        %v1779 = vsel %vm1775, %v1445, -inf
        %1780 = vmax.xlane.f32.xlu0 %v1779
        %v1781 = vpop.xlane.xlu0 %1780
        %v1782 = vsel %vm1775, %v1450, -inf
        %1783 = vmax.xlane.f32.xlu0 %v1782
        %v1784 = vpop.xlane.xlu0 %1783
        %v1785 = vsel %vm1775, %v1453, -inf
        %1786 = vmax.xlane.f32.xlu0 %v1785
        %v1787 = vpop.xlane.xlu0 %1786
        %v1788 = vsel %vm1775, %v1458, -inf
        %1789 = vmax.xlane.f32.xlu0 %v1788
        %v1790 = vpop.xlane.xlu0 %1789
        %v1791 = vsel %vm1775, %v1461, -inf
        %1792 = vmax.xlane.f32.xlu0 %v1791
        %v1793 = vpop.xlane.xlu0 %1792
        %v1794 = vsel %vm1775, %v1466, -inf
        %1795 = vmax.xlane.f32.xlu0 %v1794
        %v1796 = vpop.xlane.xlu0 %1795
        %v1797 = vsel %vm1775, %v1469, -inf
        %1798 = vmax.xlane.f32.xlu0 %v1797
        %v1799 = vpop.xlane.xlu0 %1798
        %v1800 = vsel %vm1775, %v1543, -inf
        %1801 = vmax.xlane.f32.xlu0 %v1800
        %v1802 = vpop.xlane.xlu0 %1801
        %v1803 = vsel %vm1775, %v1546, -inf
        %1804 = vmax.xlane.f32.xlu0 %v1803
        %v1805 = vpop.xlane.xlu0 %1804
        %v1806 = vsel %vm1775, %v1551, -inf
        %1807 = vmax.xlane.f32.xlu0 %v1806
        %v1808 = vpop.xlane.xlu0 %1807
        %v1809 = vsel %vm1775, %v1554, -inf
        %1810 = vmax.xlane.f32.xlu0 %v1809
        %v1811 = vpop.xlane.xlu0 %1810
        %v1812 = vsel %vm1775, %v1559, -inf
        %1813 = vmax.xlane.f32.xlu0 %v1812
        %v1814 = vpop.xlane.xlu0 %1813
        %v1815 = vsel %vm1775, %v1562, -inf
        %1816 = vmax.xlane.f32.xlu0 %v1815
        %v1817 = vpop.xlane.xlu0 %1816
        %v1818 = vsel %vm1775, %v1567, -inf
        %1819 = vmax.xlane.f32.xlu0 %v1818
        %v1820 = vpop.xlane.xlu0 %1819
        %v1821 = vsel %vm1775, %v1570, -inf
        %1822 = vmax.xlane.f32.xlu0 %v1821
        %v1823 = vpop.xlane.xlu0 %1822
        %v1824 = vsel %vm1775, %v1644, -inf
        %1825 = vmax.xlane.f32.xlu0 %v1824
        %v1826 = vpop.xlane.xlu0 %1825
        %v1827 = vsel %vm1775, %v1647, -inf
        %1828 = vmax.xlane.f32.xlu0 %v1827
        %v1829 = vpop.xlane.xlu0 %1828
        %v1830 = vsel %vm1775, %v1652, -inf
        %1831 = vmax.xlane.f32.xlu0 %v1830
        %v1832 = vpop.xlane.xlu0 %1831
        %v1833 = vsel %vm1775, %v1655, -inf
        %1834 = vmax.xlane.f32.xlu0 %v1833
        %v1835 = vpop.xlane.xlu0 %1834
        %v1836 = vsel %vm1775, %v1660, -inf
        %1837 = vmax.xlane.f32.xlu0 %v1836
        %v1838 = vpop.xlane.xlu0 %1837
        %v1839 = vsel %vm1775, %v1663, -inf
        %1840 = vmax.xlane.f32.xlu0 %v1839
        %v1841 = vpop.xlane.xlu0 %1840
        %v1842 = vsel %vm1775, %v1668, -inf
        %1843 = vmax.xlane.f32.xlu0 %v1842
        %v1844 = vpop.xlane.xlu0 %1843
        %v1845 = vsel %vm1775, %v1671, -inf
        %1846 = vmax.xlane.f32.xlu0 %v1845
        %v1847 = vpop.xlane.xlu0 %1846
        %v1848 = vsel %vm1775, %v1745, -inf
        %1849 = vmax.xlane.f32.xlu0 %v1848
        %v1850 = vpop.xlane.xlu0 %1849
        %v1851 = vsel %vm1775, %v1748, -inf
        %1852 = vmax.xlane.f32.xlu0 %v1851
        %v1853 = vpop.xlane.xlu0 %1852
        %v1854 = vsel %vm1775, %v1753, -inf
        %1855 = vmax.xlane.f32.xlu0 %v1854
        %v1856 = vpop.xlane.xlu0 %1855
        %v1857 = vsel %vm1775, %v1756, -inf
        %1858 = vmax.xlane.f32.xlu0 %v1857
        %v1859 = vpop.xlane.xlu0 %1858
        %v1860 = vsel %vm1775, %v1761, -inf
        %1861 = vmax.xlane.f32.xlu0 %v1860
        %v1862 = vpop.xlane.xlu0 %1861
        %v1863 = vsel %vm1775, %v1764, -inf
        %1864 = vmax.xlane.f32.xlu0 %v1863
        %v1865 = vpop.xlane.xlu0 %1864
        %v1866 = vsel %vm1775, %v1769, -inf
        %1867 = vmax.xlane.f32.xlu0 %v1866
        %v1868 = vpop.xlane.xlu0 %1867
        %v1869 = vsel %vm1775, %v1772, -inf
        %1870 = vmax.xlane.f32.xlu0 %v1869
        %v1871 = vpop.xlane.xlu0 %1870
        %v1872 = vsub.f32 %v1442, %v1778
        %v1873 = vsub.f32 %v1445, %v1781
        %v1874 = vsub.f32 %v1450, %v1784
        %v1875 = vsub.f32 %v1453, %v1787
        %v1876 = vsub.f32 %v1458, %v1790
        %v1877 = vsub.f32 %v1461, %v1793
        %v1878 = vsub.f32 %v1466, %v1796
        %v1879 = vsub.f32 %v1469, %v1799
        %v1880 = vsub.f32 %v1543, %v1802
        %v1881 = vsub.f32 %v1546, %v1805
        %v1882 = vsub.f32 %v1551, %v1808
        %v1883 = vsub.f32 %v1554, %v1811
        %v1884 = vsub.f32 %v1559, %v1814
        %v1885 = vsub.f32 %v1562, %v1817
        %v1886 = vsub.f32 %v1567, %v1820
        %v1887 = vsub.f32 %v1570, %v1823
        %v1888 = vsub.f32 %v1644, %v1826
        %v1889 = vsub.f32 %v1647, %v1829
        %v1890 = vsub.f32 %v1652, %v1832
        %v1891 = vsub.f32 %v1655, %v1835
        %v1892 = vsub.f32 %v1660, %v1838
        %v1893 = vsub.f32 %v1663, %v1841
        %v1894 = vsub.f32 %v1668, %v1844
        %v1895 = vsub.f32 %v1671, %v1847
        %v1896 = vsub.f32 %v1745, %v1850
        %v1897 = vsub.f32 %v1748, %v1853
        %v1898 = vsub.f32 %v1753, %v1856
        %v1899 = vsub.f32 %v1756, %v1859
        %v1900 = vsub.f32 %v1761, %v1862
        %v1901 = vsub.f32 %v1764, %v1865
        %v1902 = vsub.f32 %v1769, %v1868
        %v1903 = vsub.f32 %v1772, %v1871
        %v1904 = vmul.f32 %v1872, 1.442695
        %v1905 = vpow.pop %v1904
        %v1906 = vmul.f32 %v1873, 1.442695
        %v1907 = vpow.pop %v1906
        %v1908 = vmul.f32 %v1874, 1.442695
        %v1909 = vpow.pop %v1908
        %v1910 = vmul.f32 %v1875, 1.442695
        %v1911 = vpow.pop %v1910
        %v1912 = vmul.f32 %v1876, 1.442695
        %v1913 = vpow.pop %v1912
        %v1914 = vmul.f32 %v1877, 1.442695
        %v1915 = vpow.pop %v1914
        %v1916 = vmul.f32 %v1878, 1.442695
        %v1917 = vpow.pop %v1916
        %v1918 = vmul.f32 %v1879, 1.442695
        %v1919 = vpow.pop %v1918
        %v1920 = vmul.f32 %v1880, 1.442695
        %v1921 = vpow.pop %v1920
        %v1922 = vmul.f32 %v1881, 1.442695
        %v1923 = vpow.pop %v1922
        %v1924 = vmul.f32 %v1882, 1.442695
        %v1925 = vpow.pop %v1924
        %v1926 = vmul.f32 %v1883, 1.442695
        %v1927 = vpow.pop %v1926
        %v1928 = vmul.f32 %v1884, 1.442695
        %v1929 = vpow.pop %v1928
        %v1930 = vmul.f32 %v1885, 1.442695
        %v1931 = vpow.pop %v1930
        %v1932 = vmul.f32 %v1886, 1.442695
        %v1933 = vpow.pop %v1932
        %v1934 = vmul.f32 %v1887, 1.442695
        %v1935 = vpow.pop %v1934
        %v1936 = vmul.f32 %v1888, 1.442695
        %v1937 = vpow.pop %v1936
        %v1938 = vmul.f32 %v1889, 1.442695
        %v1939 = vpow.pop %v1938
        %v1940 = vmul.f32 %v1890, 1.442695
        %v1941 = vpow.pop %v1940
        %v1942 = vmul.f32 %v1891, 1.442695
        %v1943 = vpow.pop %v1942
        %v1944 = vmul.f32 %v1892, 1.442695
        %v1945 = vpow.pop %v1944
        %v1946 = vmul.f32 %v1893, 1.442695
        %v1947 = vpow.pop %v1946
        %v1948 = vmul.f32 %v1894, 1.442695
        %v1949 = vpow.pop %v1948
        %v1950 = vmul.f32 %v1895, 1.442695
        %v1951 = vpow.pop %v1950
        %v1952 = vmul.f32 %v1896, 1.442695
        %v1953 = vpow.pop %v1952
        %v1954 = vmul.f32 %v1897, 1.442695
        %v1955 = vpow.pop %v1954
        %v1956 = vmul.f32 %v1898, 1.442695
        %v1957 = vpow.pop %v1956
        %v1958 = vmul.f32 %v1899, 1.442695
        %v1959 = vpow.pop %v1958
        %v1960 = vmul.f32 %v1900, 1.442695
        %v1961 = vpow.pop %v1960
        %v1962 = vmul.f32 %v1901, 1.442695
        %v1963 = vpow.pop %v1962
        %v1964 = vmul.f32 %v1902, 1.442695
        %v1965 = vpow.pop %v1964
        %v1966 = vmul.f32 %v1903, 1.442695
        %v1967 = vpow.pop %v1966
        %v1968 = vsel %vm1775, %v1905, 0.0
        %1969 = vadd.xlane.f32.xlu0 %v1968
        %v1970 = vpop.xlane.xlu0 %1969
        %v1971 = vsel %vm1775, %v1907, 0.0
        %1972 = vadd.xlane.f32.xlu0 %v1971
        %v1973 = vpop.xlane.xlu0 %1972
        %v1974 = vsel %vm1775, %v1909, 0.0
        %1975 = vadd.xlane.f32.xlu0 %v1974
        %v1976 = vpop.xlane.xlu0 %1975
        %v1977 = vsel %vm1775, %v1911, 0.0
        %1978 = vadd.xlane.f32.xlu0 %v1977
        %v1979 = vpop.xlane.xlu0 %1978
        %v1980 = vsel %vm1775, %v1913, 0.0
        %1981 = vadd.xlane.f32.xlu0 %v1980
        %v1982 = vpop.xlane.xlu0 %1981
        %v1983 = vsel %vm1775, %v1915, 0.0
        %1984 = vadd.xlane.f32.xlu0 %v1983
        %v1985 = vpop.xlane.xlu0 %1984
        %v1986 = vsel %vm1775, %v1917, 0.0
        %1987 = vadd.xlane.f32.xlu0 %v1986
        %v1988 = vpop.xlane.xlu0 %1987
        %v1989 = vsel %vm1775, %v1919, 0.0
        %1990 = vadd.xlane.f32.xlu0 %v1989
        %v1991 = vpop.xlane.xlu0 %1990
        %v1992 = vsel %vm1775, %v1921, 0.0
        %1993 = vadd.xlane.f32.xlu0 %v1992
        %v1994 = vpop.xlane.xlu0 %1993
        %v1995 = vsel %vm1775, %v1923, 0.0
        %1996 = vadd.xlane.f32.xlu0 %v1995
        %v1997 = vpop.xlane.xlu0 %1996
        %v1998 = vsel %vm1775, %v1925, 0.0
        %1999 = vadd.xlane.f32.xlu0 %v1998
        %v2000 = vpop.xlane.xlu0 %1999
        %v2001 = vsel %vm1775, %v1927, 0.0
        %2002 = vadd.xlane.f32.xlu0 %v2001
        %v2003 = vpop.xlane.xlu0 %2002
        %v2004 = vsel %vm1775, %v1929, 0.0
        %2005 = vadd.xlane.f32.xlu0 %v2004
        %v2006 = vpop.xlane.xlu0 %2005
        %v2007 = vsel %vm1775, %v1931, 0.0
        %2008 = vadd.xlane.f32.xlu0 %v2007
        %v2009 = vpop.xlane.xlu0 %2008
        %v2010 = vsel %vm1775, %v1933, 0.0
        %2011 = vadd.xlane.f32.xlu0 %v2010
        %v2012 = vpop.xlane.xlu0 %2011
        %v2013 = vsel %vm1775, %v1935, 0.0
        %2014 = vadd.xlane.f32.xlu0 %v2013
        %v2015 = vpop.xlane.xlu0 %2014
        %v2016 = vsel %vm1775, %v1937, 0.0
        %2017 = vadd.xlane.f32.xlu0 %v2016
        %v2018 = vpop.xlane.xlu0 %2017
        %v2019 = vsel %vm1775, %v1939, 0.0
        %2020 = vadd.xlane.f32.xlu0 %v2019
        %v2021 = vpop.xlane.xlu0 %2020
        %v2022 = vsel %vm1775, %v1941, 0.0
        %2023 = vadd.xlane.f32.xlu0 %v2022
        %v2024 = vpop.xlane.xlu0 %2023
        %v2025 = vsel %vm1775, %v1943, 0.0
        %2026 = vadd.xlane.f32.xlu0 %v2025
        %v2027 = vpop.xlane.xlu0 %2026
        %v2028 = vsel %vm1775, %v1945, 0.0
        %2029 = vadd.xlane.f32.xlu0 %v2028
        %v2030 = vpop.xlane.xlu0 %2029
        %v2031 = vsel %vm1775, %v1947, 0.0
        %2032 = vadd.xlane.f32.xlu0 %v2031
        %v2033 = vpop.xlane.xlu0 %2032
        %v2034 = vsel %vm1775, %v1949, 0.0
        %2035 = vadd.xlane.f32.xlu0 %v2034
        %v2036 = vpop.xlane.xlu0 %2035
        %v2037 = vsel %vm1775, %v1951, 0.0
        %2038 = vadd.xlane.f32.xlu0 %v2037
        %v2039 = vpop.xlane.xlu0 %2038
        %v2040 = vsel %vm1775, %v1953, 0.0
        %2041 = vadd.xlane.f32.xlu0 %v2040
        %v2042 = vpop.xlane.xlu0 %2041
        %v2043 = vsel %vm1775, %v1955, 0.0
        %2044 = vadd.xlane.f32.xlu0 %v2043
        %v2045 = vpop.xlane.xlu0 %2044
        %v2046 = vsel %vm1775, %v1957, 0.0
        %2047 = vadd.xlane.f32.xlu0 %v2046
        %v2048 = vpop.xlane.xlu0 %2047
        %v2049 = vsel %vm1775, %v1959, 0.0
        %2050 = vadd.xlane.f32.xlu0 %v2049
        %v2051 = vpop.xlane.xlu0 %2050
        %v2052 = vsel %vm1775, %v1961, 0.0
        %2053 = vadd.xlane.f32.xlu0 %v2052
        %v2054 = vpop.xlane.xlu0 %2053
        %v2055 = vsel %vm1775, %v1963, 0.0
        %2056 = vadd.xlane.f32.xlu0 %v2055
        %v2057 = vpop.xlane.xlu0 %2056
        %v2058 = vsel %vm1775, %v1965, 0.0
        %2059 = vadd.xlane.f32.xlu0 %v2058
        %v2060 = vpop.xlane.xlu0 %2059
        %v2061 = vsel %vm1775, %v1967, 0.0
        %2062 = vadd.xlane.f32.xlu0 %v2061
        %v2063 = vpop.xlane.xlu0 %2062
        %v2064 = vrcp.pop %v1970
        %v2065 = vrcp.pop %v1973
        %v2066 = vrcp.pop %v1976
        %v2067 = vrcp.pop %v1979
        %v2068 = vrcp.pop %v1982
        %v2069 = vrcp.pop %v1985
        %v2070 = vrcp.pop %v1988
        %v2071 = vrcp.pop %v1991
        %v2072 = vrcp.pop %v1994
        %v2073 = vrcp.pop %v1997
        %v2074 = vrcp.pop %v2000
        %v2075 = vrcp.pop %v2003
        %v2076 = vrcp.pop %v2006
        %v2077 = vrcp.pop %v2009
        %v2078 = vrcp.pop %v2012
        %v2079 = vrcp.pop %v2015
        %v2080 = vrcp.pop %v2018
        %v2081 = vrcp.pop %v2021
        %v2082 = vrcp.pop %v2024
        %v2083 = vrcp.pop %v2027
        %v2084 = vrcp.pop %v2030
        %v2085 = vrcp.pop %v2033
        %v2086 = vrcp.pop %v2036
        %v2087 = vrcp.pop %v2039
        %v2088 = vrcp.pop %v2042
        %v2089 = vrcp.pop %v2045
        %v2090 = vrcp.pop %v2048
        %v2091 = vrcp.pop %v2051
        %v2092 = vrcp.pop %v2054
        %v2093 = vrcp.pop %v2057
        %v2094 = vrcp.pop %v2060
        %v2095 = vrcp.pop %v2063
        %v2096 = vmul.f32 %v1905, %v2064
        %v2097 = vmul.f32 %v1907, %v2065
        %v2098 = vmul.f32 %v1909, %v2066
        %v2099 = vmul.f32 %v1911, %v2067
        %v2100 = vmul.f32 %v1913, %v2068
        %v2101 = vmul.f32 %v1915, %v2069
        %v2102 = vmul.f32 %v1917, %v2070
        %v2103 = vmul.f32 %v1919, %v2071
        %v2104 = vmul.f32 %v1921, %v2072
        %v2105 = vmul.f32 %v1923, %v2073
        %v2106 = vmul.f32 %v1925, %v2074
        %v2107 = vmul.f32 %v1927, %v2075
        %v2108 = vmul.f32 %v1929, %v2076
        %v2109 = vmul.f32 %v1931, %v2077
        %v2110 = vmul.f32 %v1933, %v2078
        %v2111 = vmul.f32 %v1935, %v2079
        %v2112 = vmul.f32 %v1937, %v2080
        %v2113 = vmul.f32 %v1939, %v2081
        %v2114 = vmul.f32 %v1941, %v2082
        %v2115 = vmul.f32 %v1943, %v2083
        %v2116 = vmul.f32 %v1945, %v2084
        %v2117 = vmul.f32 %v1947, %v2085
        %v2118 = vmul.f32 %v1949, %v2086
        %v2119 = vmul.f32 %v1951, %v2087
        %v2120 = vmul.f32 %v1953, %v2088
        %v2121 = vmul.f32 %v1955, %v2089
        %v2122 = vmul.f32 %v1957, %v2090
        %v2123 = vmul.f32 %v1959, %v2091
        %v2124 = vmul.f32 %v1961, %v2092
        %v2125 = vmul.f32 %v1963, %v2093
        %v2126 = vmul.f32 %v1965, %v2094
        %v2127 = vmul.f32 %v1967, %v2095
        %v2128 = vpack.c.bf16 %v2097, %v2096
        %v2129 = vpack.c.bf16 %v2099, %v2098
        %v2130 = vpack.c.bf16 %v2101, %v2100
        %v2131 = vpack.c.bf16 %v2103, %v2102
        %v2132 = vpack.c.bf16 %v2105, %v2104
        %v2133 = vpack.c.bf16 %v2107, %v2106
        %v2134 = vpack.c.bf16 %v2109, %v2108
        %v2135 = vpack.c.bf16 %v2111, %v2110
        %v2136 = vpack.c.bf16 %v2113, %v2112
        %v2137 = vpack.c.bf16 %v2115, %v2114
        %v2138 = vpack.c.bf16 %v2117, %v2116
        %v2139 = vpack.c.bf16 %v2119, %v2118
        %v2140 = vpack.c.bf16 %v2121, %v2120
        %v2141 = vpack.c.bf16 %v2123, %v2122
        %v2142 = vpack.c.bf16 %v2125, %v2124
        %v2143 = vpack.c.bf16 %v2127, %v2126
        %2144 = vrot.lane.b32.xlu0 %v1346, 64
        %v2145 = vpop.permute.xlu0 %2144
        %2146 = vrot.lane.b32.xlu0 %v1347, 64
        %v2147 = vpop.permute.xlu0 %2146
        %2148 = vrot.lane.b32.xlu0 %v1348, 64
        %v2149 = vpop.permute.xlu0 %2148
        %2150 = vrot.lane.b32.xlu0 %v1349, 64
        %v2151 = vpop.permute.xlu0 %2150
        %v2157 = vsel %vm1775, %v2128, 0
        %v2160 = vsel %vm1775, %v2129, 0
        %v2163 = vsel %vm1775, %v2130, 0
        %v2166 = vsel %vm1775, %v2131, 0
        %2168 = vmatprep.subr.bf16.mxu0 0
        %2169 = vmatpush1.bf16.msra.mxu0 %v2145
        %2170 = vmatprep.subr.bf16.mxu0 0
        %2171 = vmatpush1.bf16.msra.mxu0 %v2147
        %2172 = vmatprep.subr.bf16.mxu0 0
        %2173 = vmatpush1.bf16.msra.mxu0 %v2149
        %2174 = vmatprep.subr.bf16.mxu0 0
        %2175 = vmatpush1.bf16.msra.mxu0 %v2151
        %2176 = vmatprep.subr.bf16.mxu0 0
        %2177 = vmatpush1.bf16.msra.mxu0 0
        %2178 = vmatprep.subr.bf16.mxu0 0
        %2179 = vmatpush1.bf16.msra.mxu0 0
        %2180 = vmatprep.subr.bf16.mxu0 0
        %2181 = vmatpush1.bf16.msra.mxu0 0
        %2182 = vmatprep.subr.bf16.mxu0 0
        %2183 = vmatpush1.bf16.msra.mxu0 0
        %2184 = vmatprep.subr.bf16.mxu0 0
        %2185 = vmatpush1.bf16.msra.mxu0 0
        %2186 = vmatprep.subr.bf16.mxu0 0
        %2187 = vmatpush1.bf16.msra.mxu0 0
        %2188 = vmatprep.subr.bf16.mxu0 0
        %2189 = vmatpush1.bf16.msra.mxu0 0
        %2190 = vmatprep.subr.bf16.mxu0 0
        %2191 = vmatpush1.bf16.msra.mxu0 0
        %2192 = vmatprep.subr.bf16.mxu0 0
        %2193 = vmatpush1.bf16.msra.mxu0 0
        %2194 = vmatprep.subr.bf16.mxu0 0
        %2195 = vmatpush1.bf16.msra.mxu0 0
        %2196 = vmatprep.subr.bf16.mxu0 0
        %2197 = vmatpush1.bf16.msra.mxu0 0
        %2198 = vmatprep.subr.bf16.mxu0 0
        %2199 = vmatpush1.bf16.msra.mxu0 0
        %2200 = vmatprep.mubr.bf16.mxu0 0
        %2201 = vmatmul.mubr.bf16.gmra.mrb[0].mxu0 %v2157
        %v2202 = vpop.f32.mrb[0].mxu0
        %v2203 = vadd.f32 0.0, %v2202
        %v2204 = vpop.f32.mrb[0].mxu0
        %v2205 = vpop.f32.mrb[0].mxu0
        %v2206 = vadd.f32 0.0, %v2205
        %v2207 = vpop.f32.mrb[0].mxu0
        %2208 = vmatprep.mubr.bf16.mxu0 0
        %2209 = vmatmul.mubr.bf16.gmra.mrb[0].mxu0 %v2160
        %v2210 = vpop.f32.mrb[0].mxu0
        %v2211 = vadd.f32 0.0, %v2210
        %v2212 = vpop.f32.mrb[0].mxu0
        %v2213 = vpop.f32.mrb[0].mxu0
        %v2214 = vadd.f32 0.0, %v2213
        %v2215 = vpop.f32.mrb[0].mxu0
        %2216 = vmatprep.mubr.bf16.mxu0 0
        %2217 = vmatmul.mubr.bf16.gmra.mrb[0].mxu0 %v2163
        %v2218 = vpop.f32.mrb[0].mxu0
        %v2219 = vadd.f32 0.0, %v2218
        %v2220 = vpop.f32.mrb[0].mxu0
        %v2221 = vpop.f32.mrb[0].mxu0
        %v2222 = vadd.f32 0.0, %v2221
        %v2223 = vpop.f32.mrb[0].mxu0
        %2224 = vmatprep.mubr.bf16.mxu0 0
        %2225 = vmatmul.mubr.bf16.gmra.mrb[0].mxu0 %v2166
        %v2226 = vpop.f32.mrb[0].mxu0
        %v2227 = vadd.f32 0.0, %v2226
        %v2228 = vpop.f32.mrb[0].mxu0
        %v2229 = vpop.f32.mrb[0].mxu0
        %v2230 = vadd.f32 0.0, %v2229
        %v2231 = vpop.f32.mrb[0].mxu0
        %2232 = vdwg.mxu0
        %2233 = vrot.lane.b32.xlu0 %v1350, 64
        %v2234 = vpop.permute.xlu0 %2233
        %2235 = vrot.lane.b32.xlu0 %v1351, 64
        %v2236 = vpop.permute.xlu0 %2235
        %2237 = vrot.lane.b32.xlu0 %v1352, 64
        %v2238 = vpop.permute.xlu0 %2237
        %2239 = vrot.lane.b32.xlu0 %v1353, 64
        %v2240 = vpop.permute.xlu0 %2239
        %v2246 = vsel %vm1775, %v2132, 0
        %v2249 = vsel %vm1775, %v2133, 0
        %v2252 = vsel %vm1775, %v2134, 0
        %v2255 = vsel %vm1775, %v2135, 0
        %2257 = vmatprep.subr.bf16.mxu0 0
        %2258 = vmatpush1.bf16.msra.mxu0 %v2234
        %2259 = vmatprep.subr.bf16.mxu0 0
        %2260 = vmatpush1.bf16.msra.mxu0 %v2236
        %2261 = vmatprep.subr.bf16.mxu0 0
        %2262 = vmatpush1.bf16.msra.mxu0 %v2238
        %2263 = vmatprep.subr.bf16.mxu0 0
        %2264 = vmatpush1.bf16.msra.mxu0 %v2240
        %2265 = vmatprep.subr.bf16.mxu0 0
        %2266 = vmatpush1.bf16.msra.mxu0 0
        %2267 = vmatprep.subr.bf16.mxu0 0
        %2268 = vmatpush1.bf16.msra.mxu0 0
        %2269 = vmatprep.subr.bf16.mxu0 0
        %2270 = vmatpush1.bf16.msra.mxu0 0
        %2271 = vmatprep.subr.bf16.mxu0 0
        %2272 = vmatpush1.bf16.msra.mxu0 0
        %2273 = vmatprep.subr.bf16.mxu0 0
        %2274 = vmatpush1.bf16.msra.mxu0 0
        %2275 = vmatprep.subr.bf16.mxu0 0
        %2276 = vmatpush1.bf16.msra.mxu0 0
        %2277 = vmatprep.subr.bf16.mxu0 0
        %2278 = vmatpush1.bf16.msra.mxu0 0
        %2279 = vmatprep.subr.bf16.mxu0 0
        %2280 = vmatpush1.bf16.msra.mxu0 0
        %2281 = vmatprep.subr.bf16.mxu0 0
        %2282 = vmatpush1.bf16.msra.mxu0 0
        %2283 = vmatprep.subr.bf16.mxu0 0
        %2284 = vmatpush1.bf16.msra.mxu0 0
        %2285 = vmatprep.subr.bf16.mxu0 0
        %2286 = vmatpush1.bf16.msra.mxu0 0
        %2287 = vmatprep.subr.bf16.mxu0 0
        %2288 = vmatpush1.bf16.msra.mxu0 0
        %2289 = vmatprep.mubr.bf16.mxu0 0
        %2290 = vmatmul.mubr.bf16.gmra.mrb[0].mxu0 %v2246
        %v2291 = vpop.f32.mrb[0].mxu0
        %v2292 = vadd.f32 0.0, %v2291
        %v2293 = vpop.f32.mrb[0].mxu0
        %v2294 = vpop.f32.mrb[0].mxu0
        %v2295 = vadd.f32 0.0, %v2294
        %v2296 = vpop.f32.mrb[0].mxu0
        %2297 = vmatprep.mubr.bf16.mxu0 0
        %2298 = vmatmul.mubr.bf16.gmra.mrb[0].mxu0 %v2249
        %v2299 = vpop.f32.mrb[0].mxu0
        %v2300 = vadd.f32 0.0, %v2299
        %v2301 = vpop.f32.mrb[0].mxu0
        %v2302 = vpop.f32.mrb[0].mxu0
        %v2303 = vadd.f32 0.0, %v2302
        %v2304 = vpop.f32.mrb[0].mxu0
        %2305 = vmatprep.mubr.bf16.mxu0 0
        %2306 = vmatmul.mubr.bf16.gmra.mrb[0].mxu0 %v2252
        %v2307 = vpop.f32.mrb[0].mxu0
        %v2308 = vadd.f32 0.0, %v2307
        %v2309 = vpop.f32.mrb[0].mxu0
        %v2310 = vpop.f32.mrb[0].mxu0
        %v2311 = vadd.f32 0.0, %v2310
        %v2312 = vpop.f32.mrb[0].mxu0
        %2313 = vmatprep.mubr.bf16.mxu0 0
        %2314 = vmatmul.mubr.bf16.gmra.mrb[0].mxu0 %v2255
        %v2315 = vpop.f32.mrb[0].mxu0
        %v2316 = vadd.f32 0.0, %v2315
        %v2317 = vpop.f32.mrb[0].mxu0
        %v2318 = vpop.f32.mrb[0].mxu0
        %v2319 = vadd.f32 0.0, %v2318
        %v2320 = vpop.f32.mrb[0].mxu0
        %2321 = vdwg.mxu0
        %2322 = vrot.lane.b32.xlu0 %v1354, 64
        %v2323 = vpop.permute.xlu0 %2322
        %2324 = vrot.lane.b32.xlu0 %v1355, 64
        %v2325 = vpop.permute.xlu0 %2324
        %2326 = vrot.lane.b32.xlu0 %v1356, 64
        %v2327 = vpop.permute.xlu0 %2326
        %2328 = vrot.lane.b32.xlu0 %v1357, 64
        %v2329 = vpop.permute.xlu0 %2328
        %v2335 = vsel %vm1775, %v2136, 0
        %v2338 = vsel %vm1775, %v2137, 0
        %v2341 = vsel %vm1775, %v2138, 0
        %v2344 = vsel %vm1775, %v2139, 0
        %2346 = vmatprep.subr.bf16.mxu0 0
        %2347 = vmatpush1.bf16.msra.mxu0 %v2323
        %2348 = vmatprep.subr.bf16.mxu0 0
        %2349 = vmatpush1.bf16.msra.mxu0 %v2325
        %2350 = vmatprep.subr.bf16.mxu0 0
        %2351 = vmatpush1.bf16.msra.mxu0 %v2327
        %2352 = vmatprep.subr.bf16.mxu0 0
        %2353 = vmatpush1.bf16.msra.mxu0 %v2329
        %2354 = vmatprep.subr.bf16.mxu0 0
        %2355 = vmatpush1.bf16.msra.mxu0 0
        %2356 = vmatprep.subr.bf16.mxu0 0
        %2357 = vmatpush1.bf16.msra.mxu0 0
        %2358 = vmatprep.subr.bf16.mxu0 0
        %2359 = vmatpush1.bf16.msra.mxu0 0
        %2360 = vmatprep.subr.bf16.mxu0 0
        %2361 = vmatpush1.bf16.msra.mxu0 0
        %2362 = vmatprep.subr.bf16.mxu0 0
        %2363 = vmatpush1.bf16.msra.mxu0 0
        %2364 = vmatprep.subr.bf16.mxu0 0
        %2365 = vmatpush1.bf16.msra.mxu0 0
        %2366 = vmatprep.subr.bf16.mxu0 0
        %2367 = vmatpush1.bf16.msra.mxu0 0
        %2368 = vmatprep.subr.bf16.mxu0 0
        %2369 = vmatpush1.bf16.msra.mxu0 0
        %2370 = vmatprep.subr.bf16.mxu0 0
        %2371 = vmatpush1.bf16.msra.mxu0 0
        %2372 = vmatprep.subr.bf16.mxu0 0
        %2373 = vmatpush1.bf16.msra.mxu0 0
        %2374 = vmatprep.subr.bf16.mxu0 0
        %2375 = vmatpush1.bf16.msra.mxu0 0
        %2376 = vmatprep.subr.bf16.mxu0 0
        %2377 = vmatpush1.bf16.msra.mxu0 0
        %2378 = vmatprep.mubr.bf16.mxu0 0
        %2379 = vmatmul.mubr.bf16.gmra.mrb[0].mxu0 %v2335
        %v2380 = vpop.f32.mrb[0].mxu0
        %v2381 = vadd.f32 0.0, %v2380
        %v2382 = vpop.f32.mrb[0].mxu0
        %v2383 = vpop.f32.mrb[0].mxu0
        %v2384 = vadd.f32 0.0, %v2383
        %v2385 = vpop.f32.mrb[0].mxu0
        %2386 = vmatprep.mubr.bf16.mxu0 0
        %2387 = vmatmul.mubr.bf16.gmra.mrb[0].mxu0 %v2338
        %v2388 = vpop.f32.mrb[0].mxu0
        %v2389 = vadd.f32 0.0, %v2388
        %v2390 = vpop.f32.mrb[0].mxu0
        %v2391 = vpop.f32.mrb[0].mxu0
        %v2392 = vadd.f32 0.0, %v2391
        %v2393 = vpop.f32.mrb[0].mxu0
        %2394 = vmatprep.mubr.bf16.mxu0 0
        %2395 = vmatmul.mubr.bf16.gmra.mrb[0].mxu0 %v2341
        %v2396 = vpop.f32.mrb[0].mxu0
        %v2397 = vadd.f32 0.0, %v2396
        %v2398 = vpop.f32.mrb[0].mxu0
        %v2399 = vpop.f32.mrb[0].mxu0
        %v2400 = vadd.f32 0.0, %v2399
        %v2401 = vpop.f32.mrb[0].mxu0
        %2402 = vmatprep.mubr.bf16.mxu0 0
        %2403 = vmatmul.mubr.bf16.gmra.mrb[0].mxu0 %v2344
        %v2404 = vpop.f32.mrb[0].mxu0
        %v2405 = vadd.f32 0.0, %v2404
        %v2406 = vpop.f32.mrb[0].mxu0
        %v2407 = vpop.f32.mrb[0].mxu0
        %v2408 = vadd.f32 0.0, %v2407
        %v2409 = vpop.f32.mrb[0].mxu0
        %2410 = vdwg.mxu0
        %2411 = vrot.lane.b32.xlu0 %v1358, 64
        %v2412 = vpop.permute.xlu0 %2411
        %2413 = vrot.lane.b32.xlu0 %v1359, 64
        %v2414 = vpop.permute.xlu0 %2413
        %2415 = vrot.lane.b32.xlu0 %v1360, 64
        %v2416 = vpop.permute.xlu0 %2415
        %2417 = vrot.lane.b32.xlu0 %v1361, 64
        %v2418 = vpop.permute.xlu0 %2417
        %v2424 = vsel %vm1775, %v2140, 0
        %v2427 = vsel %vm1775, %v2141, 0
        %v2430 = vsel %vm1775, %v2142, 0
        %v2433 = vsel %vm1775, %v2143, 0
        %2435 = vmatprep.subr.bf16.mxu0 0
        %2436 = vmatpush1.bf16.msra.mxu0 %v2412
        %2437 = vmatprep.subr.bf16.mxu0 0
        %2438 = vmatpush1.bf16.msra.mxu0 %v2414
        %2439 = vmatprep.subr.bf16.mxu0 0
        %2440 = vmatpush1.bf16.msra.mxu0 %v2416
        %2441 = vmatprep.subr.bf16.mxu0 0
        %2442 = vmatpush1.bf16.msra.mxu0 %v2418
        %2443 = vmatprep.subr.bf16.mxu0 0
        %2444 = vmatpush1.bf16.msra.mxu0 0
        %2445 = vmatprep.subr.bf16.mxu0 0
        %2446 = vmatpush1.bf16.msra.mxu0 0
        %2447 = vmatprep.subr.bf16.mxu0 0
        %2448 = vmatpush1.bf16.msra.mxu0 0
        %2449 = vmatprep.subr.bf16.mxu0 0
        %2450 = vmatpush1.bf16.msra.mxu0 0
        %2451 = vmatprep.subr.bf16.mxu0 0
        %2452 = vmatpush1.bf16.msra.mxu0 0
        %2453 = vmatprep.subr.bf16.mxu0 0
        %2454 = vmatpush1.bf16.msra.mxu0 0
        %2455 = vmatprep.subr.bf16.mxu0 0
        %2456 = vmatpush1.bf16.msra.mxu0 0
        %2457 = vmatprep.subr.bf16.mxu0 0
        %2458 = vmatpush1.bf16.msra.mxu0 0
        %2459 = vmatprep.subr.bf16.mxu0 0
        %2460 = vmatpush1.bf16.msra.mxu0 0
        %2461 = vmatprep.subr.bf16.mxu0 0
        %2462 = vmatpush1.bf16.msra.mxu0 0
        %2463 = vmatprep.subr.bf16.mxu0 0
        %2464 = vmatpush1.bf16.msra.mxu0 0
        %2465 = vmatprep.subr.bf16.mxu0 0
        %2466 = vmatpush1.bf16.msra.mxu0 0
        %2467 = vmatprep.mubr.bf16.mxu0 0
        %2468 = vmatmul.mubr.bf16.gmra.mrb[0].mxu0 %v2424
        %v2469 = vpop.f32.mrb[0].mxu0
        %v2470 = vadd.f32 0.0, %v2469
        %v2471 = vpop.f32.mrb[0].mxu0
        %v2472 = vpop.f32.mrb[0].mxu0
        %v2473 = vadd.f32 0.0, %v2472
        %v2474 = vpop.f32.mrb[0].mxu0
        %2475 = vmatprep.mubr.bf16.mxu0 0
        %2476 = vmatmul.mubr.bf16.gmra.mrb[0].mxu0 %v2427
        %v2477 = vpop.f32.mrb[0].mxu0
        %v2478 = vadd.f32 0.0, %v2477
        %v2479 = vpop.f32.mrb[0].mxu0
        %v2480 = vpop.f32.mrb[0].mxu0
        %v2481 = vadd.f32 0.0, %v2480
        %v2482 = vpop.f32.mrb[0].mxu0
        %2483 = vmatprep.mubr.bf16.mxu0 0
        %2484 = vmatmul.mubr.bf16.gmra.mrb[0].mxu0 %v2430
        %v2485 = vpop.f32.mrb[0].mxu0
        %v2486 = vadd.f32 0.0, %v2485
        %v2487 = vpop.f32.mrb[0].mxu0
        %v2488 = vpop.f32.mrb[0].mxu0
        %v2489 = vadd.f32 0.0, %v2488
        %v2490 = vpop.f32.mrb[0].mxu0
        %2491 = vmatprep.mubr.bf16.mxu0 0
        %2492 = vmatmul.mubr.bf16.gmra.mrb[0].mxu0 %v2433
        %v2493 = vpop.f32.mrb[0].mxu0
        %v2494 = vadd.f32 0.0, %v2493
        %v2495 = vpop.f32.mrb[0].mxu0
        %v2496 = vpop.f32.mrb[0].mxu0
        %v2497 = vadd.f32 0.0, %v2496
        %v2498 = vpop.f32.mrb[0].mxu0
        %2499 = vdwg.mxu0
        %2500 = vst.msk [vmem:[#allocation2] sm:$0xff] %vm1382, %v2203
        %2501 = vst.msk [vmem:[#allocation2 + $0x8] sm:$0xff] %vm1382, %v2206
        %2502 = vst.msk [vmem:[#allocation2 + $0x10] sm:$0xff] %vm1382, %v2211
        %2503 = vst.msk [vmem:[#allocation2 + $0x18] sm:$0xff] %vm1382, %v2214
        %2504 = vst.msk [vmem:[#allocation2 + $0x20] sm:$0xff] %vm1382, %v2219
        %2505 = vst.msk [vmem:[#allocation2 + $0x28] sm:$0xff] %vm1382, %v2222
        %2506 = vst.msk [vmem:[#allocation2 + $0x30] sm:$0xff] %vm1382, %v2227
        %2507 = vst.msk [vmem:[#allocation2 + $0x38] sm:$0xff] %vm1382, %v2230
        %2508 = vst.msk [vmem:[#allocation2 + $0x40] sm:$0xff] %vm1382, %v2292
        %2509 = vst.msk [vmem:[#allocation2 + $0x48] sm:$0xff] %vm1382, %v2295
        %2510 = vst.msk [vmem:[#allocation2 + $0x50] sm:$0xff] %vm1382, %v2300
        %2511 = vst.msk [vmem:[#allocation2 + $0x58] sm:$0xff] %vm1382, %v2303
        %2512 = vst.msk [vmem:[#allocation2 + $0x60] sm:$0xff] %vm1382, %v2308
        %2513 = vst.msk [vmem:[#allocation2 + $0x68] sm:$0xff] %vm1382, %v2311
        %2514 = vst.msk [vmem:[#allocation2 + $0x70] sm:$0xff] %vm1382, %v2316
        %2515 = vst.msk [vmem:[#allocation2 + $0x78] sm:$0xff] %vm1382, %v2319
        %2516 = vst.msk [vmem:[#allocation2 + $0x80] sm:$0xff] %vm1382, %v2381
        %2517 = vst.msk [vmem:[#allocation2 + $0x88] sm:$0xff] %vm1382, %v2384
        %2518 = vst.msk [vmem:[#allocation2 + $0x90] sm:$0xff] %vm1382, %v2389
        %2519 = vst.msk [vmem:[#allocation2 + $0x98] sm:$0xff] %vm1382, %v2392
        %2520 = vst.msk [vmem:[#allocation2 + $0xa0] sm:$0xff] %vm1382, %v2397
        %2521 = vst.msk [vmem:[#allocation2 + $0xa8] sm:$0xff] %vm1382, %v2400
        %2522 = vst.msk [vmem:[#allocation2 + $0xb0] sm:$0xff] %vm1382, %v2405
        %2523 = vst.msk [vmem:[#allocation2 + $0xb8] sm:$0xff] %vm1382, %v2408
        %2524 = vst.msk [vmem:[#allocation2 + $0xc0] sm:$0xff] %vm1382, %v2470
        %2525 = vst.msk [vmem:[#allocation2 + $0xc8] sm:$0xff] %vm1382, %v2473
        %2526 = vst.msk [vmem:[#allocation2 + $0xd0] sm:$0xff] %vm1382, %v2478
        %2527 = vst.msk [vmem:[#allocation2 + $0xd8] sm:$0xff] %vm1382, %v2481
        %2528 = vst.msk [vmem:[#allocation2 + $0xe0] sm:$0xff] %vm1382, %v2486
        %2529 = vst.msk [vmem:[#allocation2 + $0xe8] sm:$0xff] %vm1382, %v2489
        %2530 = vst.msk [vmem:[#allocation2 + $0xf0] sm:$0xff] %vm1382, %v2494
        %2531 = vst.msk [vmem:[#allocation2 + $0xf8] sm:$0xff] %vm1382, %v2497
        %s2532 = scalar_lea.vmem [#allocation6], 64
        %v2533 = vld [vmem:[%s2532] sm:$0xff]
        %v2534 = vld [vmem:[%s2532 + $0x8] sm:$0xff]
        %v2535 = vld [vmem:[%s2532 + $0x10] sm:$0xff]
        %v2536 = vld [vmem:[%s2532 + $0x18] sm:$0xff]
        %v2537 = vld [vmem:[%s2532 + $0x20] sm:$0xff]
        %v2538 = vld [vmem:[%s2532 + $0x28] sm:$0xff]
        %v2539 = vld [vmem:[%s2532 + $0x30] sm:$0xff]
        %v2540 = vld [vmem:[%s2532 + $0x38] sm:$0xff]
        %2545 = vrot.lane.b32.xlu0 %v1330, 120
        %v2546 = vpop.permute.xlu0 %2545
        %2547 = vrot.lane.b32.xlu0 %v1331, 120
        %v2548 = vpop.permute.xlu0 %2547
        %2549 = vrot.lane.b32.xlu0 %v1332, 120
        %v2550 = vpop.permute.xlu0 %2549
        %2551 = vrot.lane.b32.xlu0 %v1333, 120
        %v2552 = vpop.permute.xlu0 %2551
        %2553 = vrot.lane.b32.xlu0 %v1346, 88
        %v2554 = vpop.permute.xlu0 %2553
        %2555 = vrot.lane.b32.xlu0 %v1347, 88
        %v2556 = vpop.permute.xlu0 %2555
        %2557 = vrot.lane.b32.xlu0 %v1348, 88
        %v2558 = vpop.permute.xlu0 %2557
        %2559 = vrot.lane.b32.xlu0 %v1349, 88
        %v2560 = vpop.permute.xlu0 %2559
        %v2562 = vsel %vm1382, %v2546, 0
        %v2565 = vsel %vm1382, %v2548, 0
        %v2568 = vsel %vm1382, %v2550, 0
        %v2571 = vsel %vm1382, %v2552, 0
        %v2574 = vsel %vm1382, %v2554, 0
        %v2577 = vsel %vm1382, %v2556, 0
        %v2580 = vsel %vm1382, %v2558, 0
        %v2583 = vsel %vm1382, %v2560, 0
        %2585 = vmatprep.subr.bf16.mxu0 0
        %2586 = vmatpush1.bf16.xpose.msra.mxu0 %v2574
        %2587 = vmatprep.subr.bf16.mxu0 0
        %2588 = vmatpush1.bf16.xpose.msra.mxu0 %v2577
        %2589 = vmatprep.subr.bf16.mxu0 0
        %2590 = vmatpush1.bf16.xpose.msra.mxu0 %v2580
        %2591 = vmatprep.subr.bf16.mxu0 0
        %2592 = vmatpush1.bf16.xpose.msra.mxu0 %v2583
        %2593 = vmatprep.subr.bf16.mxu0 0
        %2594 = vmatpush1.bf16.xpose.msra.mxu0 0
        %2595 = vmatprep.subr.bf16.mxu0 0
        %2596 = vmatpush1.bf16.xpose.msra.mxu0 0
        %2597 = vmatprep.subr.bf16.mxu0 0
        %2598 = vmatpush1.bf16.xpose.msra.mxu0 0
        %2599 = vmatprep.subr.bf16.mxu0 0
        %2600 = vmatpush1.bf16.xpose.msra.mxu0 0
        %2601 = vmatprep.subr.bf16.mxu0 0
        %2602 = vmatpush1.bf16.xpose.msra.mxu0 0
        %2603 = vmatprep.subr.bf16.mxu0 0
        %2604 = vmatpush1.bf16.xpose.msra.mxu0 0
        %2605 = vmatprep.subr.bf16.mxu0 0
        %2606 = vmatpush1.bf16.xpose.msra.mxu0 0
        %2607 = vmatprep.subr.bf16.mxu0 0
        %2608 = vmatpush1.bf16.xpose.msra.mxu0 0
        %2609 = vmatprep.subr.bf16.mxu0 0
        %2610 = vmatpush1.bf16.xpose.msra.mxu0 0
        %2611 = vmatprep.subr.bf16.mxu0 0
        %2612 = vmatpush1.bf16.xpose.msra.mxu0 0
        %2613 = vmatprep.subr.bf16.mxu0 0
        %2614 = vmatpush1.bf16.xpose.msra.mxu0 0
        %2615 = vmatprep.subr.bf16.mxu0 0
        %2616 = vmatpush1.bf16.xpose.msra.mxu0 0
        %2617 = vmatprep.mubr.bf16.mxu0 0
        %2618 = vmatmul.mubr.bf16.gmra.mrb[0].mxu0 %v2562
        %v2619 = vpop.f32.mrb[0].mxu0
        %v2620 = vadd.f32 %v2533, %v2619
        %v2621 = vpop.f32.mrb[0].mxu0
        %v2622 = vpop.f32.mrb[0].mxu0
        %v2623 = vadd.f32 %v2534, %v2622
        %v2624 = vpop.f32.mrb[0].mxu0
        %2625 = vmatprep.mubr.bf16.mxu0 0
        %2626 = vmatmul.mubr.bf16.gmra.mrb[0].mxu0 %v2565
        %v2627 = vpop.f32.mrb[0].mxu0
        %v2628 = vadd.f32 %v2535, %v2627
        %v2629 = vpop.f32.mrb[0].mxu0
        %v2630 = vpop.f32.mrb[0].mxu0
        %v2631 = vadd.f32 %v2536, %v2630
        %v2632 = vpop.f32.mrb[0].mxu0
        %2633 = vmatprep.mubr.bf16.mxu0 0
        %2634 = vmatmul.mubr.bf16.gmra.mrb[0].mxu0 %v2568
        %v2635 = vpop.f32.mrb[0].mxu0
        %v2636 = vadd.f32 %v2537, %v2635
        %v2637 = vpop.f32.mrb[0].mxu0
        %v2638 = vpop.f32.mrb[0].mxu0
        %v2639 = vadd.f32 %v2538, %v2638
        %v2640 = vpop.f32.mrb[0].mxu0
        %2641 = vmatprep.mubr.bf16.mxu0 0
        %2642 = vmatmul.mubr.bf16.gmra.mrb[0].mxu0 %v2571
        %v2643 = vpop.f32.mrb[0].mxu0
        %v2644 = vadd.f32 %v2539, %v2643
        %v2645 = vpop.f32.mrb[0].mxu0
        %v2646 = vpop.f32.mrb[0].mxu0
        %v2647 = vadd.f32 %v2540, %v2646
        %v2648 = vpop.f32.mrb[0].mxu0
        %2649 = vdwg.mxu0
        %2654 = vrot.lane.b32.xlu0 %v1334, 120
        %v2655 = vpop.permute.xlu0 %2654
        %2656 = vrot.lane.b32.xlu0 %v1335, 120
        %v2657 = vpop.permute.xlu0 %2656
        %2658 = vrot.lane.b32.xlu0 %v1336, 120
        %v2659 = vpop.permute.xlu0 %2658
        %2660 = vrot.lane.b32.xlu0 %v1337, 120
        %v2661 = vpop.permute.xlu0 %2660
        %2662 = vrot.lane.b32.xlu0 %v1350, 88
        %v2663 = vpop.permute.xlu0 %2662
        %2664 = vrot.lane.b32.xlu0 %v1351, 88
        %v2665 = vpop.permute.xlu0 %2664
        %2666 = vrot.lane.b32.xlu0 %v1352, 88
        %v2667 = vpop.permute.xlu0 %2666
        %2668 = vrot.lane.b32.xlu0 %v1353, 88
        %v2669 = vpop.permute.xlu0 %2668
        %v2671 = vsel %vm1382, %v2655, 0
        %v2674 = vsel %vm1382, %v2657, 0
        %v2677 = vsel %vm1382, %v2659, 0
        %v2680 = vsel %vm1382, %v2661, 0
        %v2683 = vsel %vm1382, %v2663, 0
        %v2686 = vsel %vm1382, %v2665, 0
        %v2689 = vsel %vm1382, %v2667, 0
        %v2692 = vsel %vm1382, %v2669, 0
        %2694 = vmatprep.subr.bf16.mxu0 0
        %2695 = vmatpush1.bf16.xpose.msra.mxu0 %v2683
        %2696 = vmatprep.subr.bf16.mxu0 0
        %2697 = vmatpush1.bf16.xpose.msra.mxu0 %v2686
        %2698 = vmatprep.subr.bf16.mxu0 0
        %2699 = vmatpush1.bf16.xpose.msra.mxu0 %v2689
        %2700 = vmatprep.subr.bf16.mxu0 0
        %2701 = vmatpush1.bf16.xpose.msra.mxu0 %v2692
        %2702 = vmatprep.subr.bf16.mxu0 0
        %2703 = vmatpush1.bf16.xpose.msra.mxu0 0
        %2704 = vmatprep.subr.bf16.mxu0 0
        %2705 = vmatpush1.bf16.xpose.msra.mxu0 0
        %2706 = vmatprep.subr.bf16.mxu0 0
        %2707 = vmatpush1.bf16.xpose.msra.mxu0 0
        %2708 = vmatprep.subr.bf16.mxu0 0
        %2709 = vmatpush1.bf16.xpose.msra.mxu0 0
        %2710 = vmatprep.subr.bf16.mxu0 0
        %2711 = vmatpush1.bf16.xpose.msra.mxu0 0
        %2712 = vmatprep.subr.bf16.mxu0 0
        %2713 = vmatpush1.bf16.xpose.msra.mxu0 0
        %2714 = vmatprep.subr.bf16.mxu0 0
        %2715 = vmatpush1.bf16.xpose.msra.mxu0 0
        %2716 = vmatprep.subr.bf16.mxu0 0
        %2717 = vmatpush1.bf16.xpose.msra.mxu0 0
        %2718 = vmatprep.subr.bf16.mxu0 0
        %2719 = vmatpush1.bf16.xpose.msra.mxu0 0
        %2720 = vmatprep.subr.bf16.mxu0 0
        %2721 = vmatpush1.bf16.xpose.msra.mxu0 0
        %2722 = vmatprep.subr.bf16.mxu0 0
        %2723 = vmatpush1.bf16.xpose.msra.mxu0 0
        %2724 = vmatprep.subr.bf16.mxu0 0
        %2725 = vmatpush1.bf16.xpose.msra.mxu0 0
        %2726 = vmatprep.mubr.bf16.mxu0 0
        %2727 = vmatmul.mubr.bf16.gmra.mrb[0].mxu0 %v2671
        %v2728 = vpop.f32.mrb[0].mxu0
        %v2729 = vadd.f32 %v2533, %v2728
        %v2730 = vpop.f32.mrb[0].mxu0
        %v2731 = vpop.f32.mrb[0].mxu0
        %v2732 = vadd.f32 %v2534, %v2731
        %v2733 = vpop.f32.mrb[0].mxu0
        %2734 = vmatprep.mubr.bf16.mxu0 0
        %2735 = vmatmul.mubr.bf16.gmra.mrb[0].mxu0 %v2674
        %v2736 = vpop.f32.mrb[0].mxu0
        %v2737 = vadd.f32 %v2535, %v2736
        %v2738 = vpop.f32.mrb[0].mxu0
        %v2739 = vpop.f32.mrb[0].mxu0
        %v2740 = vadd.f32 %v2536, %v2739
        %v2741 = vpop.f32.mrb[0].mxu0
        %2742 = vmatprep.mubr.bf16.mxu0 0
        %2743 = vmatmul.mubr.bf16.gmra.mrb[0].mxu0 %v2677
        %v2744 = vpop.f32.mrb[0].mxu0
        %v2745 = vadd.f32 %v2537, %v2744
        %v2746 = vpop.f32.mrb[0].mxu0
        %v2747 = vpop.f32.mrb[0].mxu0
        %v2748 = vadd.f32 %v2538, %v2747
        %v2749 = vpop.f32.mrb[0].mxu0
        %2750 = vmatprep.mubr.bf16.mxu0 0
        %2751 = vmatmul.mubr.bf16.gmra.mrb[0].mxu0 %v2680
        %v2752 = vpop.f32.mrb[0].mxu0
        %v2753 = vadd.f32 %v2539, %v2752
        %v2754 = vpop.f32.mrb[0].mxu0
        %v2755 = vpop.f32.mrb[0].mxu0
        %v2756 = vadd.f32 %v2540, %v2755
        %v2757 = vpop.f32.mrb[0].mxu0
        %2758 = vdwg.mxu0
        %2763 = vrot.lane.b32.xlu0 %v1338, 120
        %v2764 = vpop.permute.xlu0 %2763
        %2765 = vrot.lane.b32.xlu0 %v1339, 120
        %v2766 = vpop.permute.xlu0 %2765
        %2767 = vrot.lane.b32.xlu0 %v1340, 120
        %v2768 = vpop.permute.xlu0 %2767
        %2769 = vrot.lane.b32.xlu0 %v1341, 120
        %v2770 = vpop.permute.xlu0 %2769
        %2771 = vrot.lane.b32.xlu0 %v1354, 88
        %v2772 = vpop.permute.xlu0 %2771
        %2773 = vrot.lane.b32.xlu0 %v1355, 88
        %v2774 = vpop.permute.xlu0 %2773
        %2775 = vrot.lane.b32.xlu0 %v1356, 88
        %v2776 = vpop.permute.xlu0 %2775
        %2777 = vrot.lane.b32.xlu0 %v1357, 88
        %v2778 = vpop.permute.xlu0 %2777
        %v2780 = vsel %vm1382, %v2764, 0
        %v2783 = vsel %vm1382, %v2766, 0
        %v2786 = vsel %vm1382, %v2768, 0
        %v2789 = vsel %vm1382, %v2770, 0
        %v2792 = vsel %vm1382, %v2772, 0
        %v2795 = vsel %vm1382, %v2774, 0
        %v2798 = vsel %vm1382, %v2776, 0
        %v2801 = vsel %vm1382, %v2778, 0
        %2803 = vmatprep.subr.bf16.mxu0 0
        %2804 = vmatpush1.bf16.xpose.msra.mxu0 %v2792
        %2805 = vmatprep.subr.bf16.mxu0 0
        %2806 = vmatpush1.bf16.xpose.msra.mxu0 %v2795
        %2807 = vmatprep.subr.bf16.mxu0 0
        %2808 = vmatpush1.bf16.xpose.msra.mxu0 %v2798
        %2809 = vmatprep.subr.bf16.mxu0 0
        %2810 = vmatpush1.bf16.xpose.msra.mxu0 %v2801
        %2811 = vmatprep.subr.bf16.mxu0 0
        %2812 = vmatpush1.bf16.xpose.msra.mxu0 0
        %2813 = vmatprep.subr.bf16.mxu0 0
        %2814 = vmatpush1.bf16.xpose.msra.mxu0 0
        %2815 = vmatprep.subr.bf16.mxu0 0
        %2816 = vmatpush1.bf16.xpose.msra.mxu0 0
        %2817 = vmatprep.subr.bf16.mxu0 0
        %2818 = vmatpush1.bf16.xpose.msra.mxu0 0
        %2819 = vmatprep.subr.bf16.mxu0 0
        %2820 = vmatpush1.bf16.xpose.msra.mxu0 0
        %2821 = vmatprep.subr.bf16.mxu0 0
        %2822 = vmatpush1.bf16.xpose.msra.mxu0 0
        %2823 = vmatprep.subr.bf16.mxu0 0
        %2824 = vmatpush1.bf16.xpose.msra.mxu0 0
        %2825 = vmatprep.subr.bf16.mxu0 0
        %2826 = vmatpush1.bf16.xpose.msra.mxu0 0
        %2827 = vmatprep.subr.bf16.mxu0 0
        %2828 = vmatpush1.bf16.xpose.msra.mxu0 0
        %2829 = vmatprep.subr.bf16.mxu0 0
        %2830 = vmatpush1.bf16.xpose.msra.mxu0 0
        %2831 = vmatprep.subr.bf16.mxu0 0
        %2832 = vmatpush1.bf16.xpose.msra.mxu0 0
        %2833 = vmatprep.subr.bf16.mxu0 0
        %2834 = vmatpush1.bf16.xpose.msra.mxu0 0
        %2835 = vmatprep.mubr.bf16.mxu0 0
        %2836 = vmatmul.mubr.bf16.gmra.mrb[0].mxu0 %v2780
        %v2837 = vpop.f32.mrb[0].mxu0
        %v2838 = vadd.f32 %v2533, %v2837
        %v2839 = vpop.f32.mrb[0].mxu0
        %v2840 = vpop.f32.mrb[0].mxu0
        %v2841 = vadd.f32 %v2534, %v2840
        %v2842 = vpop.f32.mrb[0].mxu0
        %2843 = vmatprep.mubr.bf16.mxu0 0
        %2844 = vmatmul.mubr.bf16.gmra.mrb[0].mxu0 %v2783
        %v2845 = vpop.f32.mrb[0].mxu0
        %v2846 = vadd.f32 %v2535, %v2845
        %v2847 = vpop.f32.mrb[0].mxu0
        %v2848 = vpop.f32.mrb[0].mxu0
        %v2849 = vadd.f32 %v2536, %v2848
        %v2850 = vpop.f32.mrb[0].mxu0
        %2851 = vmatprep.mubr.bf16.mxu0 0
        %2852 = vmatmul.mubr.bf16.gmra.mrb[0].mxu0 %v2786
        %v2853 = vpop.f32.mrb[0].mxu0
        %v2854 = vadd.f32 %v2537, %v2853
        %v2855 = vpop.f32.mrb[0].mxu0
        %v2856 = vpop.f32.mrb[0].mxu0
        %v2857 = vadd.f32 %v2538, %v2856
        %v2858 = vpop.f32.mrb[0].mxu0
        %2859 = vmatprep.mubr.bf16.mxu0 0
        %2860 = vmatmul.mubr.bf16.gmra.mrb[0].mxu0 %v2789
        %v2861 = vpop.f32.mrb[0].mxu0
        %v2862 = vadd.f32 %v2539, %v2861
        %v2863 = vpop.f32.mrb[0].mxu0
        %v2864 = vpop.f32.mrb[0].mxu0
        %v2865 = vadd.f32 %v2540, %v2864
        %v2866 = vpop.f32.mrb[0].mxu0
        %2867 = vdwg.mxu0
        %2872 = vrot.lane.b32.xlu0 %v1342, 120
        %v2873 = vpop.permute.xlu0 %2872
        %2874 = vrot.lane.b32.xlu0 %v1343, 120
        %v2875 = vpop.permute.xlu0 %2874
        %2876 = vrot.lane.b32.xlu0 %v1344, 120
        %v2877 = vpop.permute.xlu0 %2876
        %2878 = vrot.lane.b32.xlu0 %v1345, 120
        %v2879 = vpop.permute.xlu0 %2878
        %2880 = vrot.lane.b32.xlu0 %v1358, 88
        %v2881 = vpop.permute.xlu0 %2880
        %2882 = vrot.lane.b32.xlu0 %v1359, 88
        %v2883 = vpop.permute.xlu0 %2882
        %2884 = vrot.lane.b32.xlu0 %v1360, 88
        %v2885 = vpop.permute.xlu0 %2884
        %2886 = vrot.lane.b32.xlu0 %v1361, 88
        %v2887 = vpop.permute.xlu0 %2886
        %v2889 = vsel %vm1382, %v2873, 0
        %v2892 = vsel %vm1382, %v2875, 0
        %v2895 = vsel %vm1382, %v2877, 0
        %v2898 = vsel %vm1382, %v2879, 0
        %v2901 = vsel %vm1382, %v2881, 0
        %v2904 = vsel %vm1382, %v2883, 0
        %v2907 = vsel %vm1382, %v2885, 0
        %v2910 = vsel %vm1382, %v2887, 0
        %2912 = vmatprep.subr.bf16.mxu0 0
        %2913 = vmatpush1.bf16.xpose.msra.mxu0 %v2901
        %2914 = vmatprep.subr.bf16.mxu0 0
        %2915 = vmatpush1.bf16.xpose.msra.mxu0 %v2904
        %2916 = vmatprep.subr.bf16.mxu0 0
        %2917 = vmatpush1.bf16.xpose.msra.mxu0 %v2907
        %2918 = vmatprep.subr.bf16.mxu0 0
        %2919 = vmatpush1.bf16.xpose.msra.mxu0 %v2910
        %2920 = vmatprep.subr.bf16.mxu0 0
        %2921 = vmatpush1.bf16.xpose.msra.mxu0 0
        %2922 = vmatprep.subr.bf16.mxu0 0
        %2923 = vmatpush1.bf16.xpose.msra.mxu0 0
        %2924 = vmatprep.subr.bf16.mxu0 0
        %2925 = vmatpush1.bf16.xpose.msra.mxu0 0
        %2926 = vmatprep.subr.bf16.mxu0 0
        %2927 = vmatpush1.bf16.xpose.msra.mxu0 0
        %2928 = vmatprep.subr.bf16.mxu0 0
        %2929 = vmatpush1.bf16.xpose.msra.mxu0 0
        %2930 = vmatprep.subr.bf16.mxu0 0
        %2931 = vmatpush1.bf16.xpose.msra.mxu0 0
        %2932 = vmatprep.subr.bf16.mxu0 0
        %2933 = vmatpush1.bf16.xpose.msra.mxu0 0
        %2934 = vmatprep.subr.bf16.mxu0 0
        %2935 = vmatpush1.bf16.xpose.msra.mxu0 0
        %2936 = vmatprep.subr.bf16.mxu0 0
        %2937 = vmatpush1.bf16.xpose.msra.mxu0 0
        %2938 = vmatprep.subr.bf16.mxu0 0
        %2939 = vmatpush1.bf16.xpose.msra.mxu0 0
        %2940 = vmatprep.subr.bf16.mxu0 0
        %2941 = vmatpush1.bf16.xpose.msra.mxu0 0
        %2942 = vmatprep.subr.bf16.mxu0 0
        %2943 = vmatpush1.bf16.xpose.msra.mxu0 0
        %2944 = vmatprep.mubr.bf16.mxu0 0
        %2945 = vmatmul.mubr.bf16.gmra.mrb[0].mxu0 %v2889
        %v2946 = vpop.f32.mrb[0].mxu0
        %v2947 = vadd.f32 %v2533, %v2946
        %v2948 = vpop.f32.mrb[0].mxu0
        %v2949 = vpop.f32.mrb[0].mxu0
        %v2950 = vadd.f32 %v2534, %v2949
        %v2951 = vpop.f32.mrb[0].mxu0
        %2952 = vmatprep.mubr.bf16.mxu0 0
        %2953 = vmatmul.mubr.bf16.gmra.mrb[0].mxu0 %v2892
        %v2954 = vpop.f32.mrb[0].mxu0
        %v2955 = vadd.f32 %v2535, %v2954
        %v2956 = vpop.f32.mrb[0].mxu0
        %v2957 = vpop.f32.mrb[0].mxu0
        %v2958 = vadd.f32 %v2536, %v2957
        %v2959 = vpop.f32.mrb[0].mxu0
        %2960 = vmatprep.mubr.bf16.mxu0 0
        %2961 = vmatmul.mubr.bf16.gmra.mrb[0].mxu0 %v2895
        %v2962 = vpop.f32.mrb[0].mxu0
        %v2963 = vadd.f32 %v2537, %v2962
        %v2964 = vpop.f32.mrb[0].mxu0
        %v2965 = vpop.f32.mrb[0].mxu0
        %v2966 = vadd.f32 %v2538, %v2965
        %v2967 = vpop.f32.mrb[0].mxu0
        %2968 = vmatprep.mubr.bf16.mxu0 0
        %2969 = vmatmul.mubr.bf16.gmra.mrb[0].mxu0 %v2898
        %v2970 = vpop.f32.mrb[0].mxu0
        %v2971 = vadd.f32 %v2539, %v2970
        %v2972 = vpop.f32.mrb[0].mxu0
        %v2973 = vpop.f32.mrb[0].mxu0
        %v2974 = vadd.f32 %v2540, %v2973
        %v2975 = vpop.f32.mrb[0].mxu0
        %2976 = vdwg.mxu0
        %v2977 = vsel %vm1775, %v2620, -inf
        %2978 = vmax.xlane.f32.xlu0 %v2977
        %v2979 = vpop.xlane.xlu0 %2978
        %v2980 = vsel %vm1775, %v2623, -inf
        %2981 = vmax.xlane.f32.xlu0 %v2980
        %v2982 = vpop.xlane.xlu0 %2981
        %v2983 = vsel %vm1775, %v2628, -inf
        %2984 = vmax.xlane.f32.xlu0 %v2983
        %v2985 = vpop.xlane.xlu0 %2984
        %v2986 = vsel %vm1775, %v2631, -inf
        %2987 = vmax.xlane.f32.xlu0 %v2986
        %v2988 = vpop.xlane.xlu0 %2987
        %v2989 = vsel %vm1775, %v2636, -inf
        %2990 = vmax.xlane.f32.xlu0 %v2989
        %v2991 = vpop.xlane.xlu0 %2990
        %v2992 = vsel %vm1775, %v2639, -inf
        %2993 = vmax.xlane.f32.xlu0 %v2992
        %v2994 = vpop.xlane.xlu0 %2993
        %v2995 = vsel %vm1775, %v2644, -inf
        %2996 = vmax.xlane.f32.xlu0 %v2995
        %v2997 = vpop.xlane.xlu0 %2996
        %v2998 = vsel %vm1775, %v2647, -inf
        %2999 = vmax.xlane.f32.xlu0 %v2998
        %v3000 = vpop.xlane.xlu0 %2999
        %v3001 = vsel %vm1775, %v2729, -inf
        %3002 = vmax.xlane.f32.xlu0 %v3001
        %v3003 = vpop.xlane.xlu0 %3002
        %v3004 = vsel %vm1775, %v2732, -inf
        %3005 = vmax.xlane.f32.xlu0 %v3004
        %v3006 = vpop.xlane.xlu0 %3005
        %v3007 = vsel %vm1775, %v2737, -inf
        %3008 = vmax.xlane.f32.xlu0 %v3007
        %v3009 = vpop.xlane.xlu0 %3008
        %v3010 = vsel %vm1775, %v2740, -inf
        %3011 = vmax.xlane.f32.xlu0 %v3010
        %v3012 = vpop.xlane.xlu0 %3011
        %v3013 = vsel %vm1775, %v2745, -inf
        %3014 = vmax.xlane.f32.xlu0 %v3013
        %v3015 = vpop.xlane.xlu0 %3014
        %v3016 = vsel %vm1775, %v2748, -inf
        %3017 = vmax.xlane.f32.xlu0 %v3016
        %v3018 = vpop.xlane.xlu0 %3017
        %v3019 = vsel %vm1775, %v2753, -inf
        %3020 = vmax.xlane.f32.xlu0 %v3019
        %v3021 = vpop.xlane.xlu0 %3020
        %v3022 = vsel %vm1775, %v2756, -inf
        %3023 = vmax.xlane.f32.xlu0 %v3022
        %v3024 = vpop.xlane.xlu0 %3023
        %v3025 = vsel %vm1775, %v2838, -inf
        %3026 = vmax.xlane.f32.xlu0 %v3025
        %v3027 = vpop.xlane.xlu0 %3026
        %v3028 = vsel %vm1775, %v2841, -inf
        %3029 = vmax.xlane.f32.xlu0 %v3028
        %v3030 = vpop.xlane.xlu0 %3029
        %v3031 = vsel %vm1775, %v2846, -inf
        %3032 = vmax.xlane.f32.xlu0 %v3031
        %v3033 = vpop.xlane.xlu0 %3032
        %v3034 = vsel %vm1775, %v2849, -inf
        %3035 = vmax.xlane.f32.xlu0 %v3034
        %v3036 = vpop.xlane.xlu0 %3035
        %v3037 = vsel %vm1775, %v2854, -inf
        %3038 = vmax.xlane.f32.xlu0 %v3037
        %v3039 = vpop.xlane.xlu0 %3038
        %v3040 = vsel %vm1775, %v2857, -inf
        %3041 = vmax.xlane.f32.xlu0 %v3040
        %v3042 = vpop.xlane.xlu0 %3041
        %v3043 = vsel %vm1775, %v2862, -inf
        %3044 = vmax.xlane.f32.xlu0 %v3043
        %v3045 = vpop.xlane.xlu0 %3044
        %v3046 = vsel %vm1775, %v2865, -inf
        %3047 = vmax.xlane.f32.xlu0 %v3046
        %v3048 = vpop.xlane.xlu0 %3047
        %v3049 = vsel %vm1775, %v2947, -inf
        %3050 = vmax.xlane.f32.xlu0 %v3049
        %v3051 = vpop.xlane.xlu0 %3050
        %v3052 = vsel %vm1775, %v2950, -inf
        %3053 = vmax.xlane.f32.xlu0 %v3052
        %v3054 = vpop.xlane.xlu0 %3053
        %v3055 = vsel %vm1775, %v2955, -inf
        %3056 = vmax.xlane.f32.xlu0 %v3055
        %v3057 = vpop.xlane.xlu0 %3056
        %v3058 = vsel %vm1775, %v2958, -inf
        %3059 = vmax.xlane.f32.xlu0 %v3058
        %v3060 = vpop.xlane.xlu0 %3059
        %v3061 = vsel %vm1775, %v2963, -inf
        %3062 = vmax.xlane.f32.xlu0 %v3061
        %v3063 = vpop.xlane.xlu0 %3062
        %v3064 = vsel %vm1775, %v2966, -inf
        %3065 = vmax.xlane.f32.xlu0 %v3064
        %v3066 = vpop.xlane.xlu0 %3065
        %v3067 = vsel %vm1775, %v2971, -inf
        %3068 = vmax.xlane.f32.xlu0 %v3067
        %v3069 = vpop.xlane.xlu0 %3068
        %v3070 = vsel %vm1775, %v2974, -inf
        %3071 = vmax.xlane.f32.xlu0 %v3070
        %v3072 = vpop.xlane.xlu0 %3071
        %v3073 = vsub.f32 %v2620, %v2979
        %v3074 = vsub.f32 %v2623, %v2982
        %v3075 = vsub.f32 %v2628, %v2985
        %v3076 = vsub.f32 %v2631, %v2988
        %v3077 = vsub.f32 %v2636, %v2991
        %v3078 = vsub.f32 %v2639, %v2994
        %v3079 = vsub.f32 %v2644, %v2997
        %v3080 = vsub.f32 %v2647, %v3000
        %v3081 = vsub.f32 %v2729, %v3003
        %v3082 = vsub.f32 %v2732, %v3006
        %v3083 = vsub.f32 %v2737, %v3009
        %v3084 = vsub.f32 %v2740, %v3012
        %v3085 = vsub.f32 %v2745, %v3015
        %v3086 = vsub.f32 %v2748, %v3018
        %v3087 = vsub.f32 %v2753, %v3021
        %v3088 = vsub.f32 %v2756, %v3024
        %v3089 = vsub.f32 %v2838, %v3027
        %v3090 = vsub.f32 %v2841, %v3030
        %v3091 = vsub.f32 %v2846, %v3033
        %v3092 = vsub.f32 %v2849, %v3036
        %v3093 = vsub.f32 %v2854, %v3039
        %v3094 = vsub.f32 %v2857, %v3042
        %v3095 = vsub.f32 %v2862, %v3045
        %v3096 = vsub.f32 %v2865, %v3048
        %v3097 = vsub.f32 %v2947, %v3051
        %v3098 = vsub.f32 %v2950, %v3054
        %v3099 = vsub.f32 %v2955, %v3057
        %v3100 = vsub.f32 %v2958, %v3060
        %v3101 = vsub.f32 %v2963, %v3063
        %v3102 = vsub.f32 %v2966, %v3066
        %v3103 = vsub.f32 %v2971, %v3069
        %v3104 = vsub.f32 %v2974, %v3072
        %v3105 = vmul.f32 %v3073, 1.442695
        %v3106 = vpow.pop %v3105
        %v3107 = vmul.f32 %v3074, 1.442695
        %v3108 = vpow.pop %v3107
        %v3109 = vmul.f32 %v3075, 1.442695
        %v3110 = vpow.pop %v3109
        %v3111 = vmul.f32 %v3076, 1.442695
        %v3112 = vpow.pop %v3111
        %v3113 = vmul.f32 %v3077, 1.442695
        %v3114 = vpow.pop %v3113
        %v3115 = vmul.f32 %v3078, 1.442695
        %v3116 = vpow.pop %v3115
        %v3117 = vmul.f32 %v3079, 1.442695
        %v3118 = vpow.pop %v3117
        %v3119 = vmul.f32 %v3080, 1.442695
        %v3120 = vpow.pop %v3119
        %v3121 = vmul.f32 %v3081, 1.442695
        %v3122 = vpow.pop %v3121
        %v3123 = vmul.f32 %v3082, 1.442695
        %v3124 = vpow.pop %v3123
        %v3125 = vmul.f32 %v3083, 1.442695
        %v3126 = vpow.pop %v3125
        %v3127 = vmul.f32 %v3084, 1.442695
        %v3128 = vpow.pop %v3127
        %v3129 = vmul.f32 %v3085, 1.442695
        %v3130 = vpow.pop %v3129
        %v3131 = vmul.f32 %v3086, 1.442695
        %v3132 = vpow.pop %v3131
        %v3133 = vmul.f32 %v3087, 1.442695
        %v3134 = vpow.pop %v3133
        %v3135 = vmul.f32 %v3088, 1.442695
        %v3136 = vpow.pop %v3135
        %v3137 = vmul.f32 %v3089, 1.442695
        %v3138 = vpow.pop %v3137
        %v3139 = vmul.f32 %v3090, 1.442695
        %v3140 = vpow.pop %v3139
        %v3141 = vmul.f32 %v3091, 1.442695
        %v3142 = vpow.pop %v3141
        %v3143 = vmul.f32 %v3092, 1.442695
        %v3144 = vpow.pop %v3143
        %v3145 = vmul.f32 %v3093, 1.442695
        %v3146 = vpow.pop %v3145
        %v3147 = vmul.f32 %v3094, 1.442695
        %v3148 = vpow.pop %v3147
        %v3149 = vmul.f32 %v3095, 1.442695
        %v3150 = vpow.pop %v3149
        %v3151 = vmul.f32 %v3096, 1.442695
        %v3152 = vpow.pop %v3151
        %v3153 = vmul.f32 %v3097, 1.442695
        %v3154 = vpow.pop %v3153
        %v3155 = vmul.f32 %v3098, 1.442695
        %v3156 = vpow.pop %v3155
        %v3157 = vmul.f32 %v3099, 1.442695
        %v3158 = vpow.pop %v3157
        %v3159 = vmul.f32 %v3100, 1.442695
        %v3160 = vpow.pop %v3159
        %v3161 = vmul.f32 %v3101, 1.442695
        %v3162 = vpow.pop %v3161
        %v3163 = vmul.f32 %v3102, 1.442695
        %v3164 = vpow.pop %v3163
        %v3165 = vmul.f32 %v3103, 1.442695
        %v3166 = vpow.pop %v3165
        %v3167 = vmul.f32 %v3104, 1.442695
        %v3168 = vpow.pop %v3167
        %v3169 = vsel %vm1775, %v3106, 0.0
        %3170 = vadd.xlane.f32.xlu0 %v3169
        %v3171 = vpop.xlane.xlu0 %3170
        %v3172 = vsel %vm1775, %v3108, 0.0
        %3173 = vadd.xlane.f32.xlu0 %v3172
        %v3174 = vpop.xlane.xlu0 %3173
        %v3175 = vsel %vm1775, %v3110, 0.0
        %3176 = vadd.xlane.f32.xlu0 %v3175
        %v3177 = vpop.xlane.xlu0 %3176
        %v3178 = vsel %vm1775, %v3112, 0.0
        %3179 = vadd.xlane.f32.xlu0 %v3178
        %v3180 = vpop.xlane.xlu0 %3179
        %v3181 = vsel %vm1775, %v3114, 0.0
        %3182 = vadd.xlane.f32.xlu0 %v3181
        %v3183 = vpop.xlane.xlu0 %3182
        %v3184 = vsel %vm1775, %v3116, 0.0
        %3185 = vadd.xlane.f32.xlu0 %v3184
        %v3186 = vpop.xlane.xlu0 %3185
        %v3187 = vsel %vm1775, %v3118, 0.0
        %3188 = vadd.xlane.f32.xlu0 %v3187
        %v3189 = vpop.xlane.xlu0 %3188
        %v3190 = vsel %vm1775, %v3120, 0.0
        %3191 = vadd.xlane.f32.xlu0 %v3190
        %v3192 = vpop.xlane.xlu0 %3191
        %v3193 = vsel %vm1775, %v3122, 0.0
        %3194 = vadd.xlane.f32.xlu0 %v3193
        %v3195 = vpop.xlane.xlu0 %3194
        %v3196 = vsel %vm1775, %v3124, 0.0
        %3197 = vadd.xlane.f32.xlu0 %v3196
        %v3198 = vpop.xlane.xlu0 %3197
        %v3199 = vsel %vm1775, %v3126, 0.0
        %3200 = vadd.xlane.f32.xlu0 %v3199
        %v3201 = vpop.xlane.xlu0 %3200
        %v3202 = vsel %vm1775, %v3128, 0.0
        %3203 = vadd.xlane.f32.xlu0 %v3202
        %v3204 = vpop.xlane.xlu0 %3203
        %v3205 = vsel %vm1775, %v3130, 0.0
        %3206 = vadd.xlane.f32.xlu0 %v3205
        %v3207 = vpop.xlane.xlu0 %3206
        %v3208 = vsel %vm1775, %v3132, 0.0
        %3209 = vadd.xlane.f32.xlu0 %v3208
        %v3210 = vpop.xlane.xlu0 %3209
        %v3211 = vsel %vm1775, %v3134, 0.0
        %3212 = vadd.xlane.f32.xlu0 %v3211
        %v3213 = vpop.xlane.xlu0 %3212
        %v3214 = vsel %vm1775, %v3136, 0.0
        %3215 = vadd.xlane.f32.xlu0 %v3214
        %v3216 = vpop.xlane.xlu0 %3215
        %v3217 = vsel %vm1775, %v3138, 0.0
        %3218 = vadd.xlane.f32.xlu0 %v3217
        %v3219 = vpop.xlane.xlu0 %3218
        %v3220 = vsel %vm1775, %v3140, 0.0
        %3221 = vadd.xlane.f32.xlu0 %v3220
        %v3222 = vpop.xlane.xlu0 %3221
        %v3223 = vsel %vm1775, %v3142, 0.0
        %3224 = vadd.xlane.f32.xlu0 %v3223
        %v3225 = vpop.xlane.xlu0 %3224
        %v3226 = vsel %vm1775, %v3144, 0.0
        %3227 = vadd.xlane.f32.xlu0 %v3226
        %v3228 = vpop.xlane.xlu0 %3227
        %v3229 = vsel %vm1775, %v3146, 0.0
        %3230 = vadd.xlane.f32.xlu0 %v3229
        %v3231 = vpop.xlane.xlu0 %3230
        %v3232 = vsel %vm1775, %v3148, 0.0
        %3233 = vadd.xlane.f32.xlu0 %v3232
        %v3234 = vpop.xlane.xlu0 %3233
        %v3235 = vsel %vm1775, %v3150, 0.0
        %3236 = vadd.xlane.f32.xlu0 %v3235
        %v3237 = vpop.xlane.xlu0 %3236
        %v3238 = vsel %vm1775, %v3152, 0.0
        %3239 = vadd.xlane.f32.xlu0 %v3238
        %v3240 = vpop.xlane.xlu0 %3239
        %v3241 = vsel %vm1775, %v3154, 0.0
        %3242 = vadd.xlane.f32.xlu0 %v3241
        %v3243 = vpop.xlane.xlu0 %3242
        %v3244 = vsel %vm1775, %v3156, 0.0
        %3245 = vadd.xlane.f32.xlu0 %v3244
        %v3246 = vpop.xlane.xlu0 %3245
        %v3247 = vsel %vm1775, %v3158, 0.0
        %3248 = vadd.xlane.f32.xlu0 %v3247
        %v3249 = vpop.xlane.xlu0 %3248
        %v3250 = vsel %vm1775, %v3160, 0.0
        %3251 = vadd.xlane.f32.xlu0 %v3250
        %v3252 = vpop.xlane.xlu0 %3251
        %v3253 = vsel %vm1775, %v3162, 0.0
        %3254 = vadd.xlane.f32.xlu0 %v3253
        %v3255 = vpop.xlane.xlu0 %3254
        %v3256 = vsel %vm1775, %v3164, 0.0
        %3257 = vadd.xlane.f32.xlu0 %v3256
        %v3258 = vpop.xlane.xlu0 %3257
        %v3259 = vsel %vm1775, %v3166, 0.0
        %3260 = vadd.xlane.f32.xlu0 %v3259
        %v3261 = vpop.xlane.xlu0 %3260
        %v3262 = vsel %vm1775, %v3168, 0.0
        %3263 = vadd.xlane.f32.xlu0 %v3262
        %v3264 = vpop.xlane.xlu0 %3263
        %v3265 = vrcp.pop %v3171
        %v3266 = vrcp.pop %v3174
        %v3267 = vrcp.pop %v3177
        %v3268 = vrcp.pop %v3180
        %v3269 = vrcp.pop %v3183
        %v3270 = vrcp.pop %v3186
        %v3271 = vrcp.pop %v3189
        %v3272 = vrcp.pop %v3192
        %v3273 = vrcp.pop %v3195
        %v3274 = vrcp.pop %v3198
        %v3275 = vrcp.pop %v3201
        %v3276 = vrcp.pop %v3204
        %v3277 = vrcp.pop %v3207
        %v3278 = vrcp.pop %v3210
        %v3279 = vrcp.pop %v3213
        %v3280 = vrcp.pop %v3216
        %v3281 = vrcp.pop %v3219
        %v3282 = vrcp.pop %v3222
        %v3283 = vrcp.pop %v3225
        %v3284 = vrcp.pop %v3228
        %v3285 = vrcp.pop %v3231
        %v3286 = vrcp.pop %v3234
        %v3287 = vrcp.pop %v3237
        %v3288 = vrcp.pop %v3240
        %v3289 = vrcp.pop %v3243
        %v3290 = vrcp.pop %v3246
        %v3291 = vrcp.pop %v3249
        %v3292 = vrcp.pop %v3252
        %v3293 = vrcp.pop %v3255
        %v3294 = vrcp.pop %v3258
        %v3295 = vrcp.pop %v3261
        %v3296 = vrcp.pop %v3264
        %v3297 = vmul.f32 %v3106, %v3265
        %v3298 = vmul.f32 %v3108, %v3266
        %v3299 = vmul.f32 %v3110, %v3267
        %v3300 = vmul.f32 %v3112, %v3268
        %v3301 = vmul.f32 %v3114, %v3269
        %v3302 = vmul.f32 %v3116, %v3270
        %v3303 = vmul.f32 %v3118, %v3271
        %v3304 = vmul.f32 %v3120, %v3272
        %v3305 = vmul.f32 %v3122, %v3273
        %v3306 = vmul.f32 %v3124, %v3274
        %v3307 = vmul.f32 %v3126, %v3275
        %v3308 = vmul.f32 %v3128, %v3276
        %v3309 = vmul.f32 %v3130, %v3277
        %v3310 = vmul.f32 %v3132, %v3278
        %v3311 = vmul.f32 %v3134, %v3279
        %v3312 = vmul.f32 %v3136, %v3280
        %v3313 = vmul.f32 %v3138, %v3281
        %v3314 = vmul.f32 %v3140, %v3282
        %v3315 = vmul.f32 %v3142, %v3283
        %v3316 = vmul.f32 %v3144, %v3284
        %v3317 = vmul.f32 %v3146, %v3285
        %v3318 = vmul.f32 %v3148, %v3286
        %v3319 = vmul.f32 %v3150, %v3287
        %v3320 = vmul.f32 %v3152, %v3288
        %v3321 = vmul.f32 %v3154, %v3289
        %v3322 = vmul.f32 %v3156, %v3290
        %v3323 = vmul.f32 %v3158, %v3291
        %v3324 = vmul.f32 %v3160, %v3292
        %v3325 = vmul.f32 %v3162, %v3293
        %v3326 = vmul.f32 %v3164, %v3294
        %v3327 = vmul.f32 %v3166, %v3295
        %v3328 = vmul.f32 %v3168, %v3296
        %v3329 = vpack.c.bf16 %v3298, %v3297
        %v3330 = vpack.c.bf16 %v3300, %v3299
        %v3331 = vpack.c.bf16 %v3302, %v3301
        %v3332 = vpack.c.bf16 %v3304, %v3303
        %v3333 = vpack.c.bf16 %v3306, %v3305
        %v3334 = vpack.c.bf16 %v3308, %v3307
        %v3335 = vpack.c.bf16 %v3310, %v3309
        %v3336 = vpack.c.bf16 %v3312, %v3311
        %v3337 = vpack.c.bf16 %v3314, %v3313
        %v3338 = vpack.c.bf16 %v3316, %v3315
        %v3339 = vpack.c.bf16 %v3318, %v3317
        %v3340 = vpack.c.bf16 %v3320, %v3319
        %v3341 = vpack.c.bf16 %v3322, %v3321
        %v3342 = vpack.c.bf16 %v3324, %v3323
        %v3343 = vpack.c.bf16 %v3326, %v3325
        %v3344 = vpack.c.bf16 %v3328, %v3327
        %3345 = vrot.lane.b32.xlu0 %v1346, 56
        %v3346 = vpop.permute.xlu0 %3345
        %3347 = vrot.lane.b32.xlu0 %v1347, 56
        %v3348 = vpop.permute.xlu0 %3347
        %3349 = vrot.lane.b32.xlu0 %v1348, 56
        %v3350 = vpop.permute.xlu0 %3349
        %3351 = vrot.lane.b32.xlu0 %v1349, 56
        %v3352 = vpop.permute.xlu0 %3351
        %v3358 = vsel %vm1775, %v3329, 0
        %v3361 = vsel %vm1775, %v3330, 0
        %v3364 = vsel %vm1775, %v3331, 0
        %v3367 = vsel %vm1775, %v3332, 0
        %3369 = vmatprep.subr.bf16.mxu0 0
        %3370 = vmatpush1.bf16.msra.mxu0 %v3346
        %3371 = vmatprep.subr.bf16.mxu0 0
        %3372 = vmatpush1.bf16.msra.mxu0 %v3348
        %3373 = vmatprep.subr.bf16.mxu0 0
        %3374 = vmatpush1.bf16.msra.mxu0 %v3350
        %3375 = vmatprep.subr.bf16.mxu0 0
        %3376 = vmatpush1.bf16.msra.mxu0 %v3352
        %3377 = vmatprep.subr.bf16.mxu0 0
        %3378 = vmatpush1.bf16.msra.mxu0 0
        %3379 = vmatprep.subr.bf16.mxu0 0
        %3380 = vmatpush1.bf16.msra.mxu0 0
        %3381 = vmatprep.subr.bf16.mxu0 0
        %3382 = vmatpush1.bf16.msra.mxu0 0
        %3383 = vmatprep.subr.bf16.mxu0 0
        %3384 = vmatpush1.bf16.msra.mxu0 0
        %3385 = vmatprep.subr.bf16.mxu0 0
        %3386 = vmatpush1.bf16.msra.mxu0 0
        %3387 = vmatprep.subr.bf16.mxu0 0
        %3388 = vmatpush1.bf16.msra.mxu0 0
        %3389 = vmatprep.subr.bf16.mxu0 0
        %3390 = vmatpush1.bf16.msra.mxu0 0
        %3391 = vmatprep.subr.bf16.mxu0 0
        %3392 = vmatpush1.bf16.msra.mxu0 0
        %3393 = vmatprep.subr.bf16.mxu0 0
        %3394 = vmatpush1.bf16.msra.mxu0 0
        %3395 = vmatprep.subr.bf16.mxu0 0
        %3396 = vmatpush1.bf16.msra.mxu0 0
        %3397 = vmatprep.subr.bf16.mxu0 0
        %3398 = vmatpush1.bf16.msra.mxu0 0
        %3399 = vmatprep.subr.bf16.mxu0 0
        %3400 = vmatpush1.bf16.msra.mxu0 0
        %3401 = vmatprep.mubr.bf16.mxu0 0
        %3402 = vmatmul.mubr.bf16.gmra.mrb[0].mxu0 %v3358
        %v3403 = vpop.f32.mrb[0].mxu0
        %v3404 = vadd.f32 0.0, %v3403
        %v3405 = vpop.f32.mrb[0].mxu0
        %v3406 = vpop.f32.mrb[0].mxu0
        %v3407 = vadd.f32 0.0, %v3406
        %v3408 = vpop.f32.mrb[0].mxu0
        %3409 = vmatprep.mubr.bf16.mxu0 0
        %3410 = vmatmul.mubr.bf16.gmra.mrb[0].mxu0 %v3361
        %v3411 = vpop.f32.mrb[0].mxu0
        %v3412 = vadd.f32 0.0, %v3411
        %v3413 = vpop.f32.mrb[0].mxu0
        %v3414 = vpop.f32.mrb[0].mxu0
        %v3415 = vadd.f32 0.0, %v3414
        %v3416 = vpop.f32.mrb[0].mxu0
        %3417 = vmatprep.mubr.bf16.mxu0 0
        %3418 = vmatmul.mubr.bf16.gmra.mrb[0].mxu0 %v3364
        %v3419 = vpop.f32.mrb[0].mxu0
        %v3420 = vadd.f32 0.0, %v3419
        %v3421 = vpop.f32.mrb[0].mxu0
        %v3422 = vpop.f32.mrb[0].mxu0
        %v3423 = vadd.f32 0.0, %v3422
        %v3424 = vpop.f32.mrb[0].mxu0
        %3425 = vmatprep.mubr.bf16.mxu0 0
        %3426 = vmatmul.mubr.bf16.gmra.mrb[0].mxu0 %v3367
        %v3427 = vpop.f32.mrb[0].mxu0
        %v3428 = vadd.f32 0.0, %v3427
        %v3429 = vpop.f32.mrb[0].mxu0
        %v3430 = vpop.f32.mrb[0].mxu0
        %v3431 = vadd.f32 0.0, %v3430
        %v3432 = vpop.f32.mrb[0].mxu0
        %3433 = vdwg.mxu0
        %3434 = vrot.lane.b32.xlu0 %v1350, 56
        %v3435 = vpop.permute.xlu0 %3434
        %3436 = vrot.lane.b32.xlu0 %v1351, 56
        %v3437 = vpop.permute.xlu0 %3436
        %3438 = vrot.lane.b32.xlu0 %v1352, 56
        %v3439 = vpop.permute.xlu0 %3438
        %3440 = vrot.lane.b32.xlu0 %v1353, 56
        %v3441 = vpop.permute.xlu0 %3440
        %v3447 = vsel %vm1775, %v3333, 0
        %v3450 = vsel %vm1775, %v3334, 0
        %v3453 = vsel %vm1775, %v3335, 0
        %v3456 = vsel %vm1775, %v3336, 0
        %3458 = vmatprep.subr.bf16.mxu0 0
        %3459 = vmatpush1.bf16.msra.mxu0 %v3435
        %3460 = vmatprep.subr.bf16.mxu0 0
        %3461 = vmatpush1.bf16.msra.mxu0 %v3437
        %3462 = vmatprep.subr.bf16.mxu0 0
        %3463 = vmatpush1.bf16.msra.mxu0 %v3439
        %3464 = vmatprep.subr.bf16.mxu0 0
        %3465 = vmatpush1.bf16.msra.mxu0 %v3441
        %3466 = vmatprep.subr.bf16.mxu0 0
        %3467 = vmatpush1.bf16.msra.mxu0 0
        %3468 = vmatprep.subr.bf16.mxu0 0
        %3469 = vmatpush1.bf16.msra.mxu0 0
        %3470 = vmatprep.subr.bf16.mxu0 0
        %3471 = vmatpush1.bf16.msra.mxu0 0
        %3472 = vmatprep.subr.bf16.mxu0 0
        %3473 = vmatpush1.bf16.msra.mxu0 0
        %3474 = vmatprep.subr.bf16.mxu0 0
        %3475 = vmatpush1.bf16.msra.mxu0 0
        %3476 = vmatprep.subr.bf16.mxu0 0
        %3477 = vmatpush1.bf16.msra.mxu0 0
        %3478 = vmatprep.subr.bf16.mxu0 0
        %3479 = vmatpush1.bf16.msra.mxu0 0
        %3480 = vmatprep.subr.bf16.mxu0 0
        %3481 = vmatpush1.bf16.msra.mxu0 0
        %3482 = vmatprep.subr.bf16.mxu0 0
        %3483 = vmatpush1.bf16.msra.mxu0 0
        %3484 = vmatprep.subr.bf16.mxu0 0
        %3485 = vmatpush1.bf16.msra.mxu0 0
        %3486 = vmatprep.subr.bf16.mxu0 0
        %3487 = vmatpush1.bf16.msra.mxu0 0
        %3488 = vmatprep.subr.bf16.mxu0 0
        %3489 = vmatpush1.bf16.msra.mxu0 0
        %3490 = vmatprep.mubr.bf16.mxu0 0
        %3491 = vmatmul.mubr.bf16.gmra.mrb[0].mxu0 %v3447
        %v3492 = vpop.f32.mrb[0].mxu0
        %v3493 = vadd.f32 0.0, %v3492
        %v3494 = vpop.f32.mrb[0].mxu0
        %v3495 = vpop.f32.mrb[0].mxu0
        %v3496 = vadd.f32 0.0, %v3495
        %v3497 = vpop.f32.mrb[0].mxu0
        %3498 = vmatprep.mubr.bf16.mxu0 0
        %3499 = vmatmul.mubr.bf16.gmra.mrb[0].mxu0 %v3450
        %v3500 = vpop.f32.mrb[0].mxu0
        %v3501 = vadd.f32 0.0, %v3500
        %v3502 = vpop.f32.mrb[0].mxu0
        %v3503 = vpop.f32.mrb[0].mxu0
        %v3504 = vadd.f32 0.0, %v3503
        %v3505 = vpop.f32.mrb[0].mxu0
        %3506 = vmatprep.mubr.bf16.mxu0 0
        %3507 = vmatmul.mubr.bf16.gmra.mrb[0].mxu0 %v3453
        %v3508 = vpop.f32.mrb[0].mxu0
        %v3509 = vadd.f32 0.0, %v3508
        %v3510 = vpop.f32.mrb[0].mxu0
        %v3511 = vpop.f32.mrb[0].mxu0
        %v3512 = vadd.f32 0.0, %v3511
        %v3513 = vpop.f32.mrb[0].mxu0
        %3514 = vmatprep.mubr.bf16.mxu0 0
        %3515 = vmatmul.mubr.bf16.gmra.mrb[0].mxu0 %v3456
        %v3516 = vpop.f32.mrb[0].mxu0
        %v3517 = vadd.f32 0.0, %v3516
        %v3518 = vpop.f32.mrb[0].mxu0
        %v3519 = vpop.f32.mrb[0].mxu0
        %v3520 = vadd.f32 0.0, %v3519
        %v3521 = vpop.f32.mrb[0].mxu0
        %3522 = vdwg.mxu0
        %3523 = vrot.lane.b32.xlu0 %v1354, 56
        %v3524 = vpop.permute.xlu0 %3523
        %3525 = vrot.lane.b32.xlu0 %v1355, 56
        %v3526 = vpop.permute.xlu0 %3525
        %3527 = vrot.lane.b32.xlu0 %v1356, 56
        %v3528 = vpop.permute.xlu0 %3527
        %3529 = vrot.lane.b32.xlu0 %v1357, 56
        %v3530 = vpop.permute.xlu0 %3529
        %v3536 = vsel %vm1775, %v3337, 0
        %v3539 = vsel %vm1775, %v3338, 0
        %v3542 = vsel %vm1775, %v3339, 0
        %v3545 = vsel %vm1775, %v3340, 0
        %3547 = vmatprep.subr.bf16.mxu0 0
        %3548 = vmatpush1.bf16.msra.mxu0 %v3524
        %3549 = vmatprep.subr.bf16.mxu0 0
        %3550 = vmatpush1.bf16.msra.mxu0 %v3526
        %3551 = vmatprep.subr.bf16.mxu0 0
        %3552 = vmatpush1.bf16.msra.mxu0 %v3528
        %3553 = vmatprep.subr.bf16.mxu0 0
        %3554 = vmatpush1.bf16.msra.mxu0 %v3530
        %3555 = vmatprep.subr.bf16.mxu0 0
        %3556 = vmatpush1.bf16.msra.mxu0 0
        %3557 = vmatprep.subr.bf16.mxu0 0
        %3558 = vmatpush1.bf16.msra.mxu0 0
        %3559 = vmatprep.subr.bf16.mxu0 0
        %3560 = vmatpush1.bf16.msra.mxu0 0
        %3561 = vmatprep.subr.bf16.mxu0 0
        %3562 = vmatpush1.bf16.msra.mxu0 0
        %3563 = vmatprep.subr.bf16.mxu0 0
        %3564 = vmatpush1.bf16.msra.mxu0 0
        %3565 = vmatprep.subr.bf16.mxu0 0
        %3566 = vmatpush1.bf16.msra.mxu0 0
        %3567 = vmatprep.subr.bf16.mxu0 0
        %3568 = vmatpush1.bf16.msra.mxu0 0
        %3569 = vmatprep.subr.bf16.mxu0 0
        %3570 = vmatpush1.bf16.msra.mxu0 0
        %3571 = vmatprep.subr.bf16.mxu0 0
        %3572 = vmatpush1.bf16.msra.mxu0 0
        %3573 = vmatprep.subr.bf16.mxu0 0
        %3574 = vmatpush1.bf16.msra.mxu0 0
        %3575 = vmatprep.subr.bf16.mxu0 0
        %3576 = vmatpush1.bf16.msra.mxu0 0
        %3577 = vmatprep.subr.bf16.mxu0 0
        %3578 = vmatpush1.bf16.msra.mxu0 0
        %3579 = vmatprep.mubr.bf16.mxu0 0
        %3580 = vmatmul.mubr.bf16.gmra.mrb[0].mxu0 %v3536
        %v3581 = vpop.f32.mrb[0].mxu0
        %v3582 = vadd.f32 0.0, %v3581
        %v3583 = vpop.f32.mrb[0].mxu0
        %v3584 = vpop.f32.mrb[0].mxu0
        %v3585 = vadd.f32 0.0, %v3584
        %v3586 = vpop.f32.mrb[0].mxu0
        %3587 = vmatprep.mubr.bf16.mxu0 0
        %3588 = vmatmul.mubr.bf16.gmra.mrb[0].mxu0 %v3539
        %v3589 = vpop.f32.mrb[0].mxu0
        %v3590 = vadd.f32 0.0, %v3589
        %v3591 = vpop.f32.mrb[0].mxu0
        %v3592 = vpop.f32.mrb[0].mxu0
        %v3593 = vadd.f32 0.0, %v3592
        %v3594 = vpop.f32.mrb[0].mxu0
        %3595 = vmatprep.mubr.bf16.mxu0 0
        %3596 = vmatmul.mubr.bf16.gmra.mrb[0].mxu0 %v3542
        %v3597 = vpop.f32.mrb[0].mxu0
        %v3598 = vadd.f32 0.0, %v3597
        %v3599 = vpop.f32.mrb[0].mxu0
        %v3600 = vpop.f32.mrb[0].mxu0
        %v3601 = vadd.f32 0.0, %v3600
        %v3602 = vpop.f32.mrb[0].mxu0
        %3603 = vmatprep.mubr.bf16.mxu0 0
        %3604 = vmatmul.mubr.bf16.gmra.mrb[0].mxu0 %v3545
        %v3605 = vpop.f32.mrb[0].mxu0
        %v3606 = vadd.f32 0.0, %v3605
        %v3607 = vpop.f32.mrb[0].mxu0
        %v3608 = vpop.f32.mrb[0].mxu0
        %v3609 = vadd.f32 0.0, %v3608
        %v3610 = vpop.f32.mrb[0].mxu0
        %3611 = vdwg.mxu0
        %3612 = vrot.lane.b32.xlu0 %v1358, 56
        %v3613 = vpop.permute.xlu0 %3612
        %3614 = vrot.lane.b32.xlu0 %v1359, 56
        %v3615 = vpop.permute.xlu0 %3614
        %3616 = vrot.lane.b32.xlu0 %v1360, 56
        %v3617 = vpop.permute.xlu0 %3616
        %3618 = vrot.lane.b32.xlu0 %v1361, 56
        %v3619 = vpop.permute.xlu0 %3618
        %v3625 = vsel %vm1775, %v3341, 0
        %v3628 = vsel %vm1775, %v3342, 0
        %v3631 = vsel %vm1775, %v3343, 0
        %v3634 = vsel %vm1775, %v3344, 0
        %3636 = vmatprep.subr.bf16.mxu0 0
        %3637 = vmatpush1.bf16.msra.mxu0 %v3613
        %3638 = vmatprep.subr.bf16.mxu0 0
        %3639 = vmatpush1.bf16.msra.mxu0 %v3615
        %3640 = vmatprep.subr.bf16.mxu0 0
        %3641 = vmatpush1.bf16.msra.mxu0 %v3617
        %3642 = vmatprep.subr.bf16.mxu0 0
        %3643 = vmatpush1.bf16.msra.mxu0 %v3619
        %3644 = vmatprep.subr.bf16.mxu0 0
        %3645 = vmatpush1.bf16.msra.mxu0 0
        %3646 = vmatprep.subr.bf16.mxu0 0
        %3647 = vmatpush1.bf16.msra.mxu0 0
        %3648 = vmatprep.subr.bf16.mxu0 0
        %3649 = vmatpush1.bf16.msra.mxu0 0
        %3650 = vmatprep.subr.bf16.mxu0 0
        %3651 = vmatpush1.bf16.msra.mxu0 0
        %3652 = vmatprep.subr.bf16.mxu0 0
        %3653 = vmatpush1.bf16.msra.mxu0 0
        %3654 = vmatprep.subr.bf16.mxu0 0
        %3655 = vmatpush1.bf16.msra.mxu0 0
        %3656 = vmatprep.subr.bf16.mxu0 0
        %3657 = vmatpush1.bf16.msra.mxu0 0
        %3658 = vmatprep.subr.bf16.mxu0 0
        %3659 = vmatpush1.bf16.msra.mxu0 0
        %3660 = vmatprep.subr.bf16.mxu0 0
        %3661 = vmatpush1.bf16.msra.mxu0 0
        %3662 = vmatprep.subr.bf16.mxu0 0
        %3663 = vmatpush1.bf16.msra.mxu0 0
        %3664 = vmatprep.subr.bf16.mxu0 0
        %3665 = vmatpush1.bf16.msra.mxu0 0
        %3666 = vmatprep.subr.bf16.mxu0 0
        %3667 = vmatpush1.bf16.msra.mxu0 0
        %3668 = vmatprep.mubr.bf16.mxu0 0
        %3669 = vmatmul.mubr.bf16.gmra.mrb[0].mxu0 %v3625
        %v3670 = vpop.f32.mrb[0].mxu0
        %v3671 = vadd.f32 0.0, %v3670
        %v3672 = vpop.f32.mrb[0].mxu0
        %v3673 = vpop.f32.mrb[0].mxu0
        %v3674 = vadd.f32 0.0, %v3673
        %v3675 = vpop.f32.mrb[0].mxu0
        %3676 = vmatprep.mubr.bf16.mxu0 0
        %3677 = vmatmul.mubr.bf16.gmra.mrb[0].mxu0 %v3628
        %v3678 = vpop.f32.mrb[0].mxu0
        %v3679 = vadd.f32 0.0, %v3678
        %v3680 = vpop.f32.mrb[0].mxu0
        %v3681 = vpop.f32.mrb[0].mxu0
        %v3682 = vadd.f32 0.0, %v3681
        %v3683 = vpop.f32.mrb[0].mxu0
        %3684 = vmatprep.mubr.bf16.mxu0 0
        %3685 = vmatmul.mubr.bf16.gmra.mrb[0].mxu0 %v3631
        %v3686 = vpop.f32.mrb[0].mxu0
        %v3687 = vadd.f32 0.0, %v3686
        %v3688 = vpop.f32.mrb[0].mxu0
        %v3689 = vpop.f32.mrb[0].mxu0
        %v3690 = vadd.f32 0.0, %v3689
        %v3691 = vpop.f32.mrb[0].mxu0
        %3692 = vmatprep.mubr.bf16.mxu0 0
        %3693 = vmatmul.mubr.bf16.gmra.mrb[0].mxu0 %v3634
        %v3694 = vpop.f32.mrb[0].mxu0
        %v3695 = vadd.f32 0.0, %v3694
        %v3696 = vpop.f32.mrb[0].mxu0
        %v3697 = vpop.f32.mrb[0].mxu0
        %v3698 = vadd.f32 0.0, %v3697
        %v3699 = vpop.f32.mrb[0].mxu0
        %3700 = vdwg.mxu0
        %3733 = vrot.lane.b32.xlu0 %v3404, 8
        %v3734 = vpop.permute.xlu0 %3733
        %3735 = vrot.lane.b32.xlu0 %v3407, 8
        %v3736 = vpop.permute.xlu0 %3735
        %3737 = vrot.lane.b32.xlu0 %v3412, 8
        %v3738 = vpop.permute.xlu0 %3737
        %3739 = vrot.lane.b32.xlu0 %v3415, 8
        %v3740 = vpop.permute.xlu0 %3739
        %3741 = vrot.lane.b32.xlu0 %v3420, 8
        %v3742 = vpop.permute.xlu0 %3741
        %3743 = vrot.lane.b32.xlu0 %v3423, 8
        %v3744 = vpop.permute.xlu0 %3743
        %3745 = vrot.lane.b32.xlu0 %v3428, 8
        %v3746 = vpop.permute.xlu0 %3745
        %3747 = vrot.lane.b32.xlu0 %v3431, 8
        %v3748 = vpop.permute.xlu0 %3747
        %3749 = vrot.lane.b32.xlu0 %v3493, 8
        %v3750 = vpop.permute.xlu0 %3749
        %3751 = vrot.lane.b32.xlu0 %v3496, 8
        %v3752 = vpop.permute.xlu0 %3751
        %3753 = vrot.lane.b32.xlu0 %v3501, 8
        %v3754 = vpop.permute.xlu0 %3753
        %3755 = vrot.lane.b32.xlu0 %v3504, 8
        %v3756 = vpop.permute.xlu0 %3755
        %3757 = vrot.lane.b32.xlu0 %v3509, 8
        %v3758 = vpop.permute.xlu0 %3757
        %3759 = vrot.lane.b32.xlu0 %v3512, 8
        %v3760 = vpop.permute.xlu0 %3759
        %3761 = vrot.lane.b32.xlu0 %v3517, 8
        %v3762 = vpop.permute.xlu0 %3761
        %3763 = vrot.lane.b32.xlu0 %v3520, 8
        %v3764 = vpop.permute.xlu0 %3763
        %3765 = vrot.lane.b32.xlu0 %v3582, 8
        %v3766 = vpop.permute.xlu0 %3765
        %3767 = vrot.lane.b32.xlu0 %v3585, 8
        %v3768 = vpop.permute.xlu0 %3767
        %3769 = vrot.lane.b32.xlu0 %v3590, 8
        %v3770 = vpop.permute.xlu0 %3769
        %3771 = vrot.lane.b32.xlu0 %v3593, 8
        %v3772 = vpop.permute.xlu0 %3771
        %3773 = vrot.lane.b32.xlu0 %v3598, 8
        %v3774 = vpop.permute.xlu0 %3773
        %3775 = vrot.lane.b32.xlu0 %v3601, 8
        %v3776 = vpop.permute.xlu0 %3775
        %3777 = vrot.lane.b32.xlu0 %v3606, 8
        %v3778 = vpop.permute.xlu0 %3777
        %3779 = vrot.lane.b32.xlu0 %v3609, 8
        %v3780 = vpop.permute.xlu0 %3779
        %3781 = vrot.lane.b32.xlu0 %v3671, 8
        %v3782 = vpop.permute.xlu0 %3781
        %3783 = vrot.lane.b32.xlu0 %v3674, 8
        %v3784 = vpop.permute.xlu0 %3783
        %3785 = vrot.lane.b32.xlu0 %v3679, 8
        %v3786 = vpop.permute.xlu0 %3785
        %3787 = vrot.lane.b32.xlu0 %v3682, 8
        %v3788 = vpop.permute.xlu0 %3787
        %3789 = vrot.lane.b32.xlu0 %v3687, 8
        %v3790 = vpop.permute.xlu0 %3789
        %3791 = vrot.lane.b32.xlu0 %v3690, 8
        %v3792 = vpop.permute.xlu0 %3791
        %3793 = vrot.lane.b32.xlu0 %v3695, 8
        %v3794 = vpop.permute.xlu0 %3793
        %3795 = vrot.lane.b32.xlu0 %v3698, 8
        %v3796 = vpop.permute.xlu0 %3795
        %vm3829 = vcmask 130112
        %3830 = vst.msk [vmem:[#allocation2] sm:$0xff] %vm3829, %v3734
        %3831 = vst.msk [vmem:[#allocation2 + $0x8] sm:$0xff] %vm3829, %v3736
        %3832 = vst.msk [vmem:[#allocation2 + $0x10] sm:$0xff] %vm3829, %v3738
        %3833 = vst.msk [vmem:[#allocation2 + $0x18] sm:$0xff] %vm3829, %v3740
        %3834 = vst.msk [vmem:[#allocation2 + $0x20] sm:$0xff] %vm3829, %v3742
        %3835 = vst.msk [vmem:[#allocation2 + $0x28] sm:$0xff] %vm3829, %v3744
        %3836 = vst.msk [vmem:[#allocation2 + $0x30] sm:$0xff] %vm3829, %v3746
        %3837 = vst.msk [vmem:[#allocation2 + $0x38] sm:$0xff] %vm3829, %v3748
        %3838 = vst.msk [vmem:[#allocation2 + $0x40] sm:$0xff] %vm3829, %v3750
        %3839 = vst.msk [vmem:[#allocation2 + $0x48] sm:$0xff] %vm3829, %v3752
        %3840 = vst.msk [vmem:[#allocation2 + $0x50] sm:$0xff] %vm3829, %v3754
        %3841 = vst.msk [vmem:[#allocation2 + $0x58] sm:$0xff] %vm3829, %v3756
        %3842 = vst.msk [vmem:[#allocation2 + $0x60] sm:$0xff] %vm3829, %v3758
        %3843 = vst.msk [vmem:[#allocation2 + $0x68] sm:$0xff] %vm3829, %v3760
        %3844 = vst.msk [vmem:[#allocation2 + $0x70] sm:$0xff] %vm3829, %v3762
        %3845 = vst.msk [vmem:[#allocation2 + $0x78] sm:$0xff] %vm3829, %v3764
        %3846 = vst.msk [vmem:[#allocation2 + $0x80] sm:$0xff] %vm3829, %v3766
        %3847 = vst.msk [vmem:[#allocation2 + $0x88] sm:$0xff] %vm3829, %v3768
        %3848 = vst.msk [vmem:[#allocation2 + $0x90] sm:$0xff] %vm3829, %v3770
        %3849 = vst.msk [vmem:[#allocation2 + $0x98] sm:$0xff] %vm3829, %v3772
        %3850 = vst.msk [vmem:[#allocation2 + $0xa0] sm:$0xff] %vm3829, %v3774
        %3851 = vst.msk [vmem:[#allocation2 + $0xa8] sm:$0xff] %vm3829, %v3776
        %3852 = vst.msk [vmem:[#allocation2 + $0xb0] sm:$0xff] %vm3829, %v3778
        %3853 = vst.msk [vmem:[#allocation2 + $0xb8] sm:$0xff] %vm3829, %v3780
        %3854 = vst.msk [vmem:[#allocation2 + $0xc0] sm:$0xff] %vm3829, %v3782
        %3855 = vst.msk [vmem:[#allocation2 + $0xc8] sm:$0xff] %vm3829, %v3784
        %3856 = vst.msk [vmem:[#allocation2 + $0xd0] sm:$0xff] %vm3829, %v3786
        %3857 = vst.msk [vmem:[#allocation2 + $0xd8] sm:$0xff] %vm3829, %v3788
        %3858 = vst.msk [vmem:[#allocation2 + $0xe0] sm:$0xff] %vm3829, %v3790
        %3859 = vst.msk [vmem:[#allocation2 + $0xe8] sm:$0xff] %vm3829, %v3792
        %3860 = vst.msk [vmem:[#allocation2 + $0xf0] sm:$0xff] %vm3829, %v3794
        %3861 = vst.msk [vmem:[#allocation2 + $0xf8] sm:$0xff] %vm3829, %v3796
        %s3862 = scalar_lea.vmem [#allocation6], 128
        %v3863 = vld [vmem:[%s3862] sm:$0xff]
        %v3864 = vld [vmem:[%s3862 + $0x8] sm:$0xff]
        %v3865 = vld [vmem:[%s3862 + $0x10] sm:$0xff]
        %v3866 = vld [vmem:[%s3862 + $0x18] sm:$0xff]
        %v3867 = vld [vmem:[%s3862 + $0x20] sm:$0xff]
        %v3868 = vld [vmem:[%s3862 + $0x28] sm:$0xff]
        %v3869 = vld [vmem:[%s3862 + $0x30] sm:$0xff]
        %v3870 = vld [vmem:[%s3862 + $0x38] sm:$0xff]
        %3871 = vrot.lane.b32.xlu0 %v1330, 112
        %v3872 = vpop.permute.xlu0 %3871
        %3873 = vrot.lane.b32.xlu0 %v1331, 112
        %v3874 = vpop.permute.xlu0 %3873
        %3875 = vrot.lane.b32.xlu0 %v1332, 112
        %v3876 = vpop.permute.xlu0 %3875
        %3877 = vrot.lane.b32.xlu0 %v1333, 112
        %v3878 = vpop.permute.xlu0 %3877
        %3879 = vrot.lane.b32.xlu0 %v1346, 80
        %v3880 = vpop.permute.xlu0 %3879
        %3881 = vrot.lane.b32.xlu0 %v1347, 80
        %v3882 = vpop.permute.xlu0 %3881
        %3883 = vrot.lane.b32.xlu0 %v1348, 80
        %v3884 = vpop.permute.xlu0 %3883
        %3885 = vrot.lane.b32.xlu0 %v1349, 80
        %v3886 = vpop.permute.xlu0 %3885
        %v3888 = vsel %vm1382, %v3872, 0
        %v3891 = vsel %vm1382, %v3874, 0
        %v3894 = vsel %vm1382, %v3876, 0
        %v3897 = vsel %vm1382, %v3878, 0
        %v3900 = vsel %vm1382, %v3880, 0
        %v3903 = vsel %vm1382, %v3882, 0
        %v3906 = vsel %vm1382, %v3884, 0
        %v3909 = vsel %vm1382, %v3886, 0
        %3911 = vmatprep.subr.bf16.mxu0 0
        %3912 = vmatpush1.bf16.xpose.msra.mxu0 %v3900
        %3913 = vmatprep.subr.bf16.mxu0 0
        %3914 = vmatpush1.bf16.xpose.msra.mxu0 %v3903
        %3915 = vmatprep.subr.bf16.mxu0 0
        %3916 = vmatpush1.bf16.xpose.msra.mxu0 %v3906
        %3917 = vmatprep.subr.bf16.mxu0 0
        %3918 = vmatpush1.bf16.xpose.msra.mxu0 %v3909
        %3919 = vmatprep.subr.bf16.mxu0 0
        %3920 = vmatpush1.bf16.xpose.msra.mxu0 0
        %3921 = vmatprep.subr.bf16.mxu0 0
        %3922 = vmatpush1.bf16.xpose.msra.mxu0 0
        %3923 = vmatprep.subr.bf16.mxu0 0
        %3924 = vmatpush1.bf16.xpose.msra.mxu0 0
        %3925 = vmatprep.subr.bf16.mxu0 0
        %3926 = vmatpush1.bf16.xpose.msra.mxu0 0
        %3927 = vmatprep.subr.bf16.mxu0 0
        %3928 = vmatpush1.bf16.xpose.msra.mxu0 0
        %3929 = vmatprep.subr.bf16.mxu0 0
        %3930 = vmatpush1.bf16.xpose.msra.mxu0 0
        %3931 = vmatprep.subr.bf16.mxu0 0
        %3932 = vmatpush1.bf16.xpose.msra.mxu0 0
        %3933 = vmatprep.subr.bf16.mxu0 0
        %3934 = vmatpush1.bf16.xpose.msra.mxu0 0
        %3935 = vmatprep.subr.bf16.mxu0 0
        %3936 = vmatpush1.bf16.xpose.msra.mxu0 0
        %3937 = vmatprep.subr.bf16.mxu0 0
        %3938 = vmatpush1.bf16.xpose.msra.mxu0 0
        %3939 = vmatprep.subr.bf16.mxu0 0
        %3940 = vmatpush1.bf16.xpose.msra.mxu0 0
        %3941 = vmatprep.subr.bf16.mxu0 0
        %3942 = vmatpush1.bf16.xpose.msra.mxu0 0
        %3943 = vmatprep.mubr.bf16.mxu0 0
        %3944 = vmatmul.mubr.bf16.gmra.mrb[0].mxu0 %v3888
        %v3945 = vpop.f32.mrb[0].mxu0
        %v3946 = vadd.f32 %v3863, %v3945
        %v3947 = vpop.f32.mrb[0].mxu0
        %v3948 = vpop.f32.mrb[0].mxu0
        %v3949 = vadd.f32 %v3864, %v3948
        %v3950 = vpop.f32.mrb[0].mxu0
        %3951 = vmatprep.mubr.bf16.mxu0 0
        %3952 = vmatmul.mubr.bf16.gmra.mrb[0].mxu0 %v3891
        %v3953 = vpop.f32.mrb[0].mxu0
        %v3954 = vadd.f32 %v3865, %v3953
        %v3955 = vpop.f32.mrb[0].mxu0
        %v3956 = vpop.f32.mrb[0].mxu0
        %v3957 = vadd.f32 %v3866, %v3956
        %v3958 = vpop.f32.mrb[0].mxu0
        %3959 = vmatprep.mubr.bf16.mxu0 0
        %3960 = vmatmul.mubr.bf16.gmra.mrb[0].mxu0 %v3894
        %v3961 = vpop.f32.mrb[0].mxu0
        %v3962 = vadd.f32 %v3867, %v3961
        %v3963 = vpop.f32.mrb[0].mxu0
        %v3964 = vpop.f32.mrb[0].mxu0
        %v3965 = vadd.f32 %v3868, %v3964
        %v3966 = vpop.f32.mrb[0].mxu0
        %3967 = vmatprep.mubr.bf16.mxu0 0
        %3968 = vmatmul.mubr.bf16.gmra.mrb[0].mxu0 %v3897
        %v3969 = vpop.f32.mrb[0].mxu0
        %v3970 = vadd.f32 %v3869, %v3969
        %v3971 = vpop.f32.mrb[0].mxu0
        %v3972 = vpop.f32.mrb[0].mxu0
        %v3973 = vadd.f32 %v3870, %v3972
        %v3974 = vpop.f32.mrb[0].mxu0
        %3975 = vdwg.mxu0
        %3976 = vrot.lane.b32.xlu0 %v1334, 112
        %v3977 = vpop.permute.xlu0 %3976
        %3978 = vrot.lane.b32.xlu0 %v1335, 112
        %v3979 = vpop.permute.xlu0 %3978
        %3980 = vrot.lane.b32.xlu0 %v1336, 112
        %v3981 = vpop.permute.xlu0 %3980
        %3982 = vrot.lane.b32.xlu0 %v1337, 112
        %v3983 = vpop.permute.xlu0 %3982
        %3984 = vrot.lane.b32.xlu0 %v1350, 80
        %v3985 = vpop.permute.xlu0 %3984
        %3986 = vrot.lane.b32.xlu0 %v1351, 80
        %v3987 = vpop.permute.xlu0 %3986
        %3988 = vrot.lane.b32.xlu0 %v1352, 80
        %v3989 = vpop.permute.xlu0 %3988
        %3990 = vrot.lane.b32.xlu0 %v1353, 80
        %v3991 = vpop.permute.xlu0 %3990
        %v3993 = vsel %vm1382, %v3977, 0
        %v3996 = vsel %vm1382, %v3979, 0
        %v3999 = vsel %vm1382, %v3981, 0
        %v4002 = vsel %vm1382, %v3983, 0
        %v4005 = vsel %vm1382, %v3985, 0
        %v4008 = vsel %vm1382, %v3987, 0
        %v4011 = vsel %vm1382, %v3989, 0
        %v4014 = vsel %vm1382, %v3991, 0
        %4016 = vmatprep.subr.bf16.mxu0 0
        %4017 = vmatpush1.bf16.xpose.msra.mxu0 %v4005
        %4018 = vmatprep.subr.bf16.mxu0 0
        %4019 = vmatpush1.bf16.xpose.msra.mxu0 %v4008
        %4020 = vmatprep.subr.bf16.mxu0 0
        %4021 = vmatpush1.bf16.xpose.msra.mxu0 %v4011
        %4022 = vmatprep.subr.bf16.mxu0 0
        %4023 = vmatpush1.bf16.xpose.msra.mxu0 %v4014
        %4024 = vmatprep.subr.bf16.mxu0 0
        %4025 = vmatpush1.bf16.xpose.msra.mxu0 0
        %4026 = vmatprep.subr.bf16.mxu0 0
        %4027 = vmatpush1.bf16.xpose.msra.mxu0 0
        %4028 = vmatprep.subr.bf16.mxu0 0
        %4029 = vmatpush1.bf16.xpose.msra.mxu0 0
        %4030 = vmatprep.subr.bf16.mxu0 0
        %4031 = vmatpush1.bf16.xpose.msra.mxu0 0
        %4032 = vmatprep.subr.bf16.mxu0 0
        %4033 = vmatpush1.bf16.xpose.msra.mxu0 0
        %4034 = vmatprep.subr.bf16.mxu0 0
        %4035 = vmatpush1.bf16.xpose.msra.mxu0 0
        %4036 = vmatprep.subr.bf16.mxu0 0
        %4037 = vmatpush1.bf16.xpose.msra.mxu0 0
        %4038 = vmatprep.subr.bf16.mxu0 0
        %4039 = vmatpush1.bf16.xpose.msra.mxu0 0
        %4040 = vmatprep.subr.bf16.mxu0 0
        %4041 = vmatpush1.bf16.xpose.msra.mxu0 0
        %4042 = vmatprep.subr.bf16.mxu0 0
        %4043 = vmatpush1.bf16.xpose.msra.mxu0 0
        %4044 = vmatprep.subr.bf16.mxu0 0
        %4045 = vmatpush1.bf16.xpose.msra.mxu0 0
        %4046 = vmatprep.subr.bf16.mxu0 0
        %4047 = vmatpush1.bf16.xpose.msra.mxu0 0
        %4048 = vmatprep.mubr.bf16.mxu0 0
        %4049 = vmatmul.mubr.bf16.gmra.mrb[0].mxu0 %v3993
        %v4050 = vpop.f32.mrb[0].mxu0
        %v4051 = vadd.f32 %v3863, %v4050
        %v4052 = vpop.f32.mrb[0].mxu0
        %v4053 = vpop.f32.mrb[0].mxu0
        %v4054 = vadd.f32 %v3864, %v4053
        %v4055 = vpop.f32.mrb[0].mxu0
        %4056 = vmatprep.mubr.bf16.mxu0 0
        %4057 = vmatmul.mubr.bf16.gmra.mrb[0].mxu0 %v3996
        %v4058 = vpop.f32.mrb[0].mxu0
        %v4059 = vadd.f32 %v3865, %v4058
        %v4060 = vpop.f32.mrb[0].mxu0
        %v4061 = vpop.f32.mrb[0].mxu0
        %v4062 = vadd.f32 %v3866, %v4061
        %v4063 = vpop.f32.mrb[0].mxu0
        %4064 = vmatprep.mubr.bf16.mxu0 0
        %4065 = vmatmul.mubr.bf16.gmra.mrb[0].mxu0 %v3999
        %v4066 = vpop.f32.mrb[0].mxu0
        %v4067 = vadd.f32 %v3867, %v4066
        %v4068 = vpop.f32.mrb[0].mxu0
        %v4069 = vpop.f32.mrb[0].mxu0
        %v4070 = vadd.f32 %v3868, %v4069
        %v4071 = vpop.f32.mrb[0].mxu0
        %4072 = vmatprep.mubr.bf16.mxu0 0
        %4073 = vmatmul.mubr.bf16.gmra.mrb[0].mxu0 %v4002
        %v4074 = vpop.f32.mrb[0].mxu0
        %v4075 = vadd.f32 %v3869, %v4074
        %v4076 = vpop.f32.mrb[0].mxu0
        %v4077 = vpop.f32.mrb[0].mxu0
        %v4078 = vadd.f32 %v3870, %v4077
        %v4079 = vpop.f32.mrb[0].mxu0
        %4080 = vdwg.mxu0
        %4081 = vrot.lane.b32.xlu0 %v1338, 112
        %v4082 = vpop.permute.xlu0 %4081
        %4083 = vrot.lane.b32.xlu0 %v1339, 112
        %v4084 = vpop.permute.xlu0 %4083
        %4085 = vrot.lane.b32.xlu0 %v1340, 112
        %v4086 = vpop.permute.xlu0 %4085
        %4087 = vrot.lane.b32.xlu0 %v1341, 112
        %v4088 = vpop.permute.xlu0 %4087
        %4089 = vrot.lane.b32.xlu0 %v1354, 80
        %v4090 = vpop.permute.xlu0 %4089
        %4091 = vrot.lane.b32.xlu0 %v1355, 80
        %v4092 = vpop.permute.xlu0 %4091
        %4093 = vrot.lane.b32.xlu0 %v1356, 80
        %v4094 = vpop.permute.xlu0 %4093
        %4095 = vrot.lane.b32.xlu0 %v1357, 80
        %v4096 = vpop.permute.xlu0 %4095
        %v4098 = vsel %vm1382, %v4082, 0
        %v4101 = vsel %vm1382, %v4084, 0
        %v4104 = vsel %vm1382, %v4086, 0
        %v4107 = vsel %vm1382, %v4088, 0
        %v4110 = vsel %vm1382, %v4090, 0
        %v4113 = vsel %vm1382, %v4092, 0
        %v4116 = vsel %vm1382, %v4094, 0
        %v4119 = vsel %vm1382, %v4096, 0
        %4121 = vmatprep.subr.bf16.mxu0 0
        %4122 = vmatpush1.bf16.xpose.msra.mxu0 %v4110
        %4123 = vmatprep.subr.bf16.mxu0 0
        %4124 = vmatpush1.bf16.xpose.msra.mxu0 %v4113
        %4125 = vmatprep.subr.bf16.mxu0 0
        %4126 = vmatpush1.bf16.xpose.msra.mxu0 %v4116
        %4127 = vmatprep.subr.bf16.mxu0 0
        %4128 = vmatpush1.bf16.xpose.msra.mxu0 %v4119
        %4129 = vmatprep.subr.bf16.mxu0 0
        %4130 = vmatpush1.bf16.xpose.msra.mxu0 0
        %4131 = vmatprep.subr.bf16.mxu0 0
        %4132 = vmatpush1.bf16.xpose.msra.mxu0 0
        %4133 = vmatprep.subr.bf16.mxu0 0
        %4134 = vmatpush1.bf16.xpose.msra.mxu0 0
        %4135 = vmatprep.subr.bf16.mxu0 0
        %4136 = vmatpush1.bf16.xpose.msra.mxu0 0
        %4137 = vmatprep.subr.bf16.mxu0 0
        %4138 = vmatpush1.bf16.xpose.msra.mxu0 0
        %4139 = vmatprep.subr.bf16.mxu0 0
        %4140 = vmatpush1.bf16.xpose.msra.mxu0 0
        %4141 = vmatprep.subr.bf16.mxu0 0
        %4142 = vmatpush1.bf16.xpose.msra.mxu0 0
        %4143 = vmatprep.subr.bf16.mxu0 0
        %4144 = vmatpush1.bf16.xpose.msra.mxu0 0
        %4145 = vmatprep.subr.bf16.mxu0 0
        %4146 = vmatpush1.bf16.xpose.msra.mxu0 0
        %4147 = vmatprep.subr.bf16.mxu0 0
        %4148 = vmatpush1.bf16.xpose.msra.mxu0 0
        %4149 = vmatprep.subr.bf16.mxu0 0
        %4150 = vmatpush1.bf16.xpose.msra.mxu0 0
        %4151 = vmatprep.subr.bf16.mxu0 0
        %4152 = vmatpush1.bf16.xpose.msra.mxu0 0
        %4153 = vmatprep.mubr.bf16.mxu0 0
        %4154 = vmatmul.mubr.bf16.gmra.mrb[0].mxu0 %v4098
        %v4155 = vpop.f32.mrb[0].mxu0
        %v4156 = vadd.f32 %v3863, %v4155
        %v4157 = vpop.f32.mrb[0].mxu0
        %v4158 = vpop.f32.mrb[0].mxu0
        %v4159 = vadd.f32 %v3864, %v4158
        %v4160 = vpop.f32.mrb[0].mxu0
        %4161 = vmatprep.mubr.bf16.mxu0 0
        %4162 = vmatmul.mubr.bf16.gmra.mrb[0].mxu0 %v4101
        %v4163 = vpop.f32.mrb[0].mxu0
        %v4164 = vadd.f32 %v3865, %v4163
        %v4165 = vpop.f32.mrb[0].mxu0
        %v4166 = vpop.f32.mrb[0].mxu0
        %v4167 = vadd.f32 %v3866, %v4166
        %v4168 = vpop.f32.mrb[0].mxu0
        %4169 = vmatprep.mubr.bf16.mxu0 0
        %4170 = vmatmul.mubr.bf16.gmra.mrb[0].mxu0 %v4104
        %v4171 = vpop.f32.mrb[0].mxu0
        %v4172 = vadd.f32 %v3867, %v4171
        %v4173 = vpop.f32.mrb[0].mxu0
        %v4174 = vpop.f32.mrb[0].mxu0
        %v4175 = vadd.f32 %v3868, %v4174
        %v4176 = vpop.f32.mrb[0].mxu0
        %4177 = vmatprep.mubr.bf16.mxu0 0
        %4178 = vmatmul.mubr.bf16.gmra.mrb[0].mxu0 %v4107
        %v4179 = vpop.f32.mrb[0].mxu0
        %v4180 = vadd.f32 %v3869, %v4179
        %v4181 = vpop.f32.mrb[0].mxu0
        %v4182 = vpop.f32.mrb[0].mxu0
        %v4183 = vadd.f32 %v3870, %v4182
        %v4184 = vpop.f32.mrb[0].mxu0
        %4185 = vdwg.mxu0
        %4186 = vrot.lane.b32.xlu0 %v1342, 112
        %v4187 = vpop.permute.xlu0 %4186
        %4188 = vrot.lane.b32.xlu0 %v1343, 112
        %v4189 = vpop.permute.xlu0 %4188
        %4190 = vrot.lane.b32.xlu0 %v1344, 112
        %v4191 = vpop.permute.xlu0 %4190
        %4192 = vrot.lane.b32.xlu0 %v1345, 112
        %v4193 = vpop.permute.xlu0 %4192
        %4194 = vrot.lane.b32.xlu0 %v1358, 80
        %v4195 = vpop.permute.xlu0 %4194
        %4196 = vrot.lane.b32.xlu0 %v1359, 80
        %v4197 = vpop.permute.xlu0 %4196
        %4198 = vrot.lane.b32.xlu0 %v1360, 80
        %v4199 = vpop.permute.xlu0 %4198
        %4200 = vrot.lane.b32.xlu0 %v1361, 80
        %v4201 = vpop.permute.xlu0 %4200
        %v4203 = vsel %vm1382, %v4187, 0
        %v4206 = vsel %vm1382, %v4189, 0
        %v4209 = vsel %vm1382, %v4191, 0
        %v4212 = vsel %vm1382, %v4193, 0
        %v4215 = vsel %vm1382, %v4195, 0
        %v4218 = vsel %vm1382, %v4197, 0
        %v4221 = vsel %vm1382, %v4199, 0
        %v4224 = vsel %vm1382, %v4201, 0
        %4226 = vmatprep.subr.bf16.mxu0 0
        %4227 = vmatpush1.bf16.xpose.msra.mxu0 %v4215
        %4228 = vmatprep.subr.bf16.mxu0 0
        %4229 = vmatpush1.bf16.xpose.msra.mxu0 %v4218
        %4230 = vmatprep.subr.bf16.mxu0 0
        %4231 = vmatpush1.bf16.xpose.msra.mxu0 %v4221
        %4232 = vmatprep.subr.bf16.mxu0 0
        %4233 = vmatpush1.bf16.xpose.msra.mxu0 %v4224
        %4234 = vmatprep.subr.bf16.mxu0 0
        %4235 = vmatpush1.bf16.xpose.msra.mxu0 0
        %4236 = vmatprep.subr.bf16.mxu0 0
        %4237 = vmatpush1.bf16.xpose.msra.mxu0 0
        %4238 = vmatprep.subr.bf16.mxu0 0
        %4239 = vmatpush1.bf16.xpose.msra.mxu0 0
        %4240 = vmatprep.subr.bf16.mxu0 0
        %4241 = vmatpush1.bf16.xpose.msra.mxu0 0
        %4242 = vmatprep.subr.bf16.mxu0 0
        %4243 = vmatpush1.bf16.xpose.msra.mxu0 0
        %4244 = vmatprep.subr.bf16.mxu0 0
        %4245 = vmatpush1.bf16.xpose.msra.mxu0 0
        %4246 = vmatprep.subr.bf16.mxu0 0
        %4247 = vmatpush1.bf16.xpose.msra.mxu0 0
        %4248 = vmatprep.subr.bf16.mxu0 0
        %4249 = vmatpush1.bf16.xpose.msra.mxu0 0
        %4250 = vmatprep.subr.bf16.mxu0 0
        %4251 = vmatpush1.bf16.xpose.msra.mxu0 0
        %4252 = vmatprep.subr.bf16.mxu0 0
        %4253 = vmatpush1.bf16.xpose.msra.mxu0 0
        %4254 = vmatprep.subr.bf16.mxu0 0
        %4255 = vmatpush1.bf16.xpose.msra.mxu0 0
        %4256 = vmatprep.subr.bf16.mxu0 0
        %4257 = vmatpush1.bf16.xpose.msra.mxu0 0
        %4258 = vmatprep.mubr.bf16.mxu0 0
        %4259 = vmatmul.mubr.bf16.gmra.mrb[0].mxu0 %v4203
        %v4260 = vpop.f32.mrb[0].mxu0
        %v4261 = vadd.f32 %v3863, %v4260
        %v4262 = vpop.f32.mrb[0].mxu0
        %v4263 = vpop.f32.mrb[0].mxu0
        %v4264 = vadd.f32 %v3864, %v4263
        %v4265 = vpop.f32.mrb[0].mxu0
        %4266 = vmatprep.mubr.bf16.mxu0 0
        %4267 = vmatmul.mubr.bf16.gmra.mrb[0].mxu0 %v4206
        %v4268 = vpop.f32.mrb[0].mxu0
        %v4269 = vadd.f32 %v3865, %v4268
        %v4270 = vpop.f32.mrb[0].mxu0
        %v4271 = vpop.f32.mrb[0].mxu0
        %v4272 = vadd.f32 %v3866, %v4271
        %v4273 = vpop.f32.mrb[0].mxu0
        %4274 = vmatprep.mubr.bf16.mxu0 0
        %4275 = vmatmul.mubr.bf16.gmra.mrb[0].mxu0 %v4209
        %v4276 = vpop.f32.mrb[0].mxu0
        %v4277 = vadd.f32 %v3867, %v4276
        %v4278 = vpop.f32.mrb[0].mxu0
        %v4279 = vpop.f32.mrb[0].mxu0
        %v4280 = vadd.f32 %v3868, %v4279
        %v4281 = vpop.f32.mrb[0].mxu0
        %4282 = vmatprep.mubr.bf16.mxu0 0
        %4283 = vmatmul.mubr.bf16.gmra.mrb[0].mxu0 %v4212
        %v4284 = vpop.f32.mrb[0].mxu0
        %v4285 = vadd.f32 %v3869, %v4284
        %v4286 = vpop.f32.mrb[0].mxu0
        %v4287 = vpop.f32.mrb[0].mxu0
        %v4288 = vadd.f32 %v3870, %v4287
        %v4289 = vpop.f32.mrb[0].mxu0
        %4290 = vdwg.mxu0
        %v4291 = vsel %vm1775, %v3946, -inf
        %4292 = vmax.xlane.f32.xlu0 %v4291
        %v4293 = vpop.xlane.xlu0 %4292
        %v4294 = vsel %vm1775, %v3949, -inf
        %4295 = vmax.xlane.f32.xlu0 %v4294
        %v4296 = vpop.xlane.xlu0 %4295
        %v4297 = vsel %vm1775, %v3954, -inf
        %4298 = vmax.xlane.f32.xlu0 %v4297
        %v4299 = vpop.xlane.xlu0 %4298
        %v4300 = vsel %vm1775, %v3957, -inf
        %4301 = vmax.xlane.f32.xlu0 %v4300
        %v4302 = vpop.xlane.xlu0 %4301
        %v4303 = vsel %vm1775, %v3962, -inf
        %4304 = vmax.xlane.f32.xlu0 %v4303
        %v4305 = vpop.xlane.xlu0 %4304
        %v4306 = vsel %vm1775, %v3965, -inf
        %4307 = vmax.xlane.f32.xlu0 %v4306
        %v4308 = vpop.xlane.xlu0 %4307
        %v4309 = vsel %vm1775, %v3970, -inf
        %4310 = vmax.xlane.f32.xlu0 %v4309
        %v4311 = vpop.xlane.xlu0 %4310
        %v4312 = vsel %vm1775, %v3973, -inf
        %4313 = vmax.xlane.f32.xlu0 %v4312
        %v4314 = vpop.xlane.xlu0 %4313
        %v4315 = vsel %vm1775, %v4051, -inf
        %4316 = vmax.xlane.f32.xlu0 %v4315
        %v4317 = vpop.xlane.xlu0 %4316
        %v4318 = vsel %vm1775, %v4054, -inf
        %4319 = vmax.xlane.f32.xlu0 %v4318
        %v4320 = vpop.xlane.xlu0 %4319
        %v4321 = vsel %vm1775, %v4059, -inf
        %4322 = vmax.xlane.f32.xlu0 %v4321
        %v4323 = vpop.xlane.xlu0 %4322
        %v4324 = vsel %vm1775, %v4062, -inf
        %4325 = vmax.xlane.f32.xlu0 %v4324
        %v4326 = vpop.xlane.xlu0 %4325
        %v4327 = vsel %vm1775, %v4067, -inf
        %4328 = vmax.xlane.f32.xlu0 %v4327
        %v4329 = vpop.xlane.xlu0 %4328
        %v4330 = vsel %vm1775, %v4070, -inf
        %4331 = vmax.xlane.f32.xlu0 %v4330
        %v4332 = vpop.xlane.xlu0 %4331
        %v4333 = vsel %vm1775, %v4075, -inf
        %4334 = vmax.xlane.f32.xlu0 %v4333
        %v4335 = vpop.xlane.xlu0 %4334
        %v4336 = vsel %vm1775, %v4078, -inf
        %4337 = vmax.xlane.f32.xlu0 %v4336
        %v4338 = vpop.xlane.xlu0 %4337
        %v4339 = vsel %vm1775, %v4156, -inf
        %4340 = vmax.xlane.f32.xlu0 %v4339
        %v4341 = vpop.xlane.xlu0 %4340
        %v4342 = vsel %vm1775, %v4159, -inf
        %4343 = vmax.xlane.f32.xlu0 %v4342
        %v4344 = vpop.xlane.xlu0 %4343
        %v4345 = vsel %vm1775, %v4164, -inf
        %4346 = vmax.xlane.f32.xlu0 %v4345
        %v4347 = vpop.xlane.xlu0 %4346
        %v4348 = vsel %vm1775, %v4167, -inf
        %4349 = vmax.xlane.f32.xlu0 %v4348
        %v4350 = vpop.xlane.xlu0 %4349
        %v4351 = vsel %vm1775, %v4172, -inf
        %4352 = vmax.xlane.f32.xlu0 %v4351
        %v4353 = vpop.xlane.xlu0 %4352
        %v4354 = vsel %vm1775, %v4175, -inf
        %4355 = vmax.xlane.f32.xlu0 %v4354
        %v4356 = vpop.xlane.xlu0 %4355
        %v4357 = vsel %vm1775, %v4180, -inf
        %4358 = vmax.xlane.f32.xlu0 %v4357
        %v4359 = vpop.xlane.xlu0 %4358
        %v4360 = vsel %vm1775, %v4183, -inf
        %4361 = vmax.xlane.f32.xlu0 %v4360
        %v4362 = vpop.xlane.xlu0 %4361
        %v4363 = vsel %vm1775, %v4261, -inf
        %4364 = vmax.xlane.f32.xlu0 %v4363
        %v4365 = vpop.xlane.xlu0 %4364
        %v4366 = vsel %vm1775, %v4264, -inf
        %4367 = vmax.xlane.f32.xlu0 %v4366
        %v4368 = vpop.xlane.xlu0 %4367
        %v4369 = vsel %vm1775, %v4269, -inf
        %4370 = vmax.xlane.f32.xlu0 %v4369
        %v4371 = vpop.xlane.xlu0 %4370
        %v4372 = vsel %vm1775, %v4272, -inf
        %4373 = vmax.xlane.f32.xlu0 %v4372
        %v4374 = vpop.xlane.xlu0 %4373
        %v4375 = vsel %vm1775, %v4277, -inf
        %4376 = vmax.xlane.f32.xlu0 %v4375
        %v4377 = vpop.xlane.xlu0 %4376
        %v4378 = vsel %vm1775, %v4280, -inf
        %4379 = vmax.xlane.f32.xlu0 %v4378
        %v4380 = vpop.xlane.xlu0 %4379
        %v4381 = vsel %vm1775, %v4285, -inf
        %4382 = vmax.xlane.f32.xlu0 %v4381
        %v4383 = vpop.xlane.xlu0 %4382
        %v4384 = vsel %vm1775, %v4288, -inf
        %4385 = vmax.xlane.f32.xlu0 %v4384
        %v4386 = vpop.xlane.xlu0 %4385
        %v4387 = vsub.f32 %v3946, %v4293
        %v4388 = vsub.f32 %v3949, %v4296
        %v4389 = vsub.f32 %v3954, %v4299
        %v4390 = vsub.f32 %v3957, %v4302
        %v4391 = vsub.f32 %v3962, %v4305
        %v4392 = vsub.f32 %v3965, %v4308
        %v4393 = vsub.f32 %v3970, %v4311
        %v4394 = vsub.f32 %v3973, %v4314
        %v4395 = vsub.f32 %v4051, %v4317
        %v4396 = vsub.f32 %v4054, %v4320
        %v4397 = vsub.f32 %v4059, %v4323
        %v4398 = vsub.f32 %v4062, %v4326
        %v4399 = vsub.f32 %v4067, %v4329
        %v4400 = vsub.f32 %v4070, %v4332
        %v4401 = vsub.f32 %v4075, %v4335
        %v4402 = vsub.f32 %v4078, %v4338
        %v4403 = vsub.f32 %v4156, %v4341
        %v4404 = vsub.f32 %v4159, %v4344
        %v4405 = vsub.f32 %v4164, %v4347
        %v4406 = vsub.f32 %v4167, %v4350
        %v4407 = vsub.f32 %v4172, %v4353
        %v4408 = vsub.f32 %v4175, %v4356
        %v4409 = vsub.f32 %v4180, %v4359
        %v4410 = vsub.f32 %v4183, %v4362
        %v4411 = vsub.f32 %v4261, %v4365
        %v4412 = vsub.f32 %v4264, %v4368
        %v4413 = vsub.f32 %v4269, %v4371
        %v4414 = vsub.f32 %v4272, %v4374
        %v4415 = vsub.f32 %v4277, %v4377
        %v4416 = vsub.f32 %v4280, %v4380
        %v4417 = vsub.f32 %v4285, %v4383
        %v4418 = vsub.f32 %v4288, %v4386
        %v4419 = vmul.f32 %v4387, 1.442695
        %v4420 = vpow.pop %v4419
        %v4421 = vmul.f32 %v4388, 1.442695
        %v4422 = vpow.pop %v4421
        %v4423 = vmul.f32 %v4389, 1.442695
        %v4424 = vpow.pop %v4423
        %v4425 = vmul.f32 %v4390, 1.442695
        %v4426 = vpow.pop %v4425
        %v4427 = vmul.f32 %v4391, 1.442695
        %v4428 = vpow.pop %v4427
        %v4429 = vmul.f32 %v4392, 1.442695
        %v4430 = vpow.pop %v4429
        %v4431 = vmul.f32 %v4393, 1.442695
        %v4432 = vpow.pop %v4431
        %v4433 = vmul.f32 %v4394, 1.442695
        %v4434 = vpow.pop %v4433
        %v4435 = vmul.f32 %v4395, 1.442695
        %v4436 = vpow.pop %v4435
        %v4437 = vmul.f32 %v4396, 1.442695
        %v4438 = vpow.pop %v4437
        %v4439 = vmul.f32 %v4397, 1.442695
        %v4440 = vpow.pop %v4439
        %v4441 = vmul.f32 %v4398, 1.442695
        %v4442 = vpow.pop %v4441
        %v4443 = vmul.f32 %v4399, 1.442695
        %v4444 = vpow.pop %v4443
        %v4445 = vmul.f32 %v4400, 1.442695
        %v4446 = vpow.pop %v4445
        %v4447 = vmul.f32 %v4401, 1.442695
        %v4448 = vpow.pop %v4447
        %v4449 = vmul.f32 %v4402, 1.442695
        %v4450 = vpow.pop %v4449
        %v4451 = vmul.f32 %v4403, 1.442695
        %v4452 = vpow.pop %v4451
        %v4453 = vmul.f32 %v4404, 1.442695
        %v4454 = vpow.pop %v4453
        %v4455 = vmul.f32 %v4405, 1.442695
        %v4456 = vpow.pop %v4455
        %v4457 = vmul.f32 %v4406, 1.442695
        %v4458 = vpow.pop %v4457
        %v4459 = vmul.f32 %v4407, 1.442695
        %v4460 = vpow.pop %v4459
        %v4461 = vmul.f32 %v4408, 1.442695
        %v4462 = vpow.pop %v4461
        %v4463 = vmul.f32 %v4409, 1.442695
        %v4464 = vpow.pop %v4463
        %v4465 = vmul.f32 %v4410, 1.442695
        %v4466 = vpow.pop %v4465
        %v4467 = vmul.f32 %v4411, 1.442695
        %v4468 = vpow.pop %v4467
        %v4469 = vmul.f32 %v4412, 1.442695
        %v4470 = vpow.pop %v4469
        %v4471 = vmul.f32 %v4413, 1.442695
        %v4472 = vpow.pop %v4471
        %v4473 = vmul.f32 %v4414, 1.442695
        %v4474 = vpow.pop %v4473
        %v4475 = vmul.f32 %v4415, 1.442695
        %v4476 = vpow.pop %v4475
        %v4477 = vmul.f32 %v4416, 1.442695
        %v4478 = vpow.pop %v4477
        %v4479 = vmul.f32 %v4417, 1.442695
        %v4480 = vpow.pop %v4479
        %v4481 = vmul.f32 %v4418, 1.442695
        %v4482 = vpow.pop %v4481
        %v4483 = vsel %vm1775, %v4420, 0.0
        %4484 = vadd.xlane.f32.xlu0 %v4483
        %v4485 = vpop.xlane.xlu0 %4484
        %v4486 = vsel %vm1775, %v4422, 0.0
        %4487 = vadd.xlane.f32.xlu0 %v4486
        %v4488 = vpop.xlane.xlu0 %4487
        %v4489 = vsel %vm1775, %v4424, 0.0
        %4490 = vadd.xlane.f32.xlu0 %v4489
        %v4491 = vpop.xlane.xlu0 %4490
        %v4492 = vsel %vm1775, %v4426, 0.0
        %4493 = vadd.xlane.f32.xlu0 %v4492
        %v4494 = vpop.xlane.xlu0 %4493
        %v4495 = vsel %vm1775, %v4428, 0.0
        %4496 = vadd.xlane.f32.xlu0 %v4495
        %v4497 = vpop.xlane.xlu0 %4496
        %v4498 = vsel %vm1775, %v4430, 0.0
        %4499 = vadd.xlane.f32.xlu0 %v4498
        %v4500 = vpop.xlane.xlu0 %4499
        %v4501 = vsel %vm1775, %v4432, 0.0
        %4502 = vadd.xlane.f32.xlu0 %v4501
        %v4503 = vpop.xlane.xlu0 %4502
        %v4504 = vsel %vm1775, %v4434, 0.0
        %4505 = vadd.xlane.f32.xlu0 %v4504
        %v4506 = vpop.xlane.xlu0 %4505
        %v4507 = vsel %vm1775, %v4436, 0.0
        %4508 = vadd.xlane.f32.xlu0 %v4507
        %v4509 = vpop.xlane.xlu0 %4508
        %v4510 = vsel %vm1775, %v4438, 0.0
        %4511 = vadd.xlane.f32.xlu0 %v4510
        %v4512 = vpop.xlane.xlu0 %4511
        %v4513 = vsel %vm1775, %v4440, 0.0
        %4514 = vadd.xlane.f32.xlu0 %v4513
        %v4515 = vpop.xlane.xlu0 %4514
        %v4516 = vsel %vm1775, %v4442, 0.0
        %4517 = vadd.xlane.f32.xlu0 %v4516
        %v4518 = vpop.xlane.xlu0 %4517
        %v4519 = vsel %vm1775, %v4444, 0.0
        %4520 = vadd.xlane.f32.xlu0 %v4519
        %v4521 = vpop.xlane.xlu0 %4520
        %v4522 = vsel %vm1775, %v4446, 0.0
        %4523 = vadd.xlane.f32.xlu0 %v4522
        %v4524 = vpop.xlane.xlu0 %4523
        %v4525 = vsel %vm1775, %v4448, 0.0
        %4526 = vadd.xlane.f32.xlu0 %v4525
        %v4527 = vpop.xlane.xlu0 %4526
        %v4528 = vsel %vm1775, %v4450, 0.0
        %4529 = vadd.xlane.f32.xlu0 %v4528
        %v4530 = vpop.xlane.xlu0 %4529
        %v4531 = vsel %vm1775, %v4452, 0.0
        %4532 = vadd.xlane.f32.xlu0 %v4531
        %v4533 = vpop.xlane.xlu0 %4532
        %v4534 = vsel %vm1775, %v4454, 0.0
        %4535 = vadd.xlane.f32.xlu0 %v4534
        %v4536 = vpop.xlane.xlu0 %4535
        %v4537 = vsel %vm1775, %v4456, 0.0
        %4538 = vadd.xlane.f32.xlu0 %v4537
        %v4539 = vpop.xlane.xlu0 %4538
        %v4540 = vsel %vm1775, %v4458, 0.0
        %4541 = vadd.xlane.f32.xlu0 %v4540
        %v4542 = vpop.xlane.xlu0 %4541
        %v4543 = vsel %vm1775, %v4460, 0.0
        %4544 = vadd.xlane.f32.xlu0 %v4543
        %v4545 = vpop.xlane.xlu0 %4544
        %v4546 = vsel %vm1775, %v4462, 0.0
        %4547 = vadd.xlane.f32.xlu0 %v4546
        %v4548 = vpop.xlane.xlu0 %4547
        %v4549 = vsel %vm1775, %v4464, 0.0
        %4550 = vadd.xlane.f32.xlu0 %v4549
        %v4551 = vpop.xlane.xlu0 %4550
        %v4552 = vsel %vm1775, %v4466, 0.0
        %4553 = vadd.xlane.f32.xlu0 %v4552
        %v4554 = vpop.xlane.xlu0 %4553
        %v4555 = vsel %vm1775, %v4468, 0.0
        %4556 = vadd.xlane.f32.xlu0 %v4555
        %v4557 = vpop.xlane.xlu0 %4556
        %v4558 = vsel %vm1775, %v4470, 0.0
        %4559 = vadd.xlane.f32.xlu0 %v4558
        %v4560 = vpop.xlane.xlu0 %4559
        %v4561 = vsel %vm1775, %v4472, 0.0
        %4562 = vadd.xlane.f32.xlu0 %v4561
        %v4563 = vpop.xlane.xlu0 %4562
        %v4564 = vsel %vm1775, %v4474, 0.0
        %4565 = vadd.xlane.f32.xlu0 %v4564
        %v4566 = vpop.xlane.xlu0 %4565
        %v4567 = vsel %vm1775, %v4476, 0.0
        %4568 = vadd.xlane.f32.xlu0 %v4567
        %v4569 = vpop.xlane.xlu0 %4568
        %v4570 = vsel %vm1775, %v4478, 0.0
        %4571 = vadd.xlane.f32.xlu0 %v4570
        %v4572 = vpop.xlane.xlu0 %4571
        %v4573 = vsel %vm1775, %v4480, 0.0
        %4574 = vadd.xlane.f32.xlu0 %v4573
        %v4575 = vpop.xlane.xlu0 %4574
        %v4576 = vsel %vm1775, %v4482, 0.0
        %4577 = vadd.xlane.f32.xlu0 %v4576
        %v4578 = vpop.xlane.xlu0 %4577
        %v4579 = vrcp.pop %v4485
        %v4580 = vrcp.pop %v4488
        %v4581 = vrcp.pop %v4491
        %v4582 = vrcp.pop %v4494
        %v4583 = vrcp.pop %v4497
        %v4584 = vrcp.pop %v4500
        %v4585 = vrcp.pop %v4503
        %v4586 = vrcp.pop %v4506
        %v4587 = vrcp.pop %v4509
        %v4588 = vrcp.pop %v4512
        %v4589 = vrcp.pop %v4515
        %v4590 = vrcp.pop %v4518
        %v4591 = vrcp.pop %v4521
        %v4592 = vrcp.pop %v4524
        %v4593 = vrcp.pop %v4527
        %v4594 = vrcp.pop %v4530
        %v4595 = vrcp.pop %v4533
        %v4596 = vrcp.pop %v4536
        %v4597 = vrcp.pop %v4539
        %v4598 = vrcp.pop %v4542
        %v4599 = vrcp.pop %v4545
        %v4600 = vrcp.pop %v4548
        %v4601 = vrcp.pop %v4551
        %v4602 = vrcp.pop %v4554
        %v4603 = vrcp.pop %v4557
        %v4604 = vrcp.pop %v4560
        %v4605 = vrcp.pop %v4563
        %v4606 = vrcp.pop %v4566
        %v4607 = vrcp.pop %v4569
        %v4608 = vrcp.pop %v4572
        %v4609 = vrcp.pop %v4575
        %v4610 = vrcp.pop %v4578
        %v4611 = vmul.f32 %v4420, %v4579
        %v4612 = vmul.f32 %v4422, %v4580
        %v4613 = vmul.f32 %v4424, %v4581
        %v4614 = vmul.f32 %v4426, %v4582
        %v4615 = vmul.f32 %v4428, %v4583
        %v4616 = vmul.f32 %v4430, %v4584
        %v4617 = vmul.f32 %v4432, %v4585
        %v4618 = vmul.f32 %v4434, %v4586
        %v4619 = vmul.f32 %v4436, %v4587
        %v4620 = vmul.f32 %v4438, %v4588
        %v4621 = vmul.f32 %v4440, %v4589
        %v4622 = vmul.f32 %v4442, %v4590
        %v4623 = vmul.f32 %v4444, %v4591
        %v4624 = vmul.f32 %v4446, %v4592
        %v4625 = vmul.f32 %v4448, %v4593
        %v4626 = vmul.f32 %v4450, %v4594
        %v4627 = vmul.f32 %v4452, %v4595
        %v4628 = vmul.f32 %v4454, %v4596
        %v4629 = vmul.f32 %v4456, %v4597
        %v4630 = vmul.f32 %v4458, %v4598
        %v4631 = vmul.f32 %v4460, %v4599
        %v4632 = vmul.f32 %v4462, %v4600
        %v4633 = vmul.f32 %v4464, %v4601
        %v4634 = vmul.f32 %v4466, %v4602
        %v4635 = vmul.f32 %v4468, %v4603
        %v4636 = vmul.f32 %v4470, %v4604
        %v4637 = vmul.f32 %v4472, %v4605
        %v4638 = vmul.f32 %v4474, %v4606
        %v4639 = vmul.f32 %v4476, %v4607
        %v4640 = vmul.f32 %v4478, %v4608
        %v4641 = vmul.f32 %v4480, %v4609
        %v4642 = vmul.f32 %v4482, %v4610
        %v4643 = vpack.c.bf16 %v4612, %v4611
        %v4644 = vpack.c.bf16 %v4614, %v4613
        %v4645 = vpack.c.bf16 %v4616, %v4615
        %v4646 = vpack.c.bf16 %v4618, %v4617
        %v4647 = vpack.c.bf16 %v4620, %v4619
        %v4648 = vpack.c.bf16 %v4622, %v4621
        %v4649 = vpack.c.bf16 %v4624, %v4623
        %v4650 = vpack.c.bf16 %v4626, %v4625
        %v4651 = vpack.c.bf16 %v4628, %v4627
        %v4652 = vpack.c.bf16 %v4630, %v4629
        %v4653 = vpack.c.bf16 %v4632, %v4631
        %v4654 = vpack.c.bf16 %v4634, %v4633
        %v4655 = vpack.c.bf16 %v4636, %v4635
        %v4656 = vpack.c.bf16 %v4638, %v4637
        %v4657 = vpack.c.bf16 %v4640, %v4639
        %v4658 = vpack.c.bf16 %v4642, %v4641
        %4659 = vrot.lane.b32.xlu0 %v1346, 48
        %v4660 = vpop.permute.xlu0 %4659
        %4661 = vrot.lane.b32.xlu0 %v1347, 48
        %v4662 = vpop.permute.xlu0 %4661
        %4663 = vrot.lane.b32.xlu0 %v1348, 48
        %v4664 = vpop.permute.xlu0 %4663
        %4665 = vrot.lane.b32.xlu0 %v1349, 48
        %v4666 = vpop.permute.xlu0 %4665
        %v4672 = vsel %vm1775, %v4643, 0
        %v4675 = vsel %vm1775, %v4644, 0
        %v4678 = vsel %vm1775, %v4645, 0
        %v4681 = vsel %vm1775, %v4646, 0
        %4683 = vmatprep.subr.bf16.mxu0 0
        %4684 = vmatpush1.bf16.msra.mxu0 %v4660
        %4685 = vmatprep.subr.bf16.mxu0 0
        %4686 = vmatpush1.bf16.msra.mxu0 %v4662
        %4687 = vmatprep.subr.bf16.mxu0 0
        %4688 = vmatpush1.bf16.msra.mxu0 %v4664
        %4689 = vmatprep.subr.bf16.mxu0 0
        %4690 = vmatpush1.bf16.msra.mxu0 %v4666
        %4691 = vmatprep.subr.bf16.mxu0 0
        %4692 = vmatpush1.bf16.msra.mxu0 0
        %4693 = vmatprep.subr.bf16.mxu0 0
        %4694 = vmatpush1.bf16.msra.mxu0 0
        %4695 = vmatprep.subr.bf16.mxu0 0
        %4696 = vmatpush1.bf16.msra.mxu0 0
        %4697 = vmatprep.subr.bf16.mxu0 0
        %4698 = vmatpush1.bf16.msra.mxu0 0
        %4699 = vmatprep.subr.bf16.mxu0 0
        %4700 = vmatpush1.bf16.msra.mxu0 0
        %4701 = vmatprep.subr.bf16.mxu0 0
        %4702 = vmatpush1.bf16.msra.mxu0 0
        %4703 = vmatprep.subr.bf16.mxu0 0
        %4704 = vmatpush1.bf16.msra.mxu0 0
        %4705 = vmatprep.subr.bf16.mxu0 0
        %4706 = vmatpush1.bf16.msra.mxu0 0
        %4707 = vmatprep.subr.bf16.mxu0 0
        %4708 = vmatpush1.bf16.msra.mxu0 0
        %4709 = vmatprep.subr.bf16.mxu0 0
        %4710 = vmatpush1.bf16.msra.mxu0 0
        %4711 = vmatprep.subr.bf16.mxu0 0
        %4712 = vmatpush1.bf16.msra.mxu0 0
        %4713 = vmatprep.subr.bf16.mxu0 0
        %4714 = vmatpush1.bf16.msra.mxu0 0
        %4715 = vmatprep.mubr.bf16.mxu0 0
        %4716 = vmatmul.mubr.bf16.gmra.mrb[0].mxu0 %v4672
        %v4717 = vpop.f32.mrb[0].mxu0
        %v4718 = vadd.f32 0.0, %v4717
        %v4719 = vpop.f32.mrb[0].mxu0
        %v4720 = vpop.f32.mrb[0].mxu0
        %v4721 = vadd.f32 0.0, %v4720
        %v4722 = vpop.f32.mrb[0].mxu0
        %4723 = vmatprep.mubr.bf16.mxu0 0
        %4724 = vmatmul.mubr.bf16.gmra.mrb[0].mxu0 %v4675
        %v4725 = vpop.f32.mrb[0].mxu0
        %v4726 = vadd.f32 0.0, %v4725
        %v4727 = vpop.f32.mrb[0].mxu0
        %v4728 = vpop.f32.mrb[0].mxu0
        %v4729 = vadd.f32 0.0, %v4728
        %v4730 = vpop.f32.mrb[0].mxu0
        %4731 = vmatprep.mubr.bf16.mxu0 0
        %4732 = vmatmul.mubr.bf16.gmra.mrb[0].mxu0 %v4678
        %v4733 = vpop.f32.mrb[0].mxu0
        %v4734 = vadd.f32 0.0, %v4733
        %v4735 = vpop.f32.mrb[0].mxu0
        %v4736 = vpop.f32.mrb[0].mxu0
        %v4737 = vadd.f32 0.0, %v4736
        %v4738 = vpop.f32.mrb[0].mxu0
        %4739 = vmatprep.mubr.bf16.mxu0 0
        %4740 = vmatmul.mubr.bf16.gmra.mrb[0].mxu0 %v4681
        %v4741 = vpop.f32.mrb[0].mxu0
        %v4742 = vadd.f32 0.0, %v4741
        %v4743 = vpop.f32.mrb[0].mxu0
        %v4744 = vpop.f32.mrb[0].mxu0
        %v4745 = vadd.f32 0.0, %v4744
        %v4746 = vpop.f32.mrb[0].mxu0
        %4747 = vdwg.mxu0
        %4748 = vrot.lane.b32.xlu0 %v1350, 48
        %v4749 = vpop.permute.xlu0 %4748
        %4750 = vrot.lane.b32.xlu0 %v1351, 48
        %v4751 = vpop.permute.xlu0 %4750
        %4752 = vrot.lane.b32.xlu0 %v1352, 48
        %v4753 = vpop.permute.xlu0 %4752
        %4754 = vrot.lane.b32.xlu0 %v1353, 48
        %v4755 = vpop.permute.xlu0 %4754
        %v4761 = vsel %vm1775, %v4647, 0
        %v4764 = vsel %vm1775, %v4648, 0
        %v4767 = vsel %vm1775, %v4649, 0
        %v4770 = vsel %vm1775, %v4650, 0
        %4772 = vmatprep.subr.bf16.mxu0 0
        %4773 = vmatpush1.bf16.msra.mxu0 %v4749
        %4774 = vmatprep.subr.bf16.mxu0 0
        %4775 = vmatpush1.bf16.msra.mxu0 %v4751
        %4776 = vmatprep.subr.bf16.mxu0 0
        %4777 = vmatpush1.bf16.msra.mxu0 %v4753
        %4778 = vmatprep.subr.bf16.mxu0 0
        %4779 = vmatpush1.bf16.msra.mxu0 %v4755
        %4780 = vmatprep.subr.bf16.mxu0 0
        %4781 = vmatpush1.bf16.msra.mxu0 0
        %4782 = vmatprep.subr.bf16.mxu0 0
        %4783 = vmatpush1.bf16.msra.mxu0 0
        %4784 = vmatprep.subr.bf16.mxu0 0
        %4785 = vmatpush1.bf16.msra.mxu0 0
        %4786 = vmatprep.subr.bf16.mxu0 0
        %4787 = vmatpush1.bf16.msra.mxu0 0
        %4788 = vmatprep.subr.bf16.mxu0 0
        %4789 = vmatpush1.bf16.msra.mxu0 0
        %4790 = vmatprep.subr.bf16.mxu0 0
        %4791 = vmatpush1.bf16.msra.mxu0 0
        %4792 = vmatprep.subr.bf16.mxu0 0
        %4793 = vmatpush1.bf16.msra.mxu0 0
        %4794 = vmatprep.subr.bf16.mxu0 0
        %4795 = vmatpush1.bf16.msra.mxu0 0
        %4796 = vmatprep.subr.bf16.mxu0 0
        %4797 = vmatpush1.bf16.msra.mxu0 0
        %4798 = vmatprep.subr.bf16.mxu0 0
        %4799 = vmatpush1.bf16.msra.mxu0 0
        %4800 = vmatprep.subr.bf16.mxu0 0
        %4801 = vmatpush1.bf16.msra.mxu0 0
        %4802 = vmatprep.subr.bf16.mxu0 0
        %4803 = vmatpush1.bf16.msra.mxu0 0
        %4804 = vmatprep.mubr.bf16.mxu0 0
        %4805 = vmatmul.mubr.bf16.gmra.mrb[0].mxu0 %v4761
        %v4806 = vpop.f32.mrb[0].mxu0
        %v4807 = vadd.f32 0.0, %v4806
        %v4808 = vpop.f32.mrb[0].mxu0
        %v4809 = vpop.f32.mrb[0].mxu0
        %v4810 = vadd.f32 0.0, %v4809
        %v4811 = vpop.f32.mrb[0].mxu0
        %4812 = vmatprep.mubr.bf16.mxu0 0
        %4813 = vmatmul.mubr.bf16.gmra.mrb[0].mxu0 %v4764
        %v4814 = vpop.f32.mrb[0].mxu0
        %v4815 = vadd.f32 0.0, %v4814
        %v4816 = vpop.f32.mrb[0].mxu0
        %v4817 = vpop.f32.mrb[0].mxu0
        %v4818 = vadd.f32 0.0, %v4817
        %v4819 = vpop.f32.mrb[0].mxu0
        %4820 = vmatprep.mubr.bf16.mxu0 0
        %4821 = vmatmul.mubr.bf16.gmra.mrb[0].mxu0 %v4767
        %v4822 = vpop.f32.mrb[0].mxu0
        %v4823 = vadd.f32 0.0, %v4822
        %v4824 = vpop.f32.mrb[0].mxu0
        %v4825 = vpop.f32.mrb[0].mxu0
        %v4826 = vadd.f32 0.0, %v4825
        %v4827 = vpop.f32.mrb[0].mxu0
        %4828 = vmatprep.mubr.bf16.mxu0 0
        %4829 = vmatmul.mubr.bf16.gmra.mrb[0].mxu0 %v4770
        %v4830 = vpop.f32.mrb[0].mxu0
        %v4831 = vadd.f32 0.0, %v4830
        %v4832 = vpop.f32.mrb[0].mxu0
        %v4833 = vpop.f32.mrb[0].mxu0
        %v4834 = vadd.f32 0.0, %v4833
        %v4835 = vpop.f32.mrb[0].mxu0
        %4836 = vdwg.mxu0
        %4837 = vrot.lane.b32.xlu0 %v1354, 48
        %v4838 = vpop.permute.xlu0 %4837
        %4839 = vrot.lane.b32.xlu0 %v1355, 48
        %v4840 = vpop.permute.xlu0 %4839
        %4841 = vrot.lane.b32.xlu0 %v1356, 48
        %v4842 = vpop.permute.xlu0 %4841
        %4843 = vrot.lane.b32.xlu0 %v1357, 48
        %v4844 = vpop.permute.xlu0 %4843
        %v4850 = vsel %vm1775, %v4651, 0
        %v4853 = vsel %vm1775, %v4652, 0
        %v4856 = vsel %vm1775, %v4653, 0
        %v4859 = vsel %vm1775, %v4654, 0
        %4861 = vmatprep.subr.bf16.mxu0 0
        %4862 = vmatpush1.bf16.msra.mxu0 %v4838
        %4863 = vmatprep.subr.bf16.mxu0 0
        %4864 = vmatpush1.bf16.msra.mxu0 %v4840
        %4865 = vmatprep.subr.bf16.mxu0 0
        %4866 = vmatpush1.bf16.msra.mxu0 %v4842
        %4867 = vmatprep.subr.bf16.mxu0 0
        %4868 = vmatpush1.bf16.msra.mxu0 %v4844
        %4869 = vmatprep.subr.bf16.mxu0 0
        %4870 = vmatpush1.bf16.msra.mxu0 0
        %4871 = vmatprep.subr.bf16.mxu0 0
        %4872 = vmatpush1.bf16.msra.mxu0 0
        %4873 = vmatprep.subr.bf16.mxu0 0
        %4874 = vmatpush1.bf16.msra.mxu0 0
        %4875 = vmatprep.subr.bf16.mxu0 0
        %4876 = vmatpush1.bf16.msra.mxu0 0
        %4877 = vmatprep.subr.bf16.mxu0 0
        %4878 = vmatpush1.bf16.msra.mxu0 0
        %4879 = vmatprep.subr.bf16.mxu0 0
        %4880 = vmatpush1.bf16.msra.mxu0 0
        %4881 = vmatprep.subr.bf16.mxu0 0
        %4882 = vmatpush1.bf16.msra.mxu0 0
        %4883 = vmatprep.subr.bf16.mxu0 0
        %4884 = vmatpush1.bf16.msra.mxu0 0
        %4885 = vmatprep.subr.bf16.mxu0 0
        %4886 = vmatpush1.bf16.msra.mxu0 0
        %4887 = vmatprep.subr.bf16.mxu0 0
        %4888 = vmatpush1.bf16.msra.mxu0 0
        %4889 = vmatprep.subr.bf16.mxu0 0
        %4890 = vmatpush1.bf16.msra.mxu0 0
        %4891 = vmatprep.subr.bf16.mxu0 0
        %4892 = vmatpush1.bf16.msra.mxu0 0
        %4893 = vmatprep.mubr.bf16.mxu0 0
        %4894 = vmatmul.mubr.bf16.gmra.mrb[0].mxu0 %v4850
        %v4895 = vpop.f32.mrb[0].mxu0
        %v4896 = vadd.f32 0.0, %v4895
        %v4897 = vpop.f32.mrb[0].mxu0
        %v4898 = vpop.f32.mrb[0].mxu0
        %v4899 = vadd.f32 0.0, %v4898
        %v4900 = vpop.f32.mrb[0].mxu0
        %4901 = vmatprep.mubr.bf16.mxu0 0
        %4902 = vmatmul.mubr.bf16.gmra.mrb[0].mxu0 %v4853
        %v4903 = vpop.f32.mrb[0].mxu0
        %v4904 = vadd.f32 0.0, %v4903
        %v4905 = vpop.f32.mrb[0].mxu0
        %v4906 = vpop.f32.mrb[0].mxu0
        %v4907 = vadd.f32 0.0, %v4906
        %v4908 = vpop.f32.mrb[0].mxu0
        %4909 = vmatprep.mubr.bf16.mxu0 0
        %4910 = vmatmul.mubr.bf16.gmra.mrb[0].mxu0 %v4856
        %v4911 = vpop.f32.mrb[0].mxu0
        %v4912 = vadd.f32 0.0, %v4911
        %v4913 = vpop.f32.mrb[0].mxu0
        %v4914 = vpop.f32.mrb[0].mxu0
        %v4915 = vadd.f32 0.0, %v4914
        %v4916 = vpop.f32.mrb[0].mxu0
        %4917 = vmatprep.mubr.bf16.mxu0 0
        %4918 = vmatmul.mubr.bf16.gmra.mrb[0].mxu0 %v4859
        %v4919 = vpop.f32.mrb[0].mxu0
        %v4920 = vadd.f32 0.0, %v4919
        %v4921 = vpop.f32.mrb[0].mxu0
        %v4922 = vpop.f32.mrb[0].mxu0
        %v4923 = vadd.f32 0.0, %v4922
        %v4924 = vpop.f32.mrb[0].mxu0
        %4925 = vdwg.mxu0
        %4926 = vrot.lane.b32.xlu0 %v1358, 48
        %v4927 = vpop.permute.xlu0 %4926
        %4928 = vrot.lane.b32.xlu0 %v1359, 48
        %v4929 = vpop.permute.xlu0 %4928
        %4930 = vrot.lane.b32.xlu0 %v1360, 48
        %v4931 = vpop.permute.xlu0 %4930
        %4932 = vrot.lane.b32.xlu0 %v1361, 48
        %v4933 = vpop.permute.xlu0 %4932
        %v4939 = vsel %vm1775, %v4655, 0
        %v4942 = vsel %vm1775, %v4656, 0
        %v4945 = vsel %vm1775, %v4657, 0
        %v4948 = vsel %vm1775, %v4658, 0
        %4950 = vmatprep.subr.bf16.mxu0 0
        %4951 = vmatpush1.bf16.msra.mxu0 %v4927
        %4952 = vmatprep.subr.bf16.mxu0 0
        %4953 = vmatpush1.bf16.msra.mxu0 %v4929
        %4954 = vmatprep.subr.bf16.mxu0 0
        %4955 = vmatpush1.bf16.msra.mxu0 %v4931
        %4956 = vmatprep.subr.bf16.mxu0 0
        %4957 = vmatpush1.bf16.msra.mxu0 %v4933
        %4958 = vmatprep.subr.bf16.mxu0 0
        %4959 = vmatpush1.bf16.msra.mxu0 0
        %4960 = vmatprep.subr.bf16.mxu0 0
        %4961 = vmatpush1.bf16.msra.mxu0 0
        %4962 = vmatprep.subr.bf16.mxu0 0
        %4963 = vmatpush1.bf16.msra.mxu0 0
        %4964 = vmatprep.subr.bf16.mxu0 0
        %4965 = vmatpush1.bf16.msra.mxu0 0
        %4966 = vmatprep.subr.bf16.mxu0 0
        %4967 = vmatpush1.bf16.msra.mxu0 0
        %4968 = vmatprep.subr.bf16.mxu0 0
        %4969 = vmatpush1.bf16.msra.mxu0 0
        %4970 = vmatprep.subr.bf16.mxu0 0
        %4971 = vmatpush1.bf16.msra.mxu0 0
        %4972 = vmatprep.subr.bf16.mxu0 0
        %4973 = vmatpush1.bf16.msra.mxu0 0
        %4974 = vmatprep.subr.bf16.mxu0 0
        %4975 = vmatpush1.bf16.msra.mxu0 0
        %4976 = vmatprep.subr.bf16.mxu0 0
        %4977 = vmatpush1.bf16.msra.mxu0 0
        %4978 = vmatprep.subr.bf16.mxu0 0
        %4979 = vmatpush1.bf16.msra.mxu0 0
        %4980 = vmatprep.subr.bf16.mxu0 0
        %4981 = vmatpush1.bf16.msra.mxu0 0
        %4982 = vmatprep.mubr.bf16.mxu0 0
        %4983 = vmatmul.mubr.bf16.gmra.mrb[0].mxu0 %v4939
        %v4984 = vpop.f32.mrb[0].mxu0
        %v4985 = vadd.f32 0.0, %v4984
        %v4986 = vpop.f32.mrb[0].mxu0
        %v4987 = vpop.f32.mrb[0].mxu0
        %v4988 = vadd.f32 0.0, %v4987
        %v4989 = vpop.f32.mrb[0].mxu0
        %4990 = vmatprep.mubr.bf16.mxu0 0
        %4991 = vmatmul.mubr.bf16.gmra.mrb[0].mxu0 %v4942
        %v4992 = vpop.f32.mrb[0].mxu0
        %v4993 = vadd.f32 0.0, %v4992
        %v4994 = vpop.f32.mrb[0].mxu0
        %v4995 = vpop.f32.mrb[0].mxu0
        %v4996 = vadd.f32 0.0, %v4995
        %v4997 = vpop.f32.mrb[0].mxu0
        %4998 = vmatprep.mubr.bf16.mxu0 0
        %4999 = vmatmul.mubr.bf16.gmra.mrb[0].mxu0 %v4945
        %v5000 = vpop.f32.mrb[0].mxu0
        %v5001 = vadd.f32 0.0, %v5000
        %v5002 = vpop.f32.mrb[0].mxu0
        %v5003 = vpop.f32.mrb[0].mxu0
        %v5004 = vadd.f32 0.0, %v5003
        %v5005 = vpop.f32.mrb[0].mxu0
        %5006 = vmatprep.mubr.bf16.mxu0 0
        %5007 = vmatmul.mubr.bf16.gmra.mrb[0].mxu0 %v4948
        %v5008 = vpop.f32.mrb[0].mxu0
        %v5009 = vadd.f32 0.0, %v5008
        %v5010 = vpop.f32.mrb[0].mxu0
        %v5011 = vpop.f32.mrb[0].mxu0
        %v5012 = vadd.f32 0.0, %v5011
        %v5013 = vpop.f32.mrb[0].mxu0
        %5014 = vdwg.mxu0
        %5047 = vrot.lane.b32.xlu0 %v4718, 16
        %v5048 = vpop.permute.xlu0 %5047
        %5049 = vrot.lane.b32.xlu0 %v4721, 16
        %v5050 = vpop.permute.xlu0 %5049
        %5051 = vrot.lane.b32.xlu0 %v4726, 16
        %v5052 = vpop.permute.xlu0 %5051
        %5053 = vrot.lane.b32.xlu0 %v4729, 16
        %v5054 = vpop.permute.xlu0 %5053
        %5055 = vrot.lane.b32.xlu0 %v4734, 16
        %v5056 = vpop.permute.xlu0 %5055
        %5057 = vrot.lane.b32.xlu0 %v4737, 16
        %v5058 = vpop.permute.xlu0 %5057
        %5059 = vrot.lane.b32.xlu0 %v4742, 16
        %v5060 = vpop.permute.xlu0 %5059
        %5061 = vrot.lane.b32.xlu0 %v4745, 16
        %v5062 = vpop.permute.xlu0 %5061
        %5063 = vrot.lane.b32.xlu0 %v4807, 16
        %v5064 = vpop.permute.xlu0 %5063
        %5065 = vrot.lane.b32.xlu0 %v4810, 16
        %v5066 = vpop.permute.xlu0 %5065
        %5067 = vrot.lane.b32.xlu0 %v4815, 16
        %v5068 = vpop.permute.xlu0 %5067
        %5069 = vrot.lane.b32.xlu0 %v4818, 16
        %v5070 = vpop.permute.xlu0 %5069
        %5071 = vrot.lane.b32.xlu0 %v4823, 16
        %v5072 = vpop.permute.xlu0 %5071
        %5073 = vrot.lane.b32.xlu0 %v4826, 16
        %v5074 = vpop.permute.xlu0 %5073
        %5075 = vrot.lane.b32.xlu0 %v4831, 16
        %v5076 = vpop.permute.xlu0 %5075
        %5077 = vrot.lane.b32.xlu0 %v4834, 16
        %v5078 = vpop.permute.xlu0 %5077
        %5079 = vrot.lane.b32.xlu0 %v4896, 16
        %v5080 = vpop.permute.xlu0 %5079
        %5081 = vrot.lane.b32.xlu0 %v4899, 16
        %v5082 = vpop.permute.xlu0 %5081
        %5083 = vrot.lane.b32.xlu0 %v4904, 16
        %v5084 = vpop.permute.xlu0 %5083
        %5085 = vrot.lane.b32.xlu0 %v4907, 16
        %v5086 = vpop.permute.xlu0 %5085
        %5087 = vrot.lane.b32.xlu0 %v4912, 16
        %v5088 = vpop.permute.xlu0 %5087
        %5089 = vrot.lane.b32.xlu0 %v4915, 16
        %v5090 = vpop.permute.xlu0 %5089
        %5091 = vrot.lane.b32.xlu0 %v4920, 16
        %v5092 = vpop.permute.xlu0 %5091
        %5093 = vrot.lane.b32.xlu0 %v4923, 16
        %v5094 = vpop.permute.xlu0 %5093
        %5095 = vrot.lane.b32.xlu0 %v4985, 16
        %v5096 = vpop.permute.xlu0 %5095
        %5097 = vrot.lane.b32.xlu0 %v4988, 16
        %v5098 = vpop.permute.xlu0 %5097
        %5099 = vrot.lane.b32.xlu0 %v4993, 16
        %v5100 = vpop.permute.xlu0 %5099
        %5101 = vrot.lane.b32.xlu0 %v4996, 16
        %v5102 = vpop.permute.xlu0 %5101
        %5103 = vrot.lane.b32.xlu0 %v5001, 16
        %v5104 = vpop.permute.xlu0 %5103
        %5105 = vrot.lane.b32.xlu0 %v5004, 16
        %v5106 = vpop.permute.xlu0 %5105
        %5107 = vrot.lane.b32.xlu0 %v5009, 16
        %v5108 = vpop.permute.xlu0 %5107
        %5109 = vrot.lane.b32.xlu0 %v5012, 16
        %v5110 = vpop.permute.xlu0 %5109
        %vm5143 = vcmask 195712
        %5144 = vst.msk [vmem:[#allocation2] sm:$0xff] %vm5143, %v5048
        %5145 = vst.msk [vmem:[#allocation2 + $0x8] sm:$0xff] %vm5143, %v5050
        %5146 = vst.msk [vmem:[#allocation2 + $0x10] sm:$0xff] %vm5143, %v5052
        %5147 = vst.msk [vmem:[#allocation2 + $0x18] sm:$0xff] %vm5143, %v5054
        %5148 = vst.msk [vmem:[#allocation2 + $0x20] sm:$0xff] %vm5143, %v5056
        %5149 = vst.msk [vmem:[#allocation2 + $0x28] sm:$0xff] %vm5143, %v5058
        %5150 = vst.msk [vmem:[#allocation2 + $0x30] sm:$0xff] %vm5143, %v5060
        %5151 = vst.msk [vmem:[#allocation2 + $0x38] sm:$0xff] %vm5143, %v5062
        %5152 = vst.msk [vmem:[#allocation2 + $0x40] sm:$0xff] %vm5143, %v5064
        %5153 = vst.msk [vmem:[#allocation2 + $0x48] sm:$0xff] %vm5143, %v5066
        %5154 = vst.msk [vmem:[#allocation2 + $0x50] sm:$0xff] %vm5143, %v5068
        %5155 = vst.msk [vmem:[#allocation2 + $0x58] sm:$0xff] %vm5143, %v5070
        %5156 = vst.msk [vmem:[#allocation2 + $0x60] sm:$0xff] %vm5143, %v5072
        %5157 = vst.msk [vmem:[#allocation2 + $0x68] sm:$0xff] %vm5143, %v5074
        %5158 = vst.msk [vmem:[#allocation2 + $0x70] sm:$0xff] %vm5143, %v5076
        %5159 = vst.msk [vmem:[#allocation2 + $0x78] sm:$0xff] %vm5143, %v5078
        %5160 = vst.msk [vmem:[#allocation2 + $0x80] sm:$0xff] %vm5143, %v5080
        %5161 = vst.msk [vmem:[#allocation2 + $0x88] sm:$0xff] %vm5143, %v5082
        %5162 = vst.msk [vmem:[#allocation2 + $0x90] sm:$0xff] %vm5143, %v5084
        %5163 = vst.msk [vmem:[#allocation2 + $0x98] sm:$0xff] %vm5143, %v5086
        %5164 = vst.msk [vmem:[#allocation2 + $0xa0] sm:$0xff] %vm5143, %v5088
        %5165 = vst.msk [vmem:[#allocation2 + $0xa8] sm:$0xff] %vm5143, %v5090
        %5166 = vst.msk [vmem:[#allocation2 + $0xb0] sm:$0xff] %vm5143, %v5092
        %5167 = vst.msk [vmem:[#allocation2 + $0xb8] sm:$0xff] %vm5143, %v5094
        %5168 = vst.msk [vmem:[#allocation2 + $0xc0] sm:$0xff] %vm5143, %v5096
        %5169 = vst.msk [vmem:[#allocation2 + $0xc8] sm:$0xff] %vm5143, %v5098
        %5170 = vst.msk [vmem:[#allocation2 + $0xd0] sm:$0xff] %vm5143, %v5100
        %5171 = vst.msk [vmem:[#allocation2 + $0xd8] sm:$0xff] %vm5143, %v5102
        %5172 = vst.msk [vmem:[#allocation2 + $0xe0] sm:$0xff] %vm5143, %v5104
        %5173 = vst.msk [vmem:[#allocation2 + $0xe8] sm:$0xff] %vm5143, %v5106
        %5174 = vst.msk [vmem:[#allocation2 + $0xf0] sm:$0xff] %vm5143, %v5108
        %5175 = vst.msk [vmem:[#allocation2 + $0xf8] sm:$0xff] %vm5143, %v5110
        %s5176 = scalar_lea.vmem [#allocation6], 192
        %v5177 = vld [vmem:[%s5176] sm:$0xff]
        %v5178 = vld [vmem:[%s5176 + $0x8] sm:$0xff]
        %v5179 = vld [vmem:[%s5176 + $0x10] sm:$0xff]
        %v5180 = vld [vmem:[%s5176 + $0x18] sm:$0xff]
        %v5181 = vld [vmem:[%s5176 + $0x20] sm:$0xff]
        %v5182 = vld [vmem:[%s5176 + $0x28] sm:$0xff]
        %v5183 = vld [vmem:[%s5176 + $0x30] sm:$0xff]
        %v5184 = vld [vmem:[%s5176 + $0x38] sm:$0xff]
        %5185 = vrot.lane.b32.xlu0 %v1330, 104
        %v5186 = vpop.permute.xlu0 %5185
        %5187 = vrot.lane.b32.xlu0 %v1331, 104
        %v5188 = vpop.permute.xlu0 %5187
        %5189 = vrot.lane.b32.xlu0 %v1332, 104
        %v5190 = vpop.permute.xlu0 %5189
        %5191 = vrot.lane.b32.xlu0 %v1333, 104
        %v5192 = vpop.permute.xlu0 %5191
        %5193 = vrot.lane.b32.xlu0 %v1346, 72
        %v5194 = vpop.permute.xlu0 %5193
        %5195 = vrot.lane.b32.xlu0 %v1347, 72
        %v5196 = vpop.permute.xlu0 %5195
        %5197 = vrot.lane.b32.xlu0 %v1348, 72
        %v5198 = vpop.permute.xlu0 %5197
        %5199 = vrot.lane.b32.xlu0 %v1349, 72
        %v5200 = vpop.permute.xlu0 %5199
        %v5202 = vsel %vm1382, %v5186, 0
        %v5205 = vsel %vm1382, %v5188, 0
        %v5208 = vsel %vm1382, %v5190, 0
        %v5211 = vsel %vm1382, %v5192, 0
        %v5214 = vsel %vm1382, %v5194, 0
        %v5217 = vsel %vm1382, %v5196, 0
        %v5220 = vsel %vm1382, %v5198, 0
        %v5223 = vsel %vm1382, %v5200, 0
        %5225 = vmatprep.subr.bf16.mxu0 0
        %5226 = vmatpush1.bf16.xpose.msra.mxu0 %v5214
        %5227 = vmatprep.subr.bf16.mxu0 0
        %5228 = vmatpush1.bf16.xpose.msra.mxu0 %v5217
        %5229 = vmatprep.subr.bf16.mxu0 0
        %5230 = vmatpush1.bf16.xpose.msra.mxu0 %v5220
        %5231 = vmatprep.subr.bf16.mxu0 0
        %5232 = vmatpush1.bf16.xpose.msra.mxu0 %v5223
        %5233 = vmatprep.subr.bf16.mxu0 0
        %5234 = vmatpush1.bf16.xpose.msra.mxu0 0
        %5235 = vmatprep.subr.bf16.mxu0 0
        %5236 = vmatpush1.bf16.xpose.msra.mxu0 0
        %5237 = vmatprep.subr.bf16.mxu0 0
        %5238 = vmatpush1.bf16.xpose.msra.mxu0 0
        %5239 = vmatprep.subr.bf16.mxu0 0
        %5240 = vmatpush1.bf16.xpose.msra.mxu0 0
        %5241 = vmatprep.subr.bf16.mxu0 0
        %5242 = vmatpush1.bf16.xpose.msra.mxu0 0
        %5243 = vmatprep.subr.bf16.mxu0 0
        %5244 = vmatpush1.bf16.xpose.msra.mxu0 0
        %5245 = vmatprep.subr.bf16.mxu0 0
        %5246 = vmatpush1.bf16.xpose.msra.mxu0 0
        %5247 = vmatprep.subr.bf16.mxu0 0
        %5248 = vmatpush1.bf16.xpose.msra.mxu0 0
        %5249 = vmatprep.subr.bf16.mxu0 0
        %5250 = vmatpush1.bf16.xpose.msra.mxu0 0
        %5251 = vmatprep.subr.bf16.mxu0 0
        %5252 = vmatpush1.bf16.xpose.msra.mxu0 0
        %5253 = vmatprep.subr.bf16.mxu0 0
        %5254 = vmatpush1.bf16.xpose.msra.mxu0 0
        %5255 = vmatprep.subr.bf16.mxu0 0
        %5256 = vmatpush1.bf16.xpose.msra.mxu0 0
        %5257 = vmatprep.mubr.bf16.mxu0 0
        %5258 = vmatmul.mubr.bf16.gmra.mrb[0].mxu0 %v5202
        %v5259 = vpop.f32.mrb[0].mxu0
        %v5260 = vadd.f32 %v5177, %v5259
        %v5261 = vpop.f32.mrb[0].mxu0
        %v5262 = vpop.f32.mrb[0].mxu0
        %v5263 = vadd.f32 %v5178, %v5262
        %v5264 = vpop.f32.mrb[0].mxu0
        %5265 = vmatprep.mubr.bf16.mxu0 0
        %5266 = vmatmul.mubr.bf16.gmra.mrb[0].mxu0 %v5205
        %v5267 = vpop.f32.mrb[0].mxu0
        %v5268 = vadd.f32 %v5179, %v5267
        %v5269 = vpop.f32.mrb[0].mxu0
        %v5270 = vpop.f32.mrb[0].mxu0
        %v5271 = vadd.f32 %v5180, %v5270
        %v5272 = vpop.f32.mrb[0].mxu0
        %5273 = vmatprep.mubr.bf16.mxu0 0
        %5274 = vmatmul.mubr.bf16.gmra.mrb[0].mxu0 %v5208
        %v5275 = vpop.f32.mrb[0].mxu0
        %v5276 = vadd.f32 %v5181, %v5275
        %v5277 = vpop.f32.mrb[0].mxu0
        %v5278 = vpop.f32.mrb[0].mxu0
        %v5279 = vadd.f32 %v5182, %v5278
        %v5280 = vpop.f32.mrb[0].mxu0
        %5281 = vmatprep.mubr.bf16.mxu0 0
        %5282 = vmatmul.mubr.bf16.gmra.mrb[0].mxu0 %v5211
        %v5283 = vpop.f32.mrb[0].mxu0
        %v5284 = vadd.f32 %v5183, %v5283
        %v5285 = vpop.f32.mrb[0].mxu0
        %v5286 = vpop.f32.mrb[0].mxu0
        %v5287 = vadd.f32 %v5184, %v5286
        %v5288 = vpop.f32.mrb[0].mxu0
        %5289 = vdwg.mxu0
        %5290 = vrot.lane.b32.xlu0 %v1334, 104
        %v5291 = vpop.permute.xlu0 %5290
        %5292 = vrot.lane.b32.xlu0 %v1335, 104
        %v5293 = vpop.permute.xlu0 %5292
        %5294 = vrot.lane.b32.xlu0 %v1336, 104
        %v5295 = vpop.permute.xlu0 %5294
        %5296 = vrot.lane.b32.xlu0 %v1337, 104
        %v5297 = vpop.permute.xlu0 %5296
        %5298 = vrot.lane.b32.xlu0 %v1350, 72
        %v5299 = vpop.permute.xlu0 %5298
        %5300 = vrot.lane.b32.xlu0 %v1351, 72
        %v5301 = vpop.permute.xlu0 %5300
        %5302 = vrot.lane.b32.xlu0 %v1352, 72
        %v5303 = vpop.permute.xlu0 %5302
        %5304 = vrot.lane.b32.xlu0 %v1353, 72
        %v5305 = vpop.permute.xlu0 %5304
        %v5307 = vsel %vm1382, %v5291, 0
        %v5310 = vsel %vm1382, %v5293, 0
        %v5313 = vsel %vm1382, %v5295, 0
        %v5316 = vsel %vm1382, %v5297, 0
        %v5319 = vsel %vm1382, %v5299, 0
        %v5322 = vsel %vm1382, %v5301, 0
        %v5325 = vsel %vm1382, %v5303, 0
        %v5328 = vsel %vm1382, %v5305, 0
        %5330 = vmatprep.subr.bf16.mxu0 0
        %5331 = vmatpush1.bf16.xpose.msra.mxu0 %v5319
        %5332 = vmatprep.subr.bf16.mxu0 0
        %5333 = vmatpush1.bf16.xpose.msra.mxu0 %v5322
        %5334 = vmatprep.subr.bf16.mxu0 0
        %5335 = vmatpush1.bf16.xpose.msra.mxu0 %v5325
        %5336 = vmatprep.subr.bf16.mxu0 0
        %5337 = vmatpush1.bf16.xpose.msra.mxu0 %v5328
        %5338 = vmatprep.subr.bf16.mxu0 0
        %5339 = vmatpush1.bf16.xpose.msra.mxu0 0
        %5340 = vmatprep.subr.bf16.mxu0 0
        %5341 = vmatpush1.bf16.xpose.msra.mxu0 0
        %5342 = vmatprep.subr.bf16.mxu0 0
        %5343 = vmatpush1.bf16.xpose.msra.mxu0 0
        %5344 = vmatprep.subr.bf16.mxu0 0
        %5345 = vmatpush1.bf16.xpose.msra.mxu0 0
        %5346 = vmatprep.subr.bf16.mxu0 0
        %5347 = vmatpush1.bf16.xpose.msra.mxu0 0
        %5348 = vmatprep.subr.bf16.mxu0 0
        %5349 = vmatpush1.bf16.xpose.msra.mxu0 0
        %5350 = vmatprep.subr.bf16.mxu0 0
        %5351 = vmatpush1.bf16.xpose.msra.mxu0 0
        %5352 = vmatprep.subr.bf16.mxu0 0
        %5353 = vmatpush1.bf16.xpose.msra.mxu0 0
        %5354 = vmatprep.subr.bf16.mxu0 0
        %5355 = vmatpush1.bf16.xpose.msra.mxu0 0
        %5356 = vmatprep.subr.bf16.mxu0 0
        %5357 = vmatpush1.bf16.xpose.msra.mxu0 0
        %5358 = vmatprep.subr.bf16.mxu0 0
        %5359 = vmatpush1.bf16.xpose.msra.mxu0 0
        %5360 = vmatprep.subr.bf16.mxu0 0
        %5361 = vmatpush1.bf16.xpose.msra.mxu0 0
        %5362 = vmatprep.mubr.bf16.mxu0 0
        %5363 = vmatmul.mubr.bf16.gmra.mrb[0].mxu0 %v5307
        %v5364 = vpop.f32.mrb[0].mxu0
        %v5365 = vadd.f32 %v5177, %v5364
        %v5366 = vpop.f32.mrb[0].mxu0
        %v5367 = vpop.f32.mrb[0].mxu0
        %v5368 = vadd.f32 %v5178, %v5367
        %v5369 = vpop.f32.mrb[0].mxu0
        %5370 = vmatprep.mubr.bf16.mxu0 0
        %5371 = vmatmul.mubr.bf16.gmra.mrb[0].mxu0 %v5310
        %v5372 = vpop.f32.mrb[0].mxu0
        %v5373 = vadd.f32 %v5179, %v5372
        %v5374 = vpop.f32.mrb[0].mxu0
        %v5375 = vpop.f32.mrb[0].mxu0
        %v5376 = vadd.f32 %v5180, %v5375
        %v5377 = vpop.f32.mrb[0].mxu0
        %5378 = vmatprep.mubr.bf16.mxu0 0
        %5379 = vmatmul.mubr.bf16.gmra.mrb[0].mxu0 %v5313
        %v5380 = vpop.f32.mrb[0].mxu0
        %v5381 = vadd.f32 %v5181, %v5380
        %v5382 = vpop.f32.mrb[0].mxu0
        %v5383 = vpop.f32.mrb[0].mxu0
        %v5384 = vadd.f32 %v5182, %v5383
        %v5385 = vpop.f32.mrb[0].mxu0
        %5386 = vmatprep.mubr.bf16.mxu0 0
        %5387 = vmatmul.mubr.bf16.gmra.mrb[0].mxu0 %v5316
        %v5388 = vpop.f32.mrb[0].mxu0
        %v5389 = vadd.f32 %v5183, %v5388
        %v5390 = vpop.f32.mrb[0].mxu0
        %v5391 = vpop.f32.mrb[0].mxu0
        %v5392 = vadd.f32 %v5184, %v5391
        %v5393 = vpop.f32.mrb[0].mxu0
        %5394 = vdwg.mxu0
        %5395 = vrot.lane.b32.xlu0 %v1338, 104
        %v5396 = vpop.permute.xlu0 %5395
        %5397 = vrot.lane.b32.xlu0 %v1339, 104
        %v5398 = vpop.permute.xlu0 %5397
        %5399 = vrot.lane.b32.xlu0 %v1340, 104
        %v5400 = vpop.permute.xlu0 %5399
        %5401 = vrot.lane.b32.xlu0 %v1341, 104
        %v5402 = vpop.permute.xlu0 %5401
        %5403 = vrot.lane.b32.xlu0 %v1354, 72
        %v5404 = vpop.permute.xlu0 %5403
        %5405 = vrot.lane.b32.xlu0 %v1355, 72
        %v5406 = vpop.permute.xlu0 %5405
        %5407 = vrot.lane.b32.xlu0 %v1356, 72
        %v5408 = vpop.permute.xlu0 %5407
        %5409 = vrot.lane.b32.xlu0 %v1357, 72
        %v5410 = vpop.permute.xlu0 %5409
        %v5412 = vsel %vm1382, %v5396, 0
        %v5415 = vsel %vm1382, %v5398, 0
        %v5418 = vsel %vm1382, %v5400, 0
        %v5421 = vsel %vm1382, %v5402, 0
        %v5424 = vsel %vm1382, %v5404, 0
        %v5427 = vsel %vm1382, %v5406, 0
        %v5430 = vsel %vm1382, %v5408, 0
        %v5433 = vsel %vm1382, %v5410, 0
        %5435 = vmatprep.subr.bf16.mxu0 0
        %5436 = vmatpush1.bf16.xpose.msra.mxu0 %v5424
        %5437 = vmatprep.subr.bf16.mxu0 0
        %5438 = vmatpush1.bf16.xpose.msra.mxu0 %v5427
        %5439 = vmatprep.subr.bf16.mxu0 0
        %5440 = vmatpush1.bf16.xpose.msra.mxu0 %v5430
        %5441 = vmatprep.subr.bf16.mxu0 0
        %5442 = vmatpush1.bf16.xpose.msra.mxu0 %v5433
        %5443 = vmatprep.subr.bf16.mxu0 0
        %5444 = vmatpush1.bf16.xpose.msra.mxu0 0
        %5445 = vmatprep.subr.bf16.mxu0 0
        %5446 = vmatpush1.bf16.xpose.msra.mxu0 0
        %5447 = vmatprep.subr.bf16.mxu0 0
        %5448 = vmatpush1.bf16.xpose.msra.mxu0 0
        %5449 = vmatprep.subr.bf16.mxu0 0
        %5450 = vmatpush1.bf16.xpose.msra.mxu0 0
        %5451 = vmatprep.subr.bf16.mxu0 0
        %5452 = vmatpush1.bf16.xpose.msra.mxu0 0
        %5453 = vmatprep.subr.bf16.mxu0 0
        %5454 = vmatpush1.bf16.xpose.msra.mxu0 0
        %5455 = vmatprep.subr.bf16.mxu0 0
        %5456 = vmatpush1.bf16.xpose.msra.mxu0 0
        %5457 = vmatprep.subr.bf16.mxu0 0
        %5458 = vmatpush1.bf16.xpose.msra.mxu0 0
        %5459 = vmatprep.subr.bf16.mxu0 0
        %5460 = vmatpush1.bf16.xpose.msra.mxu0 0
        %5461 = vmatprep.subr.bf16.mxu0 0
        %5462 = vmatpush1.bf16.xpose.msra.mxu0 0
        %5463 = vmatprep.subr.bf16.mxu0 0
        %5464 = vmatpush1.bf16.xpose.msra.mxu0 0
        %5465 = vmatprep.subr.bf16.mxu0 0
        %5466 = vmatpush1.bf16.xpose.msra.mxu0 0
        %5467 = vmatprep.mubr.bf16.mxu0 0
        %5468 = vmatmul.mubr.bf16.gmra.mrb[0].mxu0 %v5412
        %v5469 = vpop.f32.mrb[0].mxu0
        %v5470 = vadd.f32 %v5177, %v5469
        %v5471 = vpop.f32.mrb[0].mxu0
        %v5472 = vpop.f32.mrb[0].mxu0
        %v5473 = vadd.f32 %v5178, %v5472
        %v5474 = vpop.f32.mrb[0].mxu0
        %5475 = vmatprep.mubr.bf16.mxu0 0
        %5476 = vmatmul.mubr.bf16.gmra.mrb[0].mxu0 %v5415
        %v5477 = vpop.f32.mrb[0].mxu0
        %v5478 = vadd.f32 %v5179, %v5477
        %v5479 = vpop.f32.mrb[0].mxu0
        %v5480 = vpop.f32.mrb[0].mxu0
        %v5481 = vadd.f32 %v5180, %v5480
        %v5482 = vpop.f32.mrb[0].mxu0
        %5483 = vmatprep.mubr.bf16.mxu0 0
        %5484 = vmatmul.mubr.bf16.gmra.mrb[0].mxu0 %v5418
        %v5485 = vpop.f32.mrb[0].mxu0
        %v5486 = vadd.f32 %v5181, %v5485
        %v5487 = vpop.f32.mrb[0].mxu0
        %v5488 = vpop.f32.mrb[0].mxu0
        %v5489 = vadd.f32 %v5182, %v5488
        %v5490 = vpop.f32.mrb[0].mxu0
        %5491 = vmatprep.mubr.bf16.mxu0 0
        %5492 = vmatmul.mubr.bf16.gmra.mrb[0].mxu0 %v5421
        %v5493 = vpop.f32.mrb[0].mxu0
        %v5494 = vadd.f32 %v5183, %v5493
        %v5495 = vpop.f32.mrb[0].mxu0
        %v5496 = vpop.f32.mrb[0].mxu0
        %v5497 = vadd.f32 %v5184, %v5496
        %v5498 = vpop.f32.mrb[0].mxu0
        %5499 = vdwg.mxu0
        %5500 = vrot.lane.b32.xlu0 %v1342, 104
        %v5501 = vpop.permute.xlu0 %5500
        %5502 = vrot.lane.b32.xlu0 %v1343, 104
        %v5503 = vpop.permute.xlu0 %5502
        %5504 = vrot.lane.b32.xlu0 %v1344, 104
        %v5505 = vpop.permute.xlu0 %5504
        %5506 = vrot.lane.b32.xlu0 %v1345, 104
        %v5507 = vpop.permute.xlu0 %5506
        %5508 = vrot.lane.b32.xlu0 %v1358, 72
        %v5509 = vpop.permute.xlu0 %5508
        %5510 = vrot.lane.b32.xlu0 %v1359, 72
        %v5511 = vpop.permute.xlu0 %5510
        %5512 = vrot.lane.b32.xlu0 %v1360, 72
        %v5513 = vpop.permute.xlu0 %5512
        %5514 = vrot.lane.b32.xlu0 %v1361, 72
        %v5515 = vpop.permute.xlu0 %5514
        %v5517 = vsel %vm1382, %v5501, 0
        %v5520 = vsel %vm1382, %v5503, 0
        %v5523 = vsel %vm1382, %v5505, 0
        %v5526 = vsel %vm1382, %v5507, 0
        %v5529 = vsel %vm1382, %v5509, 0
        %v5532 = vsel %vm1382, %v5511, 0
        %v5535 = vsel %vm1382, %v5513, 0
        %v5538 = vsel %vm1382, %v5515, 0
        %5540 = vmatprep.subr.bf16.mxu0 0
        %5541 = vmatpush1.bf16.xpose.msra.mxu0 %v5529
        %5542 = vmatprep.subr.bf16.mxu0 0
        %5543 = vmatpush1.bf16.xpose.msra.mxu0 %v5532
        %5544 = vmatprep.subr.bf16.mxu0 0
        %5545 = vmatpush1.bf16.xpose.msra.mxu0 %v5535
        %5546 = vmatprep.subr.bf16.mxu0 0
        %5547 = vmatpush1.bf16.xpose.msra.mxu0 %v5538
        %5548 = vmatprep.subr.bf16.mxu0 0
        %5549 = vmatpush1.bf16.xpose.msra.mxu0 0
        %5550 = vmatprep.subr.bf16.mxu0 0
        %5551 = vmatpush1.bf16.xpose.msra.mxu0 0
        %5552 = vmatprep.subr.bf16.mxu0 0
        %5553 = vmatpush1.bf16.xpose.msra.mxu0 0
        %5554 = vmatprep.subr.bf16.mxu0 0
        %5555 = vmatpush1.bf16.xpose.msra.mxu0 0
        %5556 = vmatprep.subr.bf16.mxu0 0
        %5557 = vmatpush1.bf16.xpose.msra.mxu0 0
        %5558 = vmatprep.subr.bf16.mxu0 0
        %5559 = vmatpush1.bf16.xpose.msra.mxu0 0
        %5560 = vmatprep.subr.bf16.mxu0 0
        %5561 = vmatpush1.bf16.xpose.msra.mxu0 0
        %5562 = vmatprep.subr.bf16.mxu0 0
        %5563 = vmatpush1.bf16.xpose.msra.mxu0 0
        %5564 = vmatprep.subr.bf16.mxu0 0
        %5565 = vmatpush1.bf16.xpose.msra.mxu0 0
        %5566 = vmatprep.subr.bf16.mxu0 0
        %5567 = vmatpush1.bf16.xpose.msra.mxu0 0
        %5568 = vmatprep.subr.bf16.mxu0 0
        %5569 = vmatpush1.bf16.xpose.msra.mxu0 0
        %5570 = vmatprep.subr.bf16.mxu0 0
        %5571 = vmatpush1.bf16.xpose.msra.mxu0 0
        %5572 = vmatprep.mubr.bf16.mxu0 0
        %5573 = vmatmul.mubr.bf16.gmra.mrb[0].mxu0 %v5517
        %v5574 = vpop.f32.mrb[0].mxu0
        %v5575 = vadd.f32 %v5177, %v5574
        %v5576 = vpop.f32.mrb[0].mxu0
        %v5577 = vpop.f32.mrb[0].mxu0
        %v5578 = vadd.f32 %v5178, %v5577
        %v5579 = vpop.f32.mrb[0].mxu0
        %5580 = vmatprep.mubr.bf16.mxu0 0
        %5581 = vmatmul.mubr.bf16.gmra.mrb[0].mxu0 %v5520
        %v5582 = vpop.f32.mrb[0].mxu0
        %v5583 = vadd.f32 %v5179, %v5582
        %v5584 = vpop.f32.mrb[0].mxu0
        %v5585 = vpop.f32.mrb[0].mxu0
        %v5586 = vadd.f32 %v5180, %v5585
        %v5587 = vpop.f32.mrb[0].mxu0
        %5588 = vmatprep.mubr.bf16.mxu0 0
        %5589 = vmatmul.mubr.bf16.gmra.mrb[0].mxu0 %v5523
        %v5590 = vpop.f32.mrb[0].mxu0
        %v5591 = vadd.f32 %v5181, %v5590
        %v5592 = vpop.f32.mrb[0].mxu0
        %v5593 = vpop.f32.mrb[0].mxu0
        %v5594 = vadd.f32 %v5182, %v5593
        %v5595 = vpop.f32.mrb[0].mxu0
        %5596 = vmatprep.mubr.bf16.mxu0 0
        %5597 = vmatmul.mubr.bf16.gmra.mrb[0].mxu0 %v5526
        %v5598 = vpop.f32.mrb[0].mxu0
        %v5599 = vadd.f32 %v5183, %v5598
        %v5600 = vpop.f32.mrb[0].mxu0
        %v5601 = vpop.f32.mrb[0].mxu0
        %v5602 = vadd.f32 %v5184, %v5601
        %v5603 = vpop.f32.mrb[0].mxu0
        %5604 = vdwg.mxu0
        %v5605 = vsel %vm1775, %v5260, -inf
        %5606 = vmax.xlane.f32.xlu0 %v5605
        %v5607 = vpop.xlane.xlu0 %5606
        %v5608 = vsel %vm1775, %v5263, -inf
        %5609 = vmax.xlane.f32.xlu0 %v5608
        %v5610 = vpop.xlane.xlu0 %5609
        %v5611 = vsel %vm1775, %v5268, -inf
        %5612 = vmax.xlane.f32.xlu0 %v5611
        %v5613 = vpop.xlane.xlu0 %5612
        %v5614 = vsel %vm1775, %v5271, -inf
        %5615 = vmax.xlane.f32.xlu0 %v5614
        %v5616 = vpop.xlane.xlu0 %5615
        %v5617 = vsel %vm1775, %v5276, -inf
        %5618 = vmax.xlane.f32.xlu0 %v5617
        %v5619 = vpop.xlane.xlu0 %5618
        %v5620 = vsel %vm1775, %v5279, -inf
        %5621 = vmax.xlane.f32.xlu0 %v5620
        %v5622 = vpop.xlane.xlu0 %5621
        %v5623 = vsel %vm1775, %v5284, -inf
        %5624 = vmax.xlane.f32.xlu0 %v5623
        %v5625 = vpop.xlane.xlu0 %5624
        %v5626 = vsel %vm1775, %v5287, -inf
        %5627 = vmax.xlane.f32.xlu0 %v5626
        %v5628 = vpop.xlane.xlu0 %5627
        %v5629 = vsel %vm1775, %v5365, -inf
        %5630 = vmax.xlane.f32.xlu0 %v5629
        %v5631 = vpop.xlane.xlu0 %5630
        %v5632 = vsel %vm1775, %v5368, -inf
        %5633 = vmax.xlane.f32.xlu0 %v5632
        %v5634 = vpop.xlane.xlu0 %5633
        %v5635 = vsel %vm1775, %v5373, -inf
        %5636 = vmax.xlane.f32.xlu0 %v5635
        %v5637 = vpop.xlane.xlu0 %5636
        %v5638 = vsel %vm1775, %v5376, -inf
        %5639 = vmax.xlane.f32.xlu0 %v5638
        %v5640 = vpop.xlane.xlu0 %5639
        %v5641 = vsel %vm1775, %v5381, -inf
        %5642 = vmax.xlane.f32.xlu0 %v5641
        %v5643 = vpop.xlane.xlu0 %5642
        %v5644 = vsel %vm1775, %v5384, -inf
        %5645 = vmax.xlane.f32.xlu0 %v5644
        %v5646 = vpop.xlane.xlu0 %5645
        %v5647 = vsel %vm1775, %v5389, -inf
        %5648 = vmax.xlane.f32.xlu0 %v5647
        %v5649 = vpop.xlane.xlu0 %5648
        %v5650 = vsel %vm1775, %v5392, -inf
        %5651 = vmax.xlane.f32.xlu0 %v5650
        %v5652 = vpop.xlane.xlu0 %5651
        %v5653 = vsel %vm1775, %v5470, -inf
        %5654 = vmax.xlane.f32.xlu0 %v5653
        %v5655 = vpop.xlane.xlu0 %5654
        %v5656 = vsel %vm1775, %v5473, -inf
        %5657 = vmax.xlane.f32.xlu0 %v5656
        %v5658 = vpop.xlane.xlu0 %5657
        %v5659 = vsel %vm1775, %v5478, -inf
        %5660 = vmax.xlane.f32.xlu0 %v5659
        %v5661 = vpop.xlane.xlu0 %5660
        %v5662 = vsel %vm1775, %v5481, -inf
        %5663 = vmax.xlane.f32.xlu0 %v5662
        %v5664 = vpop.xlane.xlu0 %5663
        %v5665 = vsel %vm1775, %v5486, -inf
        %5666 = vmax.xlane.f32.xlu0 %v5665
        %v5667 = vpop.xlane.xlu0 %5666
        %v5668 = vsel %vm1775, %v5489, -inf
        %5669 = vmax.xlane.f32.xlu0 %v5668
        %v5670 = vpop.xlane.xlu0 %5669
        %v5671 = vsel %vm1775, %v5494, -inf
        %5672 = vmax.xlane.f32.xlu0 %v5671
        %v5673 = vpop.xlane.xlu0 %5672
        %v5674 = vsel %vm1775, %v5497, -inf
        %5675 = vmax.xlane.f32.xlu0 %v5674
        %v5676 = vpop.xlane.xlu0 %5675
        %v5677 = vsel %vm1775, %v5575, -inf
        %5678 = vmax.xlane.f32.xlu0 %v5677
        %v5679 = vpop.xlane.xlu0 %5678
        %v5680 = vsel %vm1775, %v5578, -inf
        %5681 = vmax.xlane.f32.xlu0 %v5680
        %v5682 = vpop.xlane.xlu0 %5681
        %v5683 = vsel %vm1775, %v5583, -inf
        %5684 = vmax.xlane.f32.xlu0 %v5683
        %v5685 = vpop.xlane.xlu0 %5684
        %v5686 = vsel %vm1775, %v5586, -inf
        %5687 = vmax.xlane.f32.xlu0 %v5686
        %v5688 = vpop.xlane.xlu0 %5687
        %v5689 = vsel %vm1775, %v5591, -inf
        %5690 = vmax.xlane.f32.xlu0 %v5689
        %v5691 = vpop.xlane.xlu0 %5690
        %v5692 = vsel %vm1775, %v5594, -inf
        %5693 = vmax.xlane.f32.xlu0 %v5692
        %v5694 = vpop.xlane.xlu0 %5693
        %v5695 = vsel %vm1775, %v5599, -inf
        %5696 = vmax.xlane.f32.xlu0 %v5695
        %v5697 = vpop.xlane.xlu0 %5696
        %v5698 = vsel %vm1775, %v5602, -inf
        %5699 = vmax.xlane.f32.xlu0 %v5698
        %v5700 = vpop.xlane.xlu0 %5699
        %v5701 = vsub.f32 %v5260, %v5607
        %v5702 = vsub.f32 %v5263, %v5610
        %v5703 = vsub.f32 %v5268, %v5613
        %v5704 = vsub.f32 %v5271, %v5616
        %v5705 = vsub.f32 %v5276, %v5619
        %v5706 = vsub.f32 %v5279, %v5622
        %v5707 = vsub.f32 %v5284, %v5625
        %v5708 = vsub.f32 %v5287, %v5628
        %v5709 = vsub.f32 %v5365, %v5631
        %v5710 = vsub.f32 %v5368, %v5634
        %v5711 = vsub.f32 %v5373, %v5637
        %v5712 = vsub.f32 %v5376, %v5640
        %v5713 = vsub.f32 %v5381, %v5643
        %v5714 = vsub.f32 %v5384, %v5646
        %v5715 = vsub.f32 %v5389, %v5649
        %v5716 = vsub.f32 %v5392, %v5652
        %v5717 = vsub.f32 %v5470, %v5655
        %v5718 = vsub.f32 %v5473, %v5658
        %v5719 = vsub.f32 %v5478, %v5661
        %v5720 = vsub.f32 %v5481, %v5664
        %v5721 = vsub.f32 %v5486, %v5667
        %v5722 = vsub.f32 %v5489, %v5670
        %v5723 = vsub.f32 %v5494, %v5673
        %v5724 = vsub.f32 %v5497, %v5676
        %v5725 = vsub.f32 %v5575, %v5679
        %v5726 = vsub.f32 %v5578, %v5682
        %v5727 = vsub.f32 %v5583, %v5685
        %v5728 = vsub.f32 %v5586, %v5688
        %v5729 = vsub.f32 %v5591, %v5691
        %v5730 = vsub.f32 %v5594, %v5694
        %v5731 = vsub.f32 %v5599, %v5697
        %v5732 = vsub.f32 %v5602, %v5700
        %v5733 = vmul.f32 %v5701, 1.442695
        %v5734 = vpow.pop %v5733
        %v5735 = vmul.f32 %v5702, 1.442695
        %v5736 = vpow.pop %v5735
        %v5737 = vmul.f32 %v5703, 1.442695
        %v5738 = vpow.pop %v5737
        %v5739 = vmul.f32 %v5704, 1.442695
        %v5740 = vpow.pop %v5739
        %v5741 = vmul.f32 %v5705, 1.442695
        %v5742 = vpow.pop %v5741
        %v5743 = vmul.f32 %v5706, 1.442695
        %v5744 = vpow.pop %v5743
        %v5745 = vmul.f32 %v5707, 1.442695
        %v5746 = vpow.pop %v5745
        %v5747 = vmul.f32 %v5708, 1.442695
        %v5748 = vpow.pop %v5747
        %v5749 = vmul.f32 %v5709, 1.442695
        %v5750 = vpow.pop %v5749
        %v5751 = vmul.f32 %v5710, 1.442695
        %v5752 = vpow.pop %v5751
        %v5753 = vmul.f32 %v5711, 1.442695
        %v5754 = vpow.pop %v5753
        %v5755 = vmul.f32 %v5712, 1.442695
        %v5756 = vpow.pop %v5755
        %v5757 = vmul.f32 %v5713, 1.442695
        %v5758 = vpow.pop %v5757
        %v5759 = vmul.f32 %v5714, 1.442695
        %v5760 = vpow.pop %v5759
        %v5761 = vmul.f32 %v5715, 1.442695
        %v5762 = vpow.pop %v5761
        %v5763 = vmul.f32 %v5716, 1.442695
        %v5764 = vpow.pop %v5763
        %v5765 = vmul.f32 %v5717, 1.442695
        %v5766 = vpow.pop %v5765
        %v5767 = vmul.f32 %v5718, 1.442695
        %v5768 = vpow.pop %v5767
        %v5769 = vmul.f32 %v5719, 1.442695
        %v5770 = vpow.pop %v5769
        %v5771 = vmul.f32 %v5720, 1.442695
        %v5772 = vpow.pop %v5771
        %v5773 = vmul.f32 %v5721, 1.442695
        %v5774 = vpow.pop %v5773
        %v5775 = vmul.f32 %v5722, 1.442695
        %v5776 = vpow.pop %v5775
        %v5777 = vmul.f32 %v5723, 1.442695
        %v5778 = vpow.pop %v5777
        %v5779 = vmul.f32 %v5724, 1.442695
        %v5780 = vpow.pop %v5779
        %v5781 = vmul.f32 %v5725, 1.442695
        %v5782 = vpow.pop %v5781
        %v5783 = vmul.f32 %v5726, 1.442695
        %v5784 = vpow.pop %v5783
        %v5785 = vmul.f32 %v5727, 1.442695
        %v5786 = vpow.pop %v5785
        %v5787 = vmul.f32 %v5728, 1.442695
        %v5788 = vpow.pop %v5787
        %v5789 = vmul.f32 %v5729, 1.442695
        %v5790 = vpow.pop %v5789
        %v5791 = vmul.f32 %v5730, 1.442695
        %v5792 = vpow.pop %v5791
        %v5793 = vmul.f32 %v5731, 1.442695
        %v5794 = vpow.pop %v5793
        %v5795 = vmul.f32 %v5732, 1.442695
        %v5796 = vpow.pop %v5795
        %v5797 = vsel %vm1775, %v5734, 0.0
        %5798 = vadd.xlane.f32.xlu0 %v5797
        %v5799 = vpop.xlane.xlu0 %5798
        %v5800 = vsel %vm1775, %v5736, 0.0
        %5801 = vadd.xlane.f32.xlu0 %v5800
        %v5802 = vpop.xlane.xlu0 %5801
        %v5803 = vsel %vm1775, %v5738, 0.0
        %5804 = vadd.xlane.f32.xlu0 %v5803
        %v5805 = vpop.xlane.xlu0 %5804
        %v5806 = vsel %vm1775, %v5740, 0.0
        %5807 = vadd.xlane.f32.xlu0 %v5806
        %v5808 = vpop.xlane.xlu0 %5807
        %v5809 = vsel %vm1775, %v5742, 0.0
        %5810 = vadd.xlane.f32.xlu0 %v5809
        %v5811 = vpop.xlane.xlu0 %5810
        %v5812 = vsel %vm1775, %v5744, 0.0
        %5813 = vadd.xlane.f32.xlu0 %v5812
        %v5814 = vpop.xlane.xlu0 %5813
        %v5815 = vsel %vm1775, %v5746, 0.0
        %5816 = vadd.xlane.f32.xlu0 %v5815
        %v5817 = vpop.xlane.xlu0 %5816
        %v5818 = vsel %vm1775, %v5748, 0.0
        %5819 = vadd.xlane.f32.xlu0 %v5818
        %v5820 = vpop.xlane.xlu0 %5819
        %v5821 = vsel %vm1775, %v5750, 0.0
        %5822 = vadd.xlane.f32.xlu0 %v5821
        %v5823 = vpop.xlane.xlu0 %5822
        %v5824 = vsel %vm1775, %v5752, 0.0
        %5825 = vadd.xlane.f32.xlu0 %v5824
        %v5826 = vpop.xlane.xlu0 %5825
        %v5827 = vsel %vm1775, %v5754, 0.0
        %5828 = vadd.xlane.f32.xlu0 %v5827
        %v5829 = vpop.xlane.xlu0 %5828
        %v5830 = vsel %vm1775, %v5756, 0.0
        %5831 = vadd.xlane.f32.xlu0 %v5830
        %v5832 = vpop.xlane.xlu0 %5831
        %v5833 = vsel %vm1775, %v5758, 0.0
        %5834 = vadd.xlane.f32.xlu0 %v5833
        %v5835 = vpop.xlane.xlu0 %5834
        %v5836 = vsel %vm1775, %v5760, 0.0
        %5837 = vadd.xlane.f32.xlu0 %v5836
        %v5838 = vpop.xlane.xlu0 %5837
        %v5839 = vsel %vm1775, %v5762, 0.0
        %5840 = vadd.xlane.f32.xlu0 %v5839
        %v5841 = vpop.xlane.xlu0 %5840
        %v5842 = vsel %vm1775, %v5764, 0.0
        %5843 = vadd.xlane.f32.xlu0 %v5842
        %v5844 = vpop.xlane.xlu0 %5843
        %v5845 = vsel %vm1775, %v5766, 0.0
        %5846 = vadd.xlane.f32.xlu0 %v5845
        %v5847 = vpop.xlane.xlu0 %5846
        %v5848 = vsel %vm1775, %v5768, 0.0
        %5849 = vadd.xlane.f32.xlu0 %v5848
        %v5850 = vpop.xlane.xlu0 %5849
        %v5851 = vsel %vm1775, %v5770, 0.0
        %5852 = vadd.xlane.f32.xlu0 %v5851
        %v5853 = vpop.xlane.xlu0 %5852
        %v5854 = vsel %vm1775, %v5772, 0.0
        %5855 = vadd.xlane.f32.xlu0 %v5854
        %v5856 = vpop.xlane.xlu0 %5855
        %v5857 = vsel %vm1775, %v5774, 0.0
        %5858 = vadd.xlane.f32.xlu0 %v5857
        %v5859 = vpop.xlane.xlu0 %5858
        %v5860 = vsel %vm1775, %v5776, 0.0
        %5861 = vadd.xlane.f32.xlu0 %v5860
        %v5862 = vpop.xlane.xlu0 %5861
        %v5863 = vsel %vm1775, %v5778, 0.0
        %5864 = vadd.xlane.f32.xlu0 %v5863
        %v5865 = vpop.xlane.xlu0 %5864
        %v5866 = vsel %vm1775, %v5780, 0.0
        %5867 = vadd.xlane.f32.xlu0 %v5866
        %v5868 = vpop.xlane.xlu0 %5867
        %v5869 = vsel %vm1775, %v5782, 0.0
        %5870 = vadd.xlane.f32.xlu0 %v5869
        %v5871 = vpop.xlane.xlu0 %5870
        %v5872 = vsel %vm1775, %v5784, 0.0
        %5873 = vadd.xlane.f32.xlu0 %v5872
        %v5874 = vpop.xlane.xlu0 %5873
        %v5875 = vsel %vm1775, %v5786, 0.0
        %5876 = vadd.xlane.f32.xlu0 %v5875
        %v5877 = vpop.xlane.xlu0 %5876
        %v5878 = vsel %vm1775, %v5788, 0.0
        %5879 = vadd.xlane.f32.xlu0 %v5878
        %v5880 = vpop.xlane.xlu0 %5879
        %v5881 = vsel %vm1775, %v5790, 0.0
        %5882 = vadd.xlane.f32.xlu0 %v5881
        %v5883 = vpop.xlane.xlu0 %5882
        %v5884 = vsel %vm1775, %v5792, 0.0
        %5885 = vadd.xlane.f32.xlu0 %v5884
        %v5886 = vpop.xlane.xlu0 %5885
        %v5887 = vsel %vm1775, %v5794, 0.0
        %5888 = vadd.xlane.f32.xlu0 %v5887
        %v5889 = vpop.xlane.xlu0 %5888
        %v5890 = vsel %vm1775, %v5796, 0.0
        %5891 = vadd.xlane.f32.xlu0 %v5890
        %v5892 = vpop.xlane.xlu0 %5891
        %v5893 = vrcp.pop %v5799
        %v5894 = vrcp.pop %v5802
        %v5895 = vrcp.pop %v5805
        %v5896 = vrcp.pop %v5808
        %v5897 = vrcp.pop %v5811
        %v5898 = vrcp.pop %v5814
        %v5899 = vrcp.pop %v5817
        %v5900 = vrcp.pop %v5820
        %v5901 = vrcp.pop %v5823
        %v5902 = vrcp.pop %v5826
        %v5903 = vrcp.pop %v5829
        %v5904 = vrcp.pop %v5832
        %v5905 = vrcp.pop %v5835
        %v5906 = vrcp.pop %v5838
        %v5907 = vrcp.pop %v5841
        %v5908 = vrcp.pop %v5844
        %v5909 = vrcp.pop %v5847
        %v5910 = vrcp.pop %v5850
        %v5911 = vrcp.pop %v5853
        %v5912 = vrcp.pop %v5856
        %v5913 = vrcp.pop %v5859
        %v5914 = vrcp.pop %v5862
        %v5915 = vrcp.pop %v5865
        %v5916 = vrcp.pop %v5868
        %v5917 = vrcp.pop %v5871
        %v5918 = vrcp.pop %v5874
        %v5919 = vrcp.pop %v5877
        %v5920 = vrcp.pop %v5880
        %v5921 = vrcp.pop %v5883
        %v5922 = vrcp.pop %v5886
        %v5923 = vrcp.pop %v5889
        %v5924 = vrcp.pop %v5892
        %v5925 = vmul.f32 %v5734, %v5893
        %v5926 = vmul.f32 %v5736, %v5894
        %v5927 = vmul.f32 %v5738, %v5895
        %v5928 = vmul.f32 %v5740, %v5896
        %v5929 = vmul.f32 %v5742, %v5897
        %v5930 = vmul.f32 %v5744, %v5898
        %v5931 = vmul.f32 %v5746, %v5899
        %v5932 = vmul.f32 %v5748, %v5900
        %v5933 = vmul.f32 %v5750, %v5901
        %v5934 = vmul.f32 %v5752, %v5902
        %v5935 = vmul.f32 %v5754, %v5903
        %v5936 = vmul.f32 %v5756, %v5904
        %v5937 = vmul.f32 %v5758, %v5905
        %v5938 = vmul.f32 %v5760, %v5906
        %v5939 = vmul.f32 %v5762, %v5907
        %v5940 = vmul.f32 %v5764, %v5908
        %v5941 = vmul.f32 %v5766, %v5909
        %v5942 = vmul.f32 %v5768, %v5910
        %v5943 = vmul.f32 %v5770, %v5911
        %v5944 = vmul.f32 %v5772, %v5912
        %v5945 = vmul.f32 %v5774, %v5913
        %v5946 = vmul.f32 %v5776, %v5914
        %v5947 = vmul.f32 %v5778, %v5915
        %v5948 = vmul.f32 %v5780, %v5916
        %v5949 = vmul.f32 %v5782, %v5917
        %v5950 = vmul.f32 %v5784, %v5918
        %v5951 = vmul.f32 %v5786, %v5919
        %v5952 = vmul.f32 %v5788, %v5920
        %v5953 = vmul.f32 %v5790, %v5921
        %v5954 = vmul.f32 %v5792, %v5922
        %v5955 = vmul.f32 %v5794, %v5923
        %v5956 = vmul.f32 %v5796, %v5924
        %v5957 = vpack.c.bf16 %v5926, %v5925
        %v5958 = vpack.c.bf16 %v5928, %v5927
        %v5959 = vpack.c.bf16 %v5930, %v5929
        %v5960 = vpack.c.bf16 %v5932, %v5931
        %v5961 = vpack.c.bf16 %v5934, %v5933
        %v5962 = vpack.c.bf16 %v5936, %v5935
        %v5963 = vpack.c.bf16 %v5938, %v5937
        %v5964 = vpack.c.bf16 %v5940, %v5939
        %v5965 = vpack.c.bf16 %v5942, %v5941
        %v5966 = vpack.c.bf16 %v5944, %v5943
        %v5967 = vpack.c.bf16 %v5946, %v5945
        %v5968 = vpack.c.bf16 %v5948, %v5947
        %v5969 = vpack.c.bf16 %v5950, %v5949
        %v5970 = vpack.c.bf16 %v5952, %v5951
        %v5971 = vpack.c.bf16 %v5954, %v5953
        %v5972 = vpack.c.bf16 %v5956, %v5955
        %5973 = vrot.lane.b32.xlu0 %v1346, 40
        %v5974 = vpop.permute.xlu0 %5973
        %5975 = vrot.lane.b32.xlu0 %v1347, 40
        %v5976 = vpop.permute.xlu0 %5975
        %5977 = vrot.lane.b32.xlu0 %v1348, 40
        %v5978 = vpop.permute.xlu0 %5977
        %5979 = vrot.lane.b32.xlu0 %v1349, 40
        %v5980 = vpop.permute.xlu0 %5979
        %v5986 = vsel %vm1775, %v5957, 0
        %v5989 = vsel %vm1775, %v5958, 0
        %v5992 = vsel %vm1775, %v5959, 0
        %v5995 = vsel %vm1775, %v5960, 0
        %5997 = vmatprep.subr.bf16.mxu0 0
        %5998 = vmatpush1.bf16.msra.mxu0 %v5974
        %5999 = vmatprep.subr.bf16.mxu0 0
        %6000 = vmatpush1.bf16.msra.mxu0 %v5976
        %6001 = vmatprep.subr.bf16.mxu0 0
        %6002 = vmatpush1.bf16.msra.mxu0 %v5978
        %6003 = vmatprep.subr.bf16.mxu0 0
        %6004 = vmatpush1.bf16.msra.mxu0 %v5980
        %6005 = vmatprep.subr.bf16.mxu0 0
        %6006 = vmatpush1.bf16.msra.mxu0 0
        %6007 = vmatprep.subr.bf16.mxu0 0
        %6008 = vmatpush1.bf16.msra.mxu0 0
        %6009 = vmatprep.subr.bf16.mxu0 0
        %6010 = vmatpush1.bf16.msra.mxu0 0
        %6011 = vmatprep.subr.bf16.mxu0 0
        %6012 = vmatpush1.bf16.msra.mxu0 0
        %6013 = vmatprep.subr.bf16.mxu0 0
        %6014 = vmatpush1.bf16.msra.mxu0 0
        %6015 = vmatprep.subr.bf16.mxu0 0
        %6016 = vmatpush1.bf16.msra.mxu0 0
        %6017 = vmatprep.subr.bf16.mxu0 0
        %6018 = vmatpush1.bf16.msra.mxu0 0
        %6019 = vmatprep.subr.bf16.mxu0 0
        %6020 = vmatpush1.bf16.msra.mxu0 0
        %6021 = vmatprep.subr.bf16.mxu0 0
        %6022 = vmatpush1.bf16.msra.mxu0 0
        %6023 = vmatprep.subr.bf16.mxu0 0
        %6024 = vmatpush1.bf16.msra.mxu0 0
        %6025 = vmatprep.subr.bf16.mxu0 0
        %6026 = vmatpush1.bf16.msra.mxu0 0
        %6027 = vmatprep.subr.bf16.mxu0 0
        %6028 = vmatpush1.bf16.msra.mxu0 0
        %6029 = vmatprep.mubr.bf16.mxu0 0
        %6030 = vmatmul.mubr.bf16.gmra.mrb[0].mxu0 %v5986
        %v6031 = vpop.f32.mrb[0].mxu0
        %v6032 = vadd.f32 0.0, %v6031
        %v6033 = vpop.f32.mrb[0].mxu0
        %v6034 = vpop.f32.mrb[0].mxu0
        %v6035 = vadd.f32 0.0, %v6034
        %v6036 = vpop.f32.mrb[0].mxu0
        %6037 = vmatprep.mubr.bf16.mxu0 0
        %6038 = vmatmul.mubr.bf16.gmra.mrb[0].mxu0 %v5989
        %v6039 = vpop.f32.mrb[0].mxu0
        %v6040 = vadd.f32 0.0, %v6039
        %v6041 = vpop.f32.mrb[0].mxu0
        %v6042 = vpop.f32.mrb[0].mxu0
        %v6043 = vadd.f32 0.0, %v6042
        %v6044 = vpop.f32.mrb[0].mxu0
        %6045 = vmatprep.mubr.bf16.mxu0 0
        %6046 = vmatmul.mubr.bf16.gmra.mrb[0].mxu0 %v5992
        %v6047 = vpop.f32.mrb[0].mxu0
        %v6048 = vadd.f32 0.0, %v6047
        %v6049 = vpop.f32.mrb[0].mxu0
        %v6050 = vpop.f32.mrb[0].mxu0
        %v6051 = vadd.f32 0.0, %v6050
        %v6052 = vpop.f32.mrb[0].mxu0
        %6053 = vmatprep.mubr.bf16.mxu0 0
        %6054 = vmatmul.mubr.bf16.gmra.mrb[0].mxu0 %v5995
        %v6055 = vpop.f32.mrb[0].mxu0
        %v6056 = vadd.f32 0.0, %v6055
        %v6057 = vpop.f32.mrb[0].mxu0
        %v6058 = vpop.f32.mrb[0].mxu0
        %v6059 = vadd.f32 0.0, %v6058
        %v6060 = vpop.f32.mrb[0].mxu0
        %6061 = vdwg.mxu0
        %6062 = vrot.lane.b32.xlu0 %v1350, 40
        %v6063 = vpop.permute.xlu0 %6062
        %6064 = vrot.lane.b32.xlu0 %v1351, 40
        %v6065 = vpop.permute.xlu0 %6064
        %6066 = vrot.lane.b32.xlu0 %v1352, 40
        %v6067 = vpop.permute.xlu0 %6066
        %6068 = vrot.lane.b32.xlu0 %v1353, 40
        %v6069 = vpop.permute.xlu0 %6068
        %v6075 = vsel %vm1775, %v5961, 0
        %v6078 = vsel %vm1775, %v5962, 0
        %v6081 = vsel %vm1775, %v5963, 0
        %v6084 = vsel %vm1775, %v5964, 0
        %6086 = vmatprep.subr.bf16.mxu0 0
        %6087 = vmatpush1.bf16.msra.mxu0 %v6063
        %6088 = vmatprep.subr.bf16.mxu0 0
        %6089 = vmatpush1.bf16.msra.mxu0 %v6065
        %6090 = vmatprep.subr.bf16.mxu0 0
        %6091 = vmatpush1.bf16.msra.mxu0 %v6067
        %6092 = vmatprep.subr.bf16.mxu0 0
        %6093 = vmatpush1.bf16.msra.mxu0 %v6069
        %6094 = vmatprep.subr.bf16.mxu0 0
        %6095 = vmatpush1.bf16.msra.mxu0 0
        %6096 = vmatprep.subr.bf16.mxu0 0
        %6097 = vmatpush1.bf16.msra.mxu0 0
        %6098 = vmatprep.subr.bf16.mxu0 0
        %6099 = vmatpush1.bf16.msra.mxu0 0
        %6100 = vmatprep.subr.bf16.mxu0 0
        %6101 = vmatpush1.bf16.msra.mxu0 0
        %6102 = vmatprep.subr.bf16.mxu0 0
        %6103 = vmatpush1.bf16.msra.mxu0 0
        %6104 = vmatprep.subr.bf16.mxu0 0
        %6105 = vmatpush1.bf16.msra.mxu0 0
        %6106 = vmatprep.subr.bf16.mxu0 0
        %6107 = vmatpush1.bf16.msra.mxu0 0
        %6108 = vmatprep.subr.bf16.mxu0 0
        %6109 = vmatpush1.bf16.msra.mxu0 0
        %6110 = vmatprep.subr.bf16.mxu0 0
        %6111 = vmatpush1.bf16.msra.mxu0 0
        %6112 = vmatprep.subr.bf16.mxu0 0
        %6113 = vmatpush1.bf16.msra.mxu0 0
        %6114 = vmatprep.subr.bf16.mxu0 0
        %6115 = vmatpush1.bf16.msra.mxu0 0
        %6116 = vmatprep.subr.bf16.mxu0 0
        %6117 = vmatpush1.bf16.msra.mxu0 0
        %6118 = vmatprep.mubr.bf16.mxu0 0
        %6119 = vmatmul.mubr.bf16.gmra.mrb[0].mxu0 %v6075
        %v6120 = vpop.f32.mrb[0].mxu0
        %v6121 = vadd.f32 0.0, %v6120
        %v6122 = vpop.f32.mrb[0].mxu0
        %v6123 = vpop.f32.mrb[0].mxu0
        %v6124 = vadd.f32 0.0, %v6123
        %v6125 = vpop.f32.mrb[0].mxu0
        %6126 = vmatprep.mubr.bf16.mxu0 0
        %6127 = vmatmul.mubr.bf16.gmra.mrb[0].mxu0 %v6078
        %v6128 = vpop.f32.mrb[0].mxu0
        %v6129 = vadd.f32 0.0, %v6128
        %v6130 = vpop.f32.mrb[0].mxu0
        %v6131 = vpop.f32.mrb[0].mxu0
        %v6132 = vadd.f32 0.0, %v6131
        %v6133 = vpop.f32.mrb[0].mxu0
        %6134 = vmatprep.mubr.bf16.mxu0 0
        %6135 = vmatmul.mubr.bf16.gmra.mrb[0].mxu0 %v6081
        %v6136 = vpop.f32.mrb[0].mxu0
        %v6137 = vadd.f32 0.0, %v6136
        %v6138 = vpop.f32.mrb[0].mxu0
        %v6139 = vpop.f32.mrb[0].mxu0
        %v6140 = vadd.f32 0.0, %v6139
        %v6141 = vpop.f32.mrb[0].mxu0
        %6142 = vmatprep.mubr.bf16.mxu0 0
        %6143 = vmatmul.mubr.bf16.gmra.mrb[0].mxu0 %v6084
        %v6144 = vpop.f32.mrb[0].mxu0
        %v6145 = vadd.f32 0.0, %v6144
        %v6146 = vpop.f32.mrb[0].mxu0
        %v6147 = vpop.f32.mrb[0].mxu0
        %v6148 = vadd.f32 0.0, %v6147
        %v6149 = vpop.f32.mrb[0].mxu0
        %6150 = vdwg.mxu0
        %6151 = vrot.lane.b32.xlu0 %v1354, 40
        %v6152 = vpop.permute.xlu0 %6151
        %6153 = vrot.lane.b32.xlu0 %v1355, 40
        %v6154 = vpop.permute.xlu0 %6153
        %6155 = vrot.lane.b32.xlu0 %v1356, 40
        %v6156 = vpop.permute.xlu0 %6155
        %6157 = vrot.lane.b32.xlu0 %v1357, 40
        %v6158 = vpop.permute.xlu0 %6157
        %v6164 = vsel %vm1775, %v5965, 0
        %v6167 = vsel %vm1775, %v5966, 0
        %v6170 = vsel %vm1775, %v5967, 0
        %v6173 = vsel %vm1775, %v5968, 0
        %6175 = vmatprep.subr.bf16.mxu0 0
        %6176 = vmatpush1.bf16.msra.mxu0 %v6152
        %6177 = vmatprep.subr.bf16.mxu0 0
        %6178 = vmatpush1.bf16.msra.mxu0 %v6154
        %6179 = vmatprep.subr.bf16.mxu0 0
        %6180 = vmatpush1.bf16.msra.mxu0 %v6156
        %6181 = vmatprep.subr.bf16.mxu0 0
        %6182 = vmatpush1.bf16.msra.mxu0 %v6158
        %6183 = vmatprep.subr.bf16.mxu0 0
        %6184 = vmatpush1.bf16.msra.mxu0 0
        %6185 = vmatprep.subr.bf16.mxu0 0
        %6186 = vmatpush1.bf16.msra.mxu0 0
        %6187 = vmatprep.subr.bf16.mxu0 0
        %6188 = vmatpush1.bf16.msra.mxu0 0
        %6189 = vmatprep.subr.bf16.mxu0 0
        %6190 = vmatpush1.bf16.msra.mxu0 0
        %6191 = vmatprep.subr.bf16.mxu0 0
        %6192 = vmatpush1.bf16.msra.mxu0 0
        %6193 = vmatprep.subr.bf16.mxu0 0
        %6194 = vmatpush1.bf16.msra.mxu0 0
        %6195 = vmatprep.subr.bf16.mxu0 0
        %6196 = vmatpush1.bf16.msra.mxu0 0
        %6197 = vmatprep.subr.bf16.mxu0 0
        %6198 = vmatpush1.bf16.msra.mxu0 0
        %6199 = vmatprep.subr.bf16.mxu0 0
        %6200 = vmatpush1.bf16.msra.mxu0 0
        %6201 = vmatprep.subr.bf16.mxu0 0
        %6202 = vmatpush1.bf16.msra.mxu0 0
        %6203 = vmatprep.subr.bf16.mxu0 0
        %6204 = vmatpush1.bf16.msra.mxu0 0
        %6205 = vmatprep.subr.bf16.mxu0 0
        %6206 = vmatpush1.bf16.msra.mxu0 0
        %6207 = vmatprep.mubr.bf16.mxu0 0
        %6208 = vmatmul.mubr.bf16.gmra.mrb[0].mxu0 %v6164
        %v6209 = vpop.f32.mrb[0].mxu0
        %v6210 = vadd.f32 0.0, %v6209
        %v6211 = vpop.f32.mrb[0].mxu0
        %v6212 = vpop.f32.mrb[0].mxu0
        %v6213 = vadd.f32 0.0, %v6212
        %v6214 = vpop.f32.mrb[0].mxu0
        %6215 = vmatprep.mubr.bf16.mxu0 0
        %6216 = vmatmul.mubr.bf16.gmra.mrb[0].mxu0 %v6167
        %v6217 = vpop.f32.mrb[0].mxu0
        %v6218 = vadd.f32 0.0, %v6217
        %v6219 = vpop.f32.mrb[0].mxu0
        %v6220 = vpop.f32.mrb[0].mxu0
        %v6221 = vadd.f32 0.0, %v6220
        %v6222 = vpop.f32.mrb[0].mxu0
        %6223 = vmatprep.mubr.bf16.mxu0 0
        %6224 = vmatmul.mubr.bf16.gmra.mrb[0].mxu0 %v6170
        %v6225 = vpop.f32.mrb[0].mxu0
        %v6226 = vadd.f32 0.0, %v6225
        %v6227 = vpop.f32.mrb[0].mxu0
        %v6228 = vpop.f32.mrb[0].mxu0
        %v6229 = vadd.f32 0.0, %v6228
        %v6230 = vpop.f32.mrb[0].mxu0
        %6231 = vmatprep.mubr.bf16.mxu0 0
        %6232 = vmatmul.mubr.bf16.gmra.mrb[0].mxu0 %v6173
        %v6233 = vpop.f32.mrb[0].mxu0
        %v6234 = vadd.f32 0.0, %v6233
        %v6235 = vpop.f32.mrb[0].mxu0
        %v6236 = vpop.f32.mrb[0].mxu0
        %v6237 = vadd.f32 0.0, %v6236
        %v6238 = vpop.f32.mrb[0].mxu0
        %6239 = vdwg.mxu0
        %6240 = vrot.lane.b32.xlu0 %v1358, 40
        %v6241 = vpop.permute.xlu0 %6240
        %6242 = vrot.lane.b32.xlu0 %v1359, 40
        %v6243 = vpop.permute.xlu0 %6242
        %6244 = vrot.lane.b32.xlu0 %v1360, 40
        %v6245 = vpop.permute.xlu0 %6244
        %6246 = vrot.lane.b32.xlu0 %v1361, 40
        %v6247 = vpop.permute.xlu0 %6246
        %v6253 = vsel %vm1775, %v5969, 0
        %v6256 = vsel %vm1775, %v5970, 0
        %v6259 = vsel %vm1775, %v5971, 0
        %v6262 = vsel %vm1775, %v5972, 0
        %6264 = vmatprep.subr.bf16.mxu0 0
        %6265 = vmatpush1.bf16.msra.mxu0 %v6241
        %6266 = vmatprep.subr.bf16.mxu0 0
        %6267 = vmatpush1.bf16.msra.mxu0 %v6243
        %6268 = vmatprep.subr.bf16.mxu0 0
        %6269 = vmatpush1.bf16.msra.mxu0 %v6245
        %6270 = vmatprep.subr.bf16.mxu0 0
        %6271 = vmatpush1.bf16.msra.mxu0 %v6247
        %6272 = vmatprep.subr.bf16.mxu0 0
        %6273 = vmatpush1.bf16.msra.mxu0 0
        %6274 = vmatprep.subr.bf16.mxu0 0
        %6275 = vmatpush1.bf16.msra.mxu0 0
        %6276 = vmatprep.subr.bf16.mxu0 0
        %6277 = vmatpush1.bf16.msra.mxu0 0
        %6278 = vmatprep.subr.bf16.mxu0 0
        %6279 = vmatpush1.bf16.msra.mxu0 0
        %6280 = vmatprep.subr.bf16.mxu0 0
        %6281 = vmatpush1.bf16.msra.mxu0 0
        %6282 = vmatprep.subr.bf16.mxu0 0
        %6283 = vmatpush1.bf16.msra.mxu0 0
        %6284 = vmatprep.subr.bf16.mxu0 0
        %6285 = vmatpush1.bf16.msra.mxu0 0
        %6286 = vmatprep.subr.bf16.mxu0 0
        %6287 = vmatpush1.bf16.msra.mxu0 0
        %6288 = vmatprep.subr.bf16.mxu0 0
        %6289 = vmatpush1.bf16.msra.mxu0 0
        %6290 = vmatprep.subr.bf16.mxu0 0
        %6291 = vmatpush1.bf16.msra.mxu0 0
        %6292 = vmatprep.subr.bf16.mxu0 0
        %6293 = vmatpush1.bf16.msra.mxu0 0
        %6294 = vmatprep.subr.bf16.mxu0 0
        %6295 = vmatpush1.bf16.msra.mxu0 0
        %6296 = vmatprep.mubr.bf16.mxu0 0
        %6297 = vmatmul.mubr.bf16.gmra.mrb[0].mxu0 %v6253
        %v6298 = vpop.f32.mrb[0].mxu0
        %v6299 = vadd.f32 0.0, %v6298
        %v6300 = vpop.f32.mrb[0].mxu0
        %v6301 = vpop.f32.mrb[0].mxu0
        %v6302 = vadd.f32 0.0, %v6301
        %v6303 = vpop.f32.mrb[0].mxu0
        %6304 = vmatprep.mubr.bf16.mxu0 0
        %6305 = vmatmul.mubr.bf16.gmra.mrb[0].mxu0 %v6256
        %v6306 = vpop.f32.mrb[0].mxu0
        %v6307 = vadd.f32 0.0, %v6306
        %v6308 = vpop.f32.mrb[0].mxu0
        %v6309 = vpop.f32.mrb[0].mxu0
        %v6310 = vadd.f32 0.0, %v6309
        %v6311 = vpop.f32.mrb[0].mxu0
        %6312 = vmatprep.mubr.bf16.mxu0 0
        %6313 = vmatmul.mubr.bf16.gmra.mrb[0].mxu0 %v6259
        %v6314 = vpop.f32.mrb[0].mxu0
        %v6315 = vadd.f32 0.0, %v6314
        %v6316 = vpop.f32.mrb[0].mxu0
        %v6317 = vpop.f32.mrb[0].mxu0
        %v6318 = vadd.f32 0.0, %v6317
        %v6319 = vpop.f32.mrb[0].mxu0
        %6320 = vmatprep.mubr.bf16.mxu0 0
        %6321 = vmatmul.mubr.bf16.gmra.mrb[0].mxu0 %v6262
        %v6322 = vpop.f32.mrb[0].mxu0
        %v6323 = vadd.f32 0.0, %v6322
        %v6324 = vpop.f32.mrb[0].mxu0
        %v6325 = vpop.f32.mrb[0].mxu0
        %v6326 = vadd.f32 0.0, %v6325
        %v6327 = vpop.f32.mrb[0].mxu0
        %6328 = vdwg.mxu0
        %6361 = vrot.lane.b32.xlu0 %v6032, 24
        %v6362 = vpop.permute.xlu0 %6361
        %6363 = vrot.lane.b32.xlu0 %v6035, 24
        %v6364 = vpop.permute.xlu0 %6363
        %6365 = vrot.lane.b32.xlu0 %v6040, 24
        %v6366 = vpop.permute.xlu0 %6365
        %6367 = vrot.lane.b32.xlu0 %v6043, 24
        %v6368 = vpop.permute.xlu0 %6367
        %6369 = vrot.lane.b32.xlu0 %v6048, 24
        %v6370 = vpop.permute.xlu0 %6369
        %6371 = vrot.lane.b32.xlu0 %v6051, 24
        %v6372 = vpop.permute.xlu0 %6371
        %6373 = vrot.lane.b32.xlu0 %v6056, 24
        %v6374 = vpop.permute.xlu0 %6373
        %6375 = vrot.lane.b32.xlu0 %v6059, 24
        %v6376 = vpop.permute.xlu0 %6375
        %6377 = vrot.lane.b32.xlu0 %v6121, 24
        %v6378 = vpop.permute.xlu0 %6377
        %6379 = vrot.lane.b32.xlu0 %v6124, 24
        %v6380 = vpop.permute.xlu0 %6379
        %6381 = vrot.lane.b32.xlu0 %v6129, 24
        %v6382 = vpop.permute.xlu0 %6381
        %6383 = vrot.lane.b32.xlu0 %v6132, 24
        %v6384 = vpop.permute.xlu0 %6383
        %6385 = vrot.lane.b32.xlu0 %v6137, 24
        %v6386 = vpop.permute.xlu0 %6385
        %6387 = vrot.lane.b32.xlu0 %v6140, 24
        %v6388 = vpop.permute.xlu0 %6387
        %6389 = vrot.lane.b32.xlu0 %v6145, 24
        %v6390 = vpop.permute.xlu0 %6389
        %6391 = vrot.lane.b32.xlu0 %v6148, 24
        %v6392 = vpop.permute.xlu0 %6391
        %6393 = vrot.lane.b32.xlu0 %v6210, 24
        %v6394 = vpop.permute.xlu0 %6393
        %6395 = vrot.lane.b32.xlu0 %v6213, 24
        %v6396 = vpop.permute.xlu0 %6395
        %6397 = vrot.lane.b32.xlu0 %v6218, 24
        %v6398 = vpop.permute.xlu0 %6397
        %6399 = vrot.lane.b32.xlu0 %v6221, 24
        %v6400 = vpop.permute.xlu0 %6399
        %6401 = vrot.lane.b32.xlu0 %v6226, 24
        %v6402 = vpop.permute.xlu0 %6401
        %6403 = vrot.lane.b32.xlu0 %v6229, 24
        %v6404 = vpop.permute.xlu0 %6403
        %6405 = vrot.lane.b32.xlu0 %v6234, 24
        %v6406 = vpop.permute.xlu0 %6405
        %6407 = vrot.lane.b32.xlu0 %v6237, 24
        %v6408 = vpop.permute.xlu0 %6407
        %6409 = vrot.lane.b32.xlu0 %v6299, 24
        %v6410 = vpop.permute.xlu0 %6409
        %6411 = vrot.lane.b32.xlu0 %v6302, 24
        %v6412 = vpop.permute.xlu0 %6411
        %6413 = vrot.lane.b32.xlu0 %v6307, 24
        %v6414 = vpop.permute.xlu0 %6413
        %6415 = vrot.lane.b32.xlu0 %v6310, 24
        %v6416 = vpop.permute.xlu0 %6415
        %6417 = vrot.lane.b32.xlu0 %v6315, 24
        %v6418 = vpop.permute.xlu0 %6417
        %6419 = vrot.lane.b32.xlu0 %v6318, 24
        %v6420 = vpop.permute.xlu0 %6419
        %6421 = vrot.lane.b32.xlu0 %v6323, 24
        %v6422 = vpop.permute.xlu0 %6421
        %6423 = vrot.lane.b32.xlu0 %v6326, 24
        %v6424 = vpop.permute.xlu0 %6423
        %vm6457 = vcmask 261312
        %6458 = vst.msk [vmem:[#allocation2] sm:$0xff] %vm6457, %v6362
        %6459 = vst.msk [vmem:[#allocation2 + $0x8] sm:$0xff] %vm6457, %v6364
        %6460 = vst.msk [vmem:[#allocation2 + $0x10] sm:$0xff] %vm6457, %v6366
        %6461 = vst.msk [vmem:[#allocation2 + $0x18] sm:$0xff] %vm6457, %v6368
        %6462 = vst.msk [vmem:[#allocation2 + $0x20] sm:$0xff] %vm6457, %v6370
        %6463 = vst.msk [vmem:[#allocation2 + $0x28] sm:$0xff] %vm6457, %v6372
        %6464 = vst.msk [vmem:[#allocation2 + $0x30] sm:$0xff] %vm6457, %v6374
        %6465 = vst.msk [vmem:[#allocation2 + $0x38] sm:$0xff] %vm6457, %v6376
        %6466 = vst.msk [vmem:[#allocation2 + $0x40] sm:$0xff] %vm6457, %v6378
        %6467 = vst.msk [vmem:[#allocation2 + $0x48] sm:$0xff] %vm6457, %v6380
        %6468 = vst.msk [vmem:[#allocation2 + $0x50] sm:$0xff] %vm6457, %v6382
        %6469 = vst.msk [vmem:[#allocation2 + $0x58] sm:$0xff] %vm6457, %v6384
        %6470 = vst.msk [vmem:[#allocation2 + $0x60] sm:$0xff] %vm6457, %v6386
        %6471 = vst.msk [vmem:[#allocation2 + $0x68] sm:$0xff] %vm6457, %v6388
        %6472 = vst.msk [vmem:[#allocation2 + $0x70] sm:$0xff] %vm6457, %v6390
        %6473 = vst.msk [vmem:[#allocation2 + $0x78] sm:$0xff] %vm6457, %v6392
        %6474 = vst.msk [vmem:[#allocation2 + $0x80] sm:$0xff] %vm6457, %v6394
        %6475 = vst.msk [vmem:[#allocation2 + $0x88] sm:$0xff] %vm6457, %v6396
        %6476 = vst.msk [vmem:[#allocation2 + $0x90] sm:$0xff] %vm6457, %v6398
        %6477 = vst.msk [vmem:[#allocation2 + $0x98] sm:$0xff] %vm6457, %v6400
        %6478 = vst.msk [vmem:[#allocation2 + $0xa0] sm:$0xff] %vm6457, %v6402
        %6479 = vst.msk [vmem:[#allocation2 + $0xa8] sm:$0xff] %vm6457, %v6404
        %6480 = vst.msk [vmem:[#allocation2 + $0xb0] sm:$0xff] %vm6457, %v6406
        %6481 = vst.msk [vmem:[#allocation2 + $0xb8] sm:$0xff] %vm6457, %v6408
        %6482 = vst.msk [vmem:[#allocation2 + $0xc0] sm:$0xff] %vm6457, %v6410
        %6483 = vst.msk [vmem:[#allocation2 + $0xc8] sm:$0xff] %vm6457, %v6412
        %6484 = vst.msk [vmem:[#allocation2 + $0xd0] sm:$0xff] %vm6457, %v6414
        %6485 = vst.msk [vmem:[#allocation2 + $0xd8] sm:$0xff] %vm6457, %v6416
        %6486 = vst.msk [vmem:[#allocation2 + $0xe0] sm:$0xff] %vm6457, %v6418
        %6487 = vst.msk [vmem:[#allocation2 + $0xe8] sm:$0xff] %vm6457, %v6420
        %6488 = vst.msk [vmem:[#allocation2 + $0xf0] sm:$0xff] %vm6457, %v6422
        %6489 = vst.msk [vmem:[#allocation2 + $0xf8] sm:$0xff] %vm6457, %v6424
        %v6490 = vld [vmem:[#allocation2] sm:$0xff]
        %v6491 = vld [vmem:[#allocation2 + $0x8] sm:$0xff]
        %v6492 = vld [vmem:[#allocation2 + $0x10] sm:$0xff]
        %v6493 = vld [vmem:[#allocation2 + $0x18] sm:$0xff]
        %v6494 = vld [vmem:[#allocation2 + $0x20] sm:$0xff]
        %v6495 = vld [vmem:[#allocation2 + $0x28] sm:$0xff]
        %v6496 = vld [vmem:[#allocation2 + $0x30] sm:$0xff]
        %v6497 = vld [vmem:[#allocation2 + $0x38] sm:$0xff]
        %v6498 = vld [vmem:[#allocation2 + $0x40] sm:$0xff]
        %v6499 = vld [vmem:[#allocation2 + $0x48] sm:$0xff]
        %v6500 = vld [vmem:[#allocation2 + $0x50] sm:$0xff]
        %v6501 = vld [vmem:[#allocation2 + $0x58] sm:$0xff]
        %v6502 = vld [vmem:[#allocation2 + $0x60] sm:$0xff]
        %v6503 = vld [vmem:[#allocation2 + $0x68] sm:$0xff]
        %v6504 = vld [vmem:[#allocation2 + $0x70] sm:$0xff]
        %v6505 = vld [vmem:[#allocation2 + $0x78] sm:$0xff]
        %v6506 = vld [vmem:[#allocation2 + $0x80] sm:$0xff]
        %v6507 = vld [vmem:[#allocation2 + $0x88] sm:$0xff]
        %v6508 = vld [vmem:[#allocation2 + $0x90] sm:$0xff]
        %v6509 = vld [vmem:[#allocation2 + $0x98] sm:$0xff]
        %v6510 = vld [vmem:[#allocation2 + $0xa0] sm:$0xff]
        %v6511 = vld [vmem:[#allocation2 + $0xa8] sm:$0xff]
        %v6512 = vld [vmem:[#allocation2 + $0xb0] sm:$0xff]
        %v6513 = vld [vmem:[#allocation2 + $0xb8] sm:$0xff]
        %v6514 = vld [vmem:[#allocation2 + $0xc0] sm:$0xff]
        %v6515 = vld [vmem:[#allocation2 + $0xc8] sm:$0xff]
        %v6516 = vld [vmem:[#allocation2 + $0xd0] sm:$0xff]
        %v6517 = vld [vmem:[#allocation2 + $0xd8] sm:$0xff]
        %v6518 = vld [vmem:[#allocation2 + $0xe0] sm:$0xff]
        %v6519 = vld [vmem:[#allocation2 + $0xe8] sm:$0xff]
        %v6520 = vld [vmem:[#allocation2 + $0xf0] sm:$0xff]
        %v6521 = vld [vmem:[#allocation2 + $0xf8] sm:$0xff]
        %v6522 = vpack.c.bf16 %v6491, %v6490
        %v6523 = vpack.c.bf16 %v6493, %v6492
        %v6524 = vpack.c.bf16 %v6495, %v6494
        %v6525 = vpack.c.bf16 %v6497, %v6496
        %v6526 = vpack.c.bf16 %v6499, %v6498
        %v6527 = vpack.c.bf16 %v6501, %v6500
        %v6528 = vpack.c.bf16 %v6503, %v6502
        %v6529 = vpack.c.bf16 %v6505, %v6504
        %v6530 = vpack.c.bf16 %v6507, %v6506
        %v6531 = vpack.c.bf16 %v6509, %v6508
        %v6532 = vpack.c.bf16 %v6511, %v6510
        %v6533 = vpack.c.bf16 %v6513, %v6512
        %v6534 = vpack.c.bf16 %v6515, %v6514
        %v6535 = vpack.c.bf16 %v6517, %v6516
        %v6536 = vpack.c.bf16 %v6519, %v6518
        %v6537 = vpack.c.bf16 %v6521, %v6520
        %v6538 = vld [vmem:[%s6] sm:$0xf]
        %v6539 = vld [vmem:[%s6 + $0x4] sm:$0xf]
        %v6540 = vld [vmem:[%s6 + $0x8] sm:$0xf]
        %v6541 = vld [vmem:[%s6 + $0xc] sm:$0xf]
        %v6542 = vld [vmem:[%s7] sm:$0x1]
        %v6544 = vlaneseq
        %v6545 = vshrl.u32 %v6544, 7
        %v6546 = vsub.s32 0, %v6545
        %v6547 = vrot.slane %v6542, %v6546
        %v6553 = vunpack.c.l.b16 %v6538
        %v6554 = vunpack.c.l.b16 %v6539
        %v6555 = vunpack.c.l.b16 %v6540
        %v6556 = vunpack.c.l.b16 %v6541
        %v6557 = vpack.c.b16 %v6554, %v6553
        %v6558 = vpack.c.b16 %v6556, %v6555
        %v6562 = vsel %vm554, %v6522, 0
        %v6565 = vsel %vm554, %v6523, 0
        %v6568 = vsel %vm554, %v6524, 0
        %v6571 = vsel %vm554, %v6525, 0
        %v6574 = vsel %vm554, %v6526, 0
        %v6577 = vsel %vm554, %v6527, 0
        %v6580 = vsel %vm554, %v6528, 0
        %v6583 = vsel %vm554, %v6529, 0
        %v6586 = vsel %vm554, %v6530, 0
        %v6589 = vsel %vm554, %v6531, 0
        %v6592 = vsel %vm554, %v6532, 0
        %v6595 = vsel %vm554, %v6533, 0
        %v6598 = vsel %vm554, %v6534, 0
        %v6601 = vsel %vm554, %v6535, 0
        %v6604 = vsel %vm554, %v6536, 0
        %v6607 = vsel %vm554, %v6537, 0
        %6609 = vmatprep.subr.bf16.mxu0 0
        %6610 = vmatpush1.bf16.msra.mxu0 %v6557
        %6611 = vmatprep.subr.bf16.mxu0 0
        %6612 = vmatpush1.bf16.msra.mxu0 %v6558
        %6613 = vmatprep.subr.bf16.mxu0 0
        %6614 = vmatpush1.bf16.msra.mxu0 0
        %6615 = vmatprep.subr.bf16.mxu0 0
        %6616 = vmatpush1.bf16.msra.mxu0 0
        %6617 = vmatprep.subr.bf16.mxu0 0
        %6618 = vmatpush1.bf16.msra.mxu0 0
        %6619 = vmatprep.subr.bf16.mxu0 0
        %6620 = vmatpush1.bf16.msra.mxu0 0
        %6621 = vmatprep.subr.bf16.mxu0 0
        %6622 = vmatpush1.bf16.msra.mxu0 0
        %6623 = vmatprep.subr.bf16.mxu0 0
        %6624 = vmatpush1.bf16.msra.mxu0 0
        %6625 = vmatprep.subr.bf16.mxu0 0
        %6626 = vmatpush1.bf16.msra.mxu0 0
        %6627 = vmatprep.subr.bf16.mxu0 0
        %6628 = vmatpush1.bf16.msra.mxu0 0
        %6629 = vmatprep.subr.bf16.mxu0 0
        %6630 = vmatpush1.bf16.msra.mxu0 0
        %6631 = vmatprep.subr.bf16.mxu0 0
        %6632 = vmatpush1.bf16.msra.mxu0 0
        %6633 = vmatprep.subr.bf16.mxu0 0
        %6634 = vmatpush1.bf16.msra.mxu0 0
        %6635 = vmatprep.subr.bf16.mxu0 0
        %6636 = vmatpush1.bf16.msra.mxu0 0
        %6637 = vmatprep.subr.bf16.mxu0 0
        %6638 = vmatpush1.bf16.msra.mxu0 0
        %6639 = vmatprep.subr.bf16.mxu0 0
        %6640 = vmatpush1.bf16.msra.mxu0 0
        %6641 = vmatprep.mubr.bf16.mxu0 0
        %6642 = vmatmul.mubr.bf16.gmra.mrb[0].mxu0 %v6562
        %v6643 = vpop.f32.mrb[0].mxu0
        %v6644 = vadd.f32 %v6547, %v6643
        %v6645 = vpop.f32.mrb[0].mxu0
        %v6646 = vpop.f32.mrb[0].mxu0
        %v6647 = vadd.f32 %v6547, %v6646
        %v6648 = vpop.f32.mrb[0].mxu0
        %6649 = vmatprep.mubr.bf16.mxu0 0
        %6650 = vmatmul.mubr.bf16.gmra.mrb[0].mxu0 %v6565
        %v6651 = vpop.f32.mrb[0].mxu0
        %v6652 = vadd.f32 %v6547, %v6651
        %v6653 = vpop.f32.mrb[0].mxu0
        %v6654 = vpop.f32.mrb[0].mxu0
        %v6655 = vadd.f32 %v6547, %v6654
        %v6656 = vpop.f32.mrb[0].mxu0
        %6657 = vmatprep.mubr.bf16.mxu0 0
        %6658 = vmatmul.mubr.bf16.gmra.mrb[0].mxu0 %v6568
        %v6659 = vpop.f32.mrb[0].mxu0
        %v6660 = vadd.f32 %v6547, %v6659
        %v6661 = vpop.f32.mrb[0].mxu0
        %v6662 = vpop.f32.mrb[0].mxu0
        %v6663 = vadd.f32 %v6547, %v6662
        %v6664 = vpop.f32.mrb[0].mxu0
        %6665 = vmatprep.mubr.bf16.mxu0 0
        %6666 = vmatmul.mubr.bf16.gmra.mrb[0].mxu0 %v6571
        %v6667 = vpop.f32.mrb[0].mxu0
        %v6668 = vadd.f32 %v6547, %v6667
        %v6669 = vpop.f32.mrb[0].mxu0
        %v6670 = vpop.f32.mrb[0].mxu0
        %v6671 = vadd.f32 %v6547, %v6670
        %v6672 = vpop.f32.mrb[0].mxu0
        %6673 = vmatprep.mubr.bf16.mxu0 0
        %6674 = vmatmul.mubr.bf16.gmra.mrb[0].mxu0 %v6574
        %v6675 = vpop.f32.mrb[0].mxu0
        %v6676 = vadd.f32 %v6547, %v6675
        %v6677 = vpop.f32.mrb[0].mxu0
        %v6678 = vpop.f32.mrb[0].mxu0
        %v6679 = vadd.f32 %v6547, %v6678
        %v6680 = vpop.f32.mrb[0].mxu0
        %6681 = vmatprep.mubr.bf16.mxu0 0
        %6682 = vmatmul.mubr.bf16.gmra.mrb[0].mxu0 %v6577
        %v6683 = vpop.f32.mrb[0].mxu0
        %v6684 = vadd.f32 %v6547, %v6683
        %v6685 = vpop.f32.mrb[0].mxu0
        %v6686 = vpop.f32.mrb[0].mxu0
        %v6687 = vadd.f32 %v6547, %v6686
        %v6688 = vpop.f32.mrb[0].mxu0
        %6689 = vmatprep.mubr.bf16.mxu0 0
        %6690 = vmatmul.mubr.bf16.gmra.mrb[0].mxu0 %v6580
        %v6691 = vpop.f32.mrb[0].mxu0
        %v6692 = vadd.f32 %v6547, %v6691
        %v6693 = vpop.f32.mrb[0].mxu0
        %v6694 = vpop.f32.mrb[0].mxu0
        %v6695 = vadd.f32 %v6547, %v6694
        %v6696 = vpop.f32.mrb[0].mxu0
        %6697 = vmatprep.mubr.bf16.mxu0 0
        %6698 = vmatmul.mubr.bf16.gmra.mrb[0].mxu0 %v6583
        %v6699 = vpop.f32.mrb[0].mxu0
        %v6700 = vadd.f32 %v6547, %v6699
        %v6701 = vpop.f32.mrb[0].mxu0
        %v6702 = vpop.f32.mrb[0].mxu0
        %v6703 = vadd.f32 %v6547, %v6702
        %v6704 = vpop.f32.mrb[0].mxu0
        %6705 = vmatprep.mubr.bf16.mxu0 0
        %6706 = vmatmul.mubr.bf16.gmra.mrb[0].mxu0 %v6586
        %v6707 = vpop.f32.mrb[0].mxu0
        %v6708 = vadd.f32 %v6547, %v6707
        %v6709 = vpop.f32.mrb[0].mxu0
        %v6710 = vpop.f32.mrb[0].mxu0
        %v6711 = vadd.f32 %v6547, %v6710
        %v6712 = vpop.f32.mrb[0].mxu0
        %6713 = vmatprep.mubr.bf16.mxu0 0
        %6714 = vmatmul.mubr.bf16.gmra.mrb[0].mxu0 %v6589
        %v6715 = vpop.f32.mrb[0].mxu0
        %v6716 = vadd.f32 %v6547, %v6715
        %v6717 = vpop.f32.mrb[0].mxu0
        %v6718 = vpop.f32.mrb[0].mxu0
        %v6719 = vadd.f32 %v6547, %v6718
        %v6720 = vpop.f32.mrb[0].mxu0
        %6721 = vmatprep.mubr.bf16.mxu0 0
        %6722 = vmatmul.mubr.bf16.gmra.mrb[0].mxu0 %v6592
        %v6723 = vpop.f32.mrb[0].mxu0
        %v6724 = vadd.f32 %v6547, %v6723
        %v6725 = vpop.f32.mrb[0].mxu0
        %v6726 = vpop.f32.mrb[0].mxu0
        %v6727 = vadd.f32 %v6547, %v6726
        %v6728 = vpop.f32.mrb[0].mxu0
        %6729 = vmatprep.mubr.bf16.mxu0 0
        %6730 = vmatmul.mubr.bf16.gmra.mrb[0].mxu0 %v6595
        %v6731 = vpop.f32.mrb[0].mxu0
        %v6732 = vadd.f32 %v6547, %v6731
        %v6733 = vpop.f32.mrb[0].mxu0
        %v6734 = vpop.f32.mrb[0].mxu0
        %v6735 = vadd.f32 %v6547, %v6734
        %v6736 = vpop.f32.mrb[0].mxu0
        %6737 = vmatprep.mubr.bf16.mxu0 0
        %6738 = vmatmul.mubr.bf16.gmra.mrb[0].mxu0 %v6598
        %v6739 = vpop.f32.mrb[0].mxu0
        %v6740 = vadd.f32 %v6547, %v6739
        %v6741 = vpop.f32.mrb[0].mxu0
        %v6742 = vpop.f32.mrb[0].mxu0
        %v6743 = vadd.f32 %v6547, %v6742
        %v6744 = vpop.f32.mrb[0].mxu0
        %6745 = vmatprep.mubr.bf16.mxu0 0
        %6746 = vmatmul.mubr.bf16.gmra.mrb[0].mxu0 %v6601
        %v6747 = vpop.f32.mrb[0].mxu0
        %v6748 = vadd.f32 %v6547, %v6747
        %v6749 = vpop.f32.mrb[0].mxu0
        %v6750 = vpop.f32.mrb[0].mxu0
        %v6751 = vadd.f32 %v6547, %v6750
        %v6752 = vpop.f32.mrb[0].mxu0
        %6753 = vmatprep.mubr.bf16.mxu0 0
        %6754 = vmatmul.mubr.bf16.gmra.mrb[0].mxu0 %v6604
        %v6755 = vpop.f32.mrb[0].mxu0
        %v6756 = vadd.f32 %v6547, %v6755
        %v6757 = vpop.f32.mrb[0].mxu0
        %v6758 = vpop.f32.mrb[0].mxu0
        %v6759 = vadd.f32 %v6547, %v6758
        %v6760 = vpop.f32.mrb[0].mxu0
        %6761 = vmatprep.mubr.bf16.mxu0 0
        %6762 = vmatmul.mubr.bf16.gmra.mrb[0].mxu0 %v6607
        %v6763 = vpop.f32.mrb[0].mxu0
        %v6764 = vadd.f32 %v6547, %v6763
        %v6765 = vpop.f32.mrb[0].mxu0
        %v6766 = vpop.f32.mrb[0].mxu0
        %v6767 = vadd.f32 %v6547, %v6766
        %v6768 = vpop.f32.mrb[0].mxu0
        %6769 = vdwg.mxu0
        %v6770 = vadd.f32 %v522, %v6644
        %v6771 = vadd.f32 %v523, %v6647
        %v6772 = vadd.f32 %v524, %v6652
        %v6773 = vadd.f32 %v525, %v6655
        %v6774 = vadd.f32 %v526, %v6660
        %v6775 = vadd.f32 %v527, %v6663
        %v6776 = vadd.f32 %v528, %v6668
        %v6777 = vadd.f32 %v529, %v6671
        %v6778 = vadd.f32 %v530, %v6676
        %v6779 = vadd.f32 %v531, %v6679
        %v6780 = vadd.f32 %v532, %v6684
        %v6781 = vadd.f32 %v533, %v6687
        %v6782 = vadd.f32 %v534, %v6692
        %v6783 = vadd.f32 %v535, %v6695
        %v6784 = vadd.f32 %v536, %v6700
        %v6785 = vadd.f32 %v537, %v6703
        %v6786 = vadd.f32 %v538, %v6708
        %v6787 = vadd.f32 %v539, %v6711
        %v6788 = vadd.f32 %v540, %v6716
        %v6789 = vadd.f32 %v541, %v6719
        %v6790 = vadd.f32 %v542, %v6724
        %v6791 = vadd.f32 %v543, %v6727
        %v6792 = vadd.f32 %v544, %v6732
        %v6793 = vadd.f32 %v545, %v6735
        %v6794 = vadd.f32 %v546, %v6740
        %v6795 = vadd.f32 %v547, %v6743
        %v6796 = vadd.f32 %v548, %v6748
        %v6797 = vadd.f32 %v549, %v6751
        %v6798 = vadd.f32 %v550, %v6756
        %v6799 = vadd.f32 %v551, %v6759
        %v6800 = vadd.f32 %v552, %v6764
        %v6801 = vadd.f32 %v553, %v6767
        %v6802 = vsel %vm554, %v6770, 0.0
        %6803 = vadd.xlane.f32.xlu0 %v6802
        %v6804 = vpop.xlane.xlu0 %6803
        %v6805 = vsel %vm554, %v6771, 0.0
        %6806 = vadd.xlane.f32.xlu0 %v6805
        %v6807 = vpop.xlane.xlu0 %6806
        %v6808 = vsel %vm554, %v6772, 0.0
        %6809 = vadd.xlane.f32.xlu0 %v6808
        %v6810 = vpop.xlane.xlu0 %6809
        %v6811 = vsel %vm554, %v6773, 0.0
        %6812 = vadd.xlane.f32.xlu0 %v6811
        %v6813 = vpop.xlane.xlu0 %6812
        %v6814 = vsel %vm554, %v6774, 0.0
        %6815 = vadd.xlane.f32.xlu0 %v6814
        %v6816 = vpop.xlane.xlu0 %6815
        %v6817 = vsel %vm554, %v6775, 0.0
        %6818 = vadd.xlane.f32.xlu0 %v6817
        %v6819 = vpop.xlane.xlu0 %6818
        %v6820 = vsel %vm554, %v6776, 0.0
        %6821 = vadd.xlane.f32.xlu0 %v6820
        %v6822 = vpop.xlane.xlu0 %6821
        %v6823 = vsel %vm554, %v6777, 0.0
        %6824 = vadd.xlane.f32.xlu0 %v6823
        %v6825 = vpop.xlane.xlu0 %6824
        %v6826 = vsel %vm554, %v6778, 0.0
        %6827 = vadd.xlane.f32.xlu0 %v6826
        %v6828 = vpop.xlane.xlu0 %6827
        %v6829 = vsel %vm554, %v6779, 0.0
        %6830 = vadd.xlane.f32.xlu0 %v6829
        %v6831 = vpop.xlane.xlu0 %6830
        %v6832 = vsel %vm554, %v6780, 0.0
        %6833 = vadd.xlane.f32.xlu0 %v6832
        %v6834 = vpop.xlane.xlu0 %6833
        %v6835 = vsel %vm554, %v6781, 0.0
        %6836 = vadd.xlane.f32.xlu0 %v6835
        %v6837 = vpop.xlane.xlu0 %6836
        %v6838 = vsel %vm554, %v6782, 0.0
        %6839 = vadd.xlane.f32.xlu0 %v6838
        %v6840 = vpop.xlane.xlu0 %6839
        %v6841 = vsel %vm554, %v6783, 0.0
        %6842 = vadd.xlane.f32.xlu0 %v6841
        %v6843 = vpop.xlane.xlu0 %6842
        %v6844 = vsel %vm554, %v6784, 0.0
        %6845 = vadd.xlane.f32.xlu0 %v6844
        %v6846 = vpop.xlane.xlu0 %6845
        %v6847 = vsel %vm554, %v6785, 0.0
        %6848 = vadd.xlane.f32.xlu0 %v6847
        %v6849 = vpop.xlane.xlu0 %6848
        %v6850 = vsel %vm554, %v6786, 0.0
        %6851 = vadd.xlane.f32.xlu0 %v6850
        %v6852 = vpop.xlane.xlu0 %6851
        %v6853 = vsel %vm554, %v6787, 0.0
        %6854 = vadd.xlane.f32.xlu0 %v6853
        %v6855 = vpop.xlane.xlu0 %6854
        %v6856 = vsel %vm554, %v6788, 0.0
        %6857 = vadd.xlane.f32.xlu0 %v6856
        %v6858 = vpop.xlane.xlu0 %6857
        %v6859 = vsel %vm554, %v6789, 0.0
        %6860 = vadd.xlane.f32.xlu0 %v6859
        %v6861 = vpop.xlane.xlu0 %6860
        %v6862 = vsel %vm554, %v6790, 0.0
        %6863 = vadd.xlane.f32.xlu0 %v6862
        %v6864 = vpop.xlane.xlu0 %6863
        %v6865 = vsel %vm554, %v6791, 0.0
        %6866 = vadd.xlane.f32.xlu0 %v6865
        %v6867 = vpop.xlane.xlu0 %6866
        %v6868 = vsel %vm554, %v6792, 0.0
        %6869 = vadd.xlane.f32.xlu0 %v6868
        %v6870 = vpop.xlane.xlu0 %6869
        %v6871 = vsel %vm554, %v6793, 0.0
        %6872 = vadd.xlane.f32.xlu0 %v6871
        %v6873 = vpop.xlane.xlu0 %6872
        %v6874 = vsel %vm554, %v6794, 0.0
        %6875 = vadd.xlane.f32.xlu0 %v6874
        %v6876 = vpop.xlane.xlu0 %6875
        %v6877 = vsel %vm554, %v6795, 0.0
        %6878 = vadd.xlane.f32.xlu0 %v6877
        %v6879 = vpop.xlane.xlu0 %6878
        %v6880 = vsel %vm554, %v6796, 0.0
        %6881 = vadd.xlane.f32.xlu0 %v6880
        %v6882 = vpop.xlane.xlu0 %6881
        %v6883 = vsel %vm554, %v6797, 0.0
        %6884 = vadd.xlane.f32.xlu0 %v6883
        %v6885 = vpop.xlane.xlu0 %6884
        %v6886 = vsel %vm554, %v6798, 0.0
        %6887 = vadd.xlane.f32.xlu0 %v6886
        %v6888 = vpop.xlane.xlu0 %6887
        %v6889 = vsel %vm554, %v6799, 0.0
        %6890 = vadd.xlane.f32.xlu0 %v6889
        %v6891 = vpop.xlane.xlu0 %6890
        %v6892 = vsel %vm554, %v6800, 0.0
        %6893 = vadd.xlane.f32.xlu0 %v6892
        %v6894 = vpop.xlane.xlu0 %6893
        %v6895 = vsel %vm554, %v6801, 0.0
        %6896 = vadd.xlane.f32.xlu0 %v6895
        %v6897 = vpop.xlane.xlu0 %6896
        %v6898 = vmul.f32 %v6804, %v651
        %v6899 = vmul.f32 %v6807, %v651
        %v6900 = vmul.f32 %v6810, %v651
        %v6901 = vmul.f32 %v6813, %v651
        %v6902 = vmul.f32 %v6816, %v651
        %v6903 = vmul.f32 %v6819, %v651
        %v6904 = vmul.f32 %v6822, %v651
        %v6905 = vmul.f32 %v6825, %v651
        %v6906 = vmul.f32 %v6828, %v651
        %v6907 = vmul.f32 %v6831, %v651
        %v6908 = vmul.f32 %v6834, %v651
        %v6909 = vmul.f32 %v6837, %v651
        %v6910 = vmul.f32 %v6840, %v651
        %v6911 = vmul.f32 %v6843, %v651
        %v6912 = vmul.f32 %v6846, %v651
        %v6913 = vmul.f32 %v6849, %v651
        %v6914 = vmul.f32 %v6852, %v651
        %v6915 = vmul.f32 %v6855, %v651
        %v6916 = vmul.f32 %v6858, %v651
        %v6917 = vmul.f32 %v6861, %v651
        %v6918 = vmul.f32 %v6864, %v651
        %v6919 = vmul.f32 %v6867, %v651
        %v6920 = vmul.f32 %v6870, %v651
        %v6921 = vmul.f32 %v6873, %v651
        %v6922 = vmul.f32 %v6876, %v651
        %v6923 = vmul.f32 %v6879, %v651
        %v6924 = vmul.f32 %v6882, %v651
        %v6925 = vmul.f32 %v6885, %v651
        %v6926 = vmul.f32 %v6888, %v651
        %v6927 = vmul.f32 %v6891, %v651
        %v6928 = vmul.f32 %v6894, %v651
        %v6929 = vmul.f32 %v6897, %v651
        %v6930 = vsub.f32 %v6770, %v6898
        %v6931 = vsub.f32 %v6771, %v6899
        %v6932 = vsub.f32 %v6772, %v6900
        %v6933 = vsub.f32 %v6773, %v6901
        %v6934 = vsub.f32 %v6774, %v6902
        %v6935 = vsub.f32 %v6775, %v6903
        %v6936 = vsub.f32 %v6776, %v6904
        %v6937 = vsub.f32 %v6777, %v6905
        %v6938 = vsub.f32 %v6778, %v6906
        %v6939 = vsub.f32 %v6779, %v6907
        %v6940 = vsub.f32 %v6780, %v6908
        %v6941 = vsub.f32 %v6781, %v6909
        %v6942 = vsub.f32 %v6782, %v6910
        %v6943 = vsub.f32 %v6783, %v6911
        %v6944 = vsub.f32 %v6784, %v6912
        %v6945 = vsub.f32 %v6785, %v6913
        %v6946 = vsub.f32 %v6786, %v6914
        %v6947 = vsub.f32 %v6787, %v6915
        %v6948 = vsub.f32 %v6788, %v6916
        %v6949 = vsub.f32 %v6789, %v6917
        %v6950 = vsub.f32 %v6790, %v6918
        %v6951 = vsub.f32 %v6791, %v6919
        %v6952 = vsub.f32 %v6792, %v6920
        %v6953 = vsub.f32 %v6793, %v6921
        %v6954 = vsub.f32 %v6794, %v6922
        %v6955 = vsub.f32 %v6795, %v6923
        %v6956 = vsub.f32 %v6796, %v6924
        %v6957 = vsub.f32 %v6797, %v6925
        %v6958 = vsub.f32 %v6798, %v6926
        %v6959 = vsub.f32 %v6799, %v6927
        %v6960 = vsub.f32 %v6800, %v6928
        %v6961 = vsub.f32 %v6801, %v6929
        %v6962 = vmul.f32 %v6930, %v6930
        %v6963 = vmul.f32 %v6931, %v6931
        %v6964 = vmul.f32 %v6932, %v6932
        %v6965 = vmul.f32 %v6933, %v6933
        %v6966 = vmul.f32 %v6934, %v6934
        %v6967 = vmul.f32 %v6935, %v6935
        %v6968 = vmul.f32 %v6936, %v6936
        %v6969 = vmul.f32 %v6937, %v6937
        %v6970 = vmul.f32 %v6938, %v6938
        %v6971 = vmul.f32 %v6939, %v6939
        %v6972 = vmul.f32 %v6940, %v6940
        %v6973 = vmul.f32 %v6941, %v6941
        %v6974 = vmul.f32 %v6942, %v6942
        %v6975 = vmul.f32 %v6943, %v6943
        %v6976 = vmul.f32 %v6944, %v6944
        %v6977 = vmul.f32 %v6945, %v6945
        %v6978 = vmul.f32 %v6946, %v6946
        %v6979 = vmul.f32 %v6947, %v6947
        %v6980 = vmul.f32 %v6948, %v6948
        %v6981 = vmul.f32 %v6949, %v6949
        %v6982 = vmul.f32 %v6950, %v6950
        %v6983 = vmul.f32 %v6951, %v6951
        %v6984 = vmul.f32 %v6952, %v6952
        %v6985 = vmul.f32 %v6953, %v6953
        %v6986 = vmul.f32 %v6954, %v6954
        %v6987 = vmul.f32 %v6955, %v6955
        %v6988 = vmul.f32 %v6956, %v6956
        %v6989 = vmul.f32 %v6957, %v6957
        %v6990 = vmul.f32 %v6958, %v6958
        %v6991 = vmul.f32 %v6959, %v6959
        %v6992 = vmul.f32 %v6960, %v6960
        %v6993 = vmul.f32 %v6961, %v6961
        %v6994 = vsel %vm554, %v6962, 0.0
        %6995 = vadd.xlane.f32.xlu0 %v6994
        %v6996 = vpop.xlane.xlu0 %6995
        %v6997 = vsel %vm554, %v6963, 0.0
        %6998 = vadd.xlane.f32.xlu0 %v6997
        %v6999 = vpop.xlane.xlu0 %6998
        %v7000 = vsel %vm554, %v6964, 0.0
        %7001 = vadd.xlane.f32.xlu0 %v7000
        %v7002 = vpop.xlane.xlu0 %7001
        %v7003 = vsel %vm554, %v6965, 0.0
        %7004 = vadd.xlane.f32.xlu0 %v7003
        %v7005 = vpop.xlane.xlu0 %7004
        %v7006 = vsel %vm554, %v6966, 0.0
        %7007 = vadd.xlane.f32.xlu0 %v7006
        %v7008 = vpop.xlane.xlu0 %7007
        %v7009 = vsel %vm554, %v6967, 0.0
        %7010 = vadd.xlane.f32.xlu0 %v7009
        %v7011 = vpop.xlane.xlu0 %7010
        %v7012 = vsel %vm554, %v6968, 0.0
        %7013 = vadd.xlane.f32.xlu0 %v7012
        %v7014 = vpop.xlane.xlu0 %7013
        %v7015 = vsel %vm554, %v6969, 0.0
        %7016 = vadd.xlane.f32.xlu0 %v7015
        %v7017 = vpop.xlane.xlu0 %7016
        %v7018 = vsel %vm554, %v6970, 0.0
        %7019 = vadd.xlane.f32.xlu0 %v7018
        %v7020 = vpop.xlane.xlu0 %7019
        %v7021 = vsel %vm554, %v6971, 0.0
        %7022 = vadd.xlane.f32.xlu0 %v7021
        %v7023 = vpop.xlane.xlu0 %7022
        %v7024 = vsel %vm554, %v6972, 0.0
        %7025 = vadd.xlane.f32.xlu0 %v7024
        %v7026 = vpop.xlane.xlu0 %7025
        %v7027 = vsel %vm554, %v6973, 0.0
        %7028 = vadd.xlane.f32.xlu0 %v7027
        %v7029 = vpop.xlane.xlu0 %7028
        %v7030 = vsel %vm554, %v6974, 0.0
        %7031 = vadd.xlane.f32.xlu0 %v7030
        %v7032 = vpop.xlane.xlu0 %7031
        %v7033 = vsel %vm554, %v6975, 0.0
        %7034 = vadd.xlane.f32.xlu0 %v7033
        %v7035 = vpop.xlane.xlu0 %7034
        %v7036 = vsel %vm554, %v6976, 0.0
        %7037 = vadd.xlane.f32.xlu0 %v7036
        %v7038 = vpop.xlane.xlu0 %7037
        %v7039 = vsel %vm554, %v6977, 0.0
        %7040 = vadd.xlane.f32.xlu0 %v7039
        %v7041 = vpop.xlane.xlu0 %7040
        %v7042 = vsel %vm554, %v6978, 0.0
        %7043 = vadd.xlane.f32.xlu0 %v7042
        %v7044 = vpop.xlane.xlu0 %7043
        %v7045 = vsel %vm554, %v6979, 0.0
        %7046 = vadd.xlane.f32.xlu0 %v7045
        %v7047 = vpop.xlane.xlu0 %7046
        %v7048 = vsel %vm554, %v6980, 0.0
        %7049 = vadd.xlane.f32.xlu0 %v7048
        %v7050 = vpop.xlane.xlu0 %7049
        %v7051 = vsel %vm554, %v6981, 0.0
        %7052 = vadd.xlane.f32.xlu0 %v7051
        %v7053 = vpop.xlane.xlu0 %7052
        %v7054 = vsel %vm554, %v6982, 0.0
        %7055 = vadd.xlane.f32.xlu0 %v7054
        %v7056 = vpop.xlane.xlu0 %7055
        %v7057 = vsel %vm554, %v6983, 0.0
        %7058 = vadd.xlane.f32.xlu0 %v7057
        %v7059 = vpop.xlane.xlu0 %7058
        %v7060 = vsel %vm554, %v6984, 0.0
        %7061 = vadd.xlane.f32.xlu0 %v7060
        %v7062 = vpop.xlane.xlu0 %7061
        %v7063 = vsel %vm554, %v6985, 0.0
        %7064 = vadd.xlane.f32.xlu0 %v7063
        %v7065 = vpop.xlane.xlu0 %7064
        %v7066 = vsel %vm554, %v6986, 0.0
        %7067 = vadd.xlane.f32.xlu0 %v7066
        %v7068 = vpop.xlane.xlu0 %7067
        %v7069 = vsel %vm554, %v6987, 0.0
        %7070 = vadd.xlane.f32.xlu0 %v7069
        %v7071 = vpop.xlane.xlu0 %7070
        %v7072 = vsel %vm554, %v6988, 0.0
        %7073 = vadd.xlane.f32.xlu0 %v7072
        %v7074 = vpop.xlane.xlu0 %7073
        %v7075 = vsel %vm554, %v6989, 0.0
        %7076 = vadd.xlane.f32.xlu0 %v7075
        %v7077 = vpop.xlane.xlu0 %7076
        %v7078 = vsel %vm554, %v6990, 0.0
        %7079 = vadd.xlane.f32.xlu0 %v7078
        %v7080 = vpop.xlane.xlu0 %7079
        %v7081 = vsel %vm554, %v6991, 0.0
        %7082 = vadd.xlane.f32.xlu0 %v7081
        %v7083 = vpop.xlane.xlu0 %7082
        %v7084 = vsel %vm554, %v6992, 0.0
        %7085 = vadd.xlane.f32.xlu0 %v7084
        %v7086 = vpop.xlane.xlu0 %7085
        %v7087 = vsel %vm554, %v6993, 0.0
        %7088 = vadd.xlane.f32.xlu0 %v7087
        %v7089 = vpop.xlane.xlu0 %7088
        %v7090 = vmul.f32 %v6996, %v651
        %v7091 = vmul.f32 %v6999, %v651
        %v7092 = vmul.f32 %v7002, %v651
        %v7093 = vmul.f32 %v7005, %v651
        %v7094 = vmul.f32 %v7008, %v651
        %v7095 = vmul.f32 %v7011, %v651
        %v7096 = vmul.f32 %v7014, %v651
        %v7097 = vmul.f32 %v7017, %v651
        %v7098 = vmul.f32 %v7020, %v651
        %v7099 = vmul.f32 %v7023, %v651
        %v7100 = vmul.f32 %v7026, %v651
        %v7101 = vmul.f32 %v7029, %v651
        %v7102 = vmul.f32 %v7032, %v651
        %v7103 = vmul.f32 %v7035, %v651
        %v7104 = vmul.f32 %v7038, %v651
        %v7105 = vmul.f32 %v7041, %v651
        %v7106 = vmul.f32 %v7044, %v651
        %v7107 = vmul.f32 %v7047, %v651
        %v7108 = vmul.f32 %v7050, %v651
        %v7109 = vmul.f32 %v7053, %v651
        %v7110 = vmul.f32 %v7056, %v651
        %v7111 = vmul.f32 %v7059, %v651
        %v7112 = vmul.f32 %v7062, %v651
        %v7113 = vmul.f32 %v7065, %v651
        %v7114 = vmul.f32 %v7068, %v651
        %v7115 = vmul.f32 %v7071, %v651
        %v7116 = vmul.f32 %v7074, %v651
        %v7117 = vmul.f32 %v7077, %v651
        %v7118 = vmul.f32 %v7080, %v651
        %v7119 = vmul.f32 %v7083, %v651
        %v7120 = vmul.f32 %v7086, %v651
        %v7121 = vmul.f32 %v7089, %v651
        %v7122 = vadd.f32 %v7090, 1e-05
        %v7123 = vadd.f32 %v7091, 1e-05
        %v7124 = vadd.f32 %v7092, 1e-05
        %v7125 = vadd.f32 %v7093, 1e-05
        %v7126 = vadd.f32 %v7094, 1e-05
        %v7127 = vadd.f32 %v7095, 1e-05
        %v7128 = vadd.f32 %v7096, 1e-05
        %v7129 = vadd.f32 %v7097, 1e-05
        %v7130 = vadd.f32 %v7098, 1e-05
        %v7131 = vadd.f32 %v7099, 1e-05
        %v7132 = vadd.f32 %v7100, 1e-05
        %v7133 = vadd.f32 %v7101, 1e-05
        %v7134 = vadd.f32 %v7102, 1e-05
        %v7135 = vadd.f32 %v7103, 1e-05
        %v7136 = vadd.f32 %v7104, 1e-05
        %v7137 = vadd.f32 %v7105, 1e-05
        %v7138 = vadd.f32 %v7106, 1e-05
        %v7139 = vadd.f32 %v7107, 1e-05
        %v7140 = vadd.f32 %v7108, 1e-05
        %v7141 = vadd.f32 %v7109, 1e-05
        %v7142 = vadd.f32 %v7110, 1e-05
        %v7143 = vadd.f32 %v7111, 1e-05
        %v7144 = vadd.f32 %v7112, 1e-05
        %v7145 = vadd.f32 %v7113, 1e-05
        %v7146 = vadd.f32 %v7114, 1e-05
        %v7147 = vadd.f32 %v7115, 1e-05
        %v7148 = vadd.f32 %v7116, 1e-05
        %v7149 = vadd.f32 %v7117, 1e-05
        %v7150 = vadd.f32 %v7118, 1e-05
        %v7151 = vadd.f32 %v7119, 1e-05
        %v7152 = vadd.f32 %v7120, 1e-05
        %v7153 = vadd.f32 %v7121, 1e-05
        %v7154 = vrsqrt.pop %v7122
        %v7155 = vrsqrt.pop %v7123
        %v7156 = vrsqrt.pop %v7124
        %v7157 = vrsqrt.pop %v7125
        %v7158 = vrsqrt.pop %v7126
        %v7159 = vrsqrt.pop %v7127
        %v7160 = vrsqrt.pop %v7128
        %v7161 = vrsqrt.pop %v7129
        %v7162 = vrsqrt.pop %v7130
        %v7163 = vrsqrt.pop %v7131
        %v7164 = vrsqrt.pop %v7132
        %v7165 = vrsqrt.pop %v7133
        %v7166 = vrsqrt.pop %v7134
        %v7167 = vrsqrt.pop %v7135
        %v7168 = vrsqrt.pop %v7136
        %v7169 = vrsqrt.pop %v7137
        %v7170 = vrsqrt.pop %v7138
        %v7171 = vrsqrt.pop %v7139
        %v7172 = vrsqrt.pop %v7140
        %v7173 = vrsqrt.pop %v7141
        %v7174 = vrsqrt.pop %v7142
        %v7175 = vrsqrt.pop %v7143
        %v7176 = vrsqrt.pop %v7144
        %v7177 = vrsqrt.pop %v7145
        %v7178 = vrsqrt.pop %v7146
        %v7179 = vrsqrt.pop %v7147
        %v7180 = vrsqrt.pop %v7148
        %v7181 = vrsqrt.pop %v7149
        %v7182 = vrsqrt.pop %v7150
        %v7183 = vrsqrt.pop %v7151
        %v7184 = vrsqrt.pop %v7152
        %v7185 = vrsqrt.pop %v7153
        %v7186 = vmul.f32 %v6930, %v7154
        %v7187 = vmul.f32 %v6931, %v7155
        %v7188 = vmul.f32 %v6932, %v7156
        %v7189 = vmul.f32 %v6933, %v7157
        %v7190 = vmul.f32 %v6934, %v7158
        %v7191 = vmul.f32 %v6935, %v7159
        %v7192 = vmul.f32 %v6936, %v7160
        %v7193 = vmul.f32 %v6937, %v7161
        %v7194 = vmul.f32 %v6938, %v7162
        %v7195 = vmul.f32 %v6939, %v7163
        %v7196 = vmul.f32 %v6940, %v7164
        %v7197 = vmul.f32 %v6941, %v7165
        %v7198 = vmul.f32 %v6942, %v7166
        %v7199 = vmul.f32 %v6943, %v7167
        %v7200 = vmul.f32 %v6944, %v7168
        %v7201 = vmul.f32 %v6945, %v7169
        %v7202 = vmul.f32 %v6946, %v7170
        %v7203 = vmul.f32 %v6947, %v7171
        %v7204 = vmul.f32 %v6948, %v7172
        %v7205 = vmul.f32 %v6949, %v7173
        %v7206 = vmul.f32 %v6950, %v7174
        %v7207 = vmul.f32 %v6951, %v7175
        %v7208 = vmul.f32 %v6952, %v7176
        %v7209 = vmul.f32 %v6953, %v7177
        %v7210 = vmul.f32 %v6954, %v7178
        %v7211 = vmul.f32 %v6955, %v7179
        %v7212 = vmul.f32 %v6956, %v7180
        %v7213 = vmul.f32 %v6957, %v7181
        %v7214 = vmul.f32 %v6958, %v7182
        %v7215 = vmul.f32 %v6959, %v7183
        %v7216 = vmul.f32 %v6960, %v7184
        %v7217 = vmul.f32 %v6961, %v7185
        %v7218 = vld [vmem:[%s8] sm:$0x1]
        %v7220 = vlaneseq
        %v7221 = vshrl.u32 %v7220, 7
        %v7222 = vsub.s32 0, %v7221
        %v7223 = vrot.slane %v7218, %v7222
        %v7225 = vmul.f32 %v7186, %v7223
        %v7226 = vmul.f32 %v7187, %v7223
        %v7227 = vmul.f32 %v7188, %v7223
        %v7228 = vmul.f32 %v7189, %v7223
        %v7229 = vmul.f32 %v7190, %v7223
        %v7230 = vmul.f32 %v7191, %v7223
        %v7231 = vmul.f32 %v7192, %v7223
        %v7232 = vmul.f32 %v7193, %v7223
        %v7233 = vmul.f32 %v7194, %v7223
        %v7234 = vmul.f32 %v7195, %v7223
        %v7235 = vmul.f32 %v7196, %v7223
        %v7236 = vmul.f32 %v7197, %v7223
        %v7237 = vmul.f32 %v7198, %v7223
        %v7238 = vmul.f32 %v7199, %v7223
        %v7239 = vmul.f32 %v7200, %v7223
        %v7240 = vmul.f32 %v7201, %v7223
        %v7241 = vmul.f32 %v7202, %v7223
        %v7242 = vmul.f32 %v7203, %v7223
        %v7243 = vmul.f32 %v7204, %v7223
        %v7244 = vmul.f32 %v7205, %v7223
        %v7245 = vmul.f32 %v7206, %v7223
        %v7246 = vmul.f32 %v7207, %v7223
        %v7247 = vmul.f32 %v7208, %v7223
        %v7248 = vmul.f32 %v7209, %v7223
        %v7249 = vmul.f32 %v7210, %v7223
        %v7250 = vmul.f32 %v7211, %v7223
        %v7251 = vmul.f32 %v7212, %v7223
        %v7252 = vmul.f32 %v7213, %v7223
        %v7253 = vmul.f32 %v7214, %v7223
        %v7254 = vmul.f32 %v7215, %v7223
        %v7255 = vmul.f32 %v7216, %v7223
        %v7256 = vmul.f32 %v7217, %v7223
        %v7257 = vld [vmem:[%s9] sm:$0x1]
        %v7259 = vlaneseq
        %v7260 = vshrl.u32 %v7259, 7
        %v7261 = vsub.s32 0, %v7260
        %v7262 = vrot.slane %v7257, %v7261
        %v7264 = vadd.f32 %v7225, %v7262
        %v7265 = vadd.f32 %v7226, %v7262
        %v7266 = vadd.f32 %v7227, %v7262
        %v7267 = vadd.f32 %v7228, %v7262
        %v7268 = vadd.f32 %v7229, %v7262
        %v7269 = vadd.f32 %v7230, %v7262
        %v7270 = vadd.f32 %v7231, %v7262
        %v7271 = vadd.f32 %v7232, %v7262
        %v7272 = vadd.f32 %v7233, %v7262
        %v7273 = vadd.f32 %v7234, %v7262
        %v7274 = vadd.f32 %v7235, %v7262
        %v7275 = vadd.f32 %v7236, %v7262
        %v7276 = vadd.f32 %v7237, %v7262
        %v7277 = vadd.f32 %v7238, %v7262
        %v7278 = vadd.f32 %v7239, %v7262
        %v7279 = vadd.f32 %v7240, %v7262
        %v7280 = vadd.f32 %v7241, %v7262
        %v7281 = vadd.f32 %v7242, %v7262
        %v7282 = vadd.f32 %v7243, %v7262
        %v7283 = vadd.f32 %v7244, %v7262
        %v7284 = vadd.f32 %v7245, %v7262
        %v7285 = vadd.f32 %v7246, %v7262
        %v7286 = vadd.f32 %v7247, %v7262
        %v7287 = vadd.f32 %v7248, %v7262
        %v7288 = vadd.f32 %v7249, %v7262
        %v7289 = vadd.f32 %v7250, %v7262
        %v7290 = vadd.f32 %v7251, %v7262
        %v7291 = vadd.f32 %v7252, %v7262
        %v7292 = vadd.f32 %v7253, %v7262
        %v7293 = vadd.f32 %v7254, %v7262
        %v7294 = vadd.f32 %v7255, %v7262
        %v7295 = vadd.f32 %v7256, %v7262
        %v7296 = vpack.c.bf16 %v7265, %v7264
        %v7297 = vpack.c.bf16 %v7267, %v7266
        %v7298 = vpack.c.bf16 %v7269, %v7268
        %v7299 = vpack.c.bf16 %v7271, %v7270
        %v7300 = vpack.c.bf16 %v7273, %v7272
        %v7301 = vpack.c.bf16 %v7275, %v7274
        %v7302 = vpack.c.bf16 %v7277, %v7276
        %v7303 = vpack.c.bf16 %v7279, %v7278
        %v7304 = vpack.c.bf16 %v7281, %v7280
        %v7305 = vpack.c.bf16 %v7283, %v7282
        %v7306 = vpack.c.bf16 %v7285, %v7284
        %v7307 = vpack.c.bf16 %v7287, %v7286
        %v7308 = vpack.c.bf16 %v7289, %v7288
        %v7309 = vpack.c.bf16 %v7291, %v7290
        %v7310 = vpack.c.bf16 %v7293, %v7292
        %v7311 = vpack.c.bf16 %v7295, %v7294
        %v7312 = vld [vmem:[%s10] sm:$0xf]
        %v7313 = vld [vmem:[%s10 + $0x4] sm:$0xf]
        %v7314 = vld [vmem:[%s10 + $0x8] sm:$0xf]
        %v7315 = vld [vmem:[%s10 + $0xc] sm:$0xf]
        %v7316 = vld [vmem:[%s11] sm:$0x1]
        %v7318 = vlaneseq
        %v7319 = vshrl.u32 %v7318, 7
        %v7320 = vsub.s32 0, %v7319
        %v7321 = vrot.slane %v7316, %v7320
        %v7327 = vunpack.c.l.b16 %v7312
        %v7328 = vunpack.c.l.b16 %v7313
        %v7329 = vunpack.c.l.b16 %v7314
        %v7330 = vunpack.c.l.b16 %v7315
        %v7331 = vpack.c.b16 %v7328, %v7327
        %v7332 = vpack.c.b16 %v7330, %v7329
        %v7336 = vsel %vm554, %v7296, 0
        %v7339 = vsel %vm554, %v7297, 0
        %v7342 = vsel %vm554, %v7298, 0
        %v7345 = vsel %vm554, %v7299, 0
        %v7348 = vsel %vm554, %v7300, 0
        %v7351 = vsel %vm554, %v7301, 0
        %v7354 = vsel %vm554, %v7302, 0
        %v7357 = vsel %vm554, %v7303, 0
        %v7360 = vsel %vm554, %v7304, 0
        %v7363 = vsel %vm554, %v7305, 0
        %v7366 = vsel %vm554, %v7306, 0
        %v7369 = vsel %vm554, %v7307, 0
        %v7372 = vsel %vm554, %v7308, 0
        %v7375 = vsel %vm554, %v7309, 0
        %v7378 = vsel %vm554, %v7310, 0
        %v7381 = vsel %vm554, %v7311, 0
        %7383 = vmatprep.subr.bf16.mxu0 0
        %7384 = vmatpush1.bf16.msra.mxu0 %v7331
        %7385 = vmatprep.subr.bf16.mxu0 0
        %7386 = vmatpush1.bf16.msra.mxu0 %v7332
        %7387 = vmatprep.subr.bf16.mxu0 0
        %7388 = vmatpush1.bf16.msra.mxu0 0
        %7389 = vmatprep.subr.bf16.mxu0 0
        %7390 = vmatpush1.bf16.msra.mxu0 0
        %7391 = vmatprep.subr.bf16.mxu0 0
        %7392 = vmatpush1.bf16.msra.mxu0 0
        %7393 = vmatprep.subr.bf16.mxu0 0
        %7394 = vmatpush1.bf16.msra.mxu0 0
        %7395 = vmatprep.subr.bf16.mxu0 0
        %7396 = vmatpush1.bf16.msra.mxu0 0
        %7397 = vmatprep.subr.bf16.mxu0 0
        %7398 = vmatpush1.bf16.msra.mxu0 0
        %7399 = vmatprep.subr.bf16.mxu0 0
        %7400 = vmatpush1.bf16.msra.mxu0 0
        %7401 = vmatprep.subr.bf16.mxu0 0
        %7402 = vmatpush1.bf16.msra.mxu0 0
        %7403 = vmatprep.subr.bf16.mxu0 0
        %7404 = vmatpush1.bf16.msra.mxu0 0
        %7405 = vmatprep.subr.bf16.mxu0 0
        %7406 = vmatpush1.bf16.msra.mxu0 0
        %7407 = vmatprep.subr.bf16.mxu0 0
        %7408 = vmatpush1.bf16.msra.mxu0 0
        %7409 = vmatprep.subr.bf16.mxu0 0
        %7410 = vmatpush1.bf16.msra.mxu0 0
        %7411 = vmatprep.subr.bf16.mxu0 0
        %7412 = vmatpush1.bf16.msra.mxu0 0
        %7413 = vmatprep.subr.bf16.mxu0 0
        %7414 = vmatpush1.bf16.msra.mxu0 0
        %7415 = vmatprep.mubr.bf16.mxu0 0
        %7416 = vmatmul.mubr.bf16.gmra.mrb[0].mxu0 %v7336
        %v7417 = vpop.f32.mrb[0].mxu0
        %v7418 = vadd.f32 %v7321, %v7417
        %v7419 = vpop.f32.mrb[0].mxu0
        %v7420 = vpop.f32.mrb[0].mxu0
        %v7421 = vadd.f32 %v7321, %v7420
        %v7422 = vpop.f32.mrb[0].mxu0
        %7423 = vmatprep.mubr.bf16.mxu0 0
        %7424 = vmatmul.mubr.bf16.gmra.mrb[0].mxu0 %v7339
        %v7425 = vpop.f32.mrb[0].mxu0
        %v7426 = vadd.f32 %v7321, %v7425
        %v7427 = vpop.f32.mrb[0].mxu0
        %v7428 = vpop.f32.mrb[0].mxu0
        %v7429 = vadd.f32 %v7321, %v7428
        %v7430 = vpop.f32.mrb[0].mxu0
        %7431 = vmatprep.mubr.bf16.mxu0 0
        %7432 = vmatmul.mubr.bf16.gmra.mrb[0].mxu0 %v7342
        %v7433 = vpop.f32.mrb[0].mxu0
        %v7434 = vadd.f32 %v7321, %v7433
        %v7435 = vpop.f32.mrb[0].mxu0
        %v7436 = vpop.f32.mrb[0].mxu0
        %v7437 = vadd.f32 %v7321, %v7436
        %v7438 = vpop.f32.mrb[0].mxu0
        %7439 = vmatprep.mubr.bf16.mxu0 0
        %7440 = vmatmul.mubr.bf16.gmra.mrb[0].mxu0 %v7345
        %v7441 = vpop.f32.mrb[0].mxu0
        %v7442 = vadd.f32 %v7321, %v7441
        %v7443 = vpop.f32.mrb[0].mxu0
        %v7444 = vpop.f32.mrb[0].mxu0
        %v7445 = vadd.f32 %v7321, %v7444
        %v7446 = vpop.f32.mrb[0].mxu0
        %7447 = vmatprep.mubr.bf16.mxu0 0
        %7448 = vmatmul.mubr.bf16.gmra.mrb[0].mxu0 %v7348
        %v7449 = vpop.f32.mrb[0].mxu0
        %v7450 = vadd.f32 %v7321, %v7449
        %v7451 = vpop.f32.mrb[0].mxu0
        %v7452 = vpop.f32.mrb[0].mxu0
        %v7453 = vadd.f32 %v7321, %v7452
        %v7454 = vpop.f32.mrb[0].mxu0
        %7455 = vmatprep.mubr.bf16.mxu0 0
        %7456 = vmatmul.mubr.bf16.gmra.mrb[0].mxu0 %v7351
        %v7457 = vpop.f32.mrb[0].mxu0
        %v7458 = vadd.f32 %v7321, %v7457
        %v7459 = vpop.f32.mrb[0].mxu0
        %v7460 = vpop.f32.mrb[0].mxu0
        %v7461 = vadd.f32 %v7321, %v7460
        %v7462 = vpop.f32.mrb[0].mxu0
        %7463 = vmatprep.mubr.bf16.mxu0 0
        %7464 = vmatmul.mubr.bf16.gmra.mrb[0].mxu0 %v7354
        %v7465 = vpop.f32.mrb[0].mxu0
        %v7466 = vadd.f32 %v7321, %v7465
        %v7467 = vpop.f32.mrb[0].mxu0
        %v7468 = vpop.f32.mrb[0].mxu0
        %v7469 = vadd.f32 %v7321, %v7468
        %v7470 = vpop.f32.mrb[0].mxu0
        %7471 = vmatprep.mubr.bf16.mxu0 0
        %7472 = vmatmul.mubr.bf16.gmra.mrb[0].mxu0 %v7357
        %v7473 = vpop.f32.mrb[0].mxu0
        %v7474 = vadd.f32 %v7321, %v7473
        %v7475 = vpop.f32.mrb[0].mxu0
        %v7476 = vpop.f32.mrb[0].mxu0
        %v7477 = vadd.f32 %v7321, %v7476
        %v7478 = vpop.f32.mrb[0].mxu0
        %7479 = vmatprep.mubr.bf16.mxu0 0
        %7480 = vmatmul.mubr.bf16.gmra.mrb[0].mxu0 %v7360
        %v7481 = vpop.f32.mrb[0].mxu0
        %v7482 = vadd.f32 %v7321, %v7481
        %v7483 = vpop.f32.mrb[0].mxu0
        %v7484 = vpop.f32.mrb[0].mxu0
        %v7485 = vadd.f32 %v7321, %v7484
        %v7486 = vpop.f32.mrb[0].mxu0
        %7487 = vmatprep.mubr.bf16.mxu0 0
        %7488 = vmatmul.mubr.bf16.gmra.mrb[0].mxu0 %v7363
        %v7489 = vpop.f32.mrb[0].mxu0
        %v7490 = vadd.f32 %v7321, %v7489
        %v7491 = vpop.f32.mrb[0].mxu0
        %v7492 = vpop.f32.mrb[0].mxu0
        %v7493 = vadd.f32 %v7321, %v7492
        %v7494 = vpop.f32.mrb[0].mxu0
        %7495 = vmatprep.mubr.bf16.mxu0 0
        %7496 = vmatmul.mubr.bf16.gmra.mrb[0].mxu0 %v7366
        %v7497 = vpop.f32.mrb[0].mxu0
        %v7498 = vadd.f32 %v7321, %v7497
        %v7499 = vpop.f32.mrb[0].mxu0
        %v7500 = vpop.f32.mrb[0].mxu0
        %v7501 = vadd.f32 %v7321, %v7500
        %v7502 = vpop.f32.mrb[0].mxu0
        %7503 = vmatprep.mubr.bf16.mxu0 0
        %7504 = vmatmul.mubr.bf16.gmra.mrb[0].mxu0 %v7369
        %v7505 = vpop.f32.mrb[0].mxu0
        %v7506 = vadd.f32 %v7321, %v7505
        %v7507 = vpop.f32.mrb[0].mxu0
        %v7508 = vpop.f32.mrb[0].mxu0
        %v7509 = vadd.f32 %v7321, %v7508
        %v7510 = vpop.f32.mrb[0].mxu0
        %7511 = vmatprep.mubr.bf16.mxu0 0
        %7512 = vmatmul.mubr.bf16.gmra.mrb[0].mxu0 %v7372
        %v7513 = vpop.f32.mrb[0].mxu0
        %v7514 = vadd.f32 %v7321, %v7513
        %v7515 = vpop.f32.mrb[0].mxu0
        %v7516 = vpop.f32.mrb[0].mxu0
        %v7517 = vadd.f32 %v7321, %v7516
        %v7518 = vpop.f32.mrb[0].mxu0
        %7519 = vmatprep.mubr.bf16.mxu0 0
        %7520 = vmatmul.mubr.bf16.gmra.mrb[0].mxu0 %v7375
        %v7521 = vpop.f32.mrb[0].mxu0
        %v7522 = vadd.f32 %v7321, %v7521
        %v7523 = vpop.f32.mrb[0].mxu0
        %v7524 = vpop.f32.mrb[0].mxu0
        %v7525 = vadd.f32 %v7321, %v7524
        %v7526 = vpop.f32.mrb[0].mxu0
        %7527 = vmatprep.mubr.bf16.mxu0 0
        %7528 = vmatmul.mubr.bf16.gmra.mrb[0].mxu0 %v7378
        %v7529 = vpop.f32.mrb[0].mxu0
        %v7530 = vadd.f32 %v7321, %v7529
        %v7531 = vpop.f32.mrb[0].mxu0
        %v7532 = vpop.f32.mrb[0].mxu0
        %v7533 = vadd.f32 %v7321, %v7532
        %v7534 = vpop.f32.mrb[0].mxu0
        %7535 = vmatprep.mubr.bf16.mxu0 0
        %7536 = vmatmul.mubr.bf16.gmra.mrb[0].mxu0 %v7381
        %v7537 = vpop.f32.mrb[0].mxu0
        %v7538 = vadd.f32 %v7321, %v7537
        %v7539 = vpop.f32.mrb[0].mxu0
        %v7540 = vpop.f32.mrb[0].mxu0
        %v7541 = vadd.f32 %v7321, %v7540
        %v7542 = vpop.f32.mrb[0].mxu0
        %7543 = vdwg.mxu0
        %v7544 = vmul.f32 %v7418, %v7418
        %v7545 = vmul.f32 %v7421, %v7421
        %v7546 = vmul.f32 %v7426, %v7426
        %v7547 = vmul.f32 %v7429, %v7429
        %v7548 = vmul.f32 %v7434, %v7434
        %v7549 = vmul.f32 %v7437, %v7437
        %v7550 = vmul.f32 %v7442, %v7442
        %v7551 = vmul.f32 %v7445, %v7445
        %v7552 = vmul.f32 %v7450, %v7450
        %v7553 = vmul.f32 %v7453, %v7453
        %v7554 = vmul.f32 %v7458, %v7458
        %v7555 = vmul.f32 %v7461, %v7461
        %v7556 = vmul.f32 %v7466, %v7466
        %v7557 = vmul.f32 %v7469, %v7469
        %v7558 = vmul.f32 %v7474, %v7474
        %v7559 = vmul.f32 %v7477, %v7477
        %v7560 = vmul.f32 %v7482, %v7482
        %v7561 = vmul.f32 %v7485, %v7485
        %v7562 = vmul.f32 %v7490, %v7490
        %v7563 = vmul.f32 %v7493, %v7493
        %v7564 = vmul.f32 %v7498, %v7498
        %v7565 = vmul.f32 %v7501, %v7501
        %v7566 = vmul.f32 %v7506, %v7506
        %v7567 = vmul.f32 %v7509, %v7509
        %v7568 = vmul.f32 %v7514, %v7514
        %v7569 = vmul.f32 %v7517, %v7517
        %v7570 = vmul.f32 %v7522, %v7522
        %v7571 = vmul.f32 %v7525, %v7525
        %v7572 = vmul.f32 %v7530, %v7530
        %v7573 = vmul.f32 %v7533, %v7533
        %v7574 = vmul.f32 %v7538, %v7538
        %v7575 = vmul.f32 %v7541, %v7541
        %v7576 = vmul.f32 %v7418, %v7544
        %v7577 = vmul.f32 %v7421, %v7545
        %v7578 = vmul.f32 %v7426, %v7546
        %v7579 = vmul.f32 %v7429, %v7547
        %v7580 = vmul.f32 %v7434, %v7548
        %v7581 = vmul.f32 %v7437, %v7549
        %v7582 = vmul.f32 %v7442, %v7550
        %v7583 = vmul.f32 %v7445, %v7551
        %v7584 = vmul.f32 %v7450, %v7552
        %v7585 = vmul.f32 %v7453, %v7553
        %v7586 = vmul.f32 %v7458, %v7554
        %v7587 = vmul.f32 %v7461, %v7555
        %v7588 = vmul.f32 %v7466, %v7556
        %v7589 = vmul.f32 %v7469, %v7557
        %v7590 = vmul.f32 %v7474, %v7558
        %v7591 = vmul.f32 %v7477, %v7559
        %v7592 = vmul.f32 %v7482, %v7560
        %v7593 = vmul.f32 %v7485, %v7561
        %v7594 = vmul.f32 %v7490, %v7562
        %v7595 = vmul.f32 %v7493, %v7563
        %v7596 = vmul.f32 %v7498, %v7564
        %v7597 = vmul.f32 %v7501, %v7565
        %v7598 = vmul.f32 %v7506, %v7566
        %v7599 = vmul.f32 %v7509, %v7567
        %v7600 = vmul.f32 %v7514, %v7568
        %v7601 = vmul.f32 %v7517, %v7569
        %v7602 = vmul.f32 %v7522, %v7570
        %v7603 = vmul.f32 %v7525, %v7571
        %v7604 = vmul.f32 %v7530, %v7572
        %v7605 = vmul.f32 %v7533, %v7573
        %v7606 = vmul.f32 %v7538, %v7574
        %v7607 = vmul.f32 %v7541, %v7575
        %v7608 = vmul.f32 %v7576, 0.044715
        %v7609 = vmul.f32 %v7577, 0.044715
        %v7610 = vmul.f32 %v7578, 0.044715
        %v7611 = vmul.f32 %v7579, 0.044715
        %v7612 = vmul.f32 %v7580, 0.044715
        %v7613 = vmul.f32 %v7581, 0.044715
        %v7614 = vmul.f32 %v7582, 0.044715
        %v7615 = vmul.f32 %v7583, 0.044715
        %v7616 = vmul.f32 %v7584, 0.044715
        %v7617 = vmul.f32 %v7585, 0.044715
        %v7618 = vmul.f32 %v7586, 0.044715
        %v7619 = vmul.f32 %v7587, 0.044715
        %v7620 = vmul.f32 %v7588, 0.044715
        %v7621 = vmul.f32 %v7589, 0.044715
        %v7622 = vmul.f32 %v7590, 0.044715
        %v7623 = vmul.f32 %v7591, 0.044715
        %v7624 = vmul.f32 %v7592, 0.044715
        %v7625 = vmul.f32 %v7593, 0.044715
        %v7626 = vmul.f32 %v7594, 0.044715
        %v7627 = vmul.f32 %v7595, 0.044715
        %v7628 = vmul.f32 %v7596, 0.044715
        %v7629 = vmul.f32 %v7597, 0.044715
        %v7630 = vmul.f32 %v7598, 0.044715
        %v7631 = vmul.f32 %v7599, 0.044715
        %v7632 = vmul.f32 %v7600, 0.044715
        %v7633 = vmul.f32 %v7601, 0.044715
        %v7634 = vmul.f32 %v7602, 0.044715
        %v7635 = vmul.f32 %v7603, 0.044715
        %v7636 = vmul.f32 %v7604, 0.044715
        %v7637 = vmul.f32 %v7605, 0.044715
        %v7638 = vmul.f32 %v7606, 0.044715
        %v7639 = vmul.f32 %v7607, 0.044715
        %v7640 = vadd.f32 %v7418, %v7608
        %v7641 = vadd.f32 %v7421, %v7609
        %v7642 = vadd.f32 %v7426, %v7610
        %v7643 = vadd.f32 %v7429, %v7611
        %v7644 = vadd.f32 %v7434, %v7612
        %v7645 = vadd.f32 %v7437, %v7613
        %v7646 = vadd.f32 %v7442, %v7614
        %v7647 = vadd.f32 %v7445, %v7615
        %v7648 = vadd.f32 %v7450, %v7616
        %v7649 = vadd.f32 %v7453, %v7617
        %v7650 = vadd.f32 %v7458, %v7618
        %v7651 = vadd.f32 %v7461, %v7619
        %v7652 = vadd.f32 %v7466, %v7620
        %v7653 = vadd.f32 %v7469, %v7621
        %v7654 = vadd.f32 %v7474, %v7622
        %v7655 = vadd.f32 %v7477, %v7623
        %v7656 = vadd.f32 %v7482, %v7624
        %v7657 = vadd.f32 %v7485, %v7625
        %v7658 = vadd.f32 %v7490, %v7626
        %v7659 = vadd.f32 %v7493, %v7627
        %v7660 = vadd.f32 %v7498, %v7628
        %v7661 = vadd.f32 %v7501, %v7629
        %v7662 = vadd.f32 %v7506, %v7630
        %v7663 = vadd.f32 %v7509, %v7631
        %v7664 = vadd.f32 %v7514, %v7632
        %v7665 = vadd.f32 %v7517, %v7633
        %v7666 = vadd.f32 %v7522, %v7634
        %v7667 = vadd.f32 %v7525, %v7635
        %v7668 = vadd.f32 %v7530, %v7636
        %v7669 = vadd.f32 %v7533, %v7637
        %v7670 = vadd.f32 %v7538, %v7638
        %v7671 = vadd.f32 %v7541, %v7639
        %v7672 = vmul.f32 %v7640, 0.7978846
        %v7673 = vmul.f32 %v7641, 0.7978846
        %v7674 = vmul.f32 %v7642, 0.7978846
        %v7675 = vmul.f32 %v7643, 0.7978846
        %v7676 = vmul.f32 %v7644, 0.7978846
        %v7677 = vmul.f32 %v7645, 0.7978846
        %v7678 = vmul.f32 %v7646, 0.7978846
        %v7679 = vmul.f32 %v7647, 0.7978846
        %v7680 = vmul.f32 %v7648, 0.7978846
        %v7681 = vmul.f32 %v7649, 0.7978846
        %v7682 = vmul.f32 %v7650, 0.7978846
        %v7683 = vmul.f32 %v7651, 0.7978846
        %v7684 = vmul.f32 %v7652, 0.7978846
        %v7685 = vmul.f32 %v7653, 0.7978846
        %v7686 = vmul.f32 %v7654, 0.7978846
        %v7687 = vmul.f32 %v7655, 0.7978846
        %v7688 = vmul.f32 %v7656, 0.7978846
        %v7689 = vmul.f32 %v7657, 0.7978846
        %v7690 = vmul.f32 %v7658, 0.7978846
        %v7691 = vmul.f32 %v7659, 0.7978846
        %v7692 = vmul.f32 %v7660, 0.7978846
        %v7693 = vmul.f32 %v7661, 0.7978846
        %v7694 = vmul.f32 %v7662, 0.7978846
        %v7695 = vmul.f32 %v7663, 0.7978846
        %v7696 = vmul.f32 %v7664, 0.7978846
        %v7697 = vmul.f32 %v7665, 0.7978846
        %v7698 = vmul.f32 %v7666, 0.7978846
        %v7699 = vmul.f32 %v7667, 0.7978846
        %v7700 = vmul.f32 %v7668, 0.7978846
        %v7701 = vmul.f32 %v7669, 0.7978846
        %v7702 = vmul.f32 %v7670, 0.7978846
        %v7703 = vmul.f32 %v7671, 0.7978846
        %v7704 = vtanh.pop %v7672
        %v7705 = vtanh.pop %v7673
        %v7706 = vtanh.pop %v7674
        %v7707 = vtanh.pop %v7675
        %v7708 = vtanh.pop %v7676
        %v7709 = vtanh.pop %v7677
        %v7710 = vtanh.pop %v7678
        %v7711 = vtanh.pop %v7679
        %v7712 = vtanh.pop %v7680
        %v7713 = vtanh.pop %v7681
        %v7714 = vtanh.pop %v7682
        %v7715 = vtanh.pop %v7683
        %v7716 = vtanh.pop %v7684
        %v7717 = vtanh.pop %v7685
        %v7718 = vtanh.pop %v7686
        %v7719 = vtanh.pop %v7687
        %v7720 = vtanh.pop %v7688
        %v7721 = vtanh.pop %v7689
        %v7722 = vtanh.pop %v7690
        %v7723 = vtanh.pop %v7691
        %v7724 = vtanh.pop %v7692
        %v7725 = vtanh.pop %v7693
        %v7726 = vtanh.pop %v7694
        %v7727 = vtanh.pop %v7695
        %v7728 = vtanh.pop %v7696
        %v7729 = vtanh.pop %v7697
        %v7730 = vtanh.pop %v7698
        %v7731 = vtanh.pop %v7699
        %v7732 = vtanh.pop %v7700
        %v7733 = vtanh.pop %v7701
        %v7734 = vtanh.pop %v7702
        %v7735 = vtanh.pop %v7703
        %v7736 = vadd.f32 %v7704, 1.0
        %v7737 = vadd.f32 %v7705, 1.0
        %v7738 = vadd.f32 %v7706, 1.0
        %v7739 = vadd.f32 %v7707, 1.0
        %v7740 = vadd.f32 %v7708, 1.0
        %v7741 = vadd.f32 %v7709, 1.0
        %v7742 = vadd.f32 %v7710, 1.0
        %v7743 = vadd.f32 %v7711, 1.0
        %v7744 = vadd.f32 %v7712, 1.0
        %v7745 = vadd.f32 %v7713, 1.0
        %v7746 = vadd.f32 %v7714, 1.0
        %v7747 = vadd.f32 %v7715, 1.0
        %v7748 = vadd.f32 %v7716, 1.0
        %v7749 = vadd.f32 %v7717, 1.0
        %v7750 = vadd.f32 %v7718, 1.0
        %v7751 = vadd.f32 %v7719, 1.0
        %v7752 = vadd.f32 %v7720, 1.0
        %v7753 = vadd.f32 %v7721, 1.0
        %v7754 = vadd.f32 %v7722, 1.0
        %v7755 = vadd.f32 %v7723, 1.0
        %v7756 = vadd.f32 %v7724, 1.0
        %v7757 = vadd.f32 %v7725, 1.0
        %v7758 = vadd.f32 %v7726, 1.0
        %v7759 = vadd.f32 %v7727, 1.0
        %v7760 = vadd.f32 %v7728, 1.0
        %v7761 = vadd.f32 %v7729, 1.0
        %v7762 = vadd.f32 %v7730, 1.0
        %v7763 = vadd.f32 %v7731, 1.0
        %v7764 = vadd.f32 %v7732, 1.0
        %v7765 = vadd.f32 %v7733, 1.0
        %v7766 = vadd.f32 %v7734, 1.0
        %v7767 = vadd.f32 %v7735, 1.0
        %v7768 = vmul.f32 %v7736, 0.5
        %v7769 = vmul.f32 %v7737, 0.5
        %v7770 = vmul.f32 %v7738, 0.5
        %v7771 = vmul.f32 %v7739, 0.5
        %v7772 = vmul.f32 %v7740, 0.5
        %v7773 = vmul.f32 %v7741, 0.5
        %v7774 = vmul.f32 %v7742, 0.5
        %v7775 = vmul.f32 %v7743, 0.5
        %v7776 = vmul.f32 %v7744, 0.5
        %v7777 = vmul.f32 %v7745, 0.5
        %v7778 = vmul.f32 %v7746, 0.5
        %v7779 = vmul.f32 %v7747, 0.5
        %v7780 = vmul.f32 %v7748, 0.5
        %v7781 = vmul.f32 %v7749, 0.5
        %v7782 = vmul.f32 %v7750, 0.5
        %v7783 = vmul.f32 %v7751, 0.5
        %v7784 = vmul.f32 %v7752, 0.5
        %v7785 = vmul.f32 %v7753, 0.5
        %v7786 = vmul.f32 %v7754, 0.5
        %v7787 = vmul.f32 %v7755, 0.5
        %v7788 = vmul.f32 %v7756, 0.5
        %v7789 = vmul.f32 %v7757, 0.5
        %v7790 = vmul.f32 %v7758, 0.5
        %v7791 = vmul.f32 %v7759, 0.5
        %v7792 = vmul.f32 %v7760, 0.5
        %v7793 = vmul.f32 %v7761, 0.5
        %v7794 = vmul.f32 %v7762, 0.5
        %v7795 = vmul.f32 %v7763, 0.5
        %v7796 = vmul.f32 %v7764, 0.5
        %v7797 = vmul.f32 %v7765, 0.5
        %v7798 = vmul.f32 %v7766, 0.5
        %v7799 = vmul.f32 %v7767, 0.5
        %v7800 = vmul.f32 %v7418, %v7768
        %v7801 = vmul.f32 %v7421, %v7769
        %v7802 = vmul.f32 %v7426, %v7770
        %v7803 = vmul.f32 %v7429, %v7771
        %v7804 = vmul.f32 %v7434, %v7772
        %v7805 = vmul.f32 %v7437, %v7773
        %v7806 = vmul.f32 %v7442, %v7774
        %v7807 = vmul.f32 %v7445, %v7775
        %v7808 = vmul.f32 %v7450, %v7776
        %v7809 = vmul.f32 %v7453, %v7777
        %v7810 = vmul.f32 %v7458, %v7778
        %v7811 = vmul.f32 %v7461, %v7779
        %v7812 = vmul.f32 %v7466, %v7780
        %v7813 = vmul.f32 %v7469, %v7781
        %v7814 = vmul.f32 %v7474, %v7782
        %v7815 = vmul.f32 %v7477, %v7783
        %v7816 = vmul.f32 %v7482, %v7784
        %v7817 = vmul.f32 %v7485, %v7785
        %v7818 = vmul.f32 %v7490, %v7786
        %v7819 = vmul.f32 %v7493, %v7787
        %v7820 = vmul.f32 %v7498, %v7788
        %v7821 = vmul.f32 %v7501, %v7789
        %v7822 = vmul.f32 %v7506, %v7790
        %v7823 = vmul.f32 %v7509, %v7791
        %v7824 = vmul.f32 %v7514, %v7792
        %v7825 = vmul.f32 %v7517, %v7793
        %v7826 = vmul.f32 %v7522, %v7794
        %v7827 = vmul.f32 %v7525, %v7795
        %v7828 = vmul.f32 %v7530, %v7796
        %v7829 = vmul.f32 %v7533, %v7797
        %v7830 = vmul.f32 %v7538, %v7798
        %v7831 = vmul.f32 %v7541, %v7799
        %v7832 = vpack.c.bf16 %v7801, %v7800
        %v7833 = vpack.c.bf16 %v7803, %v7802
        %v7834 = vpack.c.bf16 %v7805, %v7804
        %v7835 = vpack.c.bf16 %v7807, %v7806
        %v7836 = vpack.c.bf16 %v7809, %v7808
        %v7837 = vpack.c.bf16 %v7811, %v7810
        %v7838 = vpack.c.bf16 %v7813, %v7812
        %v7839 = vpack.c.bf16 %v7815, %v7814
        %v7840 = vpack.c.bf16 %v7817, %v7816
        %v7841 = vpack.c.bf16 %v7819, %v7818
        %v7842 = vpack.c.bf16 %v7821, %v7820
        %v7843 = vpack.c.bf16 %v7823, %v7822
        %v7844 = vpack.c.bf16 %v7825, %v7824
        %v7845 = vpack.c.bf16 %v7827, %v7826
        %v7846 = vpack.c.bf16 %v7829, %v7828
        %v7847 = vpack.c.bf16 %v7831, %v7830
        %v7848 = vld [vmem:[%s12] sm:$0xf]
        %v7849 = vld [vmem:[%s12 + $0x4] sm:$0xf]
        %v7850 = vld [vmem:[%s12 + $0x8] sm:$0xf]
        %v7851 = vld [vmem:[%s12 + $0xc] sm:$0xf]
        %v7852 = vld [vmem:[%s12 + $0x10] sm:$0xf]
        %v7853 = vld [vmem:[%s12 + $0x14] sm:$0xf]
        %v7854 = vld [vmem:[%s12 + $0x18] sm:$0xf]
        %v7855 = vld [vmem:[%s12 + $0x1c] sm:$0xf]
        %v7856 = vld [vmem:[%s12 + $0x20] sm:$0xf]
        %v7857 = vld [vmem:[%s12 + $0x24] sm:$0xf]
        %v7858 = vld [vmem:[%s12 + $0x28] sm:$0xf]
        %v7859 = vld [vmem:[%s12 + $0x2c] sm:$0xf]
        %v7860 = vld [vmem:[%s12 + $0x30] sm:$0xf]
        %v7861 = vld [vmem:[%s12 + $0x34] sm:$0xf]
        %v7862 = vld [vmem:[%s12 + $0x38] sm:$0xf]
        %v7863 = vld [vmem:[%s12 + $0x3c] sm:$0xf]
        %v7864 = vld [vmem:[%s13] sm:$0x1]
        %v7866 = vlaneseq
        %v7867 = vshrl.u32 %v7866, 7
        %v7868 = vsub.s32 0, %v7867
        %v7869 = vrot.slane %v7864, %v7868
        %v7887 = vunpack.c.l.b16 %v7848
        %v7888 = vunpack.c.l.b16 %v7849
        %v7889 = vunpack.c.l.b16 %v7850
        %v7890 = vunpack.c.l.b16 %v7851
        %v7891 = vunpack.c.l.b16 %v7852
        %v7892 = vunpack.c.l.b16 %v7853
        %v7893 = vunpack.c.l.b16 %v7854
        %v7894 = vunpack.c.l.b16 %v7855
        %v7895 = vunpack.c.l.b16 %v7856
        %v7896 = vunpack.c.l.b16 %v7857
        %v7897 = vunpack.c.l.b16 %v7858
        %v7898 = vunpack.c.l.b16 %v7859
        %v7899 = vunpack.c.l.b16 %v7860
        %v7900 = vunpack.c.l.b16 %v7861
        %v7901 = vunpack.c.l.b16 %v7862
        %v7902 = vunpack.c.l.b16 %v7863
        %v7903 = vpack.c.b16 %v7888, %v7887
        %v7904 = vpack.c.b16 %v7890, %v7889
        %v7905 = vpack.c.b16 %v7892, %v7891
        %v7906 = vpack.c.b16 %v7894, %v7893
        %v7907 = vpack.c.b16 %v7896, %v7895
        %v7908 = vpack.c.b16 %v7898, %v7897
        %v7909 = vpack.c.b16 %v7900, %v7899
        %v7910 = vpack.c.b16 %v7902, %v7901
        %7919 = vmatprep.subr.bf16.mxu0 0
        %7920 = vmatpush1.bf16.msra.mxu0 %v7903
        %7921 = vmatprep.subr.bf16.mxu0 0
        %7922 = vmatpush1.bf16.msra.mxu0 %v7904
        %7923 = vmatprep.subr.bf16.mxu0 0
        %7924 = vmatpush1.bf16.msra.mxu0 %v7905
        %7925 = vmatprep.subr.bf16.mxu0 0
        %7926 = vmatpush1.bf16.msra.mxu0 %v7906
        %7927 = vmatprep.subr.bf16.mxu0 0
        %7928 = vmatpush1.bf16.msra.mxu0 %v7907
        %7929 = vmatprep.subr.bf16.mxu0 0
        %7930 = vmatpush1.bf16.msra.mxu0 %v7908
        %7931 = vmatprep.subr.bf16.mxu0 0
        %7932 = vmatpush1.bf16.msra.mxu0 %v7909
        %7933 = vmatprep.subr.bf16.mxu0 0
        %7934 = vmatpush1.bf16.msra.mxu0 %v7910
        %7935 = vmatprep.subr.bf16.mxu0 0
        %7936 = vmatpush1.bf16.msra.mxu0 0
        %7937 = vmatprep.subr.bf16.mxu0 0
        %7938 = vmatpush1.bf16.msra.mxu0 0
        %7939 = vmatprep.subr.bf16.mxu0 0
        %7940 = vmatpush1.bf16.msra.mxu0 0
        %7941 = vmatprep.subr.bf16.mxu0 0
        %7942 = vmatpush1.bf16.msra.mxu0 0
        %7943 = vmatprep.subr.bf16.mxu0 0
        %7944 = vmatpush1.bf16.msra.mxu0 0
        %7945 = vmatprep.subr.bf16.mxu0 0
        %7946 = vmatpush1.bf16.msra.mxu0 0
        %7947 = vmatprep.subr.bf16.mxu0 0
        %7948 = vmatpush1.bf16.msra.mxu0 0
        %7949 = vmatprep.subr.bf16.mxu0 0
        %7950 = vmatpush1.bf16.msra.mxu0 0
        %7951 = vmatprep.mubr.bf16.mxu0 0
        %7952 = vmatmul.mubr.bf16.gmra.mrb[0].mxu0 %v7832
        %v7953 = vpop.f32.mrb[0].mxu0
        %v7954 = vadd.f32 %v7869, %v7953
        %v7955 = vpop.f32.mrb[0].mxu0
        %v7956 = vpop.f32.mrb[0].mxu0
        %v7957 = vadd.f32 %v7869, %v7956
        %v7958 = vpop.f32.mrb[0].mxu0
        %7959 = vmatprep.mubr.bf16.mxu0 0
        %7960 = vmatmul.mubr.bf16.gmra.mrb[0].mxu0 %v7833
        %v7961 = vpop.f32.mrb[0].mxu0
        %v7962 = vadd.f32 %v7869, %v7961
        %v7963 = vpop.f32.mrb[0].mxu0
        %v7964 = vpop.f32.mrb[0].mxu0
        %v7965 = vadd.f32 %v7869, %v7964
        %v7966 = vpop.f32.mrb[0].mxu0
        %7967 = vmatprep.mubr.bf16.mxu0 0
        %7968 = vmatmul.mubr.bf16.gmra.mrb[0].mxu0 %v7834
        %v7969 = vpop.f32.mrb[0].mxu0
        %v7970 = vadd.f32 %v7869, %v7969
        %v7971 = vpop.f32.mrb[0].mxu0
        %v7972 = vpop.f32.mrb[0].mxu0
        %v7973 = vadd.f32 %v7869, %v7972
        %v7974 = vpop.f32.mrb[0].mxu0
        %7975 = vmatprep.mubr.bf16.mxu0 0
        %7976 = vmatmul.mubr.bf16.gmra.mrb[0].mxu0 %v7835
        %v7977 = vpop.f32.mrb[0].mxu0
        %v7978 = vadd.f32 %v7869, %v7977
        %v7979 = vpop.f32.mrb[0].mxu0
        %v7980 = vpop.f32.mrb[0].mxu0
        %v7981 = vadd.f32 %v7869, %v7980
        %v7982 = vpop.f32.mrb[0].mxu0
        %7983 = vmatprep.mubr.bf16.mxu0 0
        %7984 = vmatmul.mubr.bf16.gmra.mrb[0].mxu0 %v7836
        %v7985 = vpop.f32.mrb[0].mxu0
        %v7986 = vadd.f32 %v7869, %v7985
        %v7987 = vpop.f32.mrb[0].mxu0
        %v7988 = vpop.f32.mrb[0].mxu0
        %v7989 = vadd.f32 %v7869, %v7988
        %v7990 = vpop.f32.mrb[0].mxu0
        %7991 = vmatprep.mubr.bf16.mxu0 0
        %7992 = vmatmul.mubr.bf16.gmra.mrb[0].mxu0 %v7837
        %v7993 = vpop.f32.mrb[0].mxu0
        %v7994 = vadd.f32 %v7869, %v7993
        %v7995 = vpop.f32.mrb[0].mxu0
        %v7996 = vpop.f32.mrb[0].mxu0
        %v7997 = vadd.f32 %v7869, %v7996
        %v7998 = vpop.f32.mrb[0].mxu0
        %7999 = vmatprep.mubr.bf16.mxu0 0
        %8000 = vmatmul.mubr.bf16.gmra.mrb[0].mxu0 %v7838
        %v8001 = vpop.f32.mrb[0].mxu0
        %v8002 = vadd.f32 %v7869, %v8001
        %v8003 = vpop.f32.mrb[0].mxu0
        %v8004 = vpop.f32.mrb[0].mxu0
        %v8005 = vadd.f32 %v7869, %v8004
        %v8006 = vpop.f32.mrb[0].mxu0
        %8007 = vmatprep.mubr.bf16.mxu0 0
        %8008 = vmatmul.mubr.bf16.gmra.mrb[0].mxu0 %v7839
        %v8009 = vpop.f32.mrb[0].mxu0
        %v8010 = vadd.f32 %v7869, %v8009
        %v8011 = vpop.f32.mrb[0].mxu0
        %v8012 = vpop.f32.mrb[0].mxu0
        %v8013 = vadd.f32 %v7869, %v8012
        %v8014 = vpop.f32.mrb[0].mxu0
        %8015 = vmatprep.mubr.bf16.mxu0 0
        %8016 = vmatmul.mubr.bf16.gmra.mrb[0].mxu0 %v7840
        %v8017 = vpop.f32.mrb[0].mxu0
        %v8018 = vadd.f32 %v7869, %v8017
        %v8019 = vpop.f32.mrb[0].mxu0
        %v8020 = vpop.f32.mrb[0].mxu0
        %v8021 = vadd.f32 %v7869, %v8020
        %v8022 = vpop.f32.mrb[0].mxu0
        %8023 = vmatprep.mubr.bf16.mxu0 0
        %8024 = vmatmul.mubr.bf16.gmra.mrb[0].mxu0 %v7841
        %v8025 = vpop.f32.mrb[0].mxu0
        %v8026 = vadd.f32 %v7869, %v8025
        %v8027 = vpop.f32.mrb[0].mxu0
        %v8028 = vpop.f32.mrb[0].mxu0
        %v8029 = vadd.f32 %v7869, %v8028
        %v8030 = vpop.f32.mrb[0].mxu0
        %8031 = vmatprep.mubr.bf16.mxu0 0
        %8032 = vmatmul.mubr.bf16.gmra.mrb[0].mxu0 %v7842
        %v8033 = vpop.f32.mrb[0].mxu0
        %v8034 = vadd.f32 %v7869, %v8033
        %v8035 = vpop.f32.mrb[0].mxu0
        %v8036 = vpop.f32.mrb[0].mxu0
        %v8037 = vadd.f32 %v7869, %v8036
        %v8038 = vpop.f32.mrb[0].mxu0
        %8039 = vmatprep.mubr.bf16.mxu0 0
        %8040 = vmatmul.mubr.bf16.gmra.mrb[0].mxu0 %v7843
        %v8041 = vpop.f32.mrb[0].mxu0
        %v8042 = vadd.f32 %v7869, %v8041
        %v8043 = vpop.f32.mrb[0].mxu0
        %v8044 = vpop.f32.mrb[0].mxu0
        %v8045 = vadd.f32 %v7869, %v8044
        %v8046 = vpop.f32.mrb[0].mxu0
        %8047 = vmatprep.mubr.bf16.mxu0 0
        %8048 = vmatmul.mubr.bf16.gmra.mrb[0].mxu0 %v7844
        %v8049 = vpop.f32.mrb[0].mxu0
        %v8050 = vadd.f32 %v7869, %v8049
        %v8051 = vpop.f32.mrb[0].mxu0
        %v8052 = vpop.f32.mrb[0].mxu0
        %v8053 = vadd.f32 %v7869, %v8052
        %v8054 = vpop.f32.mrb[0].mxu0
        %8055 = vmatprep.mubr.bf16.mxu0 0
        %8056 = vmatmul.mubr.bf16.gmra.mrb[0].mxu0 %v7845
        %v8057 = vpop.f32.mrb[0].mxu0
        %v8058 = vadd.f32 %v7869, %v8057
        %v8059 = vpop.f32.mrb[0].mxu0
        %v8060 = vpop.f32.mrb[0].mxu0
        %v8061 = vadd.f32 %v7869, %v8060
        %v8062 = vpop.f32.mrb[0].mxu0
        %8063 = vmatprep.mubr.bf16.mxu0 0
        %8064 = vmatmul.mubr.bf16.gmra.mrb[0].mxu0 %v7846
        %v8065 = vpop.f32.mrb[0].mxu0
        %v8066 = vadd.f32 %v7869, %v8065
        %v8067 = vpop.f32.mrb[0].mxu0
        %v8068 = vpop.f32.mrb[0].mxu0
        %v8069 = vadd.f32 %v7869, %v8068
        %v8070 = vpop.f32.mrb[0].mxu0
        %8071 = vmatprep.mubr.bf16.mxu0 0
        %8072 = vmatmul.mubr.bf16.gmra.mrb[0].mxu0 %v7847
        %v8073 = vpop.f32.mrb[0].mxu0
        %v8074 = vadd.f32 %v7869, %v8073
        %v8075 = vpop.f32.mrb[0].mxu0
        %v8076 = vpop.f32.mrb[0].mxu0
        %v8077 = vadd.f32 %v7869, %v8076
        %v8078 = vpop.f32.mrb[0].mxu0
        %8079 = vdwg.mxu0
        %v8080 = vadd.f32 %v6770, %v7954
        %v8081 = vadd.f32 %v6771, %v7957
        %v8082 = vadd.f32 %v6772, %v7962
        %v8083 = vadd.f32 %v6773, %v7965
        %v8084 = vadd.f32 %v6774, %v7970
        %v8085 = vadd.f32 %v6775, %v7973
        %v8086 = vadd.f32 %v6776, %v7978
        %v8087 = vadd.f32 %v6777, %v7981
        %v8088 = vadd.f32 %v6778, %v7986
        %v8089 = vadd.f32 %v6779, %v7989
        %v8090 = vadd.f32 %v6780, %v7994
        %v8091 = vadd.f32 %v6781, %v7997
        %v8092 = vadd.f32 %v6782, %v8002
        %v8093 = vadd.f32 %v6783, %v8005
        %v8094 = vadd.f32 %v6784, %v8010
        %v8095 = vadd.f32 %v6785, %v8013
        %v8096 = vadd.f32 %v6786, %v8018
        %v8097 = vadd.f32 %v6787, %v8021
        %v8098 = vadd.f32 %v6788, %v8026
        %v8099 = vadd.f32 %v6789, %v8029
        %v8100 = vadd.f32 %v6790, %v8034
        %v8101 = vadd.f32 %v6791, %v8037
        %v8102 = vadd.f32 %v6792, %v8042
        %v8103 = vadd.f32 %v6793, %v8045
        %v8104 = vadd.f32 %v6794, %v8050
        %v8105 = vadd.f32 %v6795, %v8053
        %v8106 = vadd.f32 %v6796, %v8058
        %v8107 = vadd.f32 %v6797, %v8061
        %v8108 = vadd.f32 %v6798, %v8066
        %v8109 = vadd.f32 %v6799, %v8069
        %v8110 = vadd.f32 %v6800, %v8074
        %v8111 = vadd.f32 %v6801, %v8077
        %8112 = vst.msk [vmem:[%s518] sm:$0xff] %vm554, %v8080
        %8113 = vst.msk [vmem:[%s518 + $0x8] sm:$0xff] %vm554, %v8081
        %8114 = vst.msk [vmem:[%s518 + $0x10] sm:$0xff] %vm554, %v8082
        %8115 = vst.msk [vmem:[%s518 + $0x18] sm:$0xff] %vm554, %v8083
        %8116 = vst.msk [vmem:[%s518 + $0x20] sm:$0xff] %vm554, %v8084
        %8117 = vst.msk [vmem:[%s518 + $0x28] sm:$0xff] %vm554, %v8085
        %8118 = vst.msk [vmem:[%s518 + $0x30] sm:$0xff] %vm554, %v8086
        %8119 = vst.msk [vmem:[%s518 + $0x38] sm:$0xff] %vm554, %v8087
        %8120 = vst.msk [vmem:[%s518 + $0x40] sm:$0xff] %vm554, %v8088
        %8121 = vst.msk [vmem:[%s518 + $0x48] sm:$0xff] %vm554, %v8089
        %8122 = vst.msk [vmem:[%s518 + $0x50] sm:$0xff] %vm554, %v8090
        %8123 = vst.msk [vmem:[%s518 + $0x58] sm:$0xff] %vm554, %v8091
        %8124 = vst.msk [vmem:[%s518 + $0x60] sm:$0xff] %vm554, %v8092
        %8125 = vst.msk [vmem:[%s518 + $0x68] sm:$0xff] %vm554, %v8093
        %8126 = vst.msk [vmem:[%s518 + $0x70] sm:$0xff] %vm554, %v8094
        %8127 = vst.msk [vmem:[%s518 + $0x78] sm:$0xff] %vm554, %v8095
        %8128 = vst.msk [vmem:[%s518 + $0x80] sm:$0xff] %vm554, %v8096
        %8129 = vst.msk [vmem:[%s518 + $0x88] sm:$0xff] %vm554, %v8097
        %8130 = vst.msk [vmem:[%s518 + $0x90] sm:$0xff] %vm554, %v8098
        %8131 = vst.msk [vmem:[%s518 + $0x98] sm:$0xff] %vm554, %v8099
        %8132 = vst.msk [vmem:[%s518 + $0xa0] sm:$0xff] %vm554, %v8100
        %8133 = vst.msk [vmem:[%s518 + $0xa8] sm:$0xff] %vm554, %v8101
        %8134 = vst.msk [vmem:[%s518 + $0xb0] sm:$0xff] %vm554, %v8102
        %8135 = vst.msk [vmem:[%s518 + $0xb8] sm:$0xff] %vm554, %v8103
        %8136 = vst.msk [vmem:[%s518 + $0xc0] sm:$0xff] %vm554, %v8104
        %8137 = vst.msk [vmem:[%s518 + $0xc8] sm:$0xff] %vm554, %v8105
        %8138 = vst.msk [vmem:[%s518 + $0xd0] sm:$0xff] %vm554, %v8106
        %8139 = vst.msk [vmem:[%s518 + $0xd8] sm:$0xff] %vm554, %v8107
        %8140 = vst.msk [vmem:[%s518 + $0xe0] sm:$0xff] %vm554, %v8108
        %8141 = vst.msk [vmem:[%s518 + $0xe8] sm:$0xff] %vm554, %v8109
        %8142 = vst.msk [vmem:[%s518 + $0xf0] sm:$0xff] %vm554, %v8110
        %8143 = vst.msk [vmem:[%s518 + $0xf8] sm:$0xff] %vm554, %v8111
        %s8144 = sand.u32 %s355, 1
        %s8145 = scalar_lea.sflag [#allocation5], %s8144
        %s8146 = sand.u32 %s355, 1
        %s8147 = smul.addr %s8146, 256
        %s8148 = scalar_lea.vmem [#allocation8], %s8147
        // Predicated region
        $region85: #{tpu_custom_call.1} parent=75 // pred_check
          %p8149 = pneg %p365
        $region86: #{tpu_custom_call.1} parent=75 // pred_check_branch
          %8151 = sbr.rel (%p8149) target = $region88
        $region87: #{tpu_custom_call.1} parent=75 // pred_region
          %s8152 = smul.u32 32, %s36
          %s8154 = ssub.s32 4096, 4096
          %8155 = vsyncadd %s8145, %s8154
          %s8156 = smul.addr %s8152, 2
          %s8157 = sadd.s32 %s37, %s8156
          %s8158 = smul.addr %s8157, 128
          %s8159 = scalar_lea.hbm %s14, %s8158
          %s8160 = sshll.u32 %s8148, 4
          %s8161 = int_to_ptr.vmem [resolvable:$true] %s8160
          %8166 = dma.vmem_to_hbm [thread:$0]  %s8161, 4096, %s8159, %s8145, 128, 256, 8
        $region88: #{tpu_custom_call.1} parent=75 // pred_fallthru
          _
      $region76: #{tpu_custom_call.1} parent=5 // pred_fallthru
        _
      %p8167 = scmp.le.s32.totalorder 2, %s27
      // Predicated region
      $region89: #{tpu_custom_call.1} parent=5 // pred_check
        %p8168 = pneg %p8167
      $region90: #{tpu_custom_call.1} parent=5 // pred_check_branch
        %8170 = sbr.rel (%p8168) target = $region92
      $region91: #{tpu_custom_call.1} parent=5 // pred_region
        %s8171 = ssub.s32 %s27, 2
        // Predicated region
        $region93: #{tpu_custom_call.1} parent=91 // pred_check
          %p8172 = pneg %p371
        $region94: #{tpu_custom_call.1} parent=91 // pred_check_branch
          %8174 = sbr.rel (%p8172) target = $region96
        $region95: #{tpu_custom_call.1} parent=91 // pred_region
          %s8175 = sand.u32 %s356, 1
          %s8176 = scalar_lea.sflag [#allocation5], %s8175
          %s8177 = sand.u32 %s356, 1
          %s8178 = smul.addr %s8177, 256
          %s8179 = scalar_lea.vmem [#allocation8], %s8178
          %8180 = dma.done %s8176, 4096
        $region96: #{tpu_custom_call.1} parent=91 // pred_fallthru
          _
      $region92: #{tpu_custom_call.1} parent=5 // pred_fallthru
        _
    $region6: #{tpu_custom_call.1} parent=1 // loop_footer
      %s31 = sadd.s32 1, %s27
    $region7: #{tpu_custom_call.1} parent=1 // loop_footer_branch
      %26 = sbr.rel target = $region3
    $region8: #{tpu_custom_call.1} parent=1 // loop_exit
      _
    %8181 = vsyncpa [#allocation4], 1
    %s8182 = scalar_lea.sflag [#allocation4], 1
    %8183 = vsyncpa %s8182, 1
    %8184 = vsyncpa [#allocation7], 1
    %8185 = vsyncpa [#allocation5], 1
    %s8186 = scalar_lea.sflag [#allocation5], 1
    %8187 = vsyncpa %s8186, 1

</llo_original>
